<compile_context>
chip_gen: v7x
topology: tpu7x:2x2x1
jax: 0.10.0
libtpu: 0.0.40
codegen_flags: <defaults>
</compile_context>

<pallas_src>
import math
import functools

import numpy as np
import jax
import jax.numpy as jnp
from jax.experimental import pallas as pl
from jax.experimental.pallas import tpu as pltpu


def _round_up(v, m):
    return ((v + m - 1) // m) * m


def _const_spec(shape):
    """BlockSpec with a constant index_map; single-buffered when supported
    (the block never changes, so double-buffering it only wastes VMEM)."""
    idx = lambda *_: (0,) * len(shape)
    if hasattr(pl, "Buffered"):
        try:
            return pl.BlockSpec(shape, idx, pipeline_mode=pl.Buffered(1))
        except TypeError:
            pass
    return pl.BlockSpec(shape, idx)


# ----------------------------------------------------------------------------
# Pallas kernels
# ----------------------------------------------------------------------------

def _conv3x3_kernel(x_ref, w_ref, b_ref, *rest, th, wo, kcp, relu, aligned,
                    has_add):
    """3x3 / stride-1 / pad-1 conv, output rows [i*th*W, i*th*W + th*W).

    x_ref  : (Hp*W, kcp)    input with the 3 W-taps pre-gathered into channels
                            (kcp = round_up(3*cin, 8)), resident in VMEM.
    w_ref  : (3*kcp, coutp) weights ordered (di, dj, cin) x coutp.
    b_ref  : (1, coutp)     bias (mean-shift already folded in for tail convs).
    add_ref: (th*W, coutp)  optional fused residual (bicubic g), f32.
    o_ref  : (th*W, coutp)  output block.

    The 3 H-taps are accumulated into a LOCAL f32 accumulator (single store).
    """
    if has_add:
        add_ref, o_ref = rest
    else:
        (o_ref,) = rest
    i = pl.program_id(0)
    rows = th * wo
    start = i * rows
    if aligned:
        start = pl.multiple_of(start, 8)
    acc = b_ref[...] + jnp.dot(x_ref[pl.ds(start, rows), :], w_ref[0:kcp, :],
                               preferred_element_type=jnp.float32)
    for di in (1, 2):
        s = start + di * wo
        if aligned:                       # only valid when W % 8 == 0
            s = pl.multiple_of(s, 8)
        acc = acc + jnp.dot(x_ref[pl.ds(s, rows), :],
                            w_ref[di * kcp:(di + 1) * kcp, :],
                            preferred_element_type=jnp.float32)
    if relu:
        acc = jnp.maximum(acc, 0.0)
    if has_add:
        acc = acc + add_ref[...]
    o_ref[...] = acc.astype(o_ref.dtype)


def conv3x3_fused(x, w, b, th=16, relu=False, add=None, out_dtype=jnp.float32):
    """3x3, stride 1, pad 1 conv for NHWC x with batch == 1 (no 9x im2col).

    Optionally fuses a residual add (same H/W, <= cout channels) into the
    epilogue (used for the tail convs: add_mean(f + g)).
    """
    N, H, W, cin = x.shape
    kh, kw, _, cout = w.shape
    assert N == 1 and kh == 3 and kw == 3
    coutp = _round_up(cout, 128)
    kc = kw * cin
    kcp = _round_up(kc, 8)                      # keep per-tap weight slices 8-aligned
    th = min(th, H)
    if (W % 8) != 0 or ((th * W) % 8) != 0:
        th = H                                  # full block is always a legal shape
    aligned = (W % 8 == 0) and ((th * W) % 8 == 0)
    nti = pl.cdiv(H, th)
    Hp = nti * th + (kh - 1)                    # rows needed by the last grid step

    xp = jnp.pad(x[0].astype(jnp.bfloat16), ((1, Hp - H - 1), (1, 1), (0, 0)))
    # pre-gather only the W-taps into channels (3x bf16 copy instead of 9x im2col)
    xw = jnp.concatenate([xp[:, j:j + W, :] for j in range(kw)], axis=-1)
    if kcp != kc:
        xw = jnp.pad(xw, ((0, 0), (0, 0), (0, kcp - kc)))
    x2 = xw.reshape(Hp * W, kcp)

    wr = w.reshape(kh, kw * cin, cout).astype(jnp.bfloat16)
    if kcp != kc:
        wr = jnp.pad(wr, ((0, 0), (0, kcp - kc), (0, 0)))
    wr = wr.reshape(kh * kcp, cout)
    br = b.reshape(1, cout).astype(jnp.float32)
    if coutp != cout:
        wr = jnp.pad(wr, ((0, 0), (0, coutp - cout)))
        br = jnp.pad(br, ((0, 0), (0, coutp - cout)))

    args = [x2, wr, br]
    in_specs = [_const_spec((Hp * W, kcp)),
                _const_spec((kh * kcp, coutp)),
                _const_spec((1, coutp))]
    has_add = add is not None
    if has_add:
        # TODO(synk): the residual is lane-padded to coutp here; a narrow
        # (rows, 3) read + in-kernel lane concat would cut this traffic further.
        cadd = add.shape[-1]
        addp = add[0].astype(jnp.float32)
        if coutp != cadd:
            addp = jnp.pad(addp, ((0, 0), (0, 0), (0, coutp - cadd)))
        args.append(addp.reshape(H * W, coutp))
        in_specs.append(pl.BlockSpec((th * W, coutp), lambda i: (i, 0)))

    out = pl.pallas_call(
        functools.partial(_conv3x3_kernel, th=th, wo=W, kcp=kcp, relu=relu,
                          aligned=aligned, has_add=has_add),
        out_shape=jax.ShapeDtypeStruct((H * W, coutp), out_dtype),
        grid=(nti,),
        in_specs=in_specs,
        out_specs=pl.BlockSpec((th * W, coutp), lambda i: (i, 0)),
        compiler_params=pltpu.CompilerParams(dimension_semantics=("parallel",)),
    )(*args)
    y = out.reshape(1, H, W, coutp)
    return y if coutp == cout else y[..., :cout]
    # TODO(synk): for very large images, stream x2 row-slabs (memory_space=pl.ANY
    # + manual double-buffered DMA with a 2-row halo) instead of keeping it resident.


def _gmm_kernel(a_ref, b_ref, bias_ref, o_ref, *, relu):
    """Grouped matmul: out[g] = a[g] @ b[g] + bias[g] (per-evaluator weights)."""
    acc = jnp.dot(a_ref[0], b_ref[0], preferred_element_type=jnp.float32)
    acc = acc + bias_ref[0]
    if relu:
        acc = jnp.maximum(acc, 0.0)
    o_ref[0] = acc.astype(o_ref.dtype)


def grouped_matmul(a, b, bias, relu=False, out_dtype=jnp.float32, tm=256):
    """(G,M,K)@(G,K,N) + bias, gridded over (group, M-tiles), N padded to 128."""
    G, M, K = a.shape
    N = b.shape[-1]
    Np = _round_up(N, 128)
    a = a.astype(jnp.bfloat16)
    b = b.astype(jnp.bfloat16)
    bias = bias.reshape(G, 1, N).astype(jnp.float32)
    if Np != N:
        b = jnp.pad(b, ((0, 0), (0, 0), (0, Np - N)))
        bias = jnp.pad(bias, ((0, 0), (0, 0), (0, Np - N)))
    tm = min(tm, M) if M % 8 == 0 else M
    out = pl.pallas_call(
        functools.partial(_gmm_kernel, relu=relu),
        out_shape=jax.ShapeDtypeStruct((G, M, Np), out_dtype),
        grid=(G, pl.cdiv(M, tm)),
        in_specs=[
            pl.BlockSpec((1, tm, K), lambda g, i: (g, i, 0)),
            pl.BlockSpec((1, K, Np), lambda g, i: (g, 0, 0)),
            pl.BlockSpec((1, 1, Np), lambda g, i: (g, 0, 0)),
        ],
        out_specs=pl.BlockSpec((1, tm, Np), lambda g, i: (g, i, 0)),
        compiler_params=pltpu.CompilerParams(
            dimension_semantics=("parallel", "parallel")),
    )(a, b, bias)
    return out if Np == N else out[..., :N]


def _eval_head_kernel(x_ref, w_ref, b_ref, o_ref):
    """Per-evaluator AdaptiveAvgPool2d((1,1)) + 1x1 conv (linear) + softmax."""
    m = jnp.mean(x_ref[0], axis=0, keepdims=True)                    # (1, C)
    logits = jnp.dot(m, w_ref[0], preferred_element_type=jnp.float32) + b_ref[0]
    z = logits - jnp.max(logits, axis=-1, keepdims=True)
    e = jnp.exp(z)
    o_ref[0] = e / jnp.sum(e, axis=-1, keepdims=True)


def _add_shift_kernel(x_ref, m_ref, o_ref):
    o_ref[...] = x_ref[...] + m_ref[...]


def _row_tile(rows):
    if rows <= 8:
        return rows
    return min(512, _round_up(pl.cdiv(rows, 2), 8))


def mean_shift(x, shift_vec):
    """MeanShift(sign): y = x + shift_vec (per channel), lane-dense layout."""
    N, H, W, C = x.shape
    R, L = N * H, W * C
    m = jnp.tile(shift_vec.reshape(1, C).astype(jnp.float32), (1, W))
    tr = _row_tile(R)
    out = pl.pallas_call(
        _add_shift_kernel,
        out_shape=jax.ShapeDtypeStruct((R, L), jnp.float32),
        grid=(pl.cdiv(R, tr),),
        in_specs=[pl.BlockSpec((tr, L), lambda i: (i, 0)), _const_spec((1, L))],
        out_specs=pl.BlockSpec((tr, L), lambda i: (i, 0)),
        compiler_params=pltpu.CompilerParams(dimension_semantics=("parallel",)),
    )(x.reshape(R, L).astype(jnp.float32), m)
    return out.reshape(N, H, W, C)


def _bicubic_kernel(x_ref, awt_ref, ah_ref, o_ref):
    """Separable bicubic per channel: out[c] = Ah @ (x[c] @ Aw^T)."""
    t = jnp.dot(x_ref[0], awt_ref[...], preferred_element_type=jnp.float32)
    o_ref[0] = jnp.dot(ah_ref[...], t.astype(jnp.bfloat16),
                       preferred_element_type=jnp.float32)


# ----------------------------------------------------------------------------
# JAX glue built on the Pallas kernels
# ----------------------------------------------------------------------------

def conv2d(x, w, b, relu=False, add=None, out_dtype=jnp.float32):
    kh, kw, cin, cout = w.shape
    assert kh == 3 and kw == 3, "LAUNet only uses 3x3 / stride-1 / pad-1 convs here"
    return conv3x3_fused(x, w, b, relu=relu, add=add, out_dtype=out_dtype)


def pixel_shuffle(x, r):
    """Matches torch.nn.PixelShuffle channel ordering (NHWC layout)."""
    # TODO(synk): could be folded into the adjacent conv's W-tap gather / output
    # indexing to save one full memory pass per upsampler stage.
    N, H, W, Cr2 = x.shape
    C = Cr2 // (r * r)
    x = x.reshape(N, H, W, C, r, r)
    x = jnp.transpose(x, (0, 1, 4, 2, 5, 3))
    return x.reshape(N, H * r, W * r, C)


def upsampler(x, conv_list, final_dtype=jnp.bfloat16):
    """common.Upsampler: [conv(C -> 4C, 3x3, pad 1), PixelShuffle(2)] per log2(scale)."""
    for idx, cp in enumerate(conv_list):
        od = jnp.bfloat16 if idx < len(conv_list) - 1 else final_dtype
        x = conv2d(x, cp['w'], cp['b'], out_dtype=od)
        x = pixel_shuffle(x, 2)
    return x


_BICUBIC_CACHE = {}


def _bicubic_matrix(n_in, scale, a=-0.75):
    """Row-interpolation matrix reproducing torch bicubic, align_corners=False."""
    key = (n_in, scale)
    if key in _BICUBIC_CACHE:
        return _BICUBIC_CACHE[key]

    def kern(x):
        x = abs(x)
        if x <= 1.0:
            return (a + 2) * x ** 3 - (a + 3) * x ** 2 + 1.0
        if x < 2.0:
            return a * x ** 3 - 5 * a * x ** 2 + 8 * a * x - 4 * a
        return 0.0

    n_out = n_in * scale
    A = np.zeros((n_out, n_in), np.float32)
    for o in range(n_out):
        src = (o + 0.5) / scale - 0.5
        i0 = int(np.floor(src))
        t = src - i0
        ws = (kern(t + 1.0), kern(t), kern(1.0 - t), kern(2.0 - t))
        for d, wgt in zip((-1, 0, 1, 2), ws):
            idx = min(max(i0 + d, 0), n_in - 1)
            A[o, idx] += wgt
    _BICUBIC_CACHE[key] = A
    return A


def bicubic_upsample(x, scale):
    """nn.Upsample(scale_factor=scale, mode='bicubic', align_corners=False)."""
    N, H, W, C = x.shape
    assert N == 1
    Ah = jnp.asarray(_bicubic_matrix(H, scale)).astype(jnp.bfloat16)       # (Hs, H)
    Awt = jnp.asarray(_bicubic_matrix(W, scale)).T.astype(jnp.bfloat16)    # (W, Ws)
    xc = jnp.transpose(x[0], (2, 0, 1)).astype(jnp.bfloat16)               # (C, H, W)
    Hs, Ws = H * scale, W * scale
    out = pl.pallas_call(
        _bicubic_kernel,
        out_shape=jax.ShapeDtypeStruct((C, Hs, Ws), jnp.float32),
        grid=(C,),
        in_specs=[
            pl.BlockSpec((1, H, W), lambda c: (c, 0, 0)),
            _const_spec((W, Ws)),
            _const_spec((Hs, H)),
        ],
        out_specs=pl.BlockSpec((1, Hs, Ws), lambda c: (c, 0, 0)),
        compiler_params=pltpu.CompilerParams(dimension_semantics=("parallel",)),
    )(xc, Awt, Ah)
    return jnp.transpose(out, (1, 2, 0))[None]                              # (1, Hs, Ws, C)


def merge(imglist, radio):
    """Faithful port of LAUNet.merge (dim=2 in NCHW -> axis 1 in NHWC)."""
    if radio[0] == 0 and radio[-1] == 0:
        return imglist[-1]
    result = [imglist[0]]
    for i in range(1, len(imglist)):
        prev = result[-1]
        h = prev.shape[1]
        n_sz = radio[0] * i
        s_sz = radio[-1] * i
        north = prev[:, :n_sz]
        south = prev[:, h - s_sz:] if s_sz > 0 else prev[:, h:]
        result.append(jnp.concatenate([north, imglist[i], south], axis=1))
    return result[-1]


def grouped_im2col(x, kh, kw, stride):
    G, H, W, C = x.shape
    Ho = (H - kh) // stride + 1
    Wo = (W - kw) // stride + 1
    cols = []
    for i in range(kh):
        for j in range(kw):
            cols.append(x[:, i:i + (Ho - 1) * stride + 1:stride,
                          j:j + (Wo - 1) * stride + 1:stride, :])
    a = jnp.concatenate(cols, axis=-1).reshape(G, Ho * Wo, kh * kw * C)
    return a, Ho, Wo


# ----------------------------------------------------------------------------
# Parameter initialization (deterministic, synthetic)
# ----------------------------------------------------------------------------

class KeyGen:
    def __init__(self, key):
        self.key = key

    def __call__(self):
        self.key, sub = jax.random.split(self.key)
        return sub


def conv_param(kg, kh, kw, cin, cout):
    std = 1.0 / math.sqrt(kh * kw * cin)
    w = std * jax.random.normal(kg(), (kh, kw, cin, cout), jnp.float32)
    b = 0.01 * jax.random.normal(kg(), (cout,), jnp.float32)
    return {'w': w, 'b': b}


def evaluator_params(kg, n_feats, lin_bias):
    p = {}
    p['conv1'] = conv_param(kg, 3, 3, 3, n_feats)
    p['conv2'] = conv_param(kg, 3, 3, n_feats, n_feats)
    gamma = 1.0 + 0.1 * jax.random.normal(kg(), (n_feats,), jnp.float32)
    beta = 0.05 * jax.random.normal(kg(), (n_feats,), jnp.float32)
    rmean = 0.02 * jax.random.normal(kg(), (n_feats,), jnp.float32)
    rvar = 0.9 + 0.2 * jax.random.uniform(kg(), (n_feats,), jnp.float32)
    s = gamma / jnp.sqrt(rvar + 1e-5)            # BatchNorm (eval) folded to affine
    p['bn_scale'] = s
    p['bn_shift'] = beta - rmean * s
    p['lin_w'] = 0.02 * jax.random.normal(kg(), (n_feats, 2), jnp.float32)
    p['lin_b'] = jnp.asarray(lin_bias, jnp.float32)
    return p


def init_params(key, opt):
    kg = KeyGen(key)
    n_feats = 64
    level = int(math.log(opt['scale'][-1], 2))
    n_colors = opt['n_colors']
    params = {}
    params['head'] = conv_param(kg, 3, 3, n_colors, n_feats)
    params['tail'] = [conv_param(kg, 3, 3, n_feats, n_colors) for _ in range(level + 1)]
    up = []
    for _ in range(2 * level - 1):                    # Upsampler(scale=2, n_feats)
        up.append([conv_param(kg, 3, 3, n_feats, 4 * n_feats)])
    for i in range(level, 0, -1):                     # Upsampler(scale=2**i, 3)
        up.append([conv_param(kg, 3, 3, n_colors, 4 * n_colors) for _ in range(i)])
    params['up'] = up
    # Evaluator linear biases chosen so the data-dependent crop branch is both
    # exercised (evaluator 0 -> mask 1) and non-degenerate (last evaluator -> mask 0).
    ev_bias = [[-4.0, 4.0]] + [[0.0, 0.0]] * (opt['n_evaluator'] - 2) + [[4.0, -4.0]]
    params['eval'] = [evaluator_params(kg, n_feats, ev_bias[i])
                      for i in range(opt['n_evaluator'])]
    return params


# ----------------------------------------------------------------------------
# Forward passes (two jitted segments around the single host sync)
# ----------------------------------------------------------------------------

def evaluators_forward(eval_params, patches):
    """All n_evaluator Evaluator.forward passes (eval mode) batched into gridded
    Pallas kernels; returns (n_ev, 2) softmax probabilities."""
    x = jnp.concatenate(patches, axis=0).astype(jnp.bfloat16)      # (G, Hp, Wp, 3)
    G = x.shape[0]
    n_feats = eval_params[0]['conv1']['w'].shape[-1]
    # conv1 + BatchNorm(eval) folded into weights/bias + ReLU, stride 2, no pad
    w1 = jnp.stack([p['conv1']['w'] * p['bn_scale'] for p in eval_params])
    b1 = jnp.stack([p['conv1']['b'] * p['bn_scale'] + p['bn_shift'] for p in eval_params])
    a1, Ho1, Wo1 = grouped_im2col(x, 3, 3, stride=2)
    h = grouped_matmul(a1, w1.reshape(G, 27, n_feats), b1, relu=True,
                       out_dtype=jnp.bfloat16)
    h = h.reshape(G, Ho1, Wo1, n_feats)
    # conv2, stride 2, no pad
    w2 = jnp.stack([p['conv2']['w'] for p in eval_params]).reshape(G, 9 * n_feats, n_feats)
    b2 = jnp.stack([p['conv2']['b'] for p in eval_params])
    a2, Ho2, Wo2 = grouped_im2col(h, 3, 3, stride=2)
    h2 = grouped_matmul(a2, w2, b2, relu=False, out_dtype=jnp.float32)   # (G, M2, nf)
    # avg_layer + linear_layer + prob_layer, one grid step per evaluator
    lw = jnp.stack([p['lin_w'] for p in eval_params]).astype(jnp.float32)
    lb = jnp.stack([p['lin_b'] for p in eval_params]).reshape(G, 1, 2).astype(jnp.float32)
    M2 = h2.shape[1]
    probs = pl.pallas_call(
        _eval_head_kernel,
        out_shape=jax.ShapeDtypeStruct((G, 1, 2), jnp.float32),
        grid=(G,),
        in_specs=[
            pl.BlockSpec((1, M2, n_feats), lambda g: (g, 0, 0)),
            pl.BlockSpec((1, n_feats, 2), lambda g: (g, 0, 0)),
            pl.BlockSpec((1, 1, 2), lambda g: (g, 0, 0)),
        ],
        out_specs=pl.BlockSpec((1, 1, 2), lambda g: (g, 0, 0)),
        compiler_params=pltpu.CompilerParams(dimension_semantics=("parallel",)),
    )(h2, lw, lb)
    return probs.reshape(G, 2)


@functools.partial(jax.jit, static_argnames=("n_ev", "level", "rgb_range"))
def launet_stage1(params, lr_nchw, *, n_ev, level, rgb_range):
    rgb_mean = jnp.asarray([0.4737, 0.4397, 0.4043], jnp.float32) * rgb_range
    x = jnp.transpose(lr_nchw, (0, 2, 3, 1)).astype(jnp.float32)   # NCHW -> NHWC
    x = mean_shift(x, -rgb_mean)                                   # sub_mean
    g2 = bicubic_upsample(x, 2)                                    # upsample[0]
    g3 = bicubic_upsample(x, 2 ** level)                           # upsample[1]

    inp = conv2d(x, params['head']['w'], params['head']['b'], out_dtype=jnp.bfloat16)
    b1 = inp   # TODO(synk): common.CADensenet(SphereConv2D) (self.body[*]) definition not provided -> identity.
    # TODO(synk): self.tt is aliased to self.body in the reference (NONLocalBlock2D never used) -> identity.
    # tail[0] conv with the residual add + mean shift fused into the epilogue:
    g1 = conv2d(b1, params['tail'][0]['w'], params['tail'][0]['b'] + rgb_mean,
                add=x, out_dtype=jnp.bfloat16)                     # add_mean(f1 + g1)

    patches = jnp.split(g1, n_ev, axis=1)                          # torch.chunk(..., dim=2)
    probs = evaluators_forward(params['eval'], patches)
    return g1, b1, g2, g3, probs


@functools.partial(jax.jit,
                   static_argnames=("crop_n", "crop_s", "level", "rgb_range"))
def launet_stage2(params, g1, b1, g2, g3, *, crop_n, crop_s, level, rgb_range):
    rgb_mean = jnp.asarray([0.4737, 0.4397, 0.4043], jnp.float32) * rgb_range
    remain = g1.shape[1] - crop_n - crop_s
    if crop_n or crop_s:
        b1 = b1[:, crop_n:crop_n + remain]
        g2 = g2[:, crop_n * 2: crop_n * 2 + remain * 2]

    # TODO(synk): common.Resnet (self.bypass[*]) definition not provided -> identity.
    b2 = upsampler(b1, params['up'][0], final_dtype=jnp.bfloat16)  # up_blocks[0]
    g2 = conv2d(b2, params['tail'][1]['w'], params['tail'][1]['b'] + rgb_mean,
                add=g2, out_dtype=jnp.bfloat16)                    # add_mean(f2 + g2)
    if crop_n or crop_s:
        b2 = b2[:, crop_n * 2: b2.shape[1] - crop_s * 2]
        g3 = g3[:, crop_n * 8: g3.shape[1] - crop_s * 8]
    b3 = upsampler(b2, params['up'][1], final_dtype=jnp.bfloat16)  # up_blocks[1]
    g3 = conv2d(b3, params['tail'][2]['w'], params['tail'][2]['b'] + rgb_mean,
                add=g3, out_dtype=jnp.float32)                     # add_mean(f3 + g3)

    g1up = upsampler(g1, params['up'][3], final_dtype=jnp.float32) # up_blocks[3]: x4 on 3 ch
    g2up = upsampler(g2, params['up'][4], final_dtype=jnp.float32) # up_blocks[4]: x2 on 3 ch
    out = merge([g1up, g2up, g3], [crop_n * 4, remain * 4, crop_s * 4])

    results = [g1up, g2up, g3, out]
    return [jnp.transpose(r.astype(jnp.float32), (0, 3, 1, 2)) for r in results]


def launet_forward(params, opt, lr_nchw):
    assert lr_nchw.shape[0] == 1, "eval-mode Evaluator squeeze semantics assume batch=1"
    level = int(math.log(opt['scale'][-1], 2))
    n_ev = opt['n_evaluator']
    rgb_range = float(opt['rgb_range'])
    assert lr_nchw.shape[2] % n_ev == 0, "height must divide evenly into evaluator patches"

    g1, b1, g2, g3, probs = launet_stage1(params, lr_nchw, n_ev=n_ev, level=level,
                                          rgb_range=rgb_range)
    # ---- single device->host sync for all evaluator decisions ----
    probs = np.asarray(jax.device_get(probs))
    masks = [1 if probs[i, 1] > 0.5 else 0 for i in range(n_ev)]   # eval threshold == 1

    crop_n, crop_s = 0, 0
    for i in range(n_ev // 2 ** level):
        if masks[i] == 1:
            crop_n += b1.shape[1] // n_ev
        else:
            break
    for j in range(n_ev - 1, n_ev * ((2 ** level - 1) // 2 ** level), -1):
        if masks[j] == 1:
            crop_s += b1.shape[1] // n_ev
        else:
            break

    return launet_stage2(params, g1, b1, g2, g3, crop_n=crop_n, crop_s=crop_s,
                         level=level, rgb_range=rgb_range)


# ----------------------------------------------------------------------------
# Main
# ----------------------------------------------------------------------------

if __name__ == "__main__":
    opt = dict(scale=[4], n_blocks=2, n_colors=3, rgb_range=1.0, n_evaluator=4)

    key = jax.random.PRNGKey(0)
    k_in, k_par = jax.random.split(key)
    lr = jax.random.uniform(k_in, (1, 3, 32, 32), jnp.float32)     # NCHW like PyTorch
    params = init_params(k_par, opt)

    results = launet_forward(params, opt, lr)
    for r in results:
        jax.block_until_ready(r)

    print("KERNEL_OK")
</pallas_src>

<mosaic_0001>
module attributes {stable_mosaic.version = 11 : i64} {
  func.func @_add_shift_kernel(%arg0: i32, %arg1: memref<16x96xf32, #tpu.memory_space<vmem>>, %arg2: memref<1x96xf32, #tpu.memory_space<vmem>>, %arg3: memref<16x96xf32, #tpu.memory_space<vmem>>) attributes {dimension_semantics = [#tpu.dimension_semantics<parallel>], iteration_bounds = array<i64: 2>, scalar_prefetch = 0 : i64, scratch_operands = 0 : i64, tpu.core_type = #tpu.core_type<tc>, window_params = [{transform_indices = @transform_0, window_bounds = array<i64: 16, 96>}, {pipeline_mode = #tpu.pipeline_mode<synchronous>, transform_indices = @transform_1, window_bounds = array<i64: 1, 96>}, {transform_indices = @transform_2, window_bounds = array<i64: 16, 96>}]} {
    %c0 = arith.constant 0 : index
    %c0_0 = arith.constant 0 : index
    %0 = vector.load %arg1[%c0, %c0_0] : memref<16x96xf32, #tpu.memory_space<vmem>>, vector<16x96xf32>
    %c0_1 = arith.constant 0 : index
    %c0_2 = arith.constant 0 : index
    %1 = vector.load %arg2[%c0_1, %c0_2] : memref<1x96xf32, #tpu.memory_space<vmem>>, vector<1x96xf32>
    %2 = vector.broadcast %1 : vector<1x96xf32> to vector<16x96xf32>
    %3 = arith.addf %0, %2 : vector<16x96xf32>
    %c0_3 = arith.constant 0 : index
    %c0_4 = arith.constant 0 : index
    %4 = vector.load %arg3[%c0_3, %c0_4] : memref<16x96xf32, #tpu.memory_space<vmem>>, vector<16x96xf32>
    tpu.vector_store %arg3[%c0_3, %c0_4], %3 {strides = array<i32>} : memref<16x96xf32, #tpu.memory_space<vmem>>, vector<16x96xf32>,
    return
  }
  func.func @transform_0(%arg0: i32) -> (i32, i32) {
    %c0_i32 = arith.constant 0 : i32
    %c0_i32_0 = arith.constant 0 : i32
    return %arg0, %c0_i32 : i32, i32
  }
  func.func @transform_1(%arg0: i32) -> (i32, i32) {
    %c0_i32 = arith.constant 0 : i32
    %c0_i32_0 = arith.constant 0 : i32
    %c0_i32_1 = arith.constant 0 : i32
    return %c0_i32, %c0_i32_0 : i32, i32
  }
  func.func @transform_2(%arg0: i32) -> (i32, i32) {
    %c0_i32 = arith.constant 0 : i32
    %c0_i32_0 = arith.constant 0 : i32
    return %arg0, %c0_i32 : i32, i32
  }
}

module attributes {stable_mosaic.version = 11 : i64} {
  func.func @_conv3x3_kernel(%arg0: i32, %arg1: memref<1088x16xbf16, #tpu.memory_space<vmem>>, %arg2: memref<48x128xbf16, #tpu.memory_space<vmem>>, %arg3: memref<1x128xf32, #tpu.memory_space<vmem>>, %arg4: memref<512x128xbf16, #tpu.memory_space<vmem>>) attributes {dimension_semantics = [#tpu.dimension_semantics<parallel>], iteration_bounds = array<i64: 2>, scalar_prefetch = 0 : i64, scratch_operands = 0 : i64, tpu.core_type = #tpu.core_type<tc>, window_params = [{pipeline_mode = #tpu.pipeline_mode<synchronous>, transform_indices = @transform_0, window_bounds = array<i64: 1088, 16>}, {pipeline_mode = #tpu.pipeline_mode<synchronous>, transform_indices = @transform_1, window_bounds = array<i64: 48, 128>}, {pipeline_mode = #tpu.pipeline_mode<synchronous>, transform_indices = @transform_2, window_bounds = array<i64: 1, 128>}, {transform_indices = @transform_3, window_bounds = array<i64: 512, 128>}]} {
    %c512_i32 = arith.constant 512 : i32
    %0 = arith.muli %arg0, %c512_i32 : i32
    %1 = tpu.assume_multiple %0, 8 : i32
    %c0 = arith.constant 0 : index
    %c0_0 = arith.constant 0 : index
    %2 = vector.load %arg3[%c0, %c0_0] : memref<1x128xf32, #tpu.memory_space<vmem>>, vector<1x128xf32>
    %3 = arith.index_cast %1 : i32 to index
    %c0_1 = arith.constant 0 : index
    %4 = vector.load %arg1[%3, %c0_1] : memref<1088x16xbf16, #tpu.memory_space<vmem>>, vector<512x16xbf16>
    %c0_2 = arith.constant 0 : index
    %c0_3 = arith.constant 0 : index
    %5 = vector.load %arg2[%c0_2, %c0_3] : memref<48x128xbf16, #tpu.memory_space<vmem>>, vector<16x128xbf16>
    %cst = arith.constant dense<0.000000e+00> : vector<512x128xf32>
    %6 = tpu.matmul %4, %5, %cst {dimension_numbers = #tpu.dot_dimension_numbers<[1], [0], [0], [1], [0, 0, 1, 1], [], []>} : vector<512x16xbf16>, vector<16x128xbf16>, vector<512x128xf32> -> vector<512x128xf32>
    %7 = vector.broadcast %2 : vector<1x128xf32> to vector<512x128xf32>
    %8 = arith.addf %7, %6 : vector<512x128xf32>
    %c32_i32 = arith.constant 32 : i32
    %9 = arith.addi %1, %c32_i32 : i32
    %10 = tpu.assume_multiple %9, 8 : i32
    %11 = arith.index_cast %10 : i32 to index
    %c0_4 = arith.constant 0 : index
    %12 = vector.load %arg1[%11, %c0_4] : memref<1088x16xbf16, #tpu.memory_space<vmem>>, vector<512x16xbf16>
    %c16 = arith.constant 16 : index
    %c0_5 = arith.constant 0 : index
    %13 = vector.load %arg2[%c16, %c0_5] : memref<48x128xbf16, #tpu.memory_space<vmem>>, vector<16x128xbf16>
    %cst_6 = arith.constant dense<0.000000e+00> : vector<512x128xf32>
    %14 = tpu.matmul %12, %13, %cst_6 {dimension_numbers = #tpu.dot_dimension_numbers<[1], [0], [0], [1], [0, 0, 1, 1], [], []>} : vector<512x16xbf16>, vector<16x128xbf16>, vector<512x128xf32> -> vector<512x128xf32>
    %15 = arith.addf %8, %14 : vector<512x128xf32>
    %c64_i32 = arith.constant 64 : i32
    %16 = arith.addi %1, %c64_i32 : i32
    %17 = tpu.assume_multiple %16, 8 : i32
    %18 = arith.index_cast %17 : i32 to index
    %c0_7 = arith.constant 0 : index
    %19 = vector.load %arg1[%18, %c0_7] : memref<1088x16xbf16, #tpu.memory_space<vmem>>, vector<512x16xbf16>
    %c32 = arith.constant 32 : index
    %c0_8 = arith.constant 0 : index
    %20 = vector.load %arg2[%c32, %c0_8] : memref<48x128xbf16, #tpu.memory_space<vmem>>, vector<16x128xbf16>
    %cst_9 = arith.constant dense<0.000000e+00> : vector<512x128xf32>
    %21 = tpu.matmul %19, %20, %cst_9 {dimension_numbers = #tpu.dot_dimension_numbers<[1], [0], [0], [1], [0, 0, 1, 1], [], []>} : vector<512x16xbf16>, vector<16x128xbf16>, vector<512x128xf32> -> vector<512x128xf32>
    %22 = arith.addf %15, %21 : vector<512x128xf32>
    %23 = arith.truncf %22 : vector<512x128xf32> to vector<512x128xbf16>
    %c0_10 = arith.constant 0 : index
    %c0_11 = arith.constant 0 : index
    %24 = vector.load %arg4[%c0_10, %c0_11] : memref<512x128xbf16, #tpu.memory_space<vmem>>, vector<512x128xbf16>
    tpu.vector_store %arg4[%c0_10, %c0_11], %23 {strides = array<i32>} : memref<512x128xbf16, #tpu.memory_space<vmem>>, vector<512x128xbf16>,
    return
  }
  func.func @transform_0(%arg0: i32) -> (i32, i32) {
    %c0_i32 = arith.constant 0 : i32
    %c0_i32_0 = arith.constant 0 : i32
    %c0_i32_1 = arith.constant 0 : i32
    return %c0_i32, %c0_i32_0 : i32, i32
  }
  func.func @transform_1(%arg0: i32) -> (i32, i32) {
    %c0_i32 = arith.constant 0 : i32
    %c0_i32_0 = arith.constant 0 : i32
    %c0_i32_1 = arith.constant 0 : i32
    return %c0_i32, %c0_i32_0 : i32, i32
  }
  func.func @transform_2(%arg0: i32) -> (i32, i32) {
    %c0_i32 = arith.constant 0 : i32
    %c0_i32_0 = arith.constant 0 : i32
    %c0_i32_1 = arith.constant 0 : i32
    return %c0_i32, %c0_i32_0 : i32, i32
  }
  func.func @transform_3(%arg0: i32) -> (i32, i32) {
    %c0_i32 = arith.constant 0 : i32
    %c0_i32_0 = arith.constant 0 : i32
    return %arg0, %c0_i32 : i32, i32
  }
}

module attributes {stable_mosaic.version = 11 : i64} {
  func.func @_conv3x3_kernel(%arg0: i32, %arg1: memref<1088x192xbf16, #tpu.memory_space<vmem>>, %arg2: memref<576x128xbf16, #tpu.memory_space<vmem>>, %arg3: memref<1x128xf32, #tpu.memory_space<vmem>>, %arg4: memref<512x128xf32, #tpu.memory_space<vmem>>, %arg5: memref<512x128xbf16, #tpu.memory_space<vmem>>) attributes {dimension_semantics = [#tpu.dimension_semantics<parallel>], iteration_bounds = array<i64: 2>, scalar_prefetch = 0 : i64, scratch_operands = 0 : i64, tpu.core_type = #tpu.core_type<tc>, window_params = [{pipeline_mode = #tpu.pipeline_mode<synchronous>, transform_indices = @transform_0, window_bounds = array<i64: 1088, 192>}, {pipeline_mode = #tpu.pipeline_mode<synchronous>, transform_indices = @transform_1, window_bounds = array<i64: 576, 128>}, {pipeline_mode = #tpu.pipeline_mode<synchronous>, transform_indices = @transform_2, window_bounds = array<i64: 1, 128>}, {transform_indices = @transform_3, window_bounds = array<i64: 512, 128>}, {transform_indices = @transform_4, window_bounds = array<i64: 512, 128>}]} {
    %c512_i32 = arith.constant 512 : i32
    %0 = arith.muli %arg0, %c512_i32 : i32
    %1 = tpu.assume_multiple %0, 8 : i32
    %c0 = arith.constant 0 : index
    %c0_0 = arith.constant 0 : index
    %2 = vector.load %arg3[%c0, %c0_0] : memref<1x128xf32, #tpu.memory_space<vmem>>, vector<1x128xf32>
    %3 = arith.index_cast %1 : i32 to index
    %c0_1 = arith.constant 0 : index
    %4 = vector.load %arg1[%3, %c0_1] : memref<1088x192xbf16, #tpu.memory_space<vmem>>, vector<512x192xbf16>
    %c0_2 = arith.constant 0 : index
    %c0_3 = arith.constant 0 : index
    %5 = vector.load %arg2[%c0_2, %c0_3] : memref<576x128xbf16, #tpu.memory_space<vmem>>, vector<192x128xbf16>
    %cst = arith.constant dense<0.000000e+00> : vector<512x128xf32>
    %6 = tpu.matmul %4, %5, %cst {dimension_numbers = #tpu.dot_dimension_numbers<[1], [0], [0], [1], [0, 0, 1, 1], [], []>} : vector<512x192xbf16>, vector<192x128xbf16>, vector<512x128xf32> -> vector<512x128xf32>
    %7 = vector.broadcast %2 : vector<1x128xf32> to vector<512x128xf32>
    %8 = arith.addf %7, %6 : vector<512x128xf32>
    %c32_i32 = arith.constant 32 : i32
    %9 = arith.addi %1, %c32_i32 : i32
    %10 = tpu.assume_multiple %9, 8 : i32
    %11 = arith.index_cast %10 : i32 to index
    %c0_4 = arith.constant 0 : index
    %12 = vector.load %arg1[%11, %c0_4] : memref<1088x192xbf16, #tpu.memory_space<vmem>>, vector<512x192xbf16>
    %c192 = arith.constant 192 : index
    %c0_5 = arith.constant 0 : index
    %13 = vector.load %arg2[%c192, %c0_5] : memref<576x128xbf16, #tpu.memory_space<vmem>>, vector<192x128xbf16>
    %cst_6 = arith.constant dense<0.000000e+00> : vector<512x128xf32>
    %14 = tpu.matmul %12, %13, %cst_6 {dimension_numbers = #tpu.dot_dimension_numbers<[1], [0], [0], [1], [0, 0, 1, 1], [], []>} : vector<512x192xbf16>, vector<192x128xbf16>, vector<512x128xf32> -> vector<512x128xf32>
    %15 = arith.addf %8, %14 : vector<512x128xf32>
    %c64_i32 = arith.constant 64 : i32
    %16 = arith.addi %1, %c64_i32 : i32
    %17 = tpu.assume_multiple %16, 8 : i32
    %18 = arith.index_cast %17 : i32 to index
    %c0_7 = arith.constant 0 : index
    %19 = vector.load %arg1[%18, %c0_7] : memref<1088x192xbf16, #tpu.memory_space<vmem>>, vector<512x192xbf16>
    %c384 = arith.constant 384 : index
    %c0_8 = arith.constant 0 : index
    %20 = vector.load %arg2[%c384, %c0_8] : memref<576x128xbf16, #tpu.memory_space<vmem>>, vector<192x128xbf16>
    %cst_9 = arith.constant dense<0.000000e+00> : vector<512x128xf32>
    %21 = tpu.matmul %19, %20, %cst_9 {dimension_numbers = #tpu.dot_dimension_numbers<[1], [0], [0], [1], [0, 0, 1, 1], [], []>} : vector<512x192xbf16>, vector<192x128xbf16>, vector<512x128xf32> -> vector<512x128xf32>
    %22 = arith.addf %15, %21 : vector<512x128xf32>
    %c0_10 = arith.constant 0 : index
    %c0_11 = arith.constant 0 : index
    %23 = vector.load %arg4[%c0_10, %c0_11] : memref<512x128xf32, #tpu.memory_space<vmem>>, vector<512x128xf32>
    %24 = arith.addf %22, %23 : vector<512x128xf32>
    %25 = arith.truncf %24 : vector<512x128xf32> to vector<512x128xbf16>
    %c0_12 = arith.constant 0 : index
    %c0_13 = arith.constant 0 : index
    %26 = vector.load %arg5[%c0_12, %c0_13] : memref<512x128xbf16, #tpu.memory_space<vmem>>, vector<512x128xbf16>
    tpu.vector_store %arg5[%c0_12, %c0_13], %25 {strides = array<i32>} : memref<512x128xbf16, #tpu.memory_space<vmem>>, vector<512x128xbf16>,
    return
  }
  func.func @transform_0(%arg0: i32) -> (i32, i32) {
    %c0_i32 = arith.constant 0 : i32
    %c0_i32_0 = arith.constant 0 : i32
    %c0_i32_1 = arith.constant 0 : i32
    return %c0_i32, %c0_i32_0 : i32, i32
  }
  func.func @transform_1(%arg0: i32) -> (i32, i32) {
    %c0_i32 = arith.constant 0 : i32
    %c0_i32_0 = arith.constant 0 : i32
    %c0_i32_1 = arith.constant 0 : i32
    return %c0_i32, %c0_i32_0 : i32, i32
  }
  func.func @transform_2(%arg0: i32) -> (i32, i32) {
    %c0_i32 = arith.constant 0 : i32
    %c0_i32_0 = arith.constant 0 : i32
    %c0_i32_1 = arith.constant 0 : i32
    return %c0_i32, %c0_i32_0 : i32, i32
  }
  func.func @transform_3(%arg0: i32) -> (i32, i32) {
    %c0_i32 = arith.constant 0 : i32
    %c0_i32_0 = arith.constant 0 : i32
    return %arg0, %c0_i32 : i32, i32
  }
  func.func @transform_4(%arg0: i32) -> (i32, i32) {
    %c0_i32 = arith.constant 0 : i32
    %c0_i32_0 = arith.constant 0 : i32
    return %arg0, %c0_i32 : i32, i32
  }
}

module attributes {stable_mosaic.version = 11 : i64} {
  func.func @_gmm_kernel(%arg0: i32, %arg1: i32, %arg2: memref<1x45x27xbf16, #tpu.memory_space<vmem>>, %arg3: memref<1x27x128xbf16, #tpu.memory_space<vmem>>, %arg4: memref<1x1x128xf32, #tpu.memory_space<vmem>>, %arg5: memref<1x45x128xbf16, #tpu.memory_space<vmem>>) attributes {dimension_semantics = [#tpu.dimension_semantics<parallel>, #tpu.dimension_semantics<parallel>], iteration_bounds = array<i64: 4, 1>, scalar_prefetch = 0 : i64, scratch_operands = 0 : i64, tpu.core_type = #tpu.core_type<tc>, window_params = [{transform_indices = @transform_0, window_bounds = array<i64: 1, 45, 27>}, {transform_indices = @transform_1, window_bounds = array<i64: 1, 27, 128>}, {transform_indices = @transform_2, window_bounds = array<i64: 1, 1, 128>}, {transform_indices = @transform_3, window_bounds = array<i64: 1, 45, 128>}]} {
    %c0 = arith.constant 0 : index
    %c0_0 = arith.constant 0 : index
    %c0_1 = arith.constant 0 : index
    %0 = vector.load %arg2[%c0, %c0_0, %c0_1] : memref<1x45x27xbf16, #tpu.memory_space<vmem>>, vector<1x45x27xbf16>
    %1 = vector.shape_cast %0 : vector<1x45x27xbf16> to vector<45x27xbf16>
    %c0_2 = arith.constant 0 : index
    %c0_3 = arith.constant 0 : index
    %c0_4 = arith.constant 0 : index
    %2 = vector.load %arg3[%c0_2, %c0_3, %c0_4] : memref<1x27x128xbf16, #tpu.memory_space<vmem>>, vector<1x27x128xbf16>
    %3 = vector.shape_cast %2 : vector<1x27x128xbf16> to vector<27x128xbf16>
    %cst = arith.constant dense<0.000000e+00> : vector<45x128xf32>
    %4 = tpu.matmul %1, %3, %cst {dimension_numbers = #tpu.dot_dimension_numbers<[1], [0], [0], [1], [0, 0, 1, 1], [], []>} : vector<45x27xbf16>, vector<27x128xbf16>, vector<45x128xf32> -> vector<45x128xf32>
    %c0_5 = arith.constant 0 : index
    %c0_6 = arith.constant 0 : index
    %c0_7 = arith.constant 0 : index
    %5 = vector.load %arg4[%c0_5, %c0_6, %c0_7] : memref<1x1x128xf32, #tpu.memory_space<vmem>>, vector<1x1x128xf32>
    %6 = vector.shape_cast %5 : vector<1x1x128xf32> to vector<1x128xf32>
    %7 = vector.broadcast %6 : vector<1x128xf32> to vector<45x128xf32>
    %8 = arith.addf %4, %7 : vector<45x128xf32>
    %cst_8 = arith.constant 0.000000e+00 : f32
    %9 = vector.broadcast %cst_8 : f32 to vector<45x128xf32>
    %10 = arith.maximumf %8, %9 : vector<45x128xf32>
    %11 = arith.truncf %10 : vector<45x128xf32> to vector<45x128xbf16>
    %c0_9 = arith.constant 0 : index
    %c0_10 = arith.constant 0 : index
    %c0_11 = arith.constant 0 : index
    %12 = vector.load %arg5[%c0_9, %c0_10, %c0_11] : memref<1x45x128xbf16, #tpu.memory_space<vmem>>, vector<1x45x128xbf16>
    %13 = vector.shape_cast %12 : vector<1x45x128xbf16> to vector<45x128xbf16>
    %14 = vector.shape_cast %11 : vector<45x128xbf16> to vector<1x45x128xbf16>
    tpu.vector_store %arg5[%c0_9, %c0_10, %c0_11], %14 {strides = array<i32>} : memref<1x45x128xbf16, #tpu.memory_space<vmem>>, vector<1x45x128xbf16>,
    return
  }
  func.func @transform_0(%arg0: i32, %arg1: i32) -> (i32, i32, i32) {
    %c0_i32 = arith.constant 0 : i32
    %c0_i32_0 = arith.constant 0 : i32
    return %arg0, %arg1, %c0_i32 : i32, i32, i32
  }
  func.func @transform_1(%arg0: i32, %arg1: i32) -> (i32, i32, i32) {
    %c0_i32 = arith.constant 0 : i32
    %c0_i32_0 = arith.constant 0 : i32
    %c0_i32_1 = arith.constant 0 : i32
    return %arg0, %c0_i32, %c0_i32_0 : i32, i32, i32
  }
  func.func @transform_2(%arg0: i32, %arg1: i32) -> (i32, i32, i32) {
    %c0_i32 = arith.constant 0 : i32
    %c0_i32_0 = arith.constant 0 : i32
    %c0_i32_1 = arith.constant 0 : i32
    return %arg0, %c0_i32, %c0_i32_0 : i32, i32, i32
  }
  func.func @transform_3(%arg0: i32, %arg1: i32) -> (i32, i32, i32) {
    %c0_i32 = arith.constant 0 : i32
    %c0_i32_0 = arith.constant 0 : i32
    return %arg0, %arg1, %c0_i32 : i32, i32, i32
  }
}

module attributes {stable_mosaic.version = 11 : i64} {
  func.func @_gmm_kernel(%arg0: i32, %arg1: i32, %arg2: memref<1x7x576xbf16, #tpu.memory_space<vmem>>, %arg3: memref<1x576x128xbf16, #tpu.memory_space<vmem>>, %arg4: memref<1x1x128xf32, #tpu.memory_space<vmem>>, %arg5: memref<1x7x128xf32, #tpu.memory_space<vmem>>) attributes {dimension_semantics = [#tpu.dimension_semantics<parallel>, #tpu.dimension_semantics<parallel>], iteration_bounds = array<i64: 4, 1>, scalar_prefetch = 0 : i64, scratch_operands = 0 : i64, tpu.core_type = #tpu.core_type<tc>, window_params = [{transform_indices = @transform_0, window_bounds = array<i64: 1, 7, 576>}, {transform_indices = @transform_1, window_bounds = array<i64: 1, 576, 128>}, {transform_indices = @transform_2, window_bounds = array<i64: 1, 1, 128>}, {transform_indices = @transform_3, window_bounds = array<i64: 1, 7, 128>}]} {
    %c0 = arith.constant 0 : index
    %c0_0 = arith.constant 0 : index
    %c0_1 = arith.constant 0 : index
    %0 = vector.load %arg2[%c0, %c0_0, %c0_1] : memref<1x7x576xbf16, #tpu.memory_space<vmem>>, vector<1x7x576xbf16>
    %1 = vector.shape_cast %0 : vector<1x7x576xbf16> to vector<7x576xbf16>
    %c0_2 = arith.constant 0 : index
    %c0_3 = arith.constant 0 : index
    %c0_4 = arith.constant 0 : index
    %2 = vector.load %arg3[%c0_2, %c0_3, %c0_4] : memref<1x576x128xbf16, #tpu.memory_space<vmem>>, vector<1x576x128xbf16>
    %3 = vector.shape_cast %2 : vector<1x576x128xbf16> to vector<576x128xbf16>
    %cst = arith.constant dense<0.000000e+00> : vector<7x128xf32>
    %4 = tpu.matmul %1, %3, %cst {dimension_numbers = #tpu.dot_dimension_numbers<[1], [0], [0], [1], [0, 0, 1, 1], [], []>} : vector<7x576xbf16>, vector<576x128xbf16>, vector<7x128xf32> -> vector<7x128xf32>
    %c0_5 = arith.constant 0 : index
    %c0_6 = arith.constant 0 : index
    %c0_7 = arith.constant 0 : index
    %5 = vector.load %arg4[%c0_5, %c0_6, %c0_7] : memref<1x1x128xf32, #tpu.memory_space<vmem>>, vector<1x1x128xf32>
    %6 = vector.shape_cast %5 : vector<1x1x128xf32> to vector<1x128xf32>
    %7 = vector.broadcast %6 : vector<1x128xf32> to vector<7x128xf32>
    %8 = arith.addf %4, %7 : vector<7x128xf32>
    %c0_8 = arith.constant 0 : index
    %c0_9 = arith.constant 0 : index
    %c0_10 = arith.constant 0 : index
    %9 = vector.load %arg5[%c0_8, %c0_9, %c0_10] : memref<1x7x128xf32, #tpu.memory_space<vmem>>, vector<1x7x128xf32>
    %10 = vector.shape_cast %9 : vector<1x7x128xf32> to vector<7x128xf32>
    %11 = vector.shape_cast %8 : vector<7x128xf32> to vector<1x7x128xf32>
    tpu.vector_store %arg5[%c0_8, %c0_9, %c0_10], %11 {strides = array<i32>} : memref<1x7x128xf32, #tpu.memory_space<vmem>>, vector<1x7x128xf32>,
    return
  }
  func.func @transform_0(%arg0: i32, %arg1: i32) -> (i32, i32, i32) {
    %c0_i32 = arith.constant 0 : i32
    %c0_i32_0 = arith.constant 0 : i32
    return %arg0, %arg1, %c0_i32 : i32, i32, i32
  }
  func.func @transform_1(%arg0: i32, %arg1: i32) -> (i32, i32, i32) {
    %c0_i32 = arith.constant 0 : i32
    %c0_i32_0 = arith.constant 0 : i32
    %c0_i32_1 = arith.constant 0 : i32
    return %arg0, %c0_i32, %c0_i32_0 : i32, i32, i32
  }
  func.func @transform_2(%arg0: i32, %arg1: i32) -> (i32, i32, i32) {
    %c0_i32 = arith.constant 0 : i32
    %c0_i32_0 = arith.constant 0 : i32
    %c0_i32_1 = arith.constant 0 : i32
    return %arg0, %c0_i32, %c0_i32_0 : i32, i32, i32
  }
  func.func @transform_3(%arg0: i32, %arg1: i32) -> (i32, i32, i32) {
    %c0_i32 = arith.constant 0 : i32
    %c0_i32_0 = arith.constant 0 : i32
    return %arg0, %arg1, %c0_i32 : i32, i32, i32
  }
}

module attributes {stable_mosaic.version = 11 : i64} {
  func.func @_eval_head_kernel(%arg0: i32, %arg1: memref<1x7x64xf32, #tpu.memory_space<vmem>>, %arg2: memref<1x64x2xf32, #tpu.memory_space<vmem>>, %arg3: memref<1x1x2xf32, #tpu.memory_space<vmem>>, %arg4: memref<1x1x2xf32, #tpu.memory_space<vmem>>) attributes {dimension_semantics = [#tpu.dimension_semantics<parallel>], iteration_bounds = array<i64: 4>, scalar_prefetch = 0 : i64, scratch_operands = 0 : i64, tpu.core_type = #tpu.core_type<tc>, window_params = [{transform_indices = @transform_0, window_bounds = array<i64: 1, 7, 64>}, {transform_indices = @transform_1, window_bounds = array<i64: 1, 64, 2>}, {transform_indices = @transform_2, window_bounds = array<i64: 1, 1, 2>}, {transform_indices = @transform_3, window_bounds = array<i64: 1, 1, 2>}]} {
    %c0 = arith.constant 0 : index
    %c0_0 = arith.constant 0 : index
    %c0_1 = arith.constant 0 : index
    %0 = vector.load %arg1[%c0, %c0_0, %c0_1] : memref<1x7x64xf32, #tpu.memory_space<vmem>>, vector<1x7x64xf32>
    %1 = vector.shape_cast %0 : vector<1x7x64xf32> to vector<7x64xf32>
    %cst = arith.constant dense<0.000000e+00> : vector<64xf32>
    %2 = vector.multi_reduction <add>, %1, %cst [0] : vector<7x64xf32> to vector<64xf32>
    %3 = vector.shape_cast %2 : vector<64xf32> to vector<1x64xf32>
    %cst_2 = arith.constant 7.000000e+00 : f32
    %4 = vector.broadcast %cst_2 : f32 to vector<1x64xf32>
    %5 = arith.divf %3, %4 : vector<1x64xf32>
    %c0_3 = arith.constant 0 : index
    %c0_4 = arith.constant 0 : index
    %c0_5 = arith.constant 0 : index
    %6 = vector.load %arg2[%c0_3, %c0_4, %c0_5] : memref<1x64x2xf32, #tpu.memory_space<vmem>>, vector<1x64x2xf32>
    %7 = vector.shape_cast %6 : vector<1x64x2xf32> to vector<64x2xf32>
    %cst_6 = arith.constant dense<0.000000e+00> : vector<1x2xf32>
    %8 = tpu.matmul %5, %7, %cst_6 {dimension_numbers = #tpu.dot_dimension_numbers<[1], [0], [0], [1], [0, 0, 1, 1], [], []>} : vector<1x64xf32>, vector<64x2xf32>, vector<1x2xf32> -> vector<1x2xf32>
    %c0_7 = arith.constant 0 : index
    %c0_8 = arith.constant 0 : index
    %c0_9 = arith.constant 0 : index
    %9 = vector.load %arg3[%c0_7, %c0_8, %c0_9] : memref<1x1x2xf32, #tpu.memory_space<vmem>>, vector<1x1x2xf32>
    %10 = vector.shape_cast %9 : vector<1x1x2xf32> to vector<1x2xf32>
    %11 = arith.addf %8, %10 : vector<1x2xf32>
    %cst_10 = arith.constant dense<0xFF800000> : vector<1xf32>
    %12 = vector.multi_reduction <maximumf>, %11, %cst_10 [1] : vector<1x2xf32> to vector<1xf32>
    %13 = vector.shape_cast %12 : vector<1xf32> to vector<1x1xf32>
    %14 = vector.broadcast %13 : vector<1x1xf32> to vector<1x2xf32>
    %15 = arith.subf %11, %14 : vector<1x2xf32>
    %16 = math.exp %15 : vector<1x2xf32>
    %cst_11 = arith.constant dense<0.000000e+00> : vector<1xf32>
    %17 = vector.multi_reduction <add>, %16, %cst_11 [1] : vector<1x2xf32> to vector<1xf32>
    %18 = vector.shape_cast %17 : vector<1xf32> to vector<1x1xf32>
    %19 = vector.broadcast %18 : vector<1x1xf32> to vector<1x2xf32>
    %20 = arith.divf %16, %19 : vector<1x2xf32>
    %c0_12 = arith.constant 0 : index
    %c0_13 = arith.constant 0 : index
    %c0_14 = arith.constant 0 : index
    %21 = vector.load %arg4[%c0_12, %c0_13, %c0_14] : memref<1x1x2xf32, #tpu.memory_space<vmem>>, vector<1x1x2xf32>
    %22 = vector.shape_cast %21 : vector<1x1x2xf32> to vector<1x2xf32>
    %23 = vector.shape_cast %20 : vector<1x2xf32> to vector<1x1x2xf32>
    tpu.vector_store %arg4[%c0_12, %c0_13, %c0_14], %23 {strides = array<i32>} : memref<1x1x2xf32, #tpu.memory_space<vmem>>, vector<1x1x2xf32>,
    return
  }
  func.func @transform_0(%arg0: i32) -> (i32, i32, i32) {
    %c0_i32 = arith.constant 0 : i32
    %c0_i32_0 = arith.constant 0 : i32
    %c0_i32_1 = arith.constant 0 : i32
    return %arg0, %c0_i32, %c0_i32_0 : i32, i32, i32
  }
  func.func @transform_1(%arg0: i32) -> (i32, i32, i32) {
    %c0_i32 = arith.constant 0 : i32
    %c0_i32_0 = arith.constant 0 : i32
    %c0_i32_1 = arith.constant 0 : i32
    return %arg0, %c0_i32, %c0_i32_0 : i32, i32, i32
  }
  func.func @transform_2(%arg0: i32) -> (i32, i32, i32) {
    %c0_i32 = arith.constant 0 : i32
    %c0_i32_0 = arith.constant 0 : i32
    %c0_i32_1 = arith.constant 0 : i32
    return %arg0, %c0_i32, %c0_i32_0 : i32, i32, i32
  }
  func.func @transform_3(%arg0: i32) -> (i32, i32, i32) {
    %c0_i32 = arith.constant 0 : i32
    %c0_i32_0 = arith.constant 0 : i32
    %c0_i32_1 = arith.constant 0 : i32
    return %arg0, %c0_i32, %c0_i32_0 : i32, i32, i32
  }
}

module attributes {stable_mosaic.version = 11 : i64} {
  func.func @_bicubic_kernel(%arg0: i32, %arg1: memref<1x32x32xbf16, #tpu.memory_space<vmem>>, %arg2: memref<32x128xbf16, #tpu.memory_space<vmem>>, %arg3: memref<128x32xbf16, #tpu.memory_space<vmem>>, %arg4: memref<1x128x128xf32, #tpu.memory_space<vmem>>) attributes {dimension_semantics = [#tpu.dimension_semantics<parallel>], iteration_bounds = array<i64: 3>, scalar_prefetch = 0 : i64, scratch_operands = 0 : i64, tpu.core_type = #tpu.core_type<tc>, window_params = [{transform_indices = @transform_0, window_bounds = array<i64: 1, 32, 32>}, {pipeline_mode = #tpu.pipeline_mode<synchronous>, transform_indices = @transform_1, window_bounds = array<i64: 32, 128>}, {pipeline_mode = #tpu.pipeline_mode<synchronous>, transform_indices = @transform_2, window_bounds = array<i64: 128, 32>}, {transform_indices = @transform_3, window_bounds = array<i64: 1, 128, 128>}]} {
    %c0 = arith.constant 0 : index
    %c0_0 = arith.constant 0 : index
    %c0_1 = arith.constant 0 : index
    %0 = vector.load %arg1[%c0, %c0_0, %c0_1] : memref<1x32x32xbf16, #tpu.memory_space<vmem>>, vector<1x32x32xbf16>
    %1 = vector.shape_cast %0 : vector<1x32x32xbf16> to vector<32x32xbf16>
    %c0_2 = arith.constant 0 : index
    %c0_3 = arith.constant 0 : index
    %2 = vector.load %arg2[%c0_2, %c0_3] : memref<32x128xbf16, #tpu.memory_space<vmem>>, vector<32x128xbf16>
    %cst = arith.constant dense<0.000000e+00> : vector<32x128xf32>
    %3 = tpu.matmul %1, %2, %cst {dimension_numbers = #tpu.dot_dimension_numbers<[1], [0], [0], [1], [0, 0, 1, 1], [], []>} : vector<32x32xbf16>, vector<32x128xbf16>, vector<32x128xf32> -> vector<32x128xf32>
    %c0_4 = arith.constant 0 : index
    %c0_5 = arith.constant 0 : index
    %4 = vector.load %arg3[%c0_4, %c0_5] : memref<128x32xbf16, #tpu.memory_space<vmem>>, vector<128x32xbf16>
    %5 = arith.truncf %3 : vector<32x128xf32> to vector<32x128xbf16>
    %cst_6 = arith.constant dense<0.000000e+00> : vector<128x128xf32>
    %6 = tpu.matmul %4, %5, %cst_6 {dimension_numbers = #tpu.dot_dimension_numbers<[1], [0], [0], [1], [0, 0, 1, 1], [], []>} : vector<128x32xbf16>, vector<32x128xbf16>, vector<128x128xf32> -> vector<128x128xf32>
    %c0_7 = arith.constant 0 : index
    %c0_8 = arith.constant 0 : index
    %c0_9 = arith.constant 0 : index
    %7 = vector.load %arg4[%c0_7, %c0_8, %c0_9] : memref<1x128x128xf32, #tpu.memory_space<vmem>>, vector<1x128x128xf32>
    %8 = vector.shape_cast %7 : vector<1x128x128xf32> to vector<128x128xf32>
    %9 = vector.shape_cast %6 : vector<128x128xf32> to vector<1x128x128xf32>
    tpu.vector_store %arg4[%c0_7, %c0_8, %c0_9], %9 {strides = array<i32>} : memref<1x128x128xf32, #tpu.memory_space<vmem>>, vector<1x128x128xf32>,
    return
  }
  func.func @transform_0(%arg0: i32) -> (i32, i32, i32) {
    %c0_i32 = arith.constant 0 : i32
    %c0_i32_0 = arith.constant 0 : i32
    %c0_i32_1 = arith.constant 0 : i32
    return %arg0, %c0_i32, %c0_i32_0 : i32, i32, i32
  }
  func.func @transform_1(%arg0: i32) -> (i32, i32) {
    %c0_i32 = arith.constant 0 : i32
    %c0_i32_0 = arith.constant 0 : i32
    %c0_i32_1 = arith.constant 0 : i32
    return %c0_i32, %c0_i32_0 : i32, i32
  }
  func.func @transform_2(%arg0: i32) -> (i32, i32) {
    %c0_i32 = arith.constant 0 : i32
    %c0_i32_0 = arith.constant 0 : i32
    %c0_i32_1 = arith.constant 0 : i32
    return %c0_i32, %c0_i32_0 : i32, i32
  }
  func.func @transform_3(%arg0: i32) -> (i32, i32, i32) {
    %c0_i32 = arith.constant 0 : i32
    %c0_i32_0 = arith.constant 0 : i32
    %c0_i32_1 = arith.constant 0 : i32
    return %arg0, %c0_i32, %c0_i32_0 : i32, i32, i32
  }
}

module attributes {stable_mosaic.version = 11 : i64} {
  func.func @_bicubic_kernel(%arg0: i32, %arg1: memref<1x32x32xbf16, #tpu.memory_space<vmem>>, %arg2: memref<32x64xbf16, #tpu.memory_space<vmem>>, %arg3: memref<64x32xbf16, #tpu.memory_space<vmem>>, %arg4: memref<1x64x64xf32, #tpu.memory_space<vmem>>) attributes {dimension_semantics = [#tpu.dimension_semantics<parallel>], iteration_bounds = array<i64: 3>, scalar_prefetch = 0 : i64, scratch_operands = 0 : i64, tpu.core_type = #tpu.core_type<tc>, window_params = [{transform_indices = @transform_0, window_bounds = array<i64: 1, 32, 32>}, {pipeline_mode = #tpu.pipeline_mode<synchronous>, transform_indices = @transform_1, window_bounds = array<i64: 32, 64>}, {pipeline_mode = #tpu.pipeline_mode<synchronous>, transform_indices = @transform_2, window_bounds = array<i64: 64, 32>}, {transform_indices = @transform_3, window_bounds = array<i64: 1, 64, 64>}]} {
    %c0 = arith.constant 0 : index
    %c0_0 = arith.constant 0 : index
    %c0_1 = arith.constant 0 : index
    %0 = vector.load %arg1[%c0, %c0_0, %c0_1] : memref<1x32x32xbf16, #tpu.memory_space<vmem>>, vector<1x32x32xbf16>
    %1 = vector.shape_cast %0 : vector<1x32x32xbf16> to vector<32x32xbf16>
    %c0_2 = arith.constant 0 : index
    %c0_3 = arith.constant 0 : index
    %2 = vector.load %arg2[%c0_2, %c0_3] : memref<32x64xbf16, #tpu.memory_space<vmem>>, vector<32x64xbf16>
    %cst = arith.constant dense<0.000000e+00> : vector<32x64xf32>
    %3 = tpu.matmul %1, %2, %cst {dimension_numbers = #tpu.dot_dimension_numbers<[1], [0], [0], [1], [0, 0, 1, 1], [], []>} : vector<32x32xbf16>, vector<32x64xbf16>, vector<32x64xf32> -> vector<32x64xf32>
    %c0_4 = arith.constant 0 : index
    %c0_5 = arith.constant 0 : index
    %4 = vector.load %arg3[%c0_4, %c0_5] : memref<64x32xbf16, #tpu.memory_space<vmem>>, vector<64x32xbf16>
    %5 = arith.truncf %3 : vector<32x64xf32> to vector<32x64xbf16>
    %cst_6 = arith.constant dense<0.000000e+00> : vector<64x64xf32>
    %6 = tpu.matmul %4, %5, %cst_6 {dimension_numbers = #tpu.dot_dimension_numbers<[1], [0], [0], [1], [0, 0, 1, 1], [], []>} : vector<64x32xbf16>, vector<32x64xbf16>, vector<64x64xf32> -> vector<64x64xf32>
    %c0_7 = arith.constant 0 : index
    %c0_8 = arith.constant 0 : index
    %c0_9 = arith.constant 0 : index
    %7 = vector.load %arg4[%c0_7, %c0_8, %c0_9] : memref<1x64x64xf32, #tpu.memory_space<vmem>>, vector<1x64x64xf32>
    %8 = vector.shape_cast %7 : vector<1x64x64xf32> to vector<64x64xf32>
    %9 = vector.shape_cast %6 : vector<64x64xf32> to vector<1x64x64xf32>
    tpu.vector_store %arg4[%c0_7, %c0_8, %c0_9], %9 {strides = array<i32>} : memref<1x64x64xf32, #tpu.memory_space<vmem>>, vector<1x64x64xf32>,
    return
  }
  func.func @transform_0(%arg0: i32) -> (i32, i32, i32) {
    %c0_i32 = arith.constant 0 : i32
    %c0_i32_0 = arith.constant 0 : i32
    %c0_i32_1 = arith.constant 0 : i32
    return %arg0, %c0_i32, %c0_i32_0 : i32, i32, i32
  }
  func.func @transform_1(%arg0: i32) -> (i32, i32) {
    %c0_i32 = arith.constant 0 : i32
    %c0_i32_0 = arith.constant 0 : i32
    %c0_i32_1 = arith.constant 0 : i32
    return %c0_i32, %c0_i32_0 : i32, i32
  }
  func.func @transform_2(%arg0: i32) -> (i32, i32) {
    %c0_i32 = arith.constant 0 : i32
    %c0_i32_0 = arith.constant 0 : i32
    %c0_i32_1 = arith.constant 0 : i32
    return %c0_i32, %c0_i32_0 : i32, i32
  }
  func.func @transform_3(%arg0: i32) -> (i32, i32, i32) {
    %c0_i32 = arith.constant 0 : i32
    %c0_i32_0 = arith.constant 0 : i32
    %c0_i32_1 = arith.constant 0 : i32
    return %arg0, %c0_i32, %c0_i32_0 : i32, i32, i32
  }
}

</mosaic_0001>

<llo_original>
// kernel: launet_stage1.8
$region0: #{launet_stage1.8}
  #allocation0 [shape = 'u32[]', space=smem, size = 0x4, offset = 0x4, fixed_abs, tag = 'smem constant byte address 0x4 - core index']
  #allocation1 [shape = 'u32[144,128]{1,0:T(1,128)}', space=vmem, size = 0x12000, scoped, tag = 'internal scratch']
  %s0 = inlined_call_operand.vmem [shape: f32[32,96], index: 0, kind: input, shape index: {}]
  %s1 = inlined_call_operand.vmem [shape: f32[1,96], index: 1, kind: input, shape index: {}]
  %s2 = inlined_call_operand.vmem [shape: f32[32,96], index: 2, kind: output, shape index: {}]
  %s3 = sld [smem:[#allocation0]]
  $region41: #{launet_stage1.8} parent=0
    _
  %s5 = ssub.s32 1, %s3
  %s6 = scalar_select 0, %s5, %s3
  loop: start=0, step=1, limit=4
  $region2: #{launet_stage1.8} parent=0 // loop_pre_header
    _
  $region3: #{launet_stage1.8} parent=0 // loop_header
    %s8 = sphi 0, %s12
    %p9 = scmp.ge.s32.totalorder %s8, 4
    %s18 = sphi 0, %s20
    %s21 = sphi 0, %s18
    %s22 = sphi 0, %s21
    %s38 = sphi 0, %s22
    %s42 = sphi 0, %s42
    %s44 = sphi 0, %s42
    %s45 = sphi 0, %s44
    %s59 = sphi 0, %s45
    %s65 = sphi 0, %s67
    %s68 = sphi 0, %s65
    %s69 = sphi 0, %s68
    %s85 = sphi 0, %s69
  $region4: #{launet_stage1.8} parent=0 // loop_header_branch
    %11 = sbr.rel (%p9) target = $region8
  $region5: #{launet_stage1.8} parent=0 // loop_body
    %s13 = ssub.s32 %s8, 1
    %s14 = ssub.s32 %s8, 2
    %s15 = sadd.s32 %s8, 1
    %s16 = ssub.s32 %s8, %s15
    %p17 = scmp.eq.s32.totalorder %s16, 0
    %s19 = sadd.s32 %s18, 1
    %s20 = scalar_select %p17, %s18, %s19
    %p23 = pneg %p17
    %p24 = scmp.eq.s32.totalorder %s8, 1
    %p25 = por %p23, %p24
    %p26 = scmp.ne.s32.totalorder %s18, %s21
    %p27 = scmp.eq.s32.totalorder %s8, 0
    %p28 = por %p26, %p27
    %p29 = scmp.ne.s32.totalorder %s18, %s21
    %p30 = scmp.eq.s32.totalorder %s13, 1
    %p31 = por %p29, %p30
    %p32 = scmp.ne.s32.totalorder %s21, %s22
    %p33 = scmp.eq.s32.totalorder %s13, 0
    %p34 = por %p32, %p33
    %p35 = scmp.ne.s32.totalorder %s21, %s22
    %p36 = scmp.eq.s32.totalorder %s14, 1
    %p37 = por %p35, %p36
    %p39 = scmp.ne.s32.totalorder %s22, %s38
    %p40 = scmp.eq.s32.totalorder %s14, 0
    %p41 = por %p39, %p40
    %s43 = sadd.s32 %s42, 1
    %p46 = scmp.eq.s32.totalorder %s8, 1
    %p47 = scmp.ne.s32.totalorder %s42, %s44
    %p48 = scmp.eq.s32.totalorder %s8, 0
    %p49 = por %p47, %p48
    %p50 = scmp.ne.s32.totalorder %s42, %s44
    %p51 = scmp.eq.s32.totalorder %s13, 1
    %p52 = por %p50, %p51
    %p53 = scmp.ne.s32.totalorder %s44, %s45
    %p54 = scmp.eq.s32.totalorder %s13, 0
    %p55 = por %p53, %p54
    %p56 = scmp.ne.s32.totalorder %s44, %s45
    %p57 = scmp.eq.s32.totalorder %s14, 1
    %p58 = por %p56, %p57
    %p60 = scmp.ne.s32.totalorder %s45, %s59
    %p61 = scmp.eq.s32.totalorder %s14, 0
    %p62 = por %p60, %p61
    %s63 = ssub.s32 %s8, %s15
    %p64 = scmp.eq.s32.totalorder %s63, 0
    %s66 = sadd.s32 %s65, 1
    %s67 = scalar_select %p64, %s65, %s66
    %p70 = pneg %p64
    %p71 = scmp.eq.s32.totalorder %s8, 1
    %p72 = por %p70, %p71
    %p73 = scmp.ne.s32.totalorder %s65, %s68
    %p74 = scmp.eq.s32.totalorder %s8, 0
    %p75 = por %p73, %p74
    %p76 = scmp.ne.s32.totalorder %s65, %s68
    %p77 = scmp.eq.s32.totalorder %s13, 1
    %p78 = por %p76, %p77
    %p79 = scmp.ne.s32.totalorder %s68, %s69
    %p80 = scmp.eq.s32.totalorder %s13, 0
    %p81 = por %p79, %p80
    %p82 = scmp.ne.s32.totalorder %s68, %s69
    %p83 = scmp.eq.s32.totalorder %s14, 1
    %p84 = por %p82, %p83
    %p86 = scmp.ne.s32.totalorder %s69, %s85
    %p87 = scmp.eq.s32.totalorder %s14, 0
    %p88 = por %p86, %p87
    %p89 = scmp.le.s32.totalorder 1, %s8
    %p90 = scmp.lt.s32.totalorder %s8, 3
    %p91 = pnand %p89, %p90
    %p92 = pneg %p91
    // Predicated region
    $region9: #{launet_stage1.8} parent=5 // pred_check
      _
    $region10: #{launet_stage1.8} parent=5 // pred_check_branch
      %94 = sbr.rel (%p91) target = $region12
    $region11: #{launet_stage1.8} parent=5 // pred_region
      %s95 = ssub.s32 %s8, 1
      // Predicated region
      $region13: #{launet_stage1.8} parent=11 // pred_check
        %p96 = pneg %p55
      $region14: #{launet_stage1.8} parent=11 // pred_check_branch
        %98 = sbr.rel (%p96) target = $region16
      $region15: #{launet_stage1.8} parent=11 // pred_region
        _
      $region16: #{launet_stage1.8} parent=11 // pred_fallthru
        _
    $region12: #{launet_stage1.8} parent=5 // pred_fallthru
      _
    %p99 = scmp.lt.s32.totalorder %s8, 2
    // Predicated region
    $region17: #{launet_stage1.8} parent=5 // pred_check
      %p100 = pneg %p99
    $region18: #{launet_stage1.8} parent=5 // pred_check_branch
      %102 = sbr.rel (%p100) target = $region20
    $region19: #{launet_stage1.8} parent=5 // pred_region
      // Predicated region
      $region21: #{launet_stage1.8} parent=19 // pred_check
        %p103 = pneg %p28
      $region22: #{launet_stage1.8} parent=19 // pred_check_branch
        %105 = sbr.rel (%p103) target = $region24
      $region23: #{launet_stage1.8} parent=19 // pred_region
        %s106 = smul.u32 2, %s8
        %p107 = scmp.lt.s32.totalorder %s106, 3
        %s108 = scalar_select %p107, %s106, 3
        %s109 = smul.addr %s108, 8
        %s110 = scalar_lea.vmem %s0, %s109
        %s111 = smul.u32 2, %s8
      $region24: #{launet_stage1.8} parent=19 // pred_fallthru
        _
    $region20: #{launet_stage1.8} parent=5 // pred_fallthru
      _
    %p112 = scmp.le.s32.totalorder 1, %s8
    %p113 = scmp.lt.s32.totalorder %s8, 3
    %p114 = pnand %p112, %p113
    %p115 = pneg %p114
    // Predicated region
    $region25: #{launet_stage1.8} parent=5 // pred_check
      _
    $region26: #{launet_stage1.8} parent=5 // pred_check_branch
      %117 = sbr.rel (%p114) target = $region28
    $region27: #{launet_stage1.8} parent=5 // pred_region
      %s118 = ssub.s32 %s8, 1
      %s119 = smul.u32 2, %s13
      %p120 = scmp.lt.s32.totalorder %s119, 3
      %s121 = scalar_select %p120, %s119, 3
      %s122 = smul.addr %s121, 8
      %s123 = scalar_lea.vmem %s0, %s122
      %p124 = pneg %p34
      %p125 = pneg %p31
      %p126 = pneg %p55
      %p127 = pneg %p52
      %p128 = pneg %p81
      %p129 = pneg %p78
      %s130 = smul.u32 2, %s13
      %p131 = scmp.lt.s32.totalorder %s130, 3
      %s132 = scalar_select %p131, %s130, 3
      %s133 = smul.addr %s132, 8
      %s134 = scalar_lea.vmem %s2, %s133
      %s135 = smul.u32 2, %s13
      %p136 = scmp.lt.s32.totalorder %s135, 3
      %s137 = scalar_select %p136, %s135, 3
      %s138 = smul.addr %s137, 8
      %s139 = scalar_lea.vmem %s0, %s138
      %s140 = smul.u32 2, %s13
      %s141 = smul.u32 2, %s13
      %p142 = scmp.lt.s32.totalorder %s141, 3
      %s143 = scalar_select %p142, %s141, 3
      %s144 = smul.addr %s143, 8
      %s145 = scalar_lea.vmem %s2, %s144
      %s146 = smul.u32 2, %s13
      %v147 = vld [vmem:[%s139] sm:$0xff]
      %v148 = vld [vmem:[%s139 + $0x8] sm:$0xff]
      %v149 = vld [vmem:[%s1] sm:$0x1]
      %v151 = vlaneseq
      %v152 = vshrl.u32 %v151, 7
      %v153 = vsub.s32 0, %v152
      %v154 = vrot.slane %v149, %v153
      %v156 = vadd.f32 %v147, %v154
      %v157 = vadd.f32 %v148, %v154
      %vm158 = vcmask 785408
      %159 = vst.msk [vmem:[%s145] sm:$0xff] %vm158, %v156
      %160 = vst.msk [vmem:[%s145 + $0x8] sm:$0xff] %vm158, %v157
      %s161 = smul.u32 2, %s13
      %p162 = scmp.lt.s32.totalorder %s161, 3
      %s163 = scalar_select %p162, %s161, 3
      %s164 = smul.addr %s163, 8
      %s165 = scalar_lea.vmem %s2, %s164
      // Predicated region
      $region29: #{launet_stage1.8} parent=27 // pred_check
        %p166 = pneg %p78
      $region30: #{launet_stage1.8} parent=27 // pred_check_branch
        %168 = sbr.rel (%p166) target = $region32
      $region31: #{launet_stage1.8} parent=27 // pred_region
        %s169 = smul.u32 2, %s13
      $region32: #{launet_stage1.8} parent=27 // pred_fallthru
        _
    $region28: #{launet_stage1.8} parent=5 // pred_fallthru
      _
    %p170 = scmp.le.s32.totalorder 2, %s8
    // Predicated region
    $region33: #{launet_stage1.8} parent=5 // pred_check
      %p171 = pneg %p170
    $region34: #{launet_stage1.8} parent=5 // pred_check_branch
      %173 = sbr.rel (%p171) target = $region36
    $region35: #{launet_stage1.8} parent=5 // pred_region
      %s174 = ssub.s32 %s8, 2
      // Predicated region
      $region37: #{launet_stage1.8} parent=35 // pred_check
        %p175 = pneg %p84
      $region38: #{launet_stage1.8} parent=35 // pred_check_branch
        %177 = sbr.rel (%p175) target = $region40
      $region39: #{launet_stage1.8} parent=35 // pred_region
        %s178 = smul.u32 2, %s14
        %p179 = scmp.lt.s32.totalorder %s178, 3
        %s180 = scalar_select %p179, %s178, 3
        %s181 = smul.addr %s180, 8
        %s182 = scalar_lea.vmem %s2, %s181
      $region40: #{launet_stage1.8} parent=35 // pred_fallthru
        _
    $region36: #{launet_stage1.8} parent=5 // pred_fallthru
      _
  $region6: #{launet_stage1.8} parent=0 // loop_footer
    %s12 = sadd.s32 1, %s8
  $region7: #{launet_stage1.8} parent=0 // loop_footer_branch
    %7 = sbr.rel target = $region3
  $region8: #{launet_stage1.8} parent=0 // loop_exit
    _

// kernel: launet_stage1.11
$region0: #{launet_stage1.11}
  #allocation0 [shape = 'u32[]', space=smem, size = 0x4, offset = 0x4, fixed_abs, tag = 'smem constant byte address 0x4 - core index']
  #allocation1 [shape = 'u32[144,128]{1,0:T(1,128)}', space=vmem, size = 0x12000, scoped, tag = 'internal scratch']
  %s0 = inlined_call_operand.vmem [shape: bf16[1088,16], index: 0, kind: input, shape index: {}]
  %s1 = inlined_call_operand.vmem [shape: bf16[48,128], index: 1, kind: input, shape index: {}]
  %s2 = inlined_call_operand.vmem [shape: f32[1,128], index: 2, kind: input, shape index: {}]
  %s3 = inlined_call_operand.vmem [shape: bf16[1024,128], index: 3, kind: output, shape index: {}]
  %s4 = sld [smem:[#allocation0]]
  $region45: #{launet_stage1.11} parent=0
    _
  %s6 = ssub.s32 1, %s4
  %s7 = scalar_select 0, %s6, %s4
  loop: start=0, step=1, limit=4
  $region2: #{launet_stage1.11} parent=0 // loop_pre_header
    _
  $region3: #{launet_stage1.11} parent=0 // loop_header
    %s9 = sphi 0, %s13
    %p10 = scmp.ge.s32.totalorder %s9, 4
    %s17 = sphi 0, %s17
    %s19 = sphi 0, %s17
    %s20 = sphi 0, %s19
    %s34 = sphi 0, %s20
    %s38 = sphi 0, %s38
    %s40 = sphi 0, %s38
    %s41 = sphi 0, %s40
    %s55 = sphi 0, %s41
    %s59 = sphi 0, %s59
    %s61 = sphi 0, %s59
    %s62 = sphi 0, %s61
    %s76 = sphi 0, %s62
    %s82 = sphi 0, %s84
    %s85 = sphi 0, %s82
    %s86 = sphi 0, %s85
    %s102 = sphi 0, %s86
  $region4: #{launet_stage1.11} parent=0 // loop_header_branch
    %12 = sbr.rel (%p10) target = $region8
  $region5: #{launet_stage1.11} parent=0 // loop_body
    %s14 = ssub.s32 %s9, 1
    %s15 = ssub.s32 %s9, 2
    %s16 = sadd.s32 %s9, 1
    %s18 = sadd.s32 %s17, 1
    %p21 = scmp.eq.s32.totalorder %s9, 1
    %p22 = scmp.ne.s32.totalorder %s17, %s19
    %p23 = scmp.eq.s32.totalorder %s9, 0
    %p24 = por %p22, %p23
    %p25 = scmp.ne.s32.totalorder %s17, %s19
    %p26 = scmp.eq.s32.totalorder %s14, 1
    %p27 = por %p25, %p26
    %p28 = scmp.ne.s32.totalorder %s19, %s20
    %p29 = scmp.eq.s32.totalorder %s14, 0
    %p30 = por %p28, %p29
    %p31 = scmp.ne.s32.totalorder %s19, %s20
    %p32 = scmp.eq.s32.totalorder %s15, 1
    %p33 = por %p31, %p32
    %p35 = scmp.ne.s32.totalorder %s20, %s34
    %p36 = scmp.eq.s32.totalorder %s15, 0
    %p37 = por %p35, %p36
    %s39 = sadd.s32 %s38, 1
    %p42 = scmp.eq.s32.totalorder %s9, 1
    %p43 = scmp.ne.s32.totalorder %s38, %s40
    %p44 = scmp.eq.s32.totalorder %s9, 0
    %p45 = por %p43, %p44
    %p46 = scmp.ne.s32.totalorder %s38, %s40
    %p47 = scmp.eq.s32.totalorder %s14, 1
    %p48 = por %p46, %p47
    %p49 = scmp.ne.s32.totalorder %s40, %s41
    %p50 = scmp.eq.s32.totalorder %s14, 0
    %p51 = por %p49, %p50
    %p52 = scmp.ne.s32.totalorder %s40, %s41
    %p53 = scmp.eq.s32.totalorder %s15, 1
    %p54 = por %p52, %p53
    %p56 = scmp.ne.s32.totalorder %s41, %s55
    %p57 = scmp.eq.s32.totalorder %s15, 0
    %p58 = por %p56, %p57
    %s60 = sadd.s32 %s59, 1
    %p63 = scmp.eq.s32.totalorder %s9, 1
    %p64 = scmp.ne.s32.totalorder %s59, %s61
    %p65 = scmp.eq.s32.totalorder %s9, 0
    %p66 = por %p64, %p65
    %p67 = scmp.ne.s32.totalorder %s59, %s61
    %p68 = scmp.eq.s32.totalorder %s14, 1
    %p69 = por %p67, %p68
    %p70 = scmp.ne.s32.totalorder %s61, %s62
    %p71 = scmp.eq.s32.totalorder %s14, 0
    %p72 = por %p70, %p71
    %p73 = scmp.ne.s32.totalorder %s61, %s62
    %p74 = scmp.eq.s32.totalorder %s15, 1
    %p75 = por %p73, %p74
    %p77 = scmp.ne.s32.totalorder %s62, %s76
    %p78 = scmp.eq.s32.totalorder %s15, 0
    %p79 = por %p77, %p78
    %s80 = ssub.s32 %s9, %s16
    %p81 = scmp.eq.s32.totalorder %s80, 0
    %s83 = sadd.s32 %s82, 1
    %s84 = scalar_select %p81, %s82, %s83
    %p87 = pneg %p81
    %p88 = scmp.eq.s32.totalorder %s9, 1
    %p89 = por %p87, %p88
    %p90 = scmp.ne.s32.totalorder %s82, %s85
    %p91 = scmp.eq.s32.totalorder %s9, 0
    %p92 = por %p90, %p91
    %p93 = scmp.ne.s32.totalorder %s82, %s85
    %p94 = scmp.eq.s32.totalorder %s14, 1
    %p95 = por %p93, %p94
    %p96 = scmp.ne.s32.totalorder %s85, %s86
    %p97 = scmp.eq.s32.totalorder %s14, 0
    %p98 = por %p96, %p97
    %p99 = scmp.ne.s32.totalorder %s85, %s86
    %p100 = scmp.eq.s32.totalorder %s15, 1
    %p101 = por %p99, %p100
    %p103 = scmp.ne.s32.totalorder %s86, %s102
    %p104 = scmp.eq.s32.totalorder %s15, 0
    %p105 = por %p103, %p104
    %p106 = scmp.le.s32.totalorder 1, %s9
    %p107 = scmp.lt.s32.totalorder %s9, 3
    %p108 = pnand %p106, %p107
    %p109 = pneg %p108
    // Predicated region
    $region9: #{launet_stage1.11} parent=5 // pred_check
      _
    $region10: #{launet_stage1.11} parent=5 // pred_check_branch
      %111 = sbr.rel (%p108) target = $region12
    $region11: #{launet_stage1.11} parent=5 // pred_region
      %s112 = ssub.s32 %s9, 1
      // Predicated region
      $region13: #{launet_stage1.11} parent=11 // pred_check
        %p113 = pneg %p30
      $region14: #{launet_stage1.11} parent=11 // pred_check_branch
        %115 = sbr.rel (%p113) target = $region16
      $region15: #{launet_stage1.11} parent=11 // pred_region
        _
      $region16: #{launet_stage1.11} parent=11 // pred_fallthru
        _
      // Predicated region
      $region17: #{launet_stage1.11} parent=11 // pred_check
        %p116 = pneg %p51
      $region18: #{launet_stage1.11} parent=11 // pred_check_branch
        %118 = sbr.rel (%p116) target = $region20
      $region19: #{launet_stage1.11} parent=11 // pred_region
        _
      $region20: #{launet_stage1.11} parent=11 // pred_fallthru
        _
      // Predicated region
      $region21: #{launet_stage1.11} parent=11 // pred_check
        %p119 = pneg %p72
      $region22: #{launet_stage1.11} parent=11 // pred_check_branch
        %121 = sbr.rel (%p119) target = $region24
      $region23: #{launet_stage1.11} parent=11 // pred_region
        _
      $region24: #{launet_stage1.11} parent=11 // pred_fallthru
        _
    $region12: #{launet_stage1.11} parent=5 // pred_fallthru
      _
    %p122 = scmp.lt.s32.totalorder %s9, 2
    // Predicated region
    $region25: #{launet_stage1.11} parent=5 // pred_check
      %p123 = pneg %p122
    $region26: #{launet_stage1.11} parent=5 // pred_check_branch
      %125 = sbr.rel (%p123) target = $region28
    $region27: #{launet_stage1.11} parent=5 // pred_region
      _
    $region28: #{launet_stage1.11} parent=5 // pred_fallthru
      _
    %p126 = scmp.le.s32.totalorder 1, %s9
    %p127 = scmp.lt.s32.totalorder %s9, 3
    %p128 = pnand %p126, %p127
    %p129 = pneg %p128
    // Predicated region
    $region29: #{launet_stage1.11} parent=5 // pred_check
      _
    $region30: #{launet_stage1.11} parent=5 // pred_check_branch
      %131 = sbr.rel (%p128) target = $region32
    $region31: #{launet_stage1.11} parent=5 // pred_region
      %s132 = ssub.s32 %s9, 1
      %p133 = pneg %p30
      %p134 = pneg %p27
      %p135 = pneg %p51
      %p136 = pneg %p48
      %p137 = pneg %p72
      %p138 = pneg %p69
      %p139 = pneg %p98
      %p140 = pneg %p95
      %s141 = smul.u32 64, %s14
      %p142 = scmp.lt.s32.totalorder %s141, 127
      %s143 = scalar_select %p142, %s141, 127
      %s144 = smul.addr %s143, 4
      %s145 = scalar_lea.vmem %s3, %s144
      %s146 = smul.u32 64, %s14
      %p147 = scmp.lt.s32.totalorder %s146, 127
      %s148 = scalar_select %p147, %s146, 127
      %s149 = smul.addr %s148, 4
      %s150 = scalar_lea.vmem %s3, %s149
      %s151 = smul.u32 64, %s14
      %s153 = smul.u32 %s14, 512
      %v154 = vld [vmem:[%s2] sm:$0x1]
      %s155 = sshra.s32 %s153, 3
      %s156 = sand.u32 %s153, 7
      %s157 = smul.addr %s155, 4
      %s158 = scalar_lea.vmem %s0, %s157
      %v159 = vld [vmem:[%s158] sm:$0xf]
      %v160 = vld [vmem:[%s158 + $0x4] sm:$0xf]
      %v161 = vld [vmem:[%s158 + $0x8] sm:$0xf]
      %v162 = vld [vmem:[%s158 + $0xc] sm:$0xf]
      %v163 = vld [vmem:[%s158 + $0x10] sm:$0xf]
      %v164 = vld [vmem:[%s158 + $0x14] sm:$0xf]
      %v165 = vld [vmem:[%s158 + $0x18] sm:$0xf]
      %v166 = vld [vmem:[%s158 + $0x1c] sm:$0xf]
      %v167 = vld [vmem:[%s158 + $0x20] sm:$0xf]
      %v168 = vld [vmem:[%s158 + $0x24] sm:$0xf]
      %v169 = vld [vmem:[%s158 + $0x28] sm:$0xf]
      %v170 = vld [vmem:[%s158 + $0x2c] sm:$0xf]
      %v171 = vld [vmem:[%s158 + $0x30] sm:$0xf]
      %v172 = vld [vmem:[%s158 + $0x34] sm:$0xf]
      %v173 = vld [vmem:[%s158 + $0x38] sm:$0xf]
      %v174 = vld [vmem:[%s158 + $0x3c] sm:$0xf]
      %v175 = vld [vmem:[%s158 + $0x40] sm:$0xf]
      %v176 = vld [vmem:[%s158 + $0x44] sm:$0xf]
      %v177 = vld [vmem:[%s158 + $0x48] sm:$0xf]
      %v178 = vld [vmem:[%s158 + $0x4c] sm:$0xf]
      %v179 = vld [vmem:[%s158 + $0x50] sm:$0xf]
      %v180 = vld [vmem:[%s158 + $0x54] sm:$0xf]
      %v181 = vld [vmem:[%s158 + $0x58] sm:$0xf]
      %v182 = vld [vmem:[%s158 + $0x5c] sm:$0xf]
      %v183 = vld [vmem:[%s158 + $0x60] sm:$0xf]
      %v184 = vld [vmem:[%s158 + $0x64] sm:$0xf]
      %v185 = vld [vmem:[%s158 + $0x68] sm:$0xf]
      %v186 = vld [vmem:[%s158 + $0x6c] sm:$0xf]
      %v187 = vld [vmem:[%s158 + $0x70] sm:$0xf]
      %v188 = vld [vmem:[%s158 + $0x74] sm:$0xf]
      %v189 = vld [vmem:[%s158 + $0x78] sm:$0xf]
      %v190 = vld [vmem:[%s158 + $0x7c] sm:$0xf]
      %v191 = vld [vmem:[%s158 + $0x80] sm:$0xf]
      %v192 = vld [vmem:[%s158 + $0x84] sm:$0xf]
      %v193 = vld [vmem:[%s158 + $0x88] sm:$0xf]
      %v194 = vld [vmem:[%s158 + $0x8c] sm:$0xf]
      %v195 = vld [vmem:[%s158 + $0x90] sm:$0xf]
      %v196 = vld [vmem:[%s158 + $0x94] sm:$0xf]
      %v197 = vld [vmem:[%s158 + $0x98] sm:$0xf]
      %v198 = vld [vmem:[%s158 + $0x9c] sm:$0xf]
      %v199 = vld [vmem:[%s158 + $0xa0] sm:$0xf]
      %v200 = vld [vmem:[%s158 + $0xa4] sm:$0xf]
      %v201 = vld [vmem:[%s158 + $0xa8] sm:$0xf]
      %v202 = vld [vmem:[%s158 + $0xac] sm:$0xf]
      %v203 = vld [vmem:[%s158 + $0xb0] sm:$0xf]
      %v204 = vld [vmem:[%s158 + $0xb4] sm:$0xf]
      %v205 = vld [vmem:[%s158 + $0xb8] sm:$0xf]
      %v206 = vld [vmem:[%s158 + $0xbc] sm:$0xf]
      %v207 = vld [vmem:[%s158 + $0xc0] sm:$0xf]
      %v208 = vld [vmem:[%s158 + $0xc4] sm:$0xf]
      %v209 = vld [vmem:[%s158 + $0xc8] sm:$0xf]
      %v210 = vld [vmem:[%s158 + $0xcc] sm:$0xf]
      %v211 = vld [vmem:[%s158 + $0xd0] sm:$0xf]
      %v212 = vld [vmem:[%s158 + $0xd4] sm:$0xf]
      %v213 = vld [vmem:[%s158 + $0xd8] sm:$0xf]
      %v214 = vld [vmem:[%s158 + $0xdc] sm:$0xf]
      %v215 = vld [vmem:[%s158 + $0xe0] sm:$0xf]
      %v216 = vld [vmem:[%s158 + $0xe4] sm:$0xf]
      %v217 = vld [vmem:[%s158 + $0xe8] sm:$0xf]
      %v218 = vld [vmem:[%s158 + $0xec] sm:$0xf]
      %v219 = vld [vmem:[%s158 + $0xf0] sm:$0xf]
      %v220 = vld [vmem:[%s158 + $0xf4] sm:$0xf]
      %v221 = vld [vmem:[%s158 + $0xf8] sm:$0xf]
      %v222 = vld [vmem:[%s158 + $0xfc] sm:$0xf]
      %v223 = vld [vmem:[%s1] sm:$0xf]
      %v224 = vld [vmem:[%s1 + $0x4] sm:$0xf]
      %v289 = vunpack.c.l.b16 %v159
      %v290 = vunpack.c.l.b16 %v160
      %v291 = vunpack.c.l.b16 %v161
      %v292 = vunpack.c.l.b16 %v162
      %v293 = vunpack.c.l.b16 %v163
      %v294 = vunpack.c.l.b16 %v164
      %v295 = vunpack.c.l.b16 %v165
      %v296 = vunpack.c.l.b16 %v166
      %v297 = vunpack.c.l.b16 %v167
      %v298 = vunpack.c.l.b16 %v168
      %v299 = vunpack.c.l.b16 %v169
      %v300 = vunpack.c.l.b16 %v170
      %v301 = vunpack.c.l.b16 %v171
      %v302 = vunpack.c.l.b16 %v172
      %v303 = vunpack.c.l.b16 %v173
      %v304 = vunpack.c.l.b16 %v174
      %v305 = vunpack.c.l.b16 %v175
      %v306 = vunpack.c.l.b16 %v176
      %v307 = vunpack.c.l.b16 %v177
      %v308 = vunpack.c.l.b16 %v178
      %v309 = vunpack.c.l.b16 %v179
      %v310 = vunpack.c.l.b16 %v180
      %v311 = vunpack.c.l.b16 %v181
      %v312 = vunpack.c.l.b16 %v182
      %v313 = vunpack.c.l.b16 %v183
      %v314 = vunpack.c.l.b16 %v184
      %v315 = vunpack.c.l.b16 %v185
      %v316 = vunpack.c.l.b16 %v186
      %v317 = vunpack.c.l.b16 %v187
      %v318 = vunpack.c.l.b16 %v188
      %v319 = vunpack.c.l.b16 %v189
      %v320 = vunpack.c.l.b16 %v190
      %v321 = vunpack.c.l.b16 %v191
      %v322 = vunpack.c.l.b16 %v192
      %v323 = vunpack.c.l.b16 %v193
      %v324 = vunpack.c.l.b16 %v194
      %v325 = vunpack.c.l.b16 %v195
      %v326 = vunpack.c.l.b16 %v196
      %v327 = vunpack.c.l.b16 %v197
      %v328 = vunpack.c.l.b16 %v198
      %v329 = vunpack.c.l.b16 %v199
      %v330 = vunpack.c.l.b16 %v200
      %v331 = vunpack.c.l.b16 %v201
      %v332 = vunpack.c.l.b16 %v202
      %v333 = vunpack.c.l.b16 %v203
      %v334 = vunpack.c.l.b16 %v204
      %v335 = vunpack.c.l.b16 %v205
      %v336 = vunpack.c.l.b16 %v206
      %v337 = vunpack.c.l.b16 %v207
      %v338 = vunpack.c.l.b16 %v208
      %v339 = vunpack.c.l.b16 %v209
      %v340 = vunpack.c.l.b16 %v210
      %v341 = vunpack.c.l.b16 %v211
      %v342 = vunpack.c.l.b16 %v212
      %v343 = vunpack.c.l.b16 %v213
      %v344 = vunpack.c.l.b16 %v214
      %v345 = vunpack.c.l.b16 %v215
      %v346 = vunpack.c.l.b16 %v216
      %v347 = vunpack.c.l.b16 %v217
      %v348 = vunpack.c.l.b16 %v218
      %v349 = vunpack.c.l.b16 %v219
      %v350 = vunpack.c.l.b16 %v220
      %v351 = vunpack.c.l.b16 %v221
      %v352 = vunpack.c.l.b16 %v222
      %v353 = vpack.c.b16 %v290, %v289
      %v354 = vpack.c.b16 %v292, %v291
      %v355 = vpack.c.b16 %v294, %v293
      %v356 = vpack.c.b16 %v296, %v295
      %v357 = vpack.c.b16 %v298, %v297
      %v358 = vpack.c.b16 %v300, %v299
      %v359 = vpack.c.b16 %v302, %v301
      %v360 = vpack.c.b16 %v304, %v303
      %v361 = vpack.c.b16 %v306, %v305
      %v362 = vpack.c.b16 %v308, %v307
      %v363 = vpack.c.b16 %v310, %v309
      %v364 = vpack.c.b16 %v312, %v311
      %v365 = vpack.c.b16 %v314, %v313
      %v366 = vpack.c.b16 %v316, %v315
      %v367 = vpack.c.b16 %v318, %v317
      %v368 = vpack.c.b16 %v320, %v319
      %v369 = vpack.c.b16 %v322, %v321
      %v370 = vpack.c.b16 %v324, %v323
      %v371 = vpack.c.b16 %v326, %v325
      %v372 = vpack.c.b16 %v328, %v327
      %v373 = vpack.c.b16 %v330, %v329
      %v374 = vpack.c.b16 %v332, %v331
      %v375 = vpack.c.b16 %v334, %v333
      %v376 = vpack.c.b16 %v336, %v335
      %v377 = vpack.c.b16 %v338, %v337
      %v378 = vpack.c.b16 %v340, %v339
      %v379 = vpack.c.b16 %v342, %v341
      %v380 = vpack.c.b16 %v344, %v343
      %v381 = vpack.c.b16 %v346, %v345
      %v382 = vpack.c.b16 %v348, %v347
      %v383 = vpack.c.b16 %v350, %v349
      %v384 = vpack.c.b16 %v352, %v351
      %v387 = vunpack.c.l.b16 %v223
      %v388 = vunpack.c.l.b16 %v224
      %v389 = vpack.c.b16 %v388, %v387
      %vm391 = vcmask 130048
      %v393 = vsel %vm391, %v353, 0
      %v396 = vsel %vm391, %v354, 0
      %v399 = vsel %vm391, %v355, 0
      %v402 = vsel %vm391, %v356, 0
      %v405 = vsel %vm391, %v357, 0
      %v408 = vsel %vm391, %v358, 0
      %v411 = vsel %vm391, %v359, 0
      %v414 = vsel %vm391, %v360, 0
      %v417 = vsel %vm391, %v361, 0
      %v420 = vsel %vm391, %v362, 0
      %v423 = vsel %vm391, %v363, 0
      %v426 = vsel %vm391, %v364, 0
      %v429 = vsel %vm391, %v365, 0
      %v432 = vsel %vm391, %v366, 0
      %v435 = vsel %vm391, %v367, 0
      %v438 = vsel %vm391, %v368, 0
      %v441 = vsel %vm391, %v369, 0
      %v444 = vsel %vm391, %v370, 0
      %v447 = vsel %vm391, %v371, 0
      %v450 = vsel %vm391, %v372, 0
      %v453 = vsel %vm391, %v373, 0
      %v456 = vsel %vm391, %v374, 0
      %v459 = vsel %vm391, %v375, 0
      %v462 = vsel %vm391, %v376, 0
      %v465 = vsel %vm391, %v377, 0
      %v468 = vsel %vm391, %v378, 0
      %v471 = vsel %vm391, %v379, 0
      %v474 = vsel %vm391, %v380, 0
      %v477 = vsel %vm391, %v381, 0
      %v480 = vsel %vm391, %v382, 0
      %v483 = vsel %vm391, %v383, 0
      %v486 = vsel %vm391, %v384, 0
      %488 = vmatprep.subr.bf16.mxu0 0
      %489 = vmatpush1.bf16.msra.mxu0 %v389
      %490 = vmatprep.subr.bf16.mxu0 0
      %491 = vmatpush1.bf16.msra.mxu0 0
      %492 = vmatprep.subr.bf16.mxu0 0
      %493 = vmatpush1.bf16.msra.mxu0 0
      %494 = vmatprep.subr.bf16.mxu0 0
      %495 = vmatpush1.bf16.msra.mxu0 0
      %496 = vmatprep.subr.bf16.mxu0 0
      %497 = vmatpush1.bf16.msra.mxu0 0
      %498 = vmatprep.subr.bf16.mxu0 0
      %499 = vmatpush1.bf16.msra.mxu0 0
      %500 = vmatprep.subr.bf16.mxu0 0
      %501 = vmatpush1.bf16.msra.mxu0 0
      %502 = vmatprep.subr.bf16.mxu0 0
      %503 = vmatpush1.bf16.msra.mxu0 0
      %504 = vmatprep.subr.bf16.mxu0 0
      %505 = vmatpush1.bf16.msra.mxu0 0
      %506 = vmatprep.subr.bf16.mxu0 0
      %507 = vmatpush1.bf16.msra.mxu0 0
      %508 = vmatprep.subr.bf16.mxu0 0
      %509 = vmatpush1.bf16.msra.mxu0 0
      %510 = vmatprep.subr.bf16.mxu0 0
      %511 = vmatpush1.bf16.msra.mxu0 0
      %512 = vmatprep.subr.bf16.mxu0 0
      %513 = vmatpush1.bf16.msra.mxu0 0
      %514 = vmatprep.subr.bf16.mxu0 0
      %515 = vmatpush1.bf16.msra.mxu0 0
      %516 = vmatprep.subr.bf16.mxu0 0
      %517 = vmatpush1.bf16.msra.mxu0 0
      %518 = vmatprep.subr.bf16.mxu0 0
      %519 = vmatpush1.bf16.msra.mxu0 0
      %520 = vmatprep.mubr.bf16.mxu0 0
      %521 = vmatmul.mubr.bf16.gmra.mrb[0].mxu0 %v393
      %v522 = vpop.f32.mrb[0].mxu0
      %v523 = vadd.f32 0.0, %v522
      %v524 = vpop.f32.mrb[0].mxu0
      %v525 = vpop.f32.mrb[0].mxu0
      %v526 = vadd.f32 0.0, %v525
      %v527 = vpop.f32.mrb[0].mxu0
      %528 = vmatprep.mubr.bf16.mxu0 0
      %529 = vmatmul.mubr.bf16.gmra.mrb[0].mxu0 %v396
      %v530 = vpop.f32.mrb[0].mxu0
      %v531 = vadd.f32 0.0, %v530
      %v532 = vpop.f32.mrb[0].mxu0
      %v533 = vpop.f32.mrb[0].mxu0
      %v534 = vadd.f32 0.0, %v533
      %v535 = vpop.f32.mrb[0].mxu0
      %536 = vmatprep.mubr.bf16.mxu0 0
      %537 = vmatmul.mubr.bf16.gmra.mrb[0].mxu0 %v399
      %v538 = vpop.f32.mrb[0].mxu0
      %v539 = vadd.f32 0.0, %v538
      %v540 = vpop.f32.mrb[0].mxu0
      %v541 = vpop.f32.mrb[0].mxu0
      %v542 = vadd.f32 0.0, %v541
      %v543 = vpop.f32.mrb[0].mxu0
      %544 = vmatprep.mubr.bf16.mxu0 0
      %545 = vmatmul.mubr.bf16.gmra.mrb[0].mxu0 %v402
      %v546 = vpop.f32.mrb[0].mxu0
      %v547 = vadd.f32 0.0, %v546
      %v548 = vpop.f32.mrb[0].mxu0
      %v549 = vpop.f32.mrb[0].mxu0
      %v550 = vadd.f32 0.0, %v549
      %v551 = vpop.f32.mrb[0].mxu0
      %552 = vmatprep.mubr.bf16.mxu0 0
      %553 = vmatmul.mubr.bf16.gmra.mrb[0].mxu0 %v405
      %v554 = vpop.f32.mrb[0].mxu0
      %v555 = vadd.f32 0.0, %v554
      %v556 = vpop.f32.mrb[0].mxu0
      %v557 = vpop.f32.mrb[0].mxu0
      %v558 = vadd.f32 0.0, %v557
      %v559 = vpop.f32.mrb[0].mxu0
      %560 = vmatprep.mubr.bf16.mxu0 0
      %561 = vmatmul.mubr.bf16.gmra.mrb[0].mxu0 %v408
      %v562 = vpop.f32.mrb[0].mxu0
      %v563 = vadd.f32 0.0, %v562
      %v564 = vpop.f32.mrb[0].mxu0
      %v565 = vpop.f32.mrb[0].mxu0
      %v566 = vadd.f32 0.0, %v565
      %v567 = vpop.f32.mrb[0].mxu0
      %568 = vmatprep.mubr.bf16.mxu0 0
      %569 = vmatmul.mubr.bf16.gmra.mrb[0].mxu0 %v411
      %v570 = vpop.f32.mrb[0].mxu0
      %v571 = vadd.f32 0.0, %v570
      %v572 = vpop.f32.mrb[0].mxu0
      %v573 = vpop.f32.mrb[0].mxu0
      %v574 = vadd.f32 0.0, %v573
      %v575 = vpop.f32.mrb[0].mxu0
      %576 = vmatprep.mubr.bf16.mxu0 0
      %577 = vmatmul.mubr.bf16.gmra.mrb[0].mxu0 %v414
      %v578 = vpop.f32.mrb[0].mxu0
      %v579 = vadd.f32 0.0, %v578
      %v580 = vpop.f32.mrb[0].mxu0
      %v581 = vpop.f32.mrb[0].mxu0
      %v582 = vadd.f32 0.0, %v581
      %v583 = vpop.f32.mrb[0].mxu0
      %584 = vmatprep.mubr.bf16.mxu0 0
      %585 = vmatmul.mubr.bf16.gmra.mrb[0].mxu0 %v417
      %v586 = vpop.f32.mrb[0].mxu0
      %v587 = vadd.f32 0.0, %v586
      %v588 = vpop.f32.mrb[0].mxu0
      %v589 = vpop.f32.mrb[0].mxu0
      %v590 = vadd.f32 0.0, %v589
      %v591 = vpop.f32.mrb[0].mxu0
      %592 = vmatprep.mubr.bf16.mxu0 0
      %593 = vmatmul.mubr.bf16.gmra.mrb[0].mxu0 %v420
      %v594 = vpop.f32.mrb[0].mxu0
      %v595 = vadd.f32 0.0, %v594
      %v596 = vpop.f32.mrb[0].mxu0
      %v597 = vpop.f32.mrb[0].mxu0
      %v598 = vadd.f32 0.0, %v597
      %v599 = vpop.f32.mrb[0].mxu0
      %600 = vmatprep.mubr.bf16.mxu0 0
      %601 = vmatmul.mubr.bf16.gmra.mrb[0].mxu0 %v423
      %v602 = vpop.f32.mrb[0].mxu0
      %v603 = vadd.f32 0.0, %v602
      %v604 = vpop.f32.mrb[0].mxu0
      %v605 = vpop.f32.mrb[0].mxu0
      %v606 = vadd.f32 0.0, %v605
      %v607 = vpop.f32.mrb[0].mxu0
      %608 = vmatprep.mubr.bf16.mxu0 0
      %609 = vmatmul.mubr.bf16.gmra.mrb[0].mxu0 %v426
      %v610 = vpop.f32.mrb[0].mxu0
      %v611 = vadd.f32 0.0, %v610
      %v612 = vpop.f32.mrb[0].mxu0
      %v613 = vpop.f32.mrb[0].mxu0
      %v614 = vadd.f32 0.0, %v613
      %v615 = vpop.f32.mrb[0].mxu0
      %616 = vmatprep.mubr.bf16.mxu0 0
      %617 = vmatmul.mubr.bf16.gmra.mrb[0].mxu0 %v429
      %v618 = vpop.f32.mrb[0].mxu0
      %v619 = vadd.f32 0.0, %v618
      %v620 = vpop.f32.mrb[0].mxu0
      %v621 = vpop.f32.mrb[0].mxu0
      %v622 = vadd.f32 0.0, %v621
      %v623 = vpop.f32.mrb[0].mxu0
      %624 = vmatprep.mubr.bf16.mxu0 0
      %625 = vmatmul.mubr.bf16.gmra.mrb[0].mxu0 %v432
      %v626 = vpop.f32.mrb[0].mxu0
      %v627 = vadd.f32 0.0, %v626
      %v628 = vpop.f32.mrb[0].mxu0
      %v629 = vpop.f32.mrb[0].mxu0
      %v630 = vadd.f32 0.0, %v629
      %v631 = vpop.f32.mrb[0].mxu0
      %632 = vmatprep.mubr.bf16.mxu0 0
      %633 = vmatmul.mubr.bf16.gmra.mrb[0].mxu0 %v435
      %v634 = vpop.f32.mrb[0].mxu0
      %v635 = vadd.f32 0.0, %v634
      %v636 = vpop.f32.mrb[0].mxu0
      %v637 = vpop.f32.mrb[0].mxu0
      %v638 = vadd.f32 0.0, %v637
      %v639 = vpop.f32.mrb[0].mxu0
      %640 = vmatprep.mubr.bf16.mxu0 0
      %641 = vmatmul.mubr.bf16.gmra.mrb[0].mxu0 %v438
      %v642 = vpop.f32.mrb[0].mxu0
      %v643 = vadd.f32 0.0, %v642
      %v644 = vpop.f32.mrb[0].mxu0
      %v645 = vpop.f32.mrb[0].mxu0
      %v646 = vadd.f32 0.0, %v645
      %v647 = vpop.f32.mrb[0].mxu0
      %648 = vmatprep.mubr.bf16.mxu0 0
      %649 = vmatmul.mubr.bf16.gmra.mrb[0].mxu0 %v441
      %v650 = vpop.f32.mrb[0].mxu0
      %v651 = vadd.f32 0.0, %v650
      %v652 = vpop.f32.mrb[0].mxu0
      %v653 = vpop.f32.mrb[0].mxu0
      %v654 = vadd.f32 0.0, %v653
      %v655 = vpop.f32.mrb[0].mxu0
      %656 = vmatprep.mubr.bf16.mxu0 0
      %657 = vmatmul.mubr.bf16.gmra.mrb[0].mxu0 %v444
      %v658 = vpop.f32.mrb[0].mxu0
      %v659 = vadd.f32 0.0, %v658
      %v660 = vpop.f32.mrb[0].mxu0
      %v661 = vpop.f32.mrb[0].mxu0
      %v662 = vadd.f32 0.0, %v661
      %v663 = vpop.f32.mrb[0].mxu0
      %664 = vmatprep.mubr.bf16.mxu0 0
      %665 = vmatmul.mubr.bf16.gmra.mrb[0].mxu0 %v447
      %v666 = vpop.f32.mrb[0].mxu0
      %v667 = vadd.f32 0.0, %v666
      %v668 = vpop.f32.mrb[0].mxu0
      %v669 = vpop.f32.mrb[0].mxu0
      %v670 = vadd.f32 0.0, %v669
      %v671 = vpop.f32.mrb[0].mxu0
      %672 = vmatprep.mubr.bf16.mxu0 0
      %673 = vmatmul.mubr.bf16.gmra.mrb[0].mxu0 %v450
      %v674 = vpop.f32.mrb[0].mxu0
      %v675 = vadd.f32 0.0, %v674
      %v676 = vpop.f32.mrb[0].mxu0
      %v677 = vpop.f32.mrb[0].mxu0
      %v678 = vadd.f32 0.0, %v677
      %v679 = vpop.f32.mrb[0].mxu0
      %680 = vmatprep.mubr.bf16.mxu0 0
      %681 = vmatmul.mubr.bf16.gmra.mrb[0].mxu0 %v453
      %v682 = vpop.f32.mrb[0].mxu0
      %v683 = vadd.f32 0.0, %v682
      %v684 = vpop.f32.mrb[0].mxu0
      %v685 = vpop.f32.mrb[0].mxu0
      %v686 = vadd.f32 0.0, %v685
      %v687 = vpop.f32.mrb[0].mxu0
      %688 = vmatprep.mubr.bf16.mxu0 0
      %689 = vmatmul.mubr.bf16.gmra.mrb[0].mxu0 %v456
      %v690 = vpop.f32.mrb[0].mxu0
      %v691 = vadd.f32 0.0, %v690
      %v692 = vpop.f32.mrb[0].mxu0
      %v693 = vpop.f32.mrb[0].mxu0
      %v694 = vadd.f32 0.0, %v693
      %v695 = vpop.f32.mrb[0].mxu0
      %696 = vmatprep.mubr.bf16.mxu0 0
      %697 = vmatmul.mubr.bf16.gmra.mrb[0].mxu0 %v459
      %v698 = vpop.f32.mrb[0].mxu0
      %v699 = vadd.f32 0.0, %v698
      %v700 = vpop.f32.mrb[0].mxu0
      %v701 = vpop.f32.mrb[0].mxu0
      %v702 = vadd.f32 0.0, %v701
      %v703 = vpop.f32.mrb[0].mxu0
      %704 = vmatprep.mubr.bf16.mxu0 0
      %705 = vmatmul.mubr.bf16.gmra.mrb[0].mxu0 %v462
      %v706 = vpop.f32.mrb[0].mxu0
      %v707 = vadd.f32 0.0, %v706
      %v708 = vpop.f32.mrb[0].mxu0
      %v709 = vpop.f32.mrb[0].mxu0
      %v710 = vadd.f32 0.0, %v709
      %v711 = vpop.f32.mrb[0].mxu0
      %712 = vmatprep.mubr.bf16.mxu0 0
      %713 = vmatmul.mubr.bf16.gmra.mrb[0].mxu0 %v465
      %v714 = vpop.f32.mrb[0].mxu0
      %v715 = vadd.f32 0.0, %v714
      %v716 = vpop.f32.mrb[0].mxu0
      %v717 = vpop.f32.mrb[0].mxu0
      %v718 = vadd.f32 0.0, %v717
      %v719 = vpop.f32.mrb[0].mxu0
      %720 = vmatprep.mubr.bf16.mxu0 0
      %721 = vmatmul.mubr.bf16.gmra.mrb[0].mxu0 %v468
      %v722 = vpop.f32.mrb[0].mxu0
      %v723 = vadd.f32 0.0, %v722
      %v724 = vpop.f32.mrb[0].mxu0
      %v725 = vpop.f32.mrb[0].mxu0
      %v726 = vadd.f32 0.0, %v725
      %v727 = vpop.f32.mrb[0].mxu0
      %728 = vmatprep.mubr.bf16.mxu0 0
      %729 = vmatmul.mubr.bf16.gmra.mrb[0].mxu0 %v471
      %v730 = vpop.f32.mrb[0].mxu0
      %v731 = vadd.f32 0.0, %v730
      %v732 = vpop.f32.mrb[0].mxu0
      %v733 = vpop.f32.mrb[0].mxu0
      %v734 = vadd.f32 0.0, %v733
      %v735 = vpop.f32.mrb[0].mxu0
      %736 = vmatprep.mubr.bf16.mxu0 0
      %737 = vmatmul.mubr.bf16.gmra.mrb[0].mxu0 %v474
      %v738 = vpop.f32.mrb[0].mxu0
      %v739 = vadd.f32 0.0, %v738
      %v740 = vpop.f32.mrb[0].mxu0
      %v741 = vpop.f32.mrb[0].mxu0
      %v742 = vadd.f32 0.0, %v741
      %v743 = vpop.f32.mrb[0].mxu0
      %744 = vmatprep.mubr.bf16.mxu0 0
      %745 = vmatmul.mubr.bf16.gmra.mrb[0].mxu0 %v477
      %v746 = vpop.f32.mrb[0].mxu0
      %v747 = vadd.f32 0.0, %v746
      %v748 = vpop.f32.mrb[0].mxu0
      %v749 = vpop.f32.mrb[0].mxu0
      %v750 = vadd.f32 0.0, %v749
      %v751 = vpop.f32.mrb[0].mxu0
      %752 = vmatprep.mubr.bf16.mxu0 0
      %753 = vmatmul.mubr.bf16.gmra.mrb[0].mxu0 %v480
      %v754 = vpop.f32.mrb[0].mxu0
      %v755 = vadd.f32 0.0, %v754
      %v756 = vpop.f32.mrb[0].mxu0
      %v757 = vpop.f32.mrb[0].mxu0
      %v758 = vadd.f32 0.0, %v757
      %v759 = vpop.f32.mrb[0].mxu0
      %760 = vmatprep.mubr.bf16.mxu0 0
      %761 = vmatmul.mubr.bf16.gmra.mrb[0].mxu0 %v483
      %v762 = vpop.f32.mrb[0].mxu0
      %v763 = vadd.f32 0.0, %v762
      %v764 = vpop.f32.mrb[0].mxu0
      %v765 = vpop.f32.mrb[0].mxu0
      %v766 = vadd.f32 0.0, %v765
      %v767 = vpop.f32.mrb[0].mxu0
      %768 = vmatprep.mubr.bf16.mxu0 0
      %769 = vmatmul.mubr.bf16.gmra.mrb[0].mxu0 %v486
      %v770 = vpop.f32.mrb[0].mxu0
      %v771 = vadd.f32 0.0, %v770
      %v772 = vpop.f32.mrb[0].mxu0
      %v773 = vpop.f32.mrb[0].mxu0
      %v774 = vadd.f32 0.0, %v773
      %v775 = vpop.f32.mrb[0].mxu0
      %776 = vdwg.mxu0
      %v778 = vlaneseq
      %v779 = vshrl.u32 %v778, 7
      %v780 = vsub.s32 0, %v779
      %v781 = vrot.slane %v154, %v780
      %v783 = vadd.f32 %v781, %v523
      %v784 = vadd.f32 %v781, %v526
      %v785 = vadd.f32 %v781, %v531
      %v786 = vadd.f32 %v781, %v534
      %v787 = vadd.f32 %v781, %v539
      %v788 = vadd.f32 %v781, %v542
      %v789 = vadd.f32 %v781, %v547
      %v790 = vadd.f32 %v781, %v550
      %v791 = vadd.f32 %v781, %v555
      %v792 = vadd.f32 %v781, %v558
      %v793 = vadd.f32 %v781, %v563
      %v794 = vadd.f32 %v781, %v566
      %v795 = vadd.f32 %v781, %v571
      %v796 = vadd.f32 %v781, %v574
      %v797 = vadd.f32 %v781, %v579
      %v798 = vadd.f32 %v781, %v582
      %v799 = vadd.f32 %v781, %v587
      %v800 = vadd.f32 %v781, %v590
      %v801 = vadd.f32 %v781, %v595
      %v802 = vadd.f32 %v781, %v598
      %v803 = vadd.f32 %v781, %v603
      %v804 = vadd.f32 %v781, %v606
      %v805 = vadd.f32 %v781, %v611
      %v806 = vadd.f32 %v781, %v614
      %v807 = vadd.f32 %v781, %v619
      %v808 = vadd.f32 %v781, %v622
      %v809 = vadd.f32 %v781, %v627
      %v810 = vadd.f32 %v781, %v630
      %v811 = vadd.f32 %v781, %v635
      %v812 = vadd.f32 %v781, %v638
      %v813 = vadd.f32 %v781, %v643
      %v814 = vadd.f32 %v781, %v646
      %v815 = vadd.f32 %v781, %v651
      %v816 = vadd.f32 %v781, %v654
      %v817 = vadd.f32 %v781, %v659
      %v818 = vadd.f32 %v781, %v662
      %v819 = vadd.f32 %v781, %v667
      %v820 = vadd.f32 %v781, %v670
      %v821 = vadd.f32 %v781, %v675
      %v822 = vadd.f32 %v781, %v678
      %v823 = vadd.f32 %v781, %v683
      %v824 = vadd.f32 %v781, %v686
      %v825 = vadd.f32 %v781, %v691
      %v826 = vadd.f32 %v781, %v694
      %v827 = vadd.f32 %v781, %v699
      %v828 = vadd.f32 %v781, %v702
      %v829 = vadd.f32 %v781, %v707
      %v830 = vadd.f32 %v781, %v710
      %v831 = vadd.f32 %v781, %v715
      %v832 = vadd.f32 %v781, %v718
      %v833 = vadd.f32 %v781, %v723
      %v834 = vadd.f32 %v781, %v726
      %v835 = vadd.f32 %v781, %v731
      %v836 = vadd.f32 %v781, %v734
      %v837 = vadd.f32 %v781, %v739
      %v838 = vadd.f32 %v781, %v742
      %v839 = vadd.f32 %v781, %v747
      %v840 = vadd.f32 %v781, %v750
      %v841 = vadd.f32 %v781, %v755
      %v842 = vadd.f32 %v781, %v758
      %v843 = vadd.f32 %v781, %v763
      %v844 = vadd.f32 %v781, %v766
      %v845 = vadd.f32 %v781, %v771
      %v846 = vadd.f32 %v781, %v774
      %s847 = sadd.s32 %s153, 32
      %s848 = sshra.s32 %s847, 3
      %s849 = sand.u32 %s847, 7
      %s850 = smul.addr %s848, 4
      %s851 = scalar_lea.vmem %s0, %s850
      %v852 = vld [vmem:[%s851] sm:$0xf]
      %v853 = vld [vmem:[%s851 + $0x4] sm:$0xf]
      %v854 = vld [vmem:[%s851 + $0x8] sm:$0xf]
      %v855 = vld [vmem:[%s851 + $0xc] sm:$0xf]
      %v856 = vld [vmem:[%s851 + $0x10] sm:$0xf]
      %v857 = vld [vmem:[%s851 + $0x14] sm:$0xf]
      %v858 = vld [vmem:[%s851 + $0x18] sm:$0xf]
      %v859 = vld [vmem:[%s851 + $0x1c] sm:$0xf]
      %v860 = vld [vmem:[%s851 + $0x20] sm:$0xf]
      %v861 = vld [vmem:[%s851 + $0x24] sm:$0xf]
      %v862 = vld [vmem:[%s851 + $0x28] sm:$0xf]
      %v863 = vld [vmem:[%s851 + $0x2c] sm:$0xf]
      %v864 = vld [vmem:[%s851 + $0x30] sm:$0xf]
      %v865 = vld [vmem:[%s851 + $0x34] sm:$0xf]
      %v866 = vld [vmem:[%s851 + $0x38] sm:$0xf]
      %v867 = vld [vmem:[%s851 + $0x3c] sm:$0xf]
      %v868 = vld [vmem:[%s851 + $0x40] sm:$0xf]
      %v869 = vld [vmem:[%s851 + $0x44] sm:$0xf]
      %v870 = vld [vmem:[%s851 + $0x48] sm:$0xf]
      %v871 = vld [vmem:[%s851 + $0x4c] sm:$0xf]
      %v872 = vld [vmem:[%s851 + $0x50] sm:$0xf]
      %v873 = vld [vmem:[%s851 + $0x54] sm:$0xf]
      %v874 = vld [vmem:[%s851 + $0x58] sm:$0xf]
      %v875 = vld [vmem:[%s851 + $0x5c] sm:$0xf]
      %v876 = vld [vmem:[%s851 + $0x60] sm:$0xf]
      %v877 = vld [vmem:[%s851 + $0x64] sm:$0xf]
      %v878 = vld [vmem:[%s851 + $0x68] sm:$0xf]
      %v879 = vld [vmem:[%s851 + $0x6c] sm:$0xf]
      %v880 = vld [vmem:[%s851 + $0x70] sm:$0xf]
      %v881 = vld [vmem:[%s851 + $0x74] sm:$0xf]
      %v882 = vld [vmem:[%s851 + $0x78] sm:$0xf]
      %v883 = vld [vmem:[%s851 + $0x7c] sm:$0xf]
      %v884 = vld [vmem:[%s851 + $0x80] sm:$0xf]
      %v885 = vld [vmem:[%s851 + $0x84] sm:$0xf]
      %v886 = vld [vmem:[%s851 + $0x88] sm:$0xf]
      %v887 = vld [vmem:[%s851 + $0x8c] sm:$0xf]
      %v888 = vld [vmem:[%s851 + $0x90] sm:$0xf]
      %v889 = vld [vmem:[%s851 + $0x94] sm:$0xf]
      %v890 = vld [vmem:[%s851 + $0x98] sm:$0xf]
      %v891 = vld [vmem:[%s851 + $0x9c] sm:$0xf]
      %v892 = vld [vmem:[%s851 + $0xa0] sm:$0xf]
      %v893 = vld [vmem:[%s851 + $0xa4] sm:$0xf]
      %v894 = vld [vmem:[%s851 + $0xa8] sm:$0xf]
      %v895 = vld [vmem:[%s851 + $0xac] sm:$0xf]
      %v896 = vld [vmem:[%s851 + $0xb0] sm:$0xf]
      %v897 = vld [vmem:[%s851 + $0xb4] sm:$0xf]
      %v898 = vld [vmem:[%s851 + $0xb8] sm:$0xf]
      %v899 = vld [vmem:[%s851 + $0xbc] sm:$0xf]
      %v900 = vld [vmem:[%s851 + $0xc0] sm:$0xf]
      %v901 = vld [vmem:[%s851 + $0xc4] sm:$0xf]
      %v902 = vld [vmem:[%s851 + $0xc8] sm:$0xf]
      %v903 = vld [vmem:[%s851 + $0xcc] sm:$0xf]
      %v904 = vld [vmem:[%s851 + $0xd0] sm:$0xf]
      %v905 = vld [vmem:[%s851 + $0xd4] sm:$0xf]
      %v906 = vld [vmem:[%s851 + $0xd8] sm:$0xf]
      %v907 = vld [vmem:[%s851 + $0xdc] sm:$0xf]
      %v908 = vld [vmem:[%s851 + $0xe0] sm:$0xf]
      %v909 = vld [vmem:[%s851 + $0xe4] sm:$0xf]
      %v910 = vld [vmem:[%s851 + $0xe8] sm:$0xf]
      %v911 = vld [vmem:[%s851 + $0xec] sm:$0xf]
      %v912 = vld [vmem:[%s851 + $0xf0] sm:$0xf]
      %v913 = vld [vmem:[%s851 + $0xf4] sm:$0xf]
      %v914 = vld [vmem:[%s851 + $0xf8] sm:$0xf]
      %v915 = vld [vmem:[%s851 + $0xfc] sm:$0xf]
      %v916 = vld [vmem:[%s1 + $0x8] sm:$0xf]
      %v917 = vld [vmem:[%s1 + $0xc] sm:$0xf]
      %v982 = vunpack.c.l.b16 %v852
      %v983 = vunpack.c.l.b16 %v853
      %v984 = vunpack.c.l.b16 %v854
      %v985 = vunpack.c.l.b16 %v855
      %v986 = vunpack.c.l.b16 %v856
      %v987 = vunpack.c.l.b16 %v857
      %v988 = vunpack.c.l.b16 %v858
      %v989 = vunpack.c.l.b16 %v859
      %v990 = vunpack.c.l.b16 %v860
      %v991 = vunpack.c.l.b16 %v861
      %v992 = vunpack.c.l.b16 %v862
      %v993 = vunpack.c.l.b16 %v863
      %v994 = vunpack.c.l.b16 %v864
      %v995 = vunpack.c.l.b16 %v865
      %v996 = vunpack.c.l.b16 %v866
      %v997 = vunpack.c.l.b16 %v867
      %v998 = vunpack.c.l.b16 %v868
      %v999 = vunpack.c.l.b16 %v869
      %v1000 = vunpack.c.l.b16 %v870
      %v1001 = vunpack.c.l.b16 %v871
      %v1002 = vunpack.c.l.b16 %v872
      %v1003 = vunpack.c.l.b16 %v873
      %v1004 = vunpack.c.l.b16 %v874
      %v1005 = vunpack.c.l.b16 %v875
      %v1006 = vunpack.c.l.b16 %v876
      %v1007 = vunpack.c.l.b16 %v877
      %v1008 = vunpack.c.l.b16 %v878
      %v1009 = vunpack.c.l.b16 %v879
      %v1010 = vunpack.c.l.b16 %v880
      %v1011 = vunpack.c.l.b16 %v881
      %v1012 = vunpack.c.l.b16 %v882
      %v1013 = vunpack.c.l.b16 %v883
      %v1014 = vunpack.c.l.b16 %v884
      %v1015 = vunpack.c.l.b16 %v885
      %v1016 = vunpack.c.l.b16 %v886
      %v1017 = vunpack.c.l.b16 %v887
      %v1018 = vunpack.c.l.b16 %v888
      %v1019 = vunpack.c.l.b16 %v889
      %v1020 = vunpack.c.l.b16 %v890
      %v1021 = vunpack.c.l.b16 %v891
      %v1022 = vunpack.c.l.b16 %v892
      %v1023 = vunpack.c.l.b16 %v893
      %v1024 = vunpack.c.l.b16 %v894
      %v1025 = vunpack.c.l.b16 %v895
      %v1026 = vunpack.c.l.b16 %v896
      %v1027 = vunpack.c.l.b16 %v897
      %v1028 = vunpack.c.l.b16 %v898
      %v1029 = vunpack.c.l.b16 %v899
      %v1030 = vunpack.c.l.b16 %v900
      %v1031 = vunpack.c.l.b16 %v901
      %v1032 = vunpack.c.l.b16 %v902
      %v1033 = vunpack.c.l.b16 %v903
      %v1034 = vunpack.c.l.b16 %v904
      %v1035 = vunpack.c.l.b16 %v905
      %v1036 = vunpack.c.l.b16 %v906
      %v1037 = vunpack.c.l.b16 %v907
      %v1038 = vunpack.c.l.b16 %v908
      %v1039 = vunpack.c.l.b16 %v909
      %v1040 = vunpack.c.l.b16 %v910
      %v1041 = vunpack.c.l.b16 %v911
      %v1042 = vunpack.c.l.b16 %v912
      %v1043 = vunpack.c.l.b16 %v913
      %v1044 = vunpack.c.l.b16 %v914
      %v1045 = vunpack.c.l.b16 %v915
      %v1046 = vpack.c.b16 %v983, %v982
      %v1047 = vpack.c.b16 %v985, %v984
      %v1048 = vpack.c.b16 %v987, %v986
      %v1049 = vpack.c.b16 %v989, %v988
      %v1050 = vpack.c.b16 %v991, %v990
      %v1051 = vpack.c.b16 %v993, %v992
      %v1052 = vpack.c.b16 %v995, %v994
      %v1053 = vpack.c.b16 %v997, %v996
      %v1054 = vpack.c.b16 %v999, %v998
      %v1055 = vpack.c.b16 %v1001, %v1000
      %v1056 = vpack.c.b16 %v1003, %v1002
      %v1057 = vpack.c.b16 %v1005, %v1004
      %v1058 = vpack.c.b16 %v1007, %v1006
      %v1059 = vpack.c.b16 %v1009, %v1008
      %v1060 = vpack.c.b16 %v1011, %v1010
      %v1061 = vpack.c.b16 %v1013, %v1012
      %v1062 = vpack.c.b16 %v1015, %v1014
      %v1063 = vpack.c.b16 %v1017, %v1016
      %v1064 = vpack.c.b16 %v1019, %v1018
      %v1065 = vpack.c.b16 %v1021, %v1020
      %v1066 = vpack.c.b16 %v1023, %v1022
      %v1067 = vpack.c.b16 %v1025, %v1024
      %v1068 = vpack.c.b16 %v1027, %v1026
      %v1069 = vpack.c.b16 %v1029, %v1028
      %v1070 = vpack.c.b16 %v1031, %v1030
      %v1071 = vpack.c.b16 %v1033, %v1032
      %v1072 = vpack.c.b16 %v1035, %v1034
      %v1073 = vpack.c.b16 %v1037, %v1036
      %v1074 = vpack.c.b16 %v1039, %v1038
      %v1075 = vpack.c.b16 %v1041, %v1040
      %v1076 = vpack.c.b16 %v1043, %v1042
      %v1077 = vpack.c.b16 %v1045, %v1044
      %v1080 = vunpack.c.l.b16 %v916
      %v1081 = vunpack.c.l.b16 %v917
      %v1082 = vpack.c.b16 %v1081, %v1080
      %v1085 = vsel %vm391, %v1046, 0
      %v1088 = vsel %vm391, %v1047, 0
      %v1091 = vsel %vm391, %v1048, 0
      %v1094 = vsel %vm391, %v1049, 0
      %v1097 = vsel %vm391, %v1050, 0
      %v1100 = vsel %vm391, %v1051, 0
      %v1103 = vsel %vm391, %v1052, 0
      %v1106 = vsel %vm391, %v1053, 0
      %v1109 = vsel %vm391, %v1054, 0
      %v1112 = vsel %vm391, %v1055, 0
      %v1115 = vsel %vm391, %v1056, 0
      %v1118 = vsel %vm391, %v1057, 0
      %v1121 = vsel %vm391, %v1058, 0
      %v1124 = vsel %vm391, %v1059, 0
      %v1127 = vsel %vm391, %v1060, 0
      %v1130 = vsel %vm391, %v1061, 0
      %v1133 = vsel %vm391, %v1062, 0
      %v1136 = vsel %vm391, %v1063, 0
      %v1139 = vsel %vm391, %v1064, 0
      %v1142 = vsel %vm391, %v1065, 0
      %v1145 = vsel %vm391, %v1066, 0
      %v1148 = vsel %vm391, %v1067, 0
      %v1151 = vsel %vm391, %v1068, 0
      %v1154 = vsel %vm391, %v1069, 0
      %v1157 = vsel %vm391, %v1070, 0
      %v1160 = vsel %vm391, %v1071, 0
      %v1163 = vsel %vm391, %v1072, 0
      %v1166 = vsel %vm391, %v1073, 0
      %v1169 = vsel %vm391, %v1074, 0
      %v1172 = vsel %vm391, %v1075, 0
      %v1175 = vsel %vm391, %v1076, 0
      %v1178 = vsel %vm391, %v1077, 0
      %1180 = vmatprep.subr.bf16.mxu0 0
      %1181 = vmatpush1.bf16.msra.mxu0 %v1082
      %1182 = vmatprep.subr.bf16.mxu0 0
      %1183 = vmatpush1.bf16.msra.mxu0 0
      %1184 = vmatprep.subr.bf16.mxu0 0
      %1185 = vmatpush1.bf16.msra.mxu0 0
      %1186 = vmatprep.subr.bf16.mxu0 0
      %1187 = vmatpush1.bf16.msra.mxu0 0
      %1188 = vmatprep.subr.bf16.mxu0 0
      %1189 = vmatpush1.bf16.msra.mxu0 0
      %1190 = vmatprep.subr.bf16.mxu0 0
      %1191 = vmatpush1.bf16.msra.mxu0 0
      %1192 = vmatprep.subr.bf16.mxu0 0
      %1193 = vmatpush1.bf16.msra.mxu0 0
      %1194 = vmatprep.subr.bf16.mxu0 0
      %1195 = vmatpush1.bf16.msra.mxu0 0
      %1196 = vmatprep.subr.bf16.mxu0 0
      %1197 = vmatpush1.bf16.msra.mxu0 0
      %1198 = vmatprep.subr.bf16.mxu0 0
      %1199 = vmatpush1.bf16.msra.mxu0 0
      %1200 = vmatprep.subr.bf16.mxu0 0
      %1201 = vmatpush1.bf16.msra.mxu0 0
      %1202 = vmatprep.subr.bf16.mxu0 0
      %1203 = vmatpush1.bf16.msra.mxu0 0
      %1204 = vmatprep.subr.bf16.mxu0 0
      %1205 = vmatpush1.bf16.msra.mxu0 0
      %1206 = vmatprep.subr.bf16.mxu0 0
      %1207 = vmatpush1.bf16.msra.mxu0 0
      %1208 = vmatprep.subr.bf16.mxu0 0
      %1209 = vmatpush1.bf16.msra.mxu0 0
      %1210 = vmatprep.subr.bf16.mxu0 0
      %1211 = vmatpush1.bf16.msra.mxu0 0
      %1212 = vmatprep.mubr.bf16.mxu0 0
      %1213 = vmatmul.mubr.bf16.gmra.mrb[0].mxu0 %v1085
      %v1214 = vpop.f32.mrb[0].mxu0
      %v1215 = vadd.f32 0.0, %v1214
      %v1216 = vpop.f32.mrb[0].mxu0
      %v1217 = vpop.f32.mrb[0].mxu0
      %v1218 = vadd.f32 0.0, %v1217
      %v1219 = vpop.f32.mrb[0].mxu0
      %1220 = vmatprep.mubr.bf16.mxu0 0
      %1221 = vmatmul.mubr.bf16.gmra.mrb[0].mxu0 %v1088
      %v1222 = vpop.f32.mrb[0].mxu0
      %v1223 = vadd.f32 0.0, %v1222
      %v1224 = vpop.f32.mrb[0].mxu0
      %v1225 = vpop.f32.mrb[0].mxu0
      %v1226 = vadd.f32 0.0, %v1225
      %v1227 = vpop.f32.mrb[0].mxu0
      %1228 = vmatprep.mubr.bf16.mxu0 0
      %1229 = vmatmul.mubr.bf16.gmra.mrb[0].mxu0 %v1091
      %v1230 = vpop.f32.mrb[0].mxu0
      %v1231 = vadd.f32 0.0, %v1230
      %v1232 = vpop.f32.mrb[0].mxu0
      %v1233 = vpop.f32.mrb[0].mxu0
      %v1234 = vadd.f32 0.0, %v1233
      %v1235 = vpop.f32.mrb[0].mxu0
      %1236 = vmatprep.mubr.bf16.mxu0 0
      %1237 = vmatmul.mubr.bf16.gmra.mrb[0].mxu0 %v1094
      %v1238 = vpop.f32.mrb[0].mxu0
      %v1239 = vadd.f32 0.0, %v1238
      %v1240 = vpop.f32.mrb[0].mxu0
      %v1241 = vpop.f32.mrb[0].mxu0
      %v1242 = vadd.f32 0.0, %v1241
      %v1243 = vpop.f32.mrb[0].mxu0
      %1244 = vmatprep.mubr.bf16.mxu0 0
      %1245 = vmatmul.mubr.bf16.gmra.mrb[0].mxu0 %v1097
      %v1246 = vpop.f32.mrb[0].mxu0
      %v1247 = vadd.f32 0.0, %v1246
      %v1248 = vpop.f32.mrb[0].mxu0
      %v1249 = vpop.f32.mrb[0].mxu0
      %v1250 = vadd.f32 0.0, %v1249
      %v1251 = vpop.f32.mrb[0].mxu0
      %1252 = vmatprep.mubr.bf16.mxu0 0
      %1253 = vmatmul.mubr.bf16.gmra.mrb[0].mxu0 %v1100
      %v1254 = vpop.f32.mrb[0].mxu0
      %v1255 = vadd.f32 0.0, %v1254
      %v1256 = vpop.f32.mrb[0].mxu0
      %v1257 = vpop.f32.mrb[0].mxu0
      %v1258 = vadd.f32 0.0, %v1257
      %v1259 = vpop.f32.mrb[0].mxu0
      %1260 = vmatprep.mubr.bf16.mxu0 0
      %1261 = vmatmul.mubr.bf16.gmra.mrb[0].mxu0 %v1103
      %v1262 = vpop.f32.mrb[0].mxu0
      %v1263 = vadd.f32 0.0, %v1262
      %v1264 = vpop.f32.mrb[0].mxu0
      %v1265 = vpop.f32.mrb[0].mxu0
      %v1266 = vadd.f32 0.0, %v1265
      %v1267 = vpop.f32.mrb[0].mxu0
      %1268 = vmatprep.mubr.bf16.mxu0 0
      %1269 = vmatmul.mubr.bf16.gmra.mrb[0].mxu0 %v1106
      %v1270 = vpop.f32.mrb[0].mxu0
      %v1271 = vadd.f32 0.0, %v1270
      %v1272 = vpop.f32.mrb[0].mxu0
      %v1273 = vpop.f32.mrb[0].mxu0
      %v1274 = vadd.f32 0.0, %v1273
      %v1275 = vpop.f32.mrb[0].mxu0
      %1276 = vmatprep.mubr.bf16.mxu0 0
      %1277 = vmatmul.mubr.bf16.gmra.mrb[0].mxu0 %v1109
      %v1278 = vpop.f32.mrb[0].mxu0
      %v1279 = vadd.f32 0.0, %v1278
      %v1280 = vpop.f32.mrb[0].mxu0
      %v1281 = vpop.f32.mrb[0].mxu0
      %v1282 = vadd.f32 0.0, %v1281
      %v1283 = vpop.f32.mrb[0].mxu0
      %1284 = vmatprep.mubr.bf16.mxu0 0
      %1285 = vmatmul.mubr.bf16.gmra.mrb[0].mxu0 %v1112
      %v1286 = vpop.f32.mrb[0].mxu0
      %v1287 = vadd.f32 0.0, %v1286
      %v1288 = vpop.f32.mrb[0].mxu0
      %v1289 = vpop.f32.mrb[0].mxu0
      %v1290 = vadd.f32 0.0, %v1289
      %v1291 = vpop.f32.mrb[0].mxu0
      %1292 = vmatprep.mubr.bf16.mxu0 0
      %1293 = vmatmul.mubr.bf16.gmra.mrb[0].mxu0 %v1115
      %v1294 = vpop.f32.mrb[0].mxu0
      %v1295 = vadd.f32 0.0, %v1294
      %v1296 = vpop.f32.mrb[0].mxu0
      %v1297 = vpop.f32.mrb[0].mxu0
      %v1298 = vadd.f32 0.0, %v1297
      %v1299 = vpop.f32.mrb[0].mxu0
      %1300 = vmatprep.mubr.bf16.mxu0 0
      %1301 = vmatmul.mubr.bf16.gmra.mrb[0].mxu0 %v1118
      %v1302 = vpop.f32.mrb[0].mxu0
      %v1303 = vadd.f32 0.0, %v1302
      %v1304 = vpop.f32.mrb[0].mxu0
      %v1305 = vpop.f32.mrb[0].mxu0
      %v1306 = vadd.f32 0.0, %v1305
      %v1307 = vpop.f32.mrb[0].mxu0
      %1308 = vmatprep.mubr.bf16.mxu0 0
      %1309 = vmatmul.mubr.bf16.gmra.mrb[0].mxu0 %v1121
      %v1310 = vpop.f32.mrb[0].mxu0
      %v1311 = vadd.f32 0.0, %v1310
      %v1312 = vpop.f32.mrb[0].mxu0
      %v1313 = vpop.f32.mrb[0].mxu0
      %v1314 = vadd.f32 0.0, %v1313
      %v1315 = vpop.f32.mrb[0].mxu0
      %1316 = vmatprep.mubr.bf16.mxu0 0
      %1317 = vmatmul.mubr.bf16.gmra.mrb[0].mxu0 %v1124
      %v1318 = vpop.f32.mrb[0].mxu0
      %v1319 = vadd.f32 0.0, %v1318
      %v1320 = vpop.f32.mrb[0].mxu0
      %v1321 = vpop.f32.mrb[0].mxu0
      %v1322 = vadd.f32 0.0, %v1321
      %v1323 = vpop.f32.mrb[0].mxu0
      %1324 = vmatprep.mubr.bf16.mxu0 0
      %1325 = vmatmul.mubr.bf16.gmra.mrb[0].mxu0 %v1127
      %v1326 = vpop.f32.mrb[0].mxu0
      %v1327 = vadd.f32 0.0, %v1326
      %v1328 = vpop.f32.mrb[0].mxu0
      %v1329 = vpop.f32.mrb[0].mxu0
      %v1330 = vadd.f32 0.0, %v1329
      %v1331 = vpop.f32.mrb[0].mxu0
      %1332 = vmatprep.mubr.bf16.mxu0 0
      %1333 = vmatmul.mubr.bf16.gmra.mrb[0].mxu0 %v1130
      %v1334 = vpop.f32.mrb[0].mxu0
      %v1335 = vadd.f32 0.0, %v1334
      %v1336 = vpop.f32.mrb[0].mxu0
      %v1337 = vpop.f32.mrb[0].mxu0
      %v1338 = vadd.f32 0.0, %v1337
      %v1339 = vpop.f32.mrb[0].mxu0
      %1340 = vmatprep.mubr.bf16.mxu0 0
      %1341 = vmatmul.mubr.bf16.gmra.mrb[0].mxu0 %v1133
      %v1342 = vpop.f32.mrb[0].mxu0
      %v1343 = vadd.f32 0.0, %v1342
      %v1344 = vpop.f32.mrb[0].mxu0
      %v1345 = vpop.f32.mrb[0].mxu0
      %v1346 = vadd.f32 0.0, %v1345
      %v1347 = vpop.f32.mrb[0].mxu0
      %1348 = vmatprep.mubr.bf16.mxu0 0
      %1349 = vmatmul.mubr.bf16.gmra.mrb[0].mxu0 %v1136
      %v1350 = vpop.f32.mrb[0].mxu0
      %v1351 = vadd.f32 0.0, %v1350
      %v1352 = vpop.f32.mrb[0].mxu0
      %v1353 = vpop.f32.mrb[0].mxu0
      %v1354 = vadd.f32 0.0, %v1353
      %v1355 = vpop.f32.mrb[0].mxu0
      %1356 = vmatprep.mubr.bf16.mxu0 0
      %1357 = vmatmul.mubr.bf16.gmra.mrb[0].mxu0 %v1139
      %v1358 = vpop.f32.mrb[0].mxu0
      %v1359 = vadd.f32 0.0, %v1358
      %v1360 = vpop.f32.mrb[0].mxu0
      %v1361 = vpop.f32.mrb[0].mxu0
      %v1362 = vadd.f32 0.0, %v1361
      %v1363 = vpop.f32.mrb[0].mxu0
      %1364 = vmatprep.mubr.bf16.mxu0 0
      %1365 = vmatmul.mubr.bf16.gmra.mrb[0].mxu0 %v1142
      %v1366 = vpop.f32.mrb[0].mxu0
      %v1367 = vadd.f32 0.0, %v1366
      %v1368 = vpop.f32.mrb[0].mxu0
      %v1369 = vpop.f32.mrb[0].mxu0
      %v1370 = vadd.f32 0.0, %v1369
      %v1371 = vpop.f32.mrb[0].mxu0
      %1372 = vmatprep.mubr.bf16.mxu0 0
      %1373 = vmatmul.mubr.bf16.gmra.mrb[0].mxu0 %v1145
      %v1374 = vpop.f32.mrb[0].mxu0
      %v1375 = vadd.f32 0.0, %v1374
      %v1376 = vpop.f32.mrb[0].mxu0
      %v1377 = vpop.f32.mrb[0].mxu0
      %v1378 = vadd.f32 0.0, %v1377
      %v1379 = vpop.f32.mrb[0].mxu0
      %1380 = vmatprep.mubr.bf16.mxu0 0
      %1381 = vmatmul.mubr.bf16.gmra.mrb[0].mxu0 %v1148
      %v1382 = vpop.f32.mrb[0].mxu0
      %v1383 = vadd.f32 0.0, %v1382
      %v1384 = vpop.f32.mrb[0].mxu0
      %v1385 = vpop.f32.mrb[0].mxu0
      %v1386 = vadd.f32 0.0, %v1385
      %v1387 = vpop.f32.mrb[0].mxu0
      %1388 = vmatprep.mubr.bf16.mxu0 0
      %1389 = vmatmul.mubr.bf16.gmra.mrb[0].mxu0 %v1151
      %v1390 = vpop.f32.mrb[0].mxu0
      %v1391 = vadd.f32 0.0, %v1390
      %v1392 = vpop.f32.mrb[0].mxu0
      %v1393 = vpop.f32.mrb[0].mxu0
      %v1394 = vadd.f32 0.0, %v1393
      %v1395 = vpop.f32.mrb[0].mxu0
      %1396 = vmatprep.mubr.bf16.mxu0 0
      %1397 = vmatmul.mubr.bf16.gmra.mrb[0].mxu0 %v1154
      %v1398 = vpop.f32.mrb[0].mxu0
      %v1399 = vadd.f32 0.0, %v1398
      %v1400 = vpop.f32.mrb[0].mxu0
      %v1401 = vpop.f32.mrb[0].mxu0
      %v1402 = vadd.f32 0.0, %v1401
      %v1403 = vpop.f32.mrb[0].mxu0
      %1404 = vmatprep.mubr.bf16.mxu0 0
      %1405 = vmatmul.mubr.bf16.gmra.mrb[0].mxu0 %v1157
      %v1406 = vpop.f32.mrb[0].mxu0
      %v1407 = vadd.f32 0.0, %v1406
      %v1408 = vpop.f32.mrb[0].mxu0
      %v1409 = vpop.f32.mrb[0].mxu0
      %v1410 = vadd.f32 0.0, %v1409
      %v1411 = vpop.f32.mrb[0].mxu0
      %1412 = vmatprep.mubr.bf16.mxu0 0
      %1413 = vmatmul.mubr.bf16.gmra.mrb[0].mxu0 %v1160
      %v1414 = vpop.f32.mrb[0].mxu0
      %v1415 = vadd.f32 0.0, %v1414
      %v1416 = vpop.f32.mrb[0].mxu0
      %v1417 = vpop.f32.mrb[0].mxu0
      %v1418 = vadd.f32 0.0, %v1417
      %v1419 = vpop.f32.mrb[0].mxu0
      %1420 = vmatprep.mubr.bf16.mxu0 0
      %1421 = vmatmul.mubr.bf16.gmra.mrb[0].mxu0 %v1163
      %v1422 = vpop.f32.mrb[0].mxu0
      %v1423 = vadd.f32 0.0, %v1422
      %v1424 = vpop.f32.mrb[0].mxu0
      %v1425 = vpop.f32.mrb[0].mxu0
      %v1426 = vadd.f32 0.0, %v1425
      %v1427 = vpop.f32.mrb[0].mxu0
      %1428 = vmatprep.mubr.bf16.mxu0 0
      %1429 = vmatmul.mubr.bf16.gmra.mrb[0].mxu0 %v1166
      %v1430 = vpop.f32.mrb[0].mxu0
      %v1431 = vadd.f32 0.0, %v1430
      %v1432 = vpop.f32.mrb[0].mxu0
      %v1433 = vpop.f32.mrb[0].mxu0
      %v1434 = vadd.f32 0.0, %v1433
      %v1435 = vpop.f32.mrb[0].mxu0
      %1436 = vmatprep.mubr.bf16.mxu0 0
      %1437 = vmatmul.mubr.bf16.gmra.mrb[0].mxu0 %v1169
      %v1438 = vpop.f32.mrb[0].mxu0
      %v1439 = vadd.f32 0.0, %v1438
      %v1440 = vpop.f32.mrb[0].mxu0
      %v1441 = vpop.f32.mrb[0].mxu0
      %v1442 = vadd.f32 0.0, %v1441
      %v1443 = vpop.f32.mrb[0].mxu0
      %1444 = vmatprep.mubr.bf16.mxu0 0
      %1445 = vmatmul.mubr.bf16.gmra.mrb[0].mxu0 %v1172
      %v1446 = vpop.f32.mrb[0].mxu0
      %v1447 = vadd.f32 0.0, %v1446
      %v1448 = vpop.f32.mrb[0].mxu0
      %v1449 = vpop.f32.mrb[0].mxu0
      %v1450 = vadd.f32 0.0, %v1449
      %v1451 = vpop.f32.mrb[0].mxu0
      %1452 = vmatprep.mubr.bf16.mxu0 0
      %1453 = vmatmul.mubr.bf16.gmra.mrb[0].mxu0 %v1175
      %v1454 = vpop.f32.mrb[0].mxu0
      %v1455 = vadd.f32 0.0, %v1454
      %v1456 = vpop.f32.mrb[0].mxu0
      %v1457 = vpop.f32.mrb[0].mxu0
      %v1458 = vadd.f32 0.0, %v1457
      %v1459 = vpop.f32.mrb[0].mxu0
      %1460 = vmatprep.mubr.bf16.mxu0 0
      %1461 = vmatmul.mubr.bf16.gmra.mrb[0].mxu0 %v1178
      %v1462 = vpop.f32.mrb[0].mxu0
      %v1463 = vadd.f32 0.0, %v1462
      %v1464 = vpop.f32.mrb[0].mxu0
      %v1465 = vpop.f32.mrb[0].mxu0
      %v1466 = vadd.f32 0.0, %v1465
      %v1467 = vpop.f32.mrb[0].mxu0
      %1468 = vdwg.mxu0
      %v1469 = vadd.f32 %v783, %v1215
      %v1470 = vadd.f32 %v784, %v1218
      %v1471 = vadd.f32 %v785, %v1223
      %v1472 = vadd.f32 %v786, %v1226
      %v1473 = vadd.f32 %v787, %v1231
      %v1474 = vadd.f32 %v788, %v1234
      %v1475 = vadd.f32 %v789, %v1239
      %v1476 = vadd.f32 %v790, %v1242
      %v1477 = vadd.f32 %v791, %v1247
      %v1478 = vadd.f32 %v792, %v1250
      %v1479 = vadd.f32 %v793, %v1255
      %v1480 = vadd.f32 %v794, %v1258
      %v1481 = vadd.f32 %v795, %v1263
      %v1482 = vadd.f32 %v796, %v1266
      %v1483 = vadd.f32 %v797, %v1271
      %v1484 = vadd.f32 %v798, %v1274
      %v1485 = vadd.f32 %v799, %v1279
      %v1486 = vadd.f32 %v800, %v1282
      %v1487 = vadd.f32 %v801, %v1287
      %v1488 = vadd.f32 %v802, %v1290
      %v1489 = vadd.f32 %v803, %v1295
      %v1490 = vadd.f32 %v804, %v1298
      %v1491 = vadd.f32 %v805, %v1303
      %v1492 = vadd.f32 %v806, %v1306
      %v1493 = vadd.f32 %v807, %v1311
      %v1494 = vadd.f32 %v808, %v1314
      %v1495 = vadd.f32 %v809, %v1319
      %v1496 = vadd.f32 %v810, %v1322
      %v1497 = vadd.f32 %v811, %v1327
      %v1498 = vadd.f32 %v812, %v1330
      %v1499 = vadd.f32 %v813, %v1335
      %v1500 = vadd.f32 %v814, %v1338
      %v1501 = vadd.f32 %v815, %v1343
      %v1502 = vadd.f32 %v816, %v1346
      %v1503 = vadd.f32 %v817, %v1351
      %v1504 = vadd.f32 %v818, %v1354
      %v1505 = vadd.f32 %v819, %v1359
      %v1506 = vadd.f32 %v820, %v1362
      %v1507 = vadd.f32 %v821, %v1367
      %v1508 = vadd.f32 %v822, %v1370
      %v1509 = vadd.f32 %v823, %v1375
      %v1510 = vadd.f32 %v824, %v1378
      %v1511 = vadd.f32 %v825, %v1383
      %v1512 = vadd.f32 %v826, %v1386
      %v1513 = vadd.f32 %v827, %v1391
      %v1514 = vadd.f32 %v828, %v1394
      %v1515 = vadd.f32 %v829, %v1399
      %v1516 = vadd.f32 %v830, %v1402
      %v1517 = vadd.f32 %v831, %v1407
      %v1518 = vadd.f32 %v832, %v1410
      %v1519 = vadd.f32 %v833, %v1415
      %v1520 = vadd.f32 %v834, %v1418
      %v1521 = vadd.f32 %v835, %v1423
      %v1522 = vadd.f32 %v836, %v1426
      %v1523 = vadd.f32 %v837, %v1431
      %v1524 = vadd.f32 %v838, %v1434
      %v1525 = vadd.f32 %v839, %v1439
      %v1526 = vadd.f32 %v840, %v1442
      %v1527 = vadd.f32 %v841, %v1447
      %v1528 = vadd.f32 %v842, %v1450
      %v1529 = vadd.f32 %v843, %v1455
      %v1530 = vadd.f32 %v844, %v1458
      %v1531 = vadd.f32 %v845, %v1463
      %v1532 = vadd.f32 %v846, %v1466
      %s1533 = sadd.s32 %s153, 64
      %s1534 = sshra.s32 %s1533, 3
      %s1535 = sand.u32 %s1533, 7
      %s1536 = smul.addr %s1534, 4
      %s1537 = scalar_lea.vmem %s0, %s1536
      %v1538 = vld [vmem:[%s1537] sm:$0xf]
      %v1539 = vld [vmem:[%s1537 + $0x4] sm:$0xf]
      %v1540 = vld [vmem:[%s1537 + $0x8] sm:$0xf]
      %v1541 = vld [vmem:[%s1537 + $0xc] sm:$0xf]
      %v1542 = vld [vmem:[%s1537 + $0x10] sm:$0xf]
      %v1543 = vld [vmem:[%s1537 + $0x14] sm:$0xf]
      %v1544 = vld [vmem:[%s1537 + $0x18] sm:$0xf]
      %v1545 = vld [vmem:[%s1537 + $0x1c] sm:$0xf]
      %v1546 = vld [vmem:[%s1537 + $0x20] sm:$0xf]
      %v1547 = vld [vmem:[%s1537 + $0x24] sm:$0xf]
      %v1548 = vld [vmem:[%s1537 + $0x28] sm:$0xf]
      %v1549 = vld [vmem:[%s1537 + $0x2c] sm:$0xf]
      %v1550 = vld [vmem:[%s1537 + $0x30] sm:$0xf]
      %v1551 = vld [vmem:[%s1537 + $0x34] sm:$0xf]
      %v1552 = vld [vmem:[%s1537 + $0x38] sm:$0xf]
      %v1553 = vld [vmem:[%s1537 + $0x3c] sm:$0xf]
      %v1554 = vld [vmem:[%s1537 + $0x40] sm:$0xf]
      %v1555 = vld [vmem:[%s1537 + $0x44] sm:$0xf]
      %v1556 = vld [vmem:[%s1537 + $0x48] sm:$0xf]
      %v1557 = vld [vmem:[%s1537 + $0x4c] sm:$0xf]
      %v1558 = vld [vmem:[%s1537 + $0x50] sm:$0xf]
      %v1559 = vld [vmem:[%s1537 + $0x54] sm:$0xf]
      %v1560 = vld [vmem:[%s1537 + $0x58] sm:$0xf]
      %v1561 = vld [vmem:[%s1537 + $0x5c] sm:$0xf]
      %v1562 = vld [vmem:[%s1537 + $0x60] sm:$0xf]
      %v1563 = vld [vmem:[%s1537 + $0x64] sm:$0xf]
      %v1564 = vld [vmem:[%s1537 + $0x68] sm:$0xf]
      %v1565 = vld [vmem:[%s1537 + $0x6c] sm:$0xf]
      %v1566 = vld [vmem:[%s1537 + $0x70] sm:$0xf]
      %v1567 = vld [vmem:[%s1537 + $0x74] sm:$0xf]
      %v1568 = vld [vmem:[%s1537 + $0x78] sm:$0xf]
      %v1569 = vld [vmem:[%s1537 + $0x7c] sm:$0xf]
      %v1570 = vld [vmem:[%s1537 + $0x80] sm:$0xf]
      %v1571 = vld [vmem:[%s1537 + $0x84] sm:$0xf]
      %v1572 = vld [vmem:[%s1537 + $0x88] sm:$0xf]
      %v1573 = vld [vmem:[%s1537 + $0x8c] sm:$0xf]
      %v1574 = vld [vmem:[%s1537 + $0x90] sm:$0xf]
      %v1575 = vld [vmem:[%s1537 + $0x94] sm:$0xf]
      %v1576 = vld [vmem:[%s1537 + $0x98] sm:$0xf]
      %v1577 = vld [vmem:[%s1537 + $0x9c] sm:$0xf]
      %v1578 = vld [vmem:[%s1537 + $0xa0] sm:$0xf]
      %v1579 = vld [vmem:[%s1537 + $0xa4] sm:$0xf]
      %v1580 = vld [vmem:[%s1537 + $0xa8] sm:$0xf]
      %v1581 = vld [vmem:[%s1537 + $0xac] sm:$0xf]
      %v1582 = vld [vmem:[%s1537 + $0xb0] sm:$0xf]
      %v1583 = vld [vmem:[%s1537 + $0xb4] sm:$0xf]
      %v1584 = vld [vmem:[%s1537 + $0xb8] sm:$0xf]
      %v1585 = vld [vmem:[%s1537 + $0xbc] sm:$0xf]
      %v1586 = vld [vmem:[%s1537 + $0xc0] sm:$0xf]
      %v1587 = vld [vmem:[%s1537 + $0xc4] sm:$0xf]
      %v1588 = vld [vmem:[%s1537 + $0xc8] sm:$0xf]
      %v1589 = vld [vmem:[%s1537 + $0xcc] sm:$0xf]
      %v1590 = vld [vmem:[%s1537 + $0xd0] sm:$0xf]
      %v1591 = vld [vmem:[%s1537 + $0xd4] sm:$0xf]
      %v1592 = vld [vmem:[%s1537 + $0xd8] sm:$0xf]
      %v1593 = vld [vmem:[%s1537 + $0xdc] sm:$0xf]
      %v1594 = vld [vmem:[%s1537 + $0xe0] sm:$0xf]
      %v1595 = vld [vmem:[%s1537 + $0xe4] sm:$0xf]
      %v1596 = vld [vmem:[%s1537 + $0xe8] sm:$0xf]
      %v1597 = vld [vmem:[%s1537 + $0xec] sm:$0xf]
      %v1598 = vld [vmem:[%s1537 + $0xf0] sm:$0xf]
      %v1599 = vld [vmem:[%s1537 + $0xf4] sm:$0xf]
      %v1600 = vld [vmem:[%s1537 + $0xf8] sm:$0xf]
      %v1601 = vld [vmem:[%s1537 + $0xfc] sm:$0xf]
      %v1602 = vld [vmem:[%s1 + $0x10] sm:$0xf]
      %v1603 = vld [vmem:[%s1 + $0x14] sm:$0xf]
      %v1668 = vunpack.c.l.b16 %v1538
      %v1669 = vunpack.c.l.b16 %v1539
      %v1670 = vunpack.c.l.b16 %v1540
      %v1671 = vunpack.c.l.b16 %v1541
      %v1672 = vunpack.c.l.b16 %v1542
      %v1673 = vunpack.c.l.b16 %v1543
      %v1674 = vunpack.c.l.b16 %v1544
      %v1675 = vunpack.c.l.b16 %v1545
      %v1676 = vunpack.c.l.b16 %v1546
      %v1677 = vunpack.c.l.b16 %v1547
      %v1678 = vunpack.c.l.b16 %v1548
      %v1679 = vunpack.c.l.b16 %v1549
      %v1680 = vunpack.c.l.b16 %v1550
      %v1681 = vunpack.c.l.b16 %v1551
      %v1682 = vunpack.c.l.b16 %v1552
      %v1683 = vunpack.c.l.b16 %v1553
      %v1684 = vunpack.c.l.b16 %v1554
      %v1685 = vunpack.c.l.b16 %v1555
      %v1686 = vunpack.c.l.b16 %v1556
      %v1687 = vunpack.c.l.b16 %v1557
      %v1688 = vunpack.c.l.b16 %v1558
      %v1689 = vunpack.c.l.b16 %v1559
      %v1690 = vunpack.c.l.b16 %v1560
      %v1691 = vunpack.c.l.b16 %v1561
      %v1692 = vunpack.c.l.b16 %v1562
      %v1693 = vunpack.c.l.b16 %v1563
      %v1694 = vunpack.c.l.b16 %v1564
      %v1695 = vunpack.c.l.b16 %v1565
      %v1696 = vunpack.c.l.b16 %v1566
      %v1697 = vunpack.c.l.b16 %v1567
      %v1698 = vunpack.c.l.b16 %v1568
      %v1699 = vunpack.c.l.b16 %v1569
      %v1700 = vunpack.c.l.b16 %v1570
      %v1701 = vunpack.c.l.b16 %v1571
      %v1702 = vunpack.c.l.b16 %v1572
      %v1703 = vunpack.c.l.b16 %v1573
      %v1704 = vunpack.c.l.b16 %v1574
      %v1705 = vunpack.c.l.b16 %v1575
      %v1706 = vunpack.c.l.b16 %v1576
      %v1707 = vunpack.c.l.b16 %v1577
      %v1708 = vunpack.c.l.b16 %v1578
      %v1709 = vunpack.c.l.b16 %v1579
      %v1710 = vunpack.c.l.b16 %v1580
      %v1711 = vunpack.c.l.b16 %v1581
      %v1712 = vunpack.c.l.b16 %v1582
      %v1713 = vunpack.c.l.b16 %v1583
      %v1714 = vunpack.c.l.b16 %v1584
      %v1715 = vunpack.c.l.b16 %v1585
      %v1716 = vunpack.c.l.b16 %v1586
      %v1717 = vunpack.c.l.b16 %v1587
      %v1718 = vunpack.c.l.b16 %v1588
      %v1719 = vunpack.c.l.b16 %v1589
      %v1720 = vunpack.c.l.b16 %v1590
      %v1721 = vunpack.c.l.b16 %v1591
      %v1722 = vunpack.c.l.b16 %v1592
      %v1723 = vunpack.c.l.b16 %v1593
      %v1724 = vunpack.c.l.b16 %v1594
      %v1725 = vunpack.c.l.b16 %v1595
      %v1726 = vunpack.c.l.b16 %v1596
      %v1727 = vunpack.c.l.b16 %v1597
      %v1728 = vunpack.c.l.b16 %v1598
      %v1729 = vunpack.c.l.b16 %v1599
      %v1730 = vunpack.c.l.b16 %v1600
      %v1731 = vunpack.c.l.b16 %v1601
      %v1732 = vpack.c.b16 %v1669, %v1668
      %v1733 = vpack.c.b16 %v1671, %v1670
      %v1734 = vpack.c.b16 %v1673, %v1672
      %v1735 = vpack.c.b16 %v1675, %v1674
      %v1736 = vpack.c.b16 %v1677, %v1676
      %v1737 = vpack.c.b16 %v1679, %v1678
      %v1738 = vpack.c.b16 %v1681, %v1680
      %v1739 = vpack.c.b16 %v1683, %v1682
      %v1740 = vpack.c.b16 %v1685, %v1684
      %v1741 = vpack.c.b16 %v1687, %v1686
      %v1742 = vpack.c.b16 %v1689, %v1688
      %v1743 = vpack.c.b16 %v1691, %v1690
      %v1744 = vpack.c.b16 %v1693, %v1692
      %v1745 = vpack.c.b16 %v1695, %v1694
      %v1746 = vpack.c.b16 %v1697, %v1696
      %v1747 = vpack.c.b16 %v1699, %v1698
      %v1748 = vpack.c.b16 %v1701, %v1700
      %v1749 = vpack.c.b16 %v1703, %v1702
      %v1750 = vpack.c.b16 %v1705, %v1704
      %v1751 = vpack.c.b16 %v1707, %v1706
      %v1752 = vpack.c.b16 %v1709, %v1708
      %v1753 = vpack.c.b16 %v1711, %v1710
      %v1754 = vpack.c.b16 %v1713, %v1712
      %v1755 = vpack.c.b16 %v1715, %v1714
      %v1756 = vpack.c.b16 %v1717, %v1716
      %v1757 = vpack.c.b16 %v1719, %v1718
      %v1758 = vpack.c.b16 %v1721, %v1720
      %v1759 = vpack.c.b16 %v1723, %v1722
      %v1760 = vpack.c.b16 %v1725, %v1724
      %v1761 = vpack.c.b16 %v1727, %v1726
      %v1762 = vpack.c.b16 %v1729, %v1728
      %v1763 = vpack.c.b16 %v1731, %v1730
      %v1766 = vunpack.c.l.b16 %v1602
      %v1767 = vunpack.c.l.b16 %v1603
      %v1768 = vpack.c.b16 %v1767, %v1766
      %v1771 = vsel %vm391, %v1732, 0
      %v1774 = vsel %vm391, %v1733, 0
      %v1777 = vsel %vm391, %v1734, 0
      %v1780 = vsel %vm391, %v1735, 0
      %v1783 = vsel %vm391, %v1736, 0
      %v1786 = vsel %vm391, %v1737, 0
      %v1789 = vsel %vm391, %v1738, 0
      %v1792 = vsel %vm391, %v1739, 0
      %v1795 = vsel %vm391, %v1740, 0
      %v1798 = vsel %vm391, %v1741, 0
      %v1801 = vsel %vm391, %v1742, 0
      %v1804 = vsel %vm391, %v1743, 0
      %v1807 = vsel %vm391, %v1744, 0
      %v1810 = vsel %vm391, %v1745, 0
      %v1813 = vsel %vm391, %v1746, 0
      %v1816 = vsel %vm391, %v1747, 0
      %v1819 = vsel %vm391, %v1748, 0
      %v1822 = vsel %vm391, %v1749, 0
      %v1825 = vsel %vm391, %v1750, 0
      %v1828 = vsel %vm391, %v1751, 0
      %v1831 = vsel %vm391, %v1752, 0
      %v1834 = vsel %vm391, %v1753, 0
      %v1837 = vsel %vm391, %v1754, 0
      %v1840 = vsel %vm391, %v1755, 0
      %v1843 = vsel %vm391, %v1756, 0
      %v1846 = vsel %vm391, %v1757, 0
      %v1849 = vsel %vm391, %v1758, 0
      %v1852 = vsel %vm391, %v1759, 0
      %v1855 = vsel %vm391, %v1760, 0
      %v1858 = vsel %vm391, %v1761, 0
      %v1861 = vsel %vm391, %v1762, 0
      %v1864 = vsel %vm391, %v1763, 0
      %1866 = vmatprep.subr.bf16.mxu0 0
      %1867 = vmatpush1.bf16.msra.mxu0 %v1768
      %1868 = vmatprep.subr.bf16.mxu0 0
      %1869 = vmatpush1.bf16.msra.mxu0 0
      %1870 = vmatprep.subr.bf16.mxu0 0
      %1871 = vmatpush1.bf16.msra.mxu0 0
      %1872 = vmatprep.subr.bf16.mxu0 0
      %1873 = vmatpush1.bf16.msra.mxu0 0
      %1874 = vmatprep.subr.bf16.mxu0 0
      %1875 = vmatpush1.bf16.msra.mxu0 0
      %1876 = vmatprep.subr.bf16.mxu0 0
      %1877 = vmatpush1.bf16.msra.mxu0 0
      %1878 = vmatprep.subr.bf16.mxu0 0
      %1879 = vmatpush1.bf16.msra.mxu0 0
      %1880 = vmatprep.subr.bf16.mxu0 0
      %1881 = vmatpush1.bf16.msra.mxu0 0
      %1882 = vmatprep.subr.bf16.mxu0 0
      %1883 = vmatpush1.bf16.msra.mxu0 0
      %1884 = vmatprep.subr.bf16.mxu0 0
      %1885 = vmatpush1.bf16.msra.mxu0 0
      %1886 = vmatprep.subr.bf16.mxu0 0
      %1887 = vmatpush1.bf16.msra.mxu0 0
      %1888 = vmatprep.subr.bf16.mxu0 0
      %1889 = vmatpush1.bf16.msra.mxu0 0
      %1890 = vmatprep.subr.bf16.mxu0 0
      %1891 = vmatpush1.bf16.msra.mxu0 0
      %1892 = vmatprep.subr.bf16.mxu0 0
      %1893 = vmatpush1.bf16.msra.mxu0 0
      %1894 = vmatprep.subr.bf16.mxu0 0
      %1895 = vmatpush1.bf16.msra.mxu0 0
      %1896 = vmatprep.subr.bf16.mxu0 0
      %1897 = vmatpush1.bf16.msra.mxu0 0
      %1898 = vmatprep.mubr.bf16.mxu0 0
      %1899 = vmatmul.mubr.bf16.gmra.mrb[0].mxu0 %v1771
      %v1900 = vpop.f32.mrb[0].mxu0
      %v1901 = vadd.f32 0.0, %v1900
      %v1902 = vpop.f32.mrb[0].mxu0
      %v1903 = vpop.f32.mrb[0].mxu0
      %v1904 = vadd.f32 0.0, %v1903
      %v1905 = vpop.f32.mrb[0].mxu0
      %1906 = vmatprep.mubr.bf16.mxu0 0
      %1907 = vmatmul.mubr.bf16.gmra.mrb[0].mxu0 %v1774
      %v1908 = vpop.f32.mrb[0].mxu0
      %v1909 = vadd.f32 0.0, %v1908
      %v1910 = vpop.f32.mrb[0].mxu0
      %v1911 = vpop.f32.mrb[0].mxu0
      %v1912 = vadd.f32 0.0, %v1911
      %v1913 = vpop.f32.mrb[0].mxu0
      %1914 = vmatprep.mubr.bf16.mxu0 0
      %1915 = vmatmul.mubr.bf16.gmra.mrb[0].mxu0 %v1777
      %v1916 = vpop.f32.mrb[0].mxu0
      %v1917 = vadd.f32 0.0, %v1916
      %v1918 = vpop.f32.mrb[0].mxu0
      %v1919 = vpop.f32.mrb[0].mxu0
      %v1920 = vadd.f32 0.0, %v1919
      %v1921 = vpop.f32.mrb[0].mxu0
      %1922 = vmatprep.mubr.bf16.mxu0 0
      %1923 = vmatmul.mubr.bf16.gmra.mrb[0].mxu0 %v1780
      %v1924 = vpop.f32.mrb[0].mxu0
      %v1925 = vadd.f32 0.0, %v1924
      %v1926 = vpop.f32.mrb[0].mxu0
      %v1927 = vpop.f32.mrb[0].mxu0
      %v1928 = vadd.f32 0.0, %v1927
      %v1929 = vpop.f32.mrb[0].mxu0
      %1930 = vmatprep.mubr.bf16.mxu0 0
      %1931 = vmatmul.mubr.bf16.gmra.mrb[0].mxu0 %v1783
      %v1932 = vpop.f32.mrb[0].mxu0
      %v1933 = vadd.f32 0.0, %v1932
      %v1934 = vpop.f32.mrb[0].mxu0
      %v1935 = vpop.f32.mrb[0].mxu0
      %v1936 = vadd.f32 0.0, %v1935
      %v1937 = vpop.f32.mrb[0].mxu0
      %1938 = vmatprep.mubr.bf16.mxu0 0
      %1939 = vmatmul.mubr.bf16.gmra.mrb[0].mxu0 %v1786
      %v1940 = vpop.f32.mrb[0].mxu0
      %v1941 = vadd.f32 0.0, %v1940
      %v1942 = vpop.f32.mrb[0].mxu0
      %v1943 = vpop.f32.mrb[0].mxu0
      %v1944 = vadd.f32 0.0, %v1943
      %v1945 = vpop.f32.mrb[0].mxu0
      %1946 = vmatprep.mubr.bf16.mxu0 0
      %1947 = vmatmul.mubr.bf16.gmra.mrb[0].mxu0 %v1789
      %v1948 = vpop.f32.mrb[0].mxu0
      %v1949 = vadd.f32 0.0, %v1948
      %v1950 = vpop.f32.mrb[0].mxu0
      %v1951 = vpop.f32.mrb[0].mxu0
      %v1952 = vadd.f32 0.0, %v1951
      %v1953 = vpop.f32.mrb[0].mxu0
      %1954 = vmatprep.mubr.bf16.mxu0 0
      %1955 = vmatmul.mubr.bf16.gmra.mrb[0].mxu0 %v1792
      %v1956 = vpop.f32.mrb[0].mxu0
      %v1957 = vadd.f32 0.0, %v1956
      %v1958 = vpop.f32.mrb[0].mxu0
      %v1959 = vpop.f32.mrb[0].mxu0
      %v1960 = vadd.f32 0.0, %v1959
      %v1961 = vpop.f32.mrb[0].mxu0
      %1962 = vmatprep.mubr.bf16.mxu0 0
      %1963 = vmatmul.mubr.bf16.gmra.mrb[0].mxu0 %v1795
      %v1964 = vpop.f32.mrb[0].mxu0
      %v1965 = vadd.f32 0.0, %v1964
      %v1966 = vpop.f32.mrb[0].mxu0
      %v1967 = vpop.f32.mrb[0].mxu0
      %v1968 = vadd.f32 0.0, %v1967
      %v1969 = vpop.f32.mrb[0].mxu0
      %1970 = vmatprep.mubr.bf16.mxu0 0
      %1971 = vmatmul.mubr.bf16.gmra.mrb[0].mxu0 %v1798
      %v1972 = vpop.f32.mrb[0].mxu0
      %v1973 = vadd.f32 0.0, %v1972
      %v1974 = vpop.f32.mrb[0].mxu0
      %v1975 = vpop.f32.mrb[0].mxu0
      %v1976 = vadd.f32 0.0, %v1975
      %v1977 = vpop.f32.mrb[0].mxu0
      %1978 = vmatprep.mubr.bf16.mxu0 0
      %1979 = vmatmul.mubr.bf16.gmra.mrb[0].mxu0 %v1801
      %v1980 = vpop.f32.mrb[0].mxu0
      %v1981 = vadd.f32 0.0, %v1980
      %v1982 = vpop.f32.mrb[0].mxu0
      %v1983 = vpop.f32.mrb[0].mxu0
      %v1984 = vadd.f32 0.0, %v1983
      %v1985 = vpop.f32.mrb[0].mxu0
      %1986 = vmatprep.mubr.bf16.mxu0 0
      %1987 = vmatmul.mubr.bf16.gmra.mrb[0].mxu0 %v1804
      %v1988 = vpop.f32.mrb[0].mxu0
      %v1989 = vadd.f32 0.0, %v1988
      %v1990 = vpop.f32.mrb[0].mxu0
      %v1991 = vpop.f32.mrb[0].mxu0
      %v1992 = vadd.f32 0.0, %v1991
      %v1993 = vpop.f32.mrb[0].mxu0
      %1994 = vmatprep.mubr.bf16.mxu0 0
      %1995 = vmatmul.mubr.bf16.gmra.mrb[0].mxu0 %v1807
      %v1996 = vpop.f32.mrb[0].mxu0
      %v1997 = vadd.f32 0.0, %v1996
      %v1998 = vpop.f32.mrb[0].mxu0
      %v1999 = vpop.f32.mrb[0].mxu0
      %v2000 = vadd.f32 0.0, %v1999
      %v2001 = vpop.f32.mrb[0].mxu0
      %2002 = vmatprep.mubr.bf16.mxu0 0
      %2003 = vmatmul.mubr.bf16.gmra.mrb[0].mxu0 %v1810
      %v2004 = vpop.f32.mrb[0].mxu0
      %v2005 = vadd.f32 0.0, %v2004
      %v2006 = vpop.f32.mrb[0].mxu0
      %v2007 = vpop.f32.mrb[0].mxu0
      %v2008 = vadd.f32 0.0, %v2007
      %v2009 = vpop.f32.mrb[0].mxu0
      %2010 = vmatprep.mubr.bf16.mxu0 0
      %2011 = vmatmul.mubr.bf16.gmra.mrb[0].mxu0 %v1813
      %v2012 = vpop.f32.mrb[0].mxu0
      %v2013 = vadd.f32 0.0, %v2012
      %v2014 = vpop.f32.mrb[0].mxu0
      %v2015 = vpop.f32.mrb[0].mxu0
      %v2016 = vadd.f32 0.0, %v2015
      %v2017 = vpop.f32.mrb[0].mxu0
      %2018 = vmatprep.mubr.bf16.mxu0 0
      %2019 = vmatmul.mubr.bf16.gmra.mrb[0].mxu0 %v1816
      %v2020 = vpop.f32.mrb[0].mxu0
      %v2021 = vadd.f32 0.0, %v2020
      %v2022 = vpop.f32.mrb[0].mxu0
      %v2023 = vpop.f32.mrb[0].mxu0
      %v2024 = vadd.f32 0.0, %v2023
      %v2025 = vpop.f32.mrb[0].mxu0
      %2026 = vmatprep.mubr.bf16.mxu0 0
      %2027 = vmatmul.mubr.bf16.gmra.mrb[0].mxu0 %v1819
      %v2028 = vpop.f32.mrb[0].mxu0
      %v2029 = vadd.f32 0.0, %v2028
      %v2030 = vpop.f32.mrb[0].mxu0
      %v2031 = vpop.f32.mrb[0].mxu0
      %v2032 = vadd.f32 0.0, %v2031
      %v2033 = vpop.f32.mrb[0].mxu0
      %2034 = vmatprep.mubr.bf16.mxu0 0
      %2035 = vmatmul.mubr.bf16.gmra.mrb[0].mxu0 %v1822
      %v2036 = vpop.f32.mrb[0].mxu0
      %v2037 = vadd.f32 0.0, %v2036
      %v2038 = vpop.f32.mrb[0].mxu0
      %v2039 = vpop.f32.mrb[0].mxu0
      %v2040 = vadd.f32 0.0, %v2039
      %v2041 = vpop.f32.mrb[0].mxu0
      %2042 = vmatprep.mubr.bf16.mxu0 0
      %2043 = vmatmul.mubr.bf16.gmra.mrb[0].mxu0 %v1825
      %v2044 = vpop.f32.mrb[0].mxu0
      %v2045 = vadd.f32 0.0, %v2044
      %v2046 = vpop.f32.mrb[0].mxu0
      %v2047 = vpop.f32.mrb[0].mxu0
      %v2048 = vadd.f32 0.0, %v2047
      %v2049 = vpop.f32.mrb[0].mxu0
      %2050 = vmatprep.mubr.bf16.mxu0 0
      %2051 = vmatmul.mubr.bf16.gmra.mrb[0].mxu0 %v1828
      %v2052 = vpop.f32.mrb[0].mxu0
      %v2053 = vadd.f32 0.0, %v2052
      %v2054 = vpop.f32.mrb[0].mxu0
      %v2055 = vpop.f32.mrb[0].mxu0
      %v2056 = vadd.f32 0.0, %v2055
      %v2057 = vpop.f32.mrb[0].mxu0
      %2058 = vmatprep.mubr.bf16.mxu0 0
      %2059 = vmatmul.mubr.bf16.gmra.mrb[0].mxu0 %v1831
      %v2060 = vpop.f32.mrb[0].mxu0
      %v2061 = vadd.f32 0.0, %v2060
      %v2062 = vpop.f32.mrb[0].mxu0
      %v2063 = vpop.f32.mrb[0].mxu0
      %v2064 = vadd.f32 0.0, %v2063
      %v2065 = vpop.f32.mrb[0].mxu0
      %2066 = vmatprep.mubr.bf16.mxu0 0
      %2067 = vmatmul.mubr.bf16.gmra.mrb[0].mxu0 %v1834
      %v2068 = vpop.f32.mrb[0].mxu0
      %v2069 = vadd.f32 0.0, %v2068
      %v2070 = vpop.f32.mrb[0].mxu0
      %v2071 = vpop.f32.mrb[0].mxu0
      %v2072 = vadd.f32 0.0, %v2071
      %v2073 = vpop.f32.mrb[0].mxu0
      %2074 = vmatprep.mubr.bf16.mxu0 0
      %2075 = vmatmul.mubr.bf16.gmra.mrb[0].mxu0 %v1837
      %v2076 = vpop.f32.mrb[0].mxu0
      %v2077 = vadd.f32 0.0, %v2076
      %v2078 = vpop.f32.mrb[0].mxu0
      %v2079 = vpop.f32.mrb[0].mxu0
      %v2080 = vadd.f32 0.0, %v2079
      %v2081 = vpop.f32.mrb[0].mxu0
      %2082 = vmatprep.mubr.bf16.mxu0 0
      %2083 = vmatmul.mubr.bf16.gmra.mrb[0].mxu0 %v1840
      %v2084 = vpop.f32.mrb[0].mxu0
      %v2085 = vadd.f32 0.0, %v2084
      %v2086 = vpop.f32.mrb[0].mxu0
      %v2087 = vpop.f32.mrb[0].mxu0
      %v2088 = vadd.f32 0.0, %v2087
      %v2089 = vpop.f32.mrb[0].mxu0
      %2090 = vmatprep.mubr.bf16.mxu0 0
      %2091 = vmatmul.mubr.bf16.gmra.mrb[0].mxu0 %v1843
      %v2092 = vpop.f32.mrb[0].mxu0
      %v2093 = vadd.f32 0.0, %v2092
      %v2094 = vpop.f32.mrb[0].mxu0
      %v2095 = vpop.f32.mrb[0].mxu0
      %v2096 = vadd.f32 0.0, %v2095
      %v2097 = vpop.f32.mrb[0].mxu0
      %2098 = vmatprep.mubr.bf16.mxu0 0
      %2099 = vmatmul.mubr.bf16.gmra.mrb[0].mxu0 %v1846
      %v2100 = vpop.f32.mrb[0].mxu0
      %v2101 = vadd.f32 0.0, %v2100
      %v2102 = vpop.f32.mrb[0].mxu0
      %v2103 = vpop.f32.mrb[0].mxu0
      %v2104 = vadd.f32 0.0, %v2103
      %v2105 = vpop.f32.mrb[0].mxu0
      %2106 = vmatprep.mubr.bf16.mxu0 0
      %2107 = vmatmul.mubr.bf16.gmra.mrb[0].mxu0 %v1849
      %v2108 = vpop.f32.mrb[0].mxu0
      %v2109 = vadd.f32 0.0, %v2108
      %v2110 = vpop.f32.mrb[0].mxu0
      %v2111 = vpop.f32.mrb[0].mxu0
      %v2112 = vadd.f32 0.0, %v2111
      %v2113 = vpop.f32.mrb[0].mxu0
      %2114 = vmatprep.mubr.bf16.mxu0 0
      %2115 = vmatmul.mubr.bf16.gmra.mrb[0].mxu0 %v1852
      %v2116 = vpop.f32.mrb[0].mxu0
      %v2117 = vadd.f32 0.0, %v2116
      %v2118 = vpop.f32.mrb[0].mxu0
      %v2119 = vpop.f32.mrb[0].mxu0
      %v2120 = vadd.f32 0.0, %v2119
      %v2121 = vpop.f32.mrb[0].mxu0
      %2122 = vmatprep.mubr.bf16.mxu0 0
      %2123 = vmatmul.mubr.bf16.gmra.mrb[0].mxu0 %v1855
      %v2124 = vpop.f32.mrb[0].mxu0
      %v2125 = vadd.f32 0.0, %v2124
      %v2126 = vpop.f32.mrb[0].mxu0
      %v2127 = vpop.f32.mrb[0].mxu0
      %v2128 = vadd.f32 0.0, %v2127
      %v2129 = vpop.f32.mrb[0].mxu0
      %2130 = vmatprep.mubr.bf16.mxu0 0
      %2131 = vmatmul.mubr.bf16.gmra.mrb[0].mxu0 %v1858
      %v2132 = vpop.f32.mrb[0].mxu0
      %v2133 = vadd.f32 0.0, %v2132
      %v2134 = vpop.f32.mrb[0].mxu0
      %v2135 = vpop.f32.mrb[0].mxu0
      %v2136 = vadd.f32 0.0, %v2135
      %v2137 = vpop.f32.mrb[0].mxu0
      %2138 = vmatprep.mubr.bf16.mxu0 0
      %2139 = vmatmul.mubr.bf16.gmra.mrb[0].mxu0 %v1861
      %v2140 = vpop.f32.mrb[0].mxu0
      %v2141 = vadd.f32 0.0, %v2140
      %v2142 = vpop.f32.mrb[0].mxu0
      %v2143 = vpop.f32.mrb[0].mxu0
      %v2144 = vadd.f32 0.0, %v2143
      %v2145 = vpop.f32.mrb[0].mxu0
      %2146 = vmatprep.mubr.bf16.mxu0 0
      %2147 = vmatmul.mubr.bf16.gmra.mrb[0].mxu0 %v1864
      %v2148 = vpop.f32.mrb[0].mxu0
      %v2149 = vadd.f32 0.0, %v2148
      %v2150 = vpop.f32.mrb[0].mxu0
      %v2151 = vpop.f32.mrb[0].mxu0
      %v2152 = vadd.f32 0.0, %v2151
      %v2153 = vpop.f32.mrb[0].mxu0
      %2154 = vdwg.mxu0
      %v2155 = vadd.f32 %v1469, %v1901
      %v2156 = vadd.f32 %v1470, %v1904
      %v2157 = vadd.f32 %v1471, %v1909
      %v2158 = vadd.f32 %v1472, %v1912
      %v2159 = vadd.f32 %v1473, %v1917
      %v2160 = vadd.f32 %v1474, %v1920
      %v2161 = vadd.f32 %v1475, %v1925
      %v2162 = vadd.f32 %v1476, %v1928
      %v2163 = vadd.f32 %v1477, %v1933
      %v2164 = vadd.f32 %v1478, %v1936
      %v2165 = vadd.f32 %v1479, %v1941
      %v2166 = vadd.f32 %v1480, %v1944
      %v2167 = vadd.f32 %v1481, %v1949
      %v2168 = vadd.f32 %v1482, %v1952
      %v2169 = vadd.f32 %v1483, %v1957
      %v2170 = vadd.f32 %v1484, %v1960
      %v2171 = vadd.f32 %v1485, %v1965
      %v2172 = vadd.f32 %v1486, %v1968
      %v2173 = vadd.f32 %v1487, %v1973
      %v2174 = vadd.f32 %v1488, %v1976
      %v2175 = vadd.f32 %v1489, %v1981
      %v2176 = vadd.f32 %v1490, %v1984
      %v2177 = vadd.f32 %v1491, %v1989
      %v2178 = vadd.f32 %v1492, %v1992
      %v2179 = vadd.f32 %v1493, %v1997
      %v2180 = vadd.f32 %v1494, %v2000
      %v2181 = vadd.f32 %v1495, %v2005
      %v2182 = vadd.f32 %v1496, %v2008
      %v2183 = vadd.f32 %v1497, %v2013
      %v2184 = vadd.f32 %v1498, %v2016
      %v2185 = vadd.f32 %v1499, %v2021
      %v2186 = vadd.f32 %v1500, %v2024
      %v2187 = vadd.f32 %v1501, %v2029
      %v2188 = vadd.f32 %v1502, %v2032
      %v2189 = vadd.f32 %v1503, %v2037
      %v2190 = vadd.f32 %v1504, %v2040
      %v2191 = vadd.f32 %v1505, %v2045
      %v2192 = vadd.f32 %v1506, %v2048
      %v2193 = vadd.f32 %v1507, %v2053
      %v2194 = vadd.f32 %v1508, %v2056
      %v2195 = vadd.f32 %v1509, %v2061
      %v2196 = vadd.f32 %v1510, %v2064
      %v2197 = vadd.f32 %v1511, %v2069
      %v2198 = vadd.f32 %v1512, %v2072
      %v2199 = vadd.f32 %v1513, %v2077
      %v2200 = vadd.f32 %v1514, %v2080
      %v2201 = vadd.f32 %v1515, %v2085
      %v2202 = vadd.f32 %v1516, %v2088
      %v2203 = vadd.f32 %v1517, %v2093
      %v2204 = vadd.f32 %v1518, %v2096
      %v2205 = vadd.f32 %v1519, %v2101
      %v2206 = vadd.f32 %v1520, %v2104
      %v2207 = vadd.f32 %v1521, %v2109
      %v2208 = vadd.f32 %v1522, %v2112
      %v2209 = vadd.f32 %v1523, %v2117
      %v2210 = vadd.f32 %v1524, %v2120
      %v2211 = vadd.f32 %v1525, %v2125
      %v2212 = vadd.f32 %v1526, %v2128
      %v2213 = vadd.f32 %v1527, %v2133
      %v2214 = vadd.f32 %v1528, %v2136
      %v2215 = vadd.f32 %v1529, %v2141
      %v2216 = vadd.f32 %v1530, %v2144
      %v2217 = vadd.f32 %v1531, %v2149
      %v2218 = vadd.f32 %v1532, %v2152
      %v2219 = vpack.c.bf16 %v2156, %v2155
      %v2220 = vpack.c.bf16 %v2158, %v2157
      %v2221 = vpack.c.bf16 %v2160, %v2159
      %v2222 = vpack.c.bf16 %v2162, %v2161
      %v2223 = vpack.c.bf16 %v2164, %v2163
      %v2224 = vpack.c.bf16 %v2166, %v2165
      %v2225 = vpack.c.bf16 %v2168, %v2167
      %v2226 = vpack.c.bf16 %v2170, %v2169
      %v2227 = vpack.c.bf16 %v2172, %v2171
      %v2228 = vpack.c.bf16 %v2174, %v2173
      %v2229 = vpack.c.bf16 %v2176, %v2175
      %v2230 = vpack.c.bf16 %v2178, %v2177
      %v2231 = vpack.c.bf16 %v2180, %v2179
      %v2232 = vpack.c.bf16 %v2182, %v2181
      %v2233 = vpack.c.bf16 %v2184, %v2183
      %v2234 = vpack.c.bf16 %v2186, %v2185
      %v2235 = vpack.c.bf16 %v2188, %v2187
      %v2236 = vpack.c.bf16 %v2190, %v2189
      %v2237 = vpack.c.bf16 %v2192, %v2191
      %v2238 = vpack.c.bf16 %v2194, %v2193
      %v2239 = vpack.c.bf16 %v2196, %v2195
      %v2240 = vpack.c.bf16 %v2198, %v2197
      %v2241 = vpack.c.bf16 %v2200, %v2199
      %v2242 = vpack.c.bf16 %v2202, %v2201
      %v2243 = vpack.c.bf16 %v2204, %v2203
      %v2244 = vpack.c.bf16 %v2206, %v2205
      %v2245 = vpack.c.bf16 %v2208, %v2207
      %v2246 = vpack.c.bf16 %v2210, %v2209
      %v2247 = vpack.c.bf16 %v2212, %v2211
      %v2248 = vpack.c.bf16 %v2214, %v2213
      %v2249 = vpack.c.bf16 %v2216, %v2215
      %v2250 = vpack.c.bf16 %v2218, %v2217
      %v2283 = vunpack.c.l.b16 %v2219
      %v2284 = vunpack.c.h.b16 %v2219
      %v2285 = vunpack.c.l.b16 %v2220
      %v2286 = vunpack.c.h.b16 %v2220
      %v2287 = vunpack.c.l.b16 %v2221
      %v2288 = vunpack.c.h.b16 %v2221
      %v2289 = vunpack.c.l.b16 %v2222
      %v2290 = vunpack.c.h.b16 %v2222
      %v2291 = vunpack.c.l.b16 %v2223
      %v2292 = vunpack.c.h.b16 %v2223
      %v2293 = vunpack.c.l.b16 %v2224
      %v2294 = vunpack.c.h.b16 %v2224
      %v2295 = vunpack.c.l.b16 %v2225
      %v2296 = vunpack.c.h.b16 %v2225
      %v2297 = vunpack.c.l.b16 %v2226
      %v2298 = vunpack.c.h.b16 %v2226
      %v2299 = vunpack.c.l.b16 %v2227
      %v2300 = vunpack.c.h.b16 %v2227
      %v2301 = vunpack.c.l.b16 %v2228
      %v2302 = vunpack.c.h.b16 %v2228
      %v2303 = vunpack.c.l.b16 %v2229
      %v2304 = vunpack.c.h.b16 %v2229
      %v2305 = vunpack.c.l.b16 %v2230
      %v2306 = vunpack.c.h.b16 %v2230
      %v2307 = vunpack.c.l.b16 %v2231
      %v2308 = vunpack.c.h.b16 %v2231
      %v2309 = vunpack.c.l.b16 %v2232
      %v2310 = vunpack.c.h.b16 %v2232
      %v2311 = vunpack.c.l.b16 %v2233
      %v2312 = vunpack.c.h.b16 %v2233
      %v2313 = vunpack.c.l.b16 %v2234
      %v2314 = vunpack.c.h.b16 %v2234
      %v2315 = vunpack.c.l.b16 %v2235
      %v2316 = vunpack.c.h.b16 %v2235
      %v2317 = vunpack.c.l.b16 %v2236
      %v2318 = vunpack.c.h.b16 %v2236
      %v2319 = vunpack.c.l.b16 %v2237
      %v2320 = vunpack.c.h.b16 %v2237
      %v2321 = vunpack.c.l.b16 %v2238
      %v2322 = vunpack.c.h.b16 %v2238
      %v2323 = vunpack.c.l.b16 %v2239
      %v2324 = vunpack.c.h.b16 %v2239
      %v2325 = vunpack.c.l.b16 %v2240
      %v2326 = vunpack.c.h.b16 %v2240
      %v2327 = vunpack.c.l.b16 %v2241
      %v2328 = vunpack.c.h.b16 %v2241
      %v2329 = vunpack.c.l.b16 %v2242
      %v2330 = vunpack.c.h.b16 %v2242
      %v2331 = vunpack.c.l.b16 %v2243
      %v2332 = vunpack.c.h.b16 %v2243
      %v2333 = vunpack.c.l.b16 %v2244
      %v2334 = vunpack.c.h.b16 %v2244
      %v2335 = vunpack.c.l.b16 %v2245
      %v2336 = vunpack.c.h.b16 %v2245
      %v2337 = vunpack.c.l.b16 %v2246
      %v2338 = vunpack.c.h.b16 %v2246
      %v2339 = vunpack.c.l.b16 %v2247
      %v2340 = vunpack.c.h.b16 %v2247
      %v2341 = vunpack.c.l.b16 %v2248
      %v2342 = vunpack.c.h.b16 %v2248
      %v2343 = vunpack.c.l.b16 %v2249
      %v2344 = vunpack.c.h.b16 %v2249
      %v2345 = vunpack.c.l.b16 %v2250
      %v2346 = vunpack.c.h.b16 %v2250
      %v2347 = vpack.c.b16 %v2283, %v2283
      %v2348 = vpack.c.b16 %v2284, %v2284
      %v2349 = vpack.c.b16 %v2285, %v2285
      %v2350 = vpack.c.b16 %v2286, %v2286
      %v2351 = vpack.c.b16 %v2287, %v2287
      %v2352 = vpack.c.b16 %v2288, %v2288
      %v2353 = vpack.c.b16 %v2289, %v2289
      %v2354 = vpack.c.b16 %v2290, %v2290
      %v2355 = vpack.c.b16 %v2291, %v2291
      %v2356 = vpack.c.b16 %v2292, %v2292
      %v2357 = vpack.c.b16 %v2293, %v2293
      %v2358 = vpack.c.b16 %v2294, %v2294
      %v2359 = vpack.c.b16 %v2295, %v2295
      %v2360 = vpack.c.b16 %v2296, %v2296
      %v2361 = vpack.c.b16 %v2297, %v2297
      %v2362 = vpack.c.b16 %v2298, %v2298
      %v2363 = vpack.c.b16 %v2299, %v2299
      %v2364 = vpack.c.b16 %v2300, %v2300
      %v2365 = vpack.c.b16 %v2301, %v2301
      %v2366 = vpack.c.b16 %v2302, %v2302
      %v2367 = vpack.c.b16 %v2303, %v2303
      %v2368 = vpack.c.b16 %v2304, %v2304
      %v2369 = vpack.c.b16 %v2305, %v2305
      %v2370 = vpack.c.b16 %v2306, %v2306
      %v2371 = vpack.c.b16 %v2307, %v2307
      %v2372 = vpack.c.b16 %v2308, %v2308
      %v2373 = vpack.c.b16 %v2309, %v2309
      %v2374 = vpack.c.b16 %v2310, %v2310
      %v2375 = vpack.c.b16 %v2311, %v2311
      %v2376 = vpack.c.b16 %v2312, %v2312
      %v2377 = vpack.c.b16 %v2313, %v2313
      %v2378 = vpack.c.b16 %v2314, %v2314
      %v2379 = vpack.c.b16 %v2315, %v2315
      %v2380 = vpack.c.b16 %v2316, %v2316
      %v2381 = vpack.c.b16 %v2317, %v2317
      %v2382 = vpack.c.b16 %v2318, %v2318
      %v2383 = vpack.c.b16 %v2319, %v2319
      %v2384 = vpack.c.b16 %v2320, %v2320
      %v2385 = vpack.c.b16 %v2321, %v2321
      %v2386 = vpack.c.b16 %v2322, %v2322
      %v2387 = vpack.c.b16 %v2323, %v2323
      %v2388 = vpack.c.b16 %v2324, %v2324
      %v2389 = vpack.c.b16 %v2325, %v2325
      %v2390 = vpack.c.b16 %v2326, %v2326
      %v2391 = vpack.c.b16 %v2327, %v2327
      %v2392 = vpack.c.b16 %v2328, %v2328
      %v2393 = vpack.c.b16 %v2329, %v2329
      %v2394 = vpack.c.b16 %v2330, %v2330
      %v2395 = vpack.c.b16 %v2331, %v2331
      %v2396 = vpack.c.b16 %v2332, %v2332
      %v2397 = vpack.c.b16 %v2333, %v2333
      %v2398 = vpack.c.b16 %v2334, %v2334
      %v2399 = vpack.c.b16 %v2335, %v2335
      %v2400 = vpack.c.b16 %v2336, %v2336
      %v2401 = vpack.c.b16 %v2337, %v2337
      %v2402 = vpack.c.b16 %v2338, %v2338
      %v2403 = vpack.c.b16 %v2339, %v2339
      %v2404 = vpack.c.b16 %v2340, %v2340
      %v2405 = vpack.c.b16 %v2341, %v2341
      %v2406 = vpack.c.b16 %v2342, %v2342
      %v2407 = vpack.c.b16 %v2343, %v2343
      %v2408 = vpack.c.b16 %v2344, %v2344
      %v2409 = vpack.c.b16 %v2345, %v2345
      %v2410 = vpack.c.b16 %v2346, %v2346
      %2475 = vst [vmem:[%s150] sm:$0xf] %v2347
      %2476 = vst [vmem:[%s150 + $0x4] sm:$0xf] %v2348
      %2477 = vst [vmem:[%s150 + $0x8] sm:$0xf] %v2349
      %2478 = vst [vmem:[%s150 + $0xc] sm:$0xf] %v2350
      %2479 = vst [vmem:[%s150 + $0x10] sm:$0xf] %v2351
      %2480 = vst [vmem:[%s150 + $0x14] sm:$0xf] %v2352
      %2481 = vst [vmem:[%s150 + $0x18] sm:$0xf] %v2353
      %2482 = vst [vmem:[%s150 + $0x1c] sm:$0xf] %v2354
      %2483 = vst [vmem:[%s150 + $0x20] sm:$0xf] %v2355
      %2484 = vst [vmem:[%s150 + $0x24] sm:$0xf] %v2356
      %2485 = vst [vmem:[%s150 + $0x28] sm:$0xf] %v2357
      %2486 = vst [vmem:[%s150 + $0x2c] sm:$0xf] %v2358
      %2487 = vst [vmem:[%s150 + $0x30] sm:$0xf] %v2359
      %2488 = vst [vmem:[%s150 + $0x34] sm:$0xf] %v2360
      %2489 = vst [vmem:[%s150 + $0x38] sm:$0xf] %v2361
      %2490 = vst [vmem:[%s150 + $0x3c] sm:$0xf] %v2362
      %2491 = vst [vmem:[%s150 + $0x40] sm:$0xf] %v2363
      %2492 = vst [vmem:[%s150 + $0x44] sm:$0xf] %v2364
      %2493 = vst [vmem:[%s150 + $0x48] sm:$0xf] %v2365
      %2494 = vst [vmem:[%s150 + $0x4c] sm:$0xf] %v2366
      %2495 = vst [vmem:[%s150 + $0x50] sm:$0xf] %v2367
      %2496 = vst [vmem:[%s150 + $0x54] sm:$0xf] %v2368
      %2497 = vst [vmem:[%s150 + $0x58] sm:$0xf] %v2369
      %2498 = vst [vmem:[%s150 + $0x5c] sm:$0xf] %v2370
      %2499 = vst [vmem:[%s150 + $0x60] sm:$0xf] %v2371
      %2500 = vst [vmem:[%s150 + $0x64] sm:$0xf] %v2372
      %2501 = vst [vmem:[%s150 + $0x68] sm:$0xf] %v2373
      %2502 = vst [vmem:[%s150 + $0x6c] sm:$0xf] %v2374
      %2503 = vst [vmem:[%s150 + $0x70] sm:$0xf] %v2375
      %2504 = vst [vmem:[%s150 + $0x74] sm:$0xf] %v2376
      %2505 = vst [vmem:[%s150 + $0x78] sm:$0xf] %v2377
      %2506 = vst [vmem:[%s150 + $0x7c] sm:$0xf] %v2378
      %2507 = vst [vmem:[%s150 + $0x80] sm:$0xf] %v2379
      %2508 = vst [vmem:[%s150 + $0x84] sm:$0xf] %v2380
      %2509 = vst [vmem:[%s150 + $0x88] sm:$0xf] %v2381
      %2510 = vst [vmem:[%s150 + $0x8c] sm:$0xf] %v2382
      %2511 = vst [vmem:[%s150 + $0x90] sm:$0xf] %v2383
      %2512 = vst [vmem:[%s150 + $0x94] sm:$0xf] %v2384
      %2513 = vst [vmem:[%s150 + $0x98] sm:$0xf] %v2385
      %2514 = vst [vmem:[%s150 + $0x9c] sm:$0xf] %v2386
      %2515 = vst [vmem:[%s150 + $0xa0] sm:$0xf] %v2387
      %2516 = vst [vmem:[%s150 + $0xa4] sm:$0xf] %v2388
      %2517 = vst [vmem:[%s150 + $0xa8] sm:$0xf] %v2389
      %2518 = vst [vmem:[%s150 + $0xac] sm:$0xf] %v2390
      %2519 = vst [vmem:[%s150 + $0xb0] sm:$0xf] %v2391
      %2520 = vst [vmem:[%s150 + $0xb4] sm:$0xf] %v2392
      %2521 = vst [vmem:[%s150 + $0xb8] sm:$0xf] %v2393
      %2522 = vst [vmem:[%s150 + $0xbc] sm:$0xf] %v2394
      %2523 = vst [vmem:[%s150 + $0xc0] sm:$0xf] %v2395
      %2524 = vst [vmem:[%s150 + $0xc4] sm:$0xf] %v2396
      %2525 = vst [vmem:[%s150 + $0xc8] sm:$0xf] %v2397
      %2526 = vst [vmem:[%s150 + $0xcc] sm:$0xf] %v2398
      %2527 = vst [vmem:[%s150 + $0xd0] sm:$0xf] %v2399
      %2528 = vst [vmem:[%s150 + $0xd4] sm:$0xf] %v2400
      %2529 = vst [vmem:[%s150 + $0xd8] sm:$0xf] %v2401
      %2530 = vst [vmem:[%s150 + $0xdc] sm:$0xf] %v2402
      %2531 = vst [vmem:[%s150 + $0xe0] sm:$0xf] %v2403
      %2532 = vst [vmem:[%s150 + $0xe4] sm:$0xf] %v2404
      %2533 = vst [vmem:[%s150 + $0xe8] sm:$0xf] %v2405
      %2534 = vst [vmem:[%s150 + $0xec] sm:$0xf] %v2406
      %2535 = vst [vmem:[%s150 + $0xf0] sm:$0xf] %v2407
      %2536 = vst [vmem:[%s150 + $0xf4] sm:$0xf] %v2408
      %2537 = vst [vmem:[%s150 + $0xf8] sm:$0xf] %v2409
      %2538 = vst [vmem:[%s150 + $0xfc] sm:$0xf] %v2410
      %s2539 = smul.u32 64, %s14
      %p2540 = scmp.lt.s32.totalorder %s2539, 127
      %s2541 = scalar_select %p2540, %s2539, 127
      %s2542 = smul.addr %s2541, 4
      %s2543 = scalar_lea.vmem %s3, %s2542
      // Predicated region
      $region33: #{launet_stage1.11} parent=31 // pred_check
        %p2544 = pneg %p95
      $region34: #{launet_stage1.11} parent=31 // pred_check_branch
        %2546 = sbr.rel (%p2544) target = $region36
      $region35: #{launet_stage1.11} parent=31 // pred_region
        %s2547 = smul.u32 64, %s14
      $region36: #{launet_stage1.11} parent=31 // pred_fallthru
        _
    $region32: #{launet_stage1.11} parent=5 // pred_fallthru
      _
    %p2548 = scmp.le.s32.totalorder 2, %s9
    // Predicated region
    $region37: #{launet_stage1.11} parent=5 // pred_check
      %p2549 = pneg %p2548
    $region38: #{launet_stage1.11} parent=5 // pred_check_branch
      %2551 = sbr.rel (%p2549) target = $region40
    $region39: #{launet_stage1.11} parent=5 // pred_region
      %s2552 = ssub.s32 %s9, 2
      // Predicated region
      $region41: #{launet_stage1.11} parent=39 // pred_check
        %p2553 = pneg %p101
      $region42: #{launet_stage1.11} parent=39 // pred_check_branch
        %2555 = sbr.rel (%p2553) target = $region44
      $region43: #{launet_stage1.11} parent=39 // pred_region
        %s2556 = smul.u32 64, %s15
        %p2557 = scmp.lt.s32.totalorder %s2556, 127
        %s2558 = scalar_select %p2557, %s2556, 127
        %s2559 = smul.addr %s2558, 4
        %s2560 = scalar_lea.vmem %s3, %s2559
      $region44: #{launet_stage1.11} parent=39 // pred_fallthru
        _
    $region40: #{launet_stage1.11} parent=5 // pred_fallthru
      _
  $region6: #{launet_stage1.11} parent=0 // loop_footer
    %s13 = sadd.s32 1, %s9
  $region7: #{launet_stage1.11} parent=0 // loop_footer_branch
    %8 = sbr.rel target = $region3
  $region8: #{launet_stage1.11} parent=0 // loop_exit
    _

// kernel: launet_stage1.13
$region0: #{launet_stage1.13}
  #allocation0 [shape = 'u32[]', space=smem, size = 0x4, offset = 0x4, fixed_abs, tag = 'smem constant byte address 0x4 - core index']
  #allocation1 [shape = 'u32[144,128]{1,0:T(1,128)}', space=vmem, size = 0x12000, scoped, tag = 'internal scratch']
  %s0 = inlined_call_operand.vmem [shape: bf16[4,45,27], index: 0, kind: input, shape index: {}]
  %s1 = inlined_call_operand.vmem [shape: bf16[4,27,128], index: 1, kind: input, shape index: {}]
  %s2 = inlined_call_operand.vmem [shape: f32[4,1,128], index: 2, kind: input, shape index: {}]
  %s3 = inlined_call_operand.vmem [shape: bf16[4,45,128], index: 3, kind: output, shape index: {}]
  %s4 = sld [smem:[#allocation0]]
  $region45: #{launet_stage1.13} parent=0
    _
  %s6 = ssub.s32 1, %s4
  %s7 = scalar_select 0, %s6, %s4
  loop: start=0, step=1, limit=6
  $region2: #{launet_stage1.13} parent=0 // loop_pre_header
    _
  $region3: #{launet_stage1.13} parent=0 // loop_header
    %s9 = sphi 0, %s13
    %p10 = scmp.ge.s32.totalorder %s9, 6
    %s16 = sphi 0, %s28
    %s17 = sphi 0, %s24
    %s18 = sphi 0, %s16
    %s19 = sphi 0, %s17
    %s20 = sphi 0, %s18
    %s21 = sphi 0, %s19
    %s33 = sphi 0, %s35
    %s36 = sphi 0, %s33
    %s37 = sphi 0, %s36
    %s53 = sphi 0, %s37
    %s59 = sphi 0, %s61
    %s62 = sphi 0, %s59
    %s63 = sphi 0, %s62
    %s79 = sphi 0, %s63
    %s85 = sphi 0, %s87
    %s88 = sphi 0, %s85
    %s89 = sphi 0, %s88
    %s105 = sphi 0, %s89
    %s113 = sphi 0, %s115
    %s116 = sphi 0, %s113
    %s117 = sphi 0, %s116
    %s133 = sphi 0, %s117
  $region4: #{launet_stage1.13} parent=0 // loop_header_branch
    %12 = sbr.rel (%p10) target = $region8
  $region5: #{launet_stage1.13} parent=0 // loop_body
    %s14 = ssub.s32 %s9, 1
    %s15 = ssub.s32 %s9, 2
    %s22 = sadd.s32 1, %s17
    %p23 = scmp.ge.s32.totalorder %s22, 1
    %s24 = scalar_select %p23, 0, %s22
    %s25 = sadd.s32 1, %s16
    %s26 = scalar_select %p23, %s25, %s16
    %p27 = scmp.ge.s32.totalorder %s26, 4
    %s28 = scalar_select %p27, 0, %s26
    %s29 = ssub.s32 %s16, %s28
    %s30 = ssub.s32 %s17, %s24
    %s31 = sor.u32 %s29, %s30
    %p32 = scmp.eq.s32.totalorder %s31, 0
    %s34 = sadd.s32 %s33, 1
    %s35 = scalar_select %p32, %s33, %s34
    %p38 = pneg %p32
    %p39 = scmp.eq.s32.totalorder %s9, 3
    %p40 = por %p38, %p39
    %p41 = scmp.ne.s32.totalorder %s33, %s36
    %p42 = scmp.eq.s32.totalorder %s9, 0
    %p43 = por %p41, %p42
    %p44 = scmp.ne.s32.totalorder %s33, %s36
    %p45 = scmp.eq.s32.totalorder %s14, 3
    %p46 = por %p44, %p45
    %p47 = scmp.ne.s32.totalorder %s36, %s37
    %p48 = scmp.eq.s32.totalorder %s14, 0
    %p49 = por %p47, %p48
    %p50 = scmp.ne.s32.totalorder %s36, %s37
    %p51 = scmp.eq.s32.totalorder %s15, 3
    %p52 = por %p50, %p51
    %p54 = scmp.ne.s32.totalorder %s37, %s53
    %p55 = scmp.eq.s32.totalorder %s15, 0
    %p56 = por %p54, %p55
    %s57 = ssub.s32 %s16, %s28
    %p58 = scmp.eq.s32.totalorder %s57, 0
    %s60 = sadd.s32 %s59, 1
    %s61 = scalar_select %p58, %s59, %s60
    %p64 = pneg %p58
    %p65 = scmp.eq.s32.totalorder %s9, 3
    %p66 = por %p64, %p65
    %p67 = scmp.ne.s32.totalorder %s59, %s62
    %p68 = scmp.eq.s32.totalorder %s9, 0
    %p69 = por %p67, %p68
    %p70 = scmp.ne.s32.totalorder %s59, %s62
    %p71 = scmp.eq.s32.totalorder %s14, 3
    %p72 = por %p70, %p71
    %p73 = scmp.ne.s32.totalorder %s62, %s63
    %p74 = scmp.eq.s32.totalorder %s14, 0
    %p75 = por %p73, %p74
    %p76 = scmp.ne.s32.totalorder %s62, %s63
    %p77 = scmp.eq.s32.totalorder %s15, 3
    %p78 = por %p76, %p77
    %p80 = scmp.ne.s32.totalorder %s63, %s79
    %p81 = scmp.eq.s32.totalorder %s15, 0
    %p82 = por %p80, %p81
    %s83 = ssub.s32 %s16, %s28
    %p84 = scmp.eq.s32.totalorder %s83, 0
    %s86 = sadd.s32 %s85, 1
    %s87 = scalar_select %p84, %s85, %s86
    %p90 = pneg %p84
    %p91 = scmp.eq.s32.totalorder %s9, 3
    %p92 = por %p90, %p91
    %p93 = scmp.ne.s32.totalorder %s85, %s88
    %p94 = scmp.eq.s32.totalorder %s9, 0
    %p95 = por %p93, %p94
    %p96 = scmp.ne.s32.totalorder %s85, %s88
    %p97 = scmp.eq.s32.totalorder %s14, 3
    %p98 = por %p96, %p97
    %p99 = scmp.ne.s32.totalorder %s88, %s89
    %p100 = scmp.eq.s32.totalorder %s14, 0
    %p101 = por %p99, %p100
    %p102 = scmp.ne.s32.totalorder %s88, %s89
    %p103 = scmp.eq.s32.totalorder %s15, 3
    %p104 = por %p102, %p103
    %p106 = scmp.ne.s32.totalorder %s89, %s105
    %p107 = scmp.eq.s32.totalorder %s15, 0
    %p108 = por %p106, %p107
    %s109 = ssub.s32 %s16, %s28
    %s110 = ssub.s32 %s17, %s24
    %s111 = sor.u32 %s109, %s110
    %p112 = scmp.eq.s32.totalorder %s111, 0
    %s114 = sadd.s32 %s113, 1
    %s115 = scalar_select %p112, %s113, %s114
    %p118 = pneg %p112
    %p119 = scmp.eq.s32.totalorder %s9, 3
    %p120 = por %p118, %p119
    %p121 = scmp.ne.s32.totalorder %s113, %s116
    %p122 = scmp.eq.s32.totalorder %s9, 0
    %p123 = por %p121, %p122
    %p124 = scmp.ne.s32.totalorder %s113, %s116
    %p125 = scmp.eq.s32.totalorder %s14, 3
    %p126 = por %p124, %p125
    %p127 = scmp.ne.s32.totalorder %s116, %s117
    %p128 = scmp.eq.s32.totalorder %s14, 0
    %p129 = por %p127, %p128
    %p130 = scmp.ne.s32.totalorder %s116, %s117
    %p131 = scmp.eq.s32.totalorder %s15, 3
    %p132 = por %p130, %p131
    %p134 = scmp.ne.s32.totalorder %s117, %s133
    %p135 = scmp.eq.s32.totalorder %s15, 0
    %p136 = por %p134, %p135
    %p137 = scmp.le.s32.totalorder 1, %s9
    %p138 = scmp.lt.s32.totalorder %s9, 5
    %p139 = pnand %p137, %p138
    %p140 = pneg %p139
    // Predicated region
    $region9: #{launet_stage1.13} parent=5 // pred_check
      _
    $region10: #{launet_stage1.13} parent=5 // pred_check_branch
      %142 = sbr.rel (%p139) target = $region12
    $region11: #{launet_stage1.13} parent=5 // pred_region
      %s143 = ssub.s32 %s9, 1
    $region12: #{launet_stage1.13} parent=5 // pred_fallthru
      _
    %p144 = scmp.lt.s32.totalorder %s9, 4
    // Predicated region
    $region13: #{launet_stage1.13} parent=5 // pred_check
      %p145 = pneg %p144
    $region14: #{launet_stage1.13} parent=5 // pred_check_branch
      %147 = sbr.rel (%p145) target = $region16
    $region15: #{launet_stage1.13} parent=5 // pred_region
      // Predicated region
      $region17: #{launet_stage1.13} parent=15 // pred_check
        %p148 = pneg %p43
      $region18: #{launet_stage1.13} parent=15 // pred_check_branch
        %150 = sbr.rel (%p148) target = $region20
      $region19: #{launet_stage1.13} parent=15 // pred_region
        %s151 = smul.u32 6, %s17
        %p152 = scmp.lt.s32.totalorder %s16, 3
        %s153 = scalar_select %p152, %s16, 3
        %p154 = scmp.lt.s32.totalorder %s151, 5
        %s155 = scalar_select %p154, %s151, 5
        %s156 = smul.addr %s153, 6
        %s157 = sadd.s32 %s155, %s156
        %s158 = smul.addr %s157, 4
        %s159 = scalar_lea.vmem %s0, %s158
        %s160 = smul.u32 6, %s17
      $region20: #{launet_stage1.13} parent=15 // pred_fallthru
        _
      // Predicated region
      $region21: #{launet_stage1.13} parent=15 // pred_check
        %p161 = pneg %p69
      $region22: #{launet_stage1.13} parent=15 // pred_check_branch
        %163 = sbr.rel (%p161) target = $region24
      $region23: #{launet_stage1.13} parent=15 // pred_region
        %p164 = scmp.lt.s32.totalorder %s16, 3
        %s165 = scalar_select %p164, %s16, 3
        %s166 = smul.addr %s165, 4
        %s167 = smul.addr %s166, 4
        %s168 = scalar_lea.vmem %s1, %s167
      $region24: #{launet_stage1.13} parent=15 // pred_fallthru
        _
      // Predicated region
      $region25: #{launet_stage1.13} parent=15 // pred_check
        %p169 = pneg %p95
      $region26: #{launet_stage1.13} parent=15 // pred_check_branch
        %171 = sbr.rel (%p169) target = $region28
      $region27: #{launet_stage1.13} parent=15 // pred_region
        %p172 = scmp.lt.s32.totalorder %s16, 3
        %s173 = scalar_select %p172, %s16, 3
        %s174 = scalar_lea.vmem %s2, %s173
      $region28: #{launet_stage1.13} parent=15 // pred_fallthru
        _
    $region16: #{launet_stage1.13} parent=5 // pred_fallthru
      _
    %p175 = scmp.le.s32.totalorder 1, %s9
    %p176 = scmp.lt.s32.totalorder %s9, 5
    %p177 = pnand %p175, %p176
    %p178 = pneg %p177
    // Predicated region
    $region29: #{launet_stage1.13} parent=5 // pred_check
      _
    $region30: #{launet_stage1.13} parent=5 // pred_check_branch
      %180 = sbr.rel (%p177) target = $region32
    $region31: #{launet_stage1.13} parent=5 // pred_region
      %s181 = ssub.s32 %s9, 1
      %s182 = smul.u32 6, %s19
      %p183 = scmp.lt.s32.totalorder %s18, 3
      %s184 = scalar_select %p183, %s18, 3
      %p185 = scmp.lt.s32.totalorder %s182, 5
      %s186 = scalar_select %p185, %s182, 5
      %s187 = smul.addr %s184, 6
      %s188 = sadd.s32 %s186, %s187
      %s189 = smul.addr %s188, 4
      %s190 = scalar_lea.vmem %s0, %s189
      %p191 = pneg %p49
      %p192 = pneg %p46
      %p193 = scmp.lt.s32.totalorder %s18, 3
      %s194 = scalar_select %p193, %s18, 3
      %s195 = smul.addr %s194, 4
      %s196 = smul.addr %s195, 4
      %s197 = scalar_lea.vmem %s1, %s196
      %p198 = pneg %p75
      %p199 = pneg %p72
      %p200 = scmp.lt.s32.totalorder %s18, 3
      %s201 = scalar_select %p200, %s18, 3
      %s202 = scalar_lea.vmem %s2, %s201
      %p203 = pneg %p101
      %p204 = pneg %p98
      %p205 = pneg %p129
      %p206 = pneg %p126
      %s207 = smul.u32 6, %s19
      %p208 = scmp.lt.s32.totalorder %s18, 3
      %s209 = scalar_select %p208, %s18, 3
      %p210 = scmp.lt.s32.totalorder %s207, 5
      %s211 = scalar_select %p210, %s207, 5
      %s212 = smul.addr %s209, 6
      %s213 = sadd.s32 %s211, %s212
      %s214 = smul.addr %s213, 4
      %s215 = scalar_lea.vmem %s3, %s214
      %s216 = smul.u32 6, %s19
      %p217 = scmp.lt.s32.totalorder %s18, 3
      %s218 = scalar_select %p217, %s18, 3
      %p219 = scmp.lt.s32.totalorder %s216, 5
      %s220 = scalar_select %p219, %s216, 5
      %s221 = smul.addr %s218, 6
      %s222 = sadd.s32 %s220, %s221
      %s223 = smul.addr %s222, 4
      %s224 = scalar_lea.vmem %s0, %s223
      %s225 = smul.u32 6, %s19
      %p226 = scmp.lt.s32.totalorder %s18, 3
      %s227 = scalar_select %p226, %s18, 3
      %s228 = smul.addr %s227, 4
      %s229 = smul.addr %s228, 4
      %s230 = scalar_lea.vmem %s1, %s229
      %p231 = scmp.lt.s32.totalorder %s18, 3
      %s232 = scalar_select %p231, %s18, 3
      %s233 = scalar_lea.vmem %s2, %s232
      %s234 = smul.u32 6, %s19
      %p235 = scmp.lt.s32.totalorder %s18, 3
      %s236 = scalar_select %p235, %s18, 3
      %p237 = scmp.lt.s32.totalorder %s234, 5
      %s238 = scalar_select %p237, %s234, 5
      %s239 = smul.addr %s236, 6
      %s240 = sadd.s32 %s238, %s239
      %s241 = smul.addr %s240, 4
      %s242 = scalar_lea.vmem %s3, %s241
      %s243 = smul.u32 6, %s19
      %v245 = vld [vmem:[%s224] sm:$0xf]
      %v246 = vld [vmem:[%s224 + $0x4] sm:$0xf]
      %v247 = vld [vmem:[%s224 + $0x8] sm:$0xf]
      %v248 = vld [vmem:[%s224 + $0xc] sm:$0xf]
      %v249 = vld [vmem:[%s224 + $0x10] sm:$0xf]
      %v250 = vld [vmem:[%s224 + $0x14] sm:$0x7]
      %v251 = vld [vmem:[%s230] sm:$0xf]
      %v252 = vld [vmem:[%s230 + $0x4] sm:$0xf]
      %v253 = vld [vmem:[%s230 + $0x8] sm:$0xf]
      %v254 = vld [vmem:[%s230 + $0xc] sm:$0x3]
      %v255 = vld [vmem:[%s233] sm:$0x1]
      %v257 = vlaneseq
      %v258 = vshrl.u32 %v257, 7
      %v259 = vsub.s32 0, %v258
      %v260 = vrot.slane %v255, %v259
      %v268 = vunpack.c.l.b16 %v245
      %v269 = vunpack.c.l.b16 %v246
      %v270 = vunpack.c.l.b16 %v247
      %v271 = vunpack.c.l.b16 %v248
      %v272 = vunpack.c.l.b16 %v249
      %v273 = vunpack.c.l.b16 %v250
      %v274 = vpack.c.b16 %v269, %v268
      %v275 = vpack.c.b16 %v271, %v270
      %v276 = vpack.c.b16 %v273, %v272
      %v281 = vunpack.c.l.b16 %v251
      %v282 = vunpack.c.l.b16 %v252
      %v283 = vunpack.c.l.b16 %v253
      %v284 = vunpack.c.l.b16 %v254
      %v285 = vpack.c.b16 %v282, %v281
      %v286 = vpack.c.b16 %v284, %v283
      %vm288 = vcmask 220160
      %v290 = vsel %vm288, %v274, 0
      %v293 = vsel %vm288, %v275, 0
      %v296 = vsel %vm288, %v276, 0
      %vm298 = vcmask 1044480
      %vm299 = vcmask 1045504
      %v300 = vsel %vm298, 4294967295, 65535
      %v301 = vsel %vm299, %v300, 0
      %v303 = vand.u32 %v286, %v301
      %305 = vmatprep.subr.bf16.mxu0 0
      %306 = vmatpush1.bf16.msra.mxu0 %v285
      %307 = vmatprep.subr.bf16.mxu0 0
      %308 = vmatpush1.bf16.msra.mxu0 %v303
      %309 = vmatprep.subr.bf16.mxu0 0
      %310 = vmatpush1.bf16.msra.mxu0 0
      %311 = vmatprep.subr.bf16.mxu0 0
      %312 = vmatpush1.bf16.msra.mxu0 0
      %313 = vmatprep.subr.bf16.mxu0 0
      %314 = vmatpush1.bf16.msra.mxu0 0
      %315 = vmatprep.subr.bf16.mxu0 0
      %316 = vmatpush1.bf16.msra.mxu0 0
      %317 = vmatprep.subr.bf16.mxu0 0
      %318 = vmatpush1.bf16.msra.mxu0 0
      %319 = vmatprep.subr.bf16.mxu0 0
      %320 = vmatpush1.bf16.msra.mxu0 0
      %321 = vmatprep.subr.bf16.mxu0 0
      %322 = vmatpush1.bf16.msra.mxu0 0
      %323 = vmatprep.subr.bf16.mxu0 0
      %324 = vmatpush1.bf16.msra.mxu0 0
      %325 = vmatprep.subr.bf16.mxu0 0
      %326 = vmatpush1.bf16.msra.mxu0 0
      %327 = vmatprep.subr.bf16.mxu0 0
      %328 = vmatpush1.bf16.msra.mxu0 0
      %329 = vmatprep.subr.bf16.mxu0 0
      %330 = vmatpush1.bf16.msra.mxu0 0
      %331 = vmatprep.subr.bf16.mxu0 0
      %332 = vmatpush1.bf16.msra.mxu0 0
      %333 = vmatprep.subr.bf16.mxu0 0
      %334 = vmatpush1.bf16.msra.mxu0 0
      %335 = vmatprep.subr.bf16.mxu0 0
      %336 = vmatpush1.bf16.msra.mxu0 0
      %337 = vmatprep.mubr.bf16.mxu0 0
      %338 = vmatmul.mubr.bf16.gmra.mrb[0].mxu0 %v290
      %v339 = vpop.f32.mrb[0].mxu0
      %v340 = vadd.f32 %v260, %v339
      %v341 = vpop.f32.mrb[0].mxu0
      %v342 = vpop.f32.mrb[0].mxu0
      %v343 = vadd.f32 %v260, %v342
      %v344 = vpop.f32.mrb[0].mxu0
      %345 = vmatprep.mubr.bf16.mxu0 0
      %346 = vmatmul.mubr.bf16.gmra.mrb[0].mxu0 %v293
      %v347 = vpop.f32.mrb[0].mxu0
      %v348 = vadd.f32 %v260, %v347
      %v349 = vpop.f32.mrb[0].mxu0
      %v350 = vpop.f32.mrb[0].mxu0
      %v351 = vadd.f32 %v260, %v350
      %v352 = vpop.f32.mrb[0].mxu0
      %353 = vmatprep.mubr.bf16.mxu0 0
      %354 = vmatmul.mubr.bf16.gmra.mrb[0].mxu0 %v296
      %v355 = vpop.f32.mrb[0].mxu0
      %v356 = vadd.f32 %v260, %v355
      %v357 = vpop.f32.mrb[0].mxu0
      %v358 = vpop.f32.mrb[0].mxu0
      %v359 = vadd.f32 %v260, %v358
      %v360 = vpop.f32.mrb[0].mxu0
      %361 = vdwg.mxu0
      %v362 = vmax.f32 %v340, 0.0
      %v363 = vmax.f32 %v343, 0.0
      %v364 = vmax.f32 %v348, 0.0
      %v365 = vmax.f32 %v351, 0.0
      %v366 = vmax.f32 %v356, 0.0
      %v367 = vmax.f32 %v359, 0.0
      %v368 = vpack.c.bf16 %v363, %v362
      %v369 = vpack.c.bf16 %v365, %v364
      %v370 = vpack.c.bf16 %v367, %v366
      %v374 = vunpack.c.l.b16 %v368
      %v375 = vunpack.c.h.b16 %v368
      %v376 = vunpack.c.l.b16 %v369
      %v377 = vunpack.c.h.b16 %v369
      %v378 = vunpack.c.l.b16 %v370
      %v379 = vunpack.c.h.b16 %v370
      %v380 = vpack.c.b16 %v374, %v374
      %v381 = vpack.c.b16 %v375, %v375
      %v382 = vpack.c.b16 %v376, %v376
      %v383 = vpack.c.b16 %v377, %v377
      %v384 = vpack.c.b16 %v378, %v378
      %v385 = vpack.c.b16 %v379, %v379
      %392 = vst [vmem:[%s242] sm:$0xf] %v380
      %393 = vst [vmem:[%s242 + $0x4] sm:$0xf] %v381
      %394 = vst [vmem:[%s242 + $0x8] sm:$0xf] %v382
      %395 = vst [vmem:[%s242 + $0xc] sm:$0xf] %v383
      %396 = vst [vmem:[%s242 + $0x10] sm:$0xf] %v384
      %vm397 = vcmask 1042432
      %vm398 = vsmask.f32 2304
      %vm399 = vmand %vm397, %vm398
      %v400 = vld [vmem:[%s242 + $0x14] sm:$0x7]
      %v401 = vsel %vm399, %v385, %v400
      %402 = vst [vmem:[%s242 + $0x14] sm:$0x7] %v401
      %s403 = smul.u32 6, %s19
      %p404 = scmp.lt.s32.totalorder %s18, 3
      %s405 = scalar_select %p404, %s18, 3
      %p406 = scmp.lt.s32.totalorder %s403, 5
      %s407 = scalar_select %p406, %s403, 5
      %s408 = smul.addr %s405, 6
      %s409 = sadd.s32 %s407, %s408
      %s410 = smul.addr %s409, 4
      %s411 = scalar_lea.vmem %s3, %s410
      // Predicated region
      $region33: #{launet_stage1.13} parent=31 // pred_check
        %p412 = pneg %p126
      $region34: #{launet_stage1.13} parent=31 // pred_check_branch
        %414 = sbr.rel (%p412) target = $region36
      $region35: #{launet_stage1.13} parent=31 // pred_region
        %s415 = smul.u32 6, %s19
      $region36: #{launet_stage1.13} parent=31 // pred_fallthru
        _
    $region32: #{launet_stage1.13} parent=5 // pred_fallthru
      _
    %p416 = scmp.le.s32.totalorder 2, %s9
    // Predicated region
    $region37: #{launet_stage1.13} parent=5 // pred_check
      %p417 = pneg %p416
    $region38: #{launet_stage1.13} parent=5 // pred_check_branch
      %419 = sbr.rel (%p417) target = $region40
    $region39: #{launet_stage1.13} parent=5 // pred_region
      %s420 = ssub.s32 %s9, 2
      // Predicated region
      $region41: #{launet_stage1.13} parent=39 // pred_check
        %p421 = pneg %p132
      $region42: #{launet_stage1.13} parent=39 // pred_check_branch
        %423 = sbr.rel (%p421) target = $region44
      $region43: #{launet_stage1.13} parent=39 // pred_region
        %s424 = smul.u32 6, %s21
        %p425 = scmp.lt.s32.totalorder %s20, 3
        %s426 = scalar_select %p425, %s20, 3
        %p427 = scmp.lt.s32.totalorder %s424, 5
        %s428 = scalar_select %p427, %s424, 5
        %s429 = smul.addr %s426, 6
        %s430 = sadd.s32 %s428, %s429
        %s431 = smul.addr %s430, 4
        %s432 = scalar_lea.vmem %s3, %s431
      $region44: #{launet_stage1.13} parent=39 // pred_fallthru
        _
    $region40: #{launet_stage1.13} parent=5 // pred_fallthru
      _
  $region6: #{launet_stage1.13} parent=0 // loop_footer
    %s13 = sadd.s32 1, %s9
  $region7: #{launet_stage1.13} parent=0 // loop_footer_branch
    %8 = sbr.rel target = $region3
  $region8: #{launet_stage1.13} parent=0 // loop_exit
    _

// kernel: launet_stage1.12
$region0: #{launet_stage1.12}
  #allocation0 [shape = 'u32[]', space=smem, size = 0x4, offset = 0x4, fixed_abs, tag = 'smem constant byte address 0x4 - core index']
  #allocation1 [shape = 'u32[144,128]{1,0:T(1,128)}', space=vmem, size = 0x12000, scoped, tag = 'internal scratch']
  %s0 = inlined_call_operand.vmem [shape: bf16[1088,192], index: 0, kind: input, shape index: {}]
  %s1 = inlined_call_operand.vmem [shape: bf16[576,128], index: 1, kind: input, shape index: {}]
  %s2 = inlined_call_operand.vmem [shape: f32[1,128], index: 2, kind: input, shape index: {}]
  %s3 = inlined_call_operand.vmem [shape: f32[1024,128], index: 3, kind: input, shape index: {}]
  %s4 = inlined_call_operand.vmem [shape: bf16[1024,128], index: 4, kind: output, shape index: {}]
  %s5 = sld [smem:[#allocation0]]
  $region49: #{launet_stage1.12} parent=0
    _
  %s7 = ssub.s32 1, %s5
  %s8 = scalar_select 0, %s7, %s5
  loop: start=0, step=1, limit=4
  $region2: #{launet_stage1.12} parent=0 // loop_pre_header
    _
  $region3: #{launet_stage1.12} parent=0 // loop_header
    %s10 = sphi 0, %s14
    %p11 = scmp.ge.s32.totalorder %s10, 4
    %s18 = sphi 0, %s18
    %s20 = sphi 0, %s18
    %s21 = sphi 0, %s20
    %s35 = sphi 0, %s21
    %s39 = sphi 0, %s39
    %s41 = sphi 0, %s39
    %s42 = sphi 0, %s41
    %s56 = sphi 0, %s42
    %s60 = sphi 0, %s60
    %s62 = sphi 0, %s60
    %s63 = sphi 0, %s62
    %s77 = sphi 0, %s63
    %s83 = sphi 0, %s85
    %s86 = sphi 0, %s83
    %s87 = sphi 0, %s86
    %s103 = sphi 0, %s87
    %s109 = sphi 0, %s111
    %s112 = sphi 0, %s109
    %s113 = sphi 0, %s112
    %s129 = sphi 0, %s113
  $region4: #{launet_stage1.12} parent=0 // loop_header_branch
    %13 = sbr.rel (%p11) target = $region8
  $region5: #{launet_stage1.12} parent=0 // loop_body
    %s15 = ssub.s32 %s10, 1
    %s16 = ssub.s32 %s10, 2
    %s17 = sadd.s32 %s10, 1
    %s19 = sadd.s32 %s18, 1
    %p22 = scmp.eq.s32.totalorder %s10, 1
    %p23 = scmp.ne.s32.totalorder %s18, %s20
    %p24 = scmp.eq.s32.totalorder %s10, 0
    %p25 = por %p23, %p24
    %p26 = scmp.ne.s32.totalorder %s18, %s20
    %p27 = scmp.eq.s32.totalorder %s15, 1
    %p28 = por %p26, %p27
    %p29 = scmp.ne.s32.totalorder %s20, %s21
    %p30 = scmp.eq.s32.totalorder %s15, 0
    %p31 = por %p29, %p30
    %p32 = scmp.ne.s32.totalorder %s20, %s21
    %p33 = scmp.eq.s32.totalorder %s16, 1
    %p34 = por %p32, %p33
    %p36 = scmp.ne.s32.totalorder %s21, %s35
    %p37 = scmp.eq.s32.totalorder %s16, 0
    %p38 = por %p36, %p37
    %s40 = sadd.s32 %s39, 1
    %p43 = scmp.eq.s32.totalorder %s10, 1
    %p44 = scmp.ne.s32.totalorder %s39, %s41
    %p45 = scmp.eq.s32.totalorder %s10, 0
    %p46 = por %p44, %p45
    %p47 = scmp.ne.s32.totalorder %s39, %s41
    %p48 = scmp.eq.s32.totalorder %s15, 1
    %p49 = por %p47, %p48
    %p50 = scmp.ne.s32.totalorder %s41, %s42
    %p51 = scmp.eq.s32.totalorder %s15, 0
    %p52 = por %p50, %p51
    %p53 = scmp.ne.s32.totalorder %s41, %s42
    %p54 = scmp.eq.s32.totalorder %s16, 1
    %p55 = por %p53, %p54
    %p57 = scmp.ne.s32.totalorder %s42, %s56
    %p58 = scmp.eq.s32.totalorder %s16, 0
    %p59 = por %p57, %p58
    %s61 = sadd.s32 %s60, 1
    %p64 = scmp.eq.s32.totalorder %s10, 1
    %p65 = scmp.ne.s32.totalorder %s60, %s62
    %p66 = scmp.eq.s32.totalorder %s10, 0
    %p67 = por %p65, %p66
    %p68 = scmp.ne.s32.totalorder %s60, %s62
    %p69 = scmp.eq.s32.totalorder %s15, 1
    %p70 = por %p68, %p69
    %p71 = scmp.ne.s32.totalorder %s62, %s63
    %p72 = scmp.eq.s32.totalorder %s15, 0
    %p73 = por %p71, %p72
    %p74 = scmp.ne.s32.totalorder %s62, %s63
    %p75 = scmp.eq.s32.totalorder %s16, 1
    %p76 = por %p74, %p75
    %p78 = scmp.ne.s32.totalorder %s63, %s77
    %p79 = scmp.eq.s32.totalorder %s16, 0
    %p80 = por %p78, %p79
    %s81 = ssub.s32 %s10, %s17
    %p82 = scmp.eq.s32.totalorder %s81, 0
    %s84 = sadd.s32 %s83, 1
    %s85 = scalar_select %p82, %s83, %s84
    %p88 = pneg %p82
    %p89 = scmp.eq.s32.totalorder %s10, 1
    %p90 = por %p88, %p89
    %p91 = scmp.ne.s32.totalorder %s83, %s86
    %p92 = scmp.eq.s32.totalorder %s10, 0
    %p93 = por %p91, %p92
    %p94 = scmp.ne.s32.totalorder %s83, %s86
    %p95 = scmp.eq.s32.totalorder %s15, 1
    %p96 = por %p94, %p95
    %p97 = scmp.ne.s32.totalorder %s86, %s87
    %p98 = scmp.eq.s32.totalorder %s15, 0
    %p99 = por %p97, %p98
    %p100 = scmp.ne.s32.totalorder %s86, %s87
    %p101 = scmp.eq.s32.totalorder %s16, 1
    %p102 = por %p100, %p101
    %p104 = scmp.ne.s32.totalorder %s87, %s103
    %p105 = scmp.eq.s32.totalorder %s16, 0
    %p106 = por %p104, %p105
    %s107 = ssub.s32 %s10, %s17
    %p108 = scmp.eq.s32.totalorder %s107, 0
    %s110 = sadd.s32 %s109, 1
    %s111 = scalar_select %p108, %s109, %s110
    %p114 = pneg %p108
    %p115 = scmp.eq.s32.totalorder %s10, 1
    %p116 = por %p114, %p115
    %p117 = scmp.ne.s32.totalorder %s109, %s112
    %p118 = scmp.eq.s32.totalorder %s10, 0
    %p119 = por %p117, %p118
    %p120 = scmp.ne.s32.totalorder %s109, %s112
    %p121 = scmp.eq.s32.totalorder %s15, 1
    %p122 = por %p120, %p121
    %p123 = scmp.ne.s32.totalorder %s112, %s113
    %p124 = scmp.eq.s32.totalorder %s15, 0
    %p125 = por %p123, %p124
    %p126 = scmp.ne.s32.totalorder %s112, %s113
    %p127 = scmp.eq.s32.totalorder %s16, 1
    %p128 = por %p126, %p127
    %p130 = scmp.ne.s32.totalorder %s113, %s129
    %p131 = scmp.eq.s32.totalorder %s16, 0
    %p132 = por %p130, %p131
    %p133 = scmp.le.s32.totalorder 1, %s10
    %p134 = scmp.lt.s32.totalorder %s10, 3
    %p135 = pnand %p133, %p134
    %p136 = pneg %p135
    // Predicated region
    $region9: #{launet_stage1.12} parent=5 // pred_check
      _
    $region10: #{launet_stage1.12} parent=5 // pred_check_branch
      %138 = sbr.rel (%p135) target = $region12
    $region11: #{launet_stage1.12} parent=5 // pred_region
      %s139 = ssub.s32 %s10, 1
      // Predicated region
      $region13: #{launet_stage1.12} parent=11 // pred_check
        %p140 = pneg %p31
      $region14: #{launet_stage1.12} parent=11 // pred_check_branch
        %142 = sbr.rel (%p140) target = $region16
      $region15: #{launet_stage1.12} parent=11 // pred_region
        _
      $region16: #{launet_stage1.12} parent=11 // pred_fallthru
        _
      // Predicated region
      $region17: #{launet_stage1.12} parent=11 // pred_check
        %p143 = pneg %p52
      $region18: #{launet_stage1.12} parent=11 // pred_check_branch
        %145 = sbr.rel (%p143) target = $region20
      $region19: #{launet_stage1.12} parent=11 // pred_region
        _
      $region20: #{launet_stage1.12} parent=11 // pred_fallthru
        _
      // Predicated region
      $region21: #{launet_stage1.12} parent=11 // pred_check
        %p146 = pneg %p73
      $region22: #{launet_stage1.12} parent=11 // pred_check_branch
        %148 = sbr.rel (%p146) target = $region24
      $region23: #{launet_stage1.12} parent=11 // pred_region
        _
      $region24: #{launet_stage1.12} parent=11 // pred_fallthru
        _
    $region12: #{launet_stage1.12} parent=5 // pred_fallthru
      _
    %p149 = scmp.lt.s32.totalorder %s10, 2
    // Predicated region
    $region25: #{launet_stage1.12} parent=5 // pred_check
      %p150 = pneg %p149
    $region26: #{launet_stage1.12} parent=5 // pred_check_branch
      %152 = sbr.rel (%p150) target = $region28
    $region27: #{launet_stage1.12} parent=5 // pred_region
      // Predicated region
      $region29: #{launet_stage1.12} parent=27 // pred_check
        %p153 = pneg %p93
      $region30: #{launet_stage1.12} parent=27 // pred_check_branch
        %155 = sbr.rel (%p153) target = $region32
      $region31: #{launet_stage1.12} parent=27 // pred_region
        %s156 = smul.u32 64, %s10
        %p157 = scmp.lt.s32.totalorder %s156, 127
        %s158 = scalar_select %p157, %s156, 127
        %s159 = smul.addr %s158, 8
        %s160 = scalar_lea.vmem %s3, %s159
        %s161 = smul.u32 64, %s10
      $region32: #{launet_stage1.12} parent=27 // pred_fallthru
        _
    $region28: #{launet_stage1.12} parent=5 // pred_fallthru
      _
    %p162 = scmp.le.s32.totalorder 1, %s10
    %p163 = scmp.lt.s32.totalorder %s10, 3
    %p164 = pnand %p162, %p163
    %p165 = pneg %p164
    // Predicated region
    $region33: #{launet_stage1.12} parent=5 // pred_check
      _
    $region34: #{launet_stage1.12} parent=5 // pred_check_branch
      %167 = sbr.rel (%p164) target = $region36
    $region35: #{launet_stage1.12} parent=5 // pred_region
      %s168 = ssub.s32 %s10, 1
      %p169 = pneg %p31
      %p170 = pneg %p28
      %p171 = pneg %p52
      %p172 = pneg %p49
      %p173 = pneg %p73
      %p174 = pneg %p70
      %s175 = smul.u32 64, %s15
      %p176 = scmp.lt.s32.totalorder %s175, 127
      %s177 = scalar_select %p176, %s175, 127
      %s178 = smul.addr %s177, 8
      %s179 = scalar_lea.vmem %s3, %s178
      %p180 = pneg %p99
      %p181 = pneg %p96
      %p182 = pneg %p125
      %p183 = pneg %p122
      %s184 = smul.u32 64, %s15
      %p185 = scmp.lt.s32.totalorder %s184, 127
      %s186 = scalar_select %p185, %s184, 127
      %s187 = smul.addr %s186, 4
      %s188 = scalar_lea.vmem %s4, %s187
      %s189 = smul.u32 64, %s15
      %p190 = scmp.lt.s32.totalorder %s189, 127
      %s191 = scalar_select %p190, %s189, 127
      %s192 = smul.addr %s191, 8
      %s193 = scalar_lea.vmem %s3, %s192
      %s194 = smul.u32 64, %s15
      %s195 = smul.u32 64, %s15
      %p196 = scmp.lt.s32.totalorder %s195, 127
      %s197 = scalar_select %p196, %s195, 127
      %s198 = smul.addr %s197, 4
      %s199 = scalar_lea.vmem %s4, %s198
      %s200 = smul.u32 64, %s15
      %s202 = smul.u32 %s15, 512
      %v203 = vld [vmem:[%s2] sm:$0x1]
      %s204 = sshra.s32 %s202, 3
      %s205 = sand.u32 %s202, 7
      %s206 = smul.u32 %s204, 2
      %s207 = smul.addr %s206, 4
      %s208 = scalar_lea.vmem %s0, %s207
      %v209 = vld [vmem:[%s208] sm:$0xff]
      %v210 = vld [vmem:[%s208 + $0x8] sm:$0xff]
      %v211 = vld [vmem:[%s208 + $0x10] sm:$0xff]
      %v212 = vld [vmem:[%s208 + $0x18] sm:$0xff]
      %v213 = vld [vmem:[%s208 + $0x20] sm:$0xff]
      %v214 = vld [vmem:[%s208 + $0x28] sm:$0xff]
      %v215 = vld [vmem:[%s208 + $0x30] sm:$0xff]
      %v216 = vld [vmem:[%s208 + $0x38] sm:$0xff]
      %v217 = vld [vmem:[%s208 + $0x40] sm:$0xff]
      %v218 = vld [vmem:[%s208 + $0x48] sm:$0xff]
      %v219 = vld [vmem:[%s208 + $0x50] sm:$0xff]
      %v220 = vld [vmem:[%s208 + $0x58] sm:$0xff]
      %v221 = vld [vmem:[%s208 + $0x60] sm:$0xff]
      %v222 = vld [vmem:[%s208 + $0x68] sm:$0xff]
      %v223 = vld [vmem:[%s208 + $0x70] sm:$0xff]
      %v224 = vld [vmem:[%s208 + $0x78] sm:$0xff]
      %v225 = vld [vmem:[%s208 + $0x80] sm:$0xff]
      %v226 = vld [vmem:[%s208 + $0x88] sm:$0xff]
      %v227 = vld [vmem:[%s208 + $0x90] sm:$0xff]
      %v228 = vld [vmem:[%s208 + $0x98] sm:$0xff]
      %v229 = vld [vmem:[%s208 + $0xa0] sm:$0xff]
      %v230 = vld [vmem:[%s208 + $0xa8] sm:$0xff]
      %v231 = vld [vmem:[%s208 + $0xb0] sm:$0xff]
      %v232 = vld [vmem:[%s208 + $0xb8] sm:$0xff]
      %v233 = vld [vmem:[%s208 + $0xc0] sm:$0xff]
      %v234 = vld [vmem:[%s208 + $0xc8] sm:$0xff]
      %v235 = vld [vmem:[%s208 + $0xd0] sm:$0xff]
      %v236 = vld [vmem:[%s208 + $0xd8] sm:$0xff]
      %v237 = vld [vmem:[%s208 + $0xe0] sm:$0xff]
      %v238 = vld [vmem:[%s208 + $0xe8] sm:$0xff]
      %v239 = vld [vmem:[%s208 + $0xf0] sm:$0xff]
      %v240 = vld [vmem:[%s208 + $0xf8] sm:$0xff]
      %v241 = vld [vmem:[%s208 + $0x100] sm:$0xff]
      %v242 = vld [vmem:[%s208 + $0x108] sm:$0xff]
      %v243 = vld [vmem:[%s208 + $0x110] sm:$0xff]
      %v244 = vld [vmem:[%s208 + $0x118] sm:$0xff]
      %v245 = vld [vmem:[%s208 + $0x120] sm:$0xff]
      %v246 = vld [vmem:[%s208 + $0x128] sm:$0xff]
      %v247 = vld [vmem:[%s208 + $0x130] sm:$0xff]
      %v248 = vld [vmem:[%s208 + $0x138] sm:$0xff]
      %v249 = vld [vmem:[%s208 + $0x140] sm:$0xff]
      %v250 = vld [vmem:[%s208 + $0x148] sm:$0xff]
      %v251 = vld [vmem:[%s208 + $0x150] sm:$0xff]
      %v252 = vld [vmem:[%s208 + $0x158] sm:$0xff]
      %v253 = vld [vmem:[%s208 + $0x160] sm:$0xff]
      %v254 = vld [vmem:[%s208 + $0x168] sm:$0xff]
      %v255 = vld [vmem:[%s208 + $0x170] sm:$0xff]
      %v256 = vld [vmem:[%s208 + $0x178] sm:$0xff]
      %v257 = vld [vmem:[%s208 + $0x180] sm:$0xff]
      %v258 = vld [vmem:[%s208 + $0x188] sm:$0xff]
      %v259 = vld [vmem:[%s208 + $0x190] sm:$0xff]
      %v260 = vld [vmem:[%s208 + $0x198] sm:$0xff]
      %v261 = vld [vmem:[%s208 + $0x1a0] sm:$0xff]
      %v262 = vld [vmem:[%s208 + $0x1a8] sm:$0xff]
      %v263 = vld [vmem:[%s208 + $0x1b0] sm:$0xff]
      %v264 = vld [vmem:[%s208 + $0x1b8] sm:$0xff]
      %v265 = vld [vmem:[%s208 + $0x1c0] sm:$0xff]
      %v266 = vld [vmem:[%s208 + $0x1c8] sm:$0xff]
      %v267 = vld [vmem:[%s208 + $0x1d0] sm:$0xff]
      %v268 = vld [vmem:[%s208 + $0x1d8] sm:$0xff]
      %v269 = vld [vmem:[%s208 + $0x1e0] sm:$0xff]
      %v270 = vld [vmem:[%s208 + $0x1e8] sm:$0xff]
      %v271 = vld [vmem:[%s208 + $0x1f0] sm:$0xff]
      %v272 = vld [vmem:[%s208 + $0x1f8] sm:$0xff]
      %v273 = vld [vmem:[%s1] sm:$0xf]
      %v274 = vld [vmem:[%s1 + $0x4] sm:$0xf]
      %v275 = vld [vmem:[%s1 + $0x8] sm:$0xf]
      %v276 = vld [vmem:[%s1 + $0xc] sm:$0xf]
      %v277 = vld [vmem:[%s1 + $0x10] sm:$0xf]
      %v278 = vld [vmem:[%s1 + $0x14] sm:$0xf]
      %v279 = vld [vmem:[%s1 + $0x18] sm:$0xf]
      %v280 = vld [vmem:[%s1 + $0x1c] sm:$0xf]
      %v281 = vld [vmem:[%s1 + $0x20] sm:$0xf]
      %v282 = vld [vmem:[%s1 + $0x24] sm:$0xf]
      %v283 = vld [vmem:[%s1 + $0x28] sm:$0xf]
      %v284 = vld [vmem:[%s1 + $0x2c] sm:$0xf]
      %v285 = vld [vmem:[%s1 + $0x30] sm:$0xf]
      %v286 = vld [vmem:[%s1 + $0x34] sm:$0xf]
      %v287 = vld [vmem:[%s1 + $0x38] sm:$0xf]
      %v288 = vld [vmem:[%s1 + $0x3c] sm:$0xf]
      %v289 = vld [vmem:[%s1 + $0x40] sm:$0xf]
      %v290 = vld [vmem:[%s1 + $0x44] sm:$0xf]
      %v291 = vld [vmem:[%s1 + $0x48] sm:$0xf]
      %v292 = vld [vmem:[%s1 + $0x4c] sm:$0xf]
      %v293 = vld [vmem:[%s1 + $0x50] sm:$0xf]
      %v294 = vld [vmem:[%s1 + $0x54] sm:$0xf]
      %v295 = vld [vmem:[%s1 + $0x58] sm:$0xf]
      %v296 = vld [vmem:[%s1 + $0x5c] sm:$0xf]
      %v361 = vunpack.c.l.b16 %v209
      %v362 = vunpack.c.h.b16 %v209
      %v363 = vunpack.c.l.b16 %v210
      %v364 = vunpack.c.h.b16 %v210
      %v365 = vunpack.c.l.b16 %v211
      %v366 = vunpack.c.h.b16 %v211
      %v367 = vunpack.c.l.b16 %v212
      %v368 = vunpack.c.h.b16 %v212
      %v369 = vunpack.c.l.b16 %v213
      %v370 = vunpack.c.h.b16 %v213
      %v371 = vunpack.c.l.b16 %v214
      %v372 = vunpack.c.h.b16 %v214
      %v373 = vunpack.c.l.b16 %v215
      %v374 = vunpack.c.h.b16 %v215
      %v375 = vunpack.c.l.b16 %v216
      %v376 = vunpack.c.h.b16 %v216
      %v377 = vunpack.c.l.b16 %v217
      %v378 = vunpack.c.h.b16 %v217
      %v379 = vunpack.c.l.b16 %v218
      %v380 = vunpack.c.h.b16 %v218
      %v381 = vunpack.c.l.b16 %v219
      %v382 = vunpack.c.h.b16 %v219
      %v383 = vunpack.c.l.b16 %v220
      %v384 = vunpack.c.h.b16 %v220
      %v385 = vunpack.c.l.b16 %v221
      %v386 = vunpack.c.h.b16 %v221
      %v387 = vunpack.c.l.b16 %v222
      %v388 = vunpack.c.h.b16 %v222
      %v389 = vunpack.c.l.b16 %v223
      %v390 = vunpack.c.h.b16 %v223
      %v391 = vunpack.c.l.b16 %v224
      %v392 = vunpack.c.h.b16 %v224
      %v393 = vunpack.c.l.b16 %v225
      %v394 = vunpack.c.h.b16 %v225
      %v395 = vunpack.c.l.b16 %v226
      %v396 = vunpack.c.h.b16 %v226
      %v397 = vunpack.c.l.b16 %v227
      %v398 = vunpack.c.h.b16 %v227
      %v399 = vunpack.c.l.b16 %v228
      %v400 = vunpack.c.h.b16 %v228
      %v401 = vunpack.c.l.b16 %v229
      %v402 = vunpack.c.h.b16 %v229
      %v403 = vunpack.c.l.b16 %v230
      %v404 = vunpack.c.h.b16 %v230
      %v405 = vunpack.c.l.b16 %v231
      %v406 = vunpack.c.h.b16 %v231
      %v407 = vunpack.c.l.b16 %v232
      %v408 = vunpack.c.h.b16 %v232
      %v409 = vunpack.c.l.b16 %v233
      %v410 = vunpack.c.h.b16 %v233
      %v411 = vunpack.c.l.b16 %v234
      %v412 = vunpack.c.h.b16 %v234
      %v413 = vunpack.c.l.b16 %v235
      %v414 = vunpack.c.h.b16 %v235
      %v415 = vunpack.c.l.b16 %v236
      %v416 = vunpack.c.h.b16 %v236
      %v417 = vunpack.c.l.b16 %v237
      %v418 = vunpack.c.h.b16 %v237
      %v419 = vunpack.c.l.b16 %v238
      %v420 = vunpack.c.h.b16 %v238
      %v421 = vunpack.c.l.b16 %v239
      %v422 = vunpack.c.h.b16 %v239
      %v423 = vunpack.c.l.b16 %v240
      %v424 = vunpack.c.h.b16 %v240
      %v425 = vunpack.c.l.b16 %v241
      %v426 = vunpack.c.h.b16 %v241
      %v427 = vunpack.c.l.b16 %v242
      %v428 = vunpack.c.h.b16 %v242
      %v429 = vunpack.c.l.b16 %v243
      %v430 = vunpack.c.h.b16 %v243
      %v431 = vunpack.c.l.b16 %v244
      %v432 = vunpack.c.h.b16 %v244
      %v433 = vunpack.c.l.b16 %v245
      %v434 = vunpack.c.h.b16 %v245
      %v435 = vunpack.c.l.b16 %v246
      %v436 = vunpack.c.h.b16 %v246
      %v437 = vunpack.c.l.b16 %v247
      %v438 = vunpack.c.h.b16 %v247
      %v439 = vunpack.c.l.b16 %v248
      %v440 = vunpack.c.h.b16 %v248
      %v441 = vunpack.c.l.b16 %v249
      %v442 = vunpack.c.h.b16 %v249
      %v443 = vunpack.c.l.b16 %v250
      %v444 = vunpack.c.h.b16 %v250
      %v445 = vunpack.c.l.b16 %v251
      %v446 = vunpack.c.h.b16 %v251
      %v447 = vunpack.c.l.b16 %v252
      %v448 = vunpack.c.h.b16 %v252
      %v449 = vunpack.c.l.b16 %v253
      %v450 = vunpack.c.h.b16 %v253
      %v451 = vunpack.c.l.b16 %v254
      %v452 = vunpack.c.h.b16 %v254
      %v453 = vunpack.c.l.b16 %v255
      %v454 = vunpack.c.h.b16 %v255
      %v455 = vunpack.c.l.b16 %v256
      %v456 = vunpack.c.h.b16 %v256
      %v457 = vunpack.c.l.b16 %v257
      %v458 = vunpack.c.h.b16 %v257
      %v459 = vunpack.c.l.b16 %v258
      %v460 = vunpack.c.h.b16 %v258
      %v461 = vunpack.c.l.b16 %v259
      %v462 = vunpack.c.h.b16 %v259
      %v463 = vunpack.c.l.b16 %v260
      %v464 = vunpack.c.h.b16 %v260
      %v465 = vunpack.c.l.b16 %v261
      %v466 = vunpack.c.h.b16 %v261
      %v467 = vunpack.c.l.b16 %v262
      %v468 = vunpack.c.h.b16 %v262
      %v469 = vunpack.c.l.b16 %v263
      %v470 = vunpack.c.h.b16 %v263
      %v471 = vunpack.c.l.b16 %v264
      %v472 = vunpack.c.h.b16 %v264
      %v473 = vunpack.c.l.b16 %v265
      %v474 = vunpack.c.h.b16 %v265
      %v475 = vunpack.c.l.b16 %v266
      %v476 = vunpack.c.h.b16 %v266
      %v477 = vunpack.c.l.b16 %v267
      %v478 = vunpack.c.h.b16 %v267
      %v479 = vunpack.c.l.b16 %v268
      %v480 = vunpack.c.h.b16 %v268
      %v481 = vunpack.c.l.b16 %v269
      %v482 = vunpack.c.h.b16 %v269
      %v483 = vunpack.c.l.b16 %v270
      %v484 = vunpack.c.h.b16 %v270
      %v485 = vunpack.c.l.b16 %v271
      %v486 = vunpack.c.h.b16 %v271
      %v487 = vunpack.c.l.b16 %v272
      %v488 = vunpack.c.h.b16 %v272
      %v489 = vpack.c.b16 %v363, %v361
      %v490 = vpack.c.b16 %v364, %v362
      %v491 = vpack.c.b16 %v367, %v365
      %v492 = vpack.c.b16 %v368, %v366
      %v493 = vpack.c.b16 %v371, %v369
      %v494 = vpack.c.b16 %v372, %v370
      %v495 = vpack.c.b16 %v375, %v373
      %v496 = vpack.c.b16 %v376, %v374
      %v497 = vpack.c.b16 %v379, %v377
      %v498 = vpack.c.b16 %v380, %v378
      %v499 = vpack.c.b16 %v383, %v381
      %v500 = vpack.c.b16 %v384, %v382
      %v501 = vpack.c.b16 %v387, %v385
      %v502 = vpack.c.b16 %v388, %v386
      %v503 = vpack.c.b16 %v391, %v389
      %v504 = vpack.c.b16 %v392, %v390
      %v505 = vpack.c.b16 %v395, %v393
      %v506 = vpack.c.b16 %v396, %v394
      %v507 = vpack.c.b16 %v399, %v397
      %v508 = vpack.c.b16 %v400, %v398
      %v509 = vpack.c.b16 %v403, %v401
      %v510 = vpack.c.b16 %v404, %v402
      %v511 = vpack.c.b16 %v407, %v405
      %v512 = vpack.c.b16 %v408, %v406
      %v513 = vpack.c.b16 %v411, %v409
      %v514 = vpack.c.b16 %v412, %v410
      %v515 = vpack.c.b16 %v415, %v413
      %v516 = vpack.c.b16 %v416, %v414
      %v517 = vpack.c.b16 %v419, %v417
      %v518 = vpack.c.b16 %v420, %v418
      %v519 = vpack.c.b16 %v423, %v421
      %v520 = vpack.c.b16 %v424, %v422
      %v521 = vpack.c.b16 %v427, %v425
      %v522 = vpack.c.b16 %v428, %v426
      %v523 = vpack.c.b16 %v431, %v429
      %v524 = vpack.c.b16 %v432, %v430
      %v525 = vpack.c.b16 %v435, %v433
      %v526 = vpack.c.b16 %v436, %v434
      %v527 = vpack.c.b16 %v439, %v437
      %v528 = vpack.c.b16 %v440, %v438
      %v529 = vpack.c.b16 %v443, %v441
      %v530 = vpack.c.b16 %v444, %v442
      %v531 = vpack.c.b16 %v447, %v445
      %v532 = vpack.c.b16 %v448, %v446
      %v533 = vpack.c.b16 %v451, %v449
      %v534 = vpack.c.b16 %v452, %v450
      %v535 = vpack.c.b16 %v455, %v453
      %v536 = vpack.c.b16 %v456, %v454
      %v537 = vpack.c.b16 %v459, %v457
      %v538 = vpack.c.b16 %v460, %v458
      %v539 = vpack.c.b16 %v463, %v461
      %v540 = vpack.c.b16 %v464, %v462
      %v541 = vpack.c.b16 %v467, %v465
      %v542 = vpack.c.b16 %v468, %v466
      %v543 = vpack.c.b16 %v471, %v469
      %v544 = vpack.c.b16 %v472, %v470
      %v545 = vpack.c.b16 %v475, %v473
      %v546 = vpack.c.b16 %v476, %v474
      %v547 = vpack.c.b16 %v479, %v477
      %v548 = vpack.c.b16 %v480, %v478
      %v549 = vpack.c.b16 %v483, %v481
      %v550 = vpack.c.b16 %v484, %v482
      %v551 = vpack.c.b16 %v487, %v485
      %v552 = vpack.c.b16 %v488, %v486
      %v609 = vunpack.c.l.b16 %v273
      %v610 = vunpack.c.l.b16 %v274
      %v611 = vunpack.c.l.b16 %v275
      %v612 = vunpack.c.l.b16 %v276
      %v613 = vunpack.c.l.b16 %v277
      %v614 = vunpack.c.l.b16 %v278
      %v615 = vunpack.c.l.b16 %v279
      %v616 = vunpack.c.l.b16 %v280
      %v617 = vunpack.c.l.b16 %v281
      %v618 = vunpack.c.l.b16 %v282
      %v619 = vunpack.c.l.b16 %v283
      %v620 = vunpack.c.l.b16 %v284
      %v621 = vunpack.c.l.b16 %v285
      %v622 = vunpack.c.l.b16 %v286
      %v623 = vunpack.c.l.b16 %v287
      %v624 = vunpack.c.l.b16 %v288
      %v625 = vunpack.c.l.b16 %v289
      %v626 = vunpack.c.l.b16 %v290
      %v627 = vunpack.c.l.b16 %v291
      %v628 = vunpack.c.l.b16 %v292
      %v629 = vunpack.c.l.b16 %v293
      %v630 = vunpack.c.l.b16 %v294
      %v631 = vunpack.c.l.b16 %v295
      %v632 = vunpack.c.l.b16 %v296
      %v633 = vpack.c.b16 %v610, %v609
      %v634 = vpack.c.b16 %v612, %v611
      %v635 = vpack.c.b16 %v614, %v613
      %v636 = vpack.c.b16 %v616, %v615
      %v637 = vpack.c.b16 %v618, %v617
      %v638 = vpack.c.b16 %v620, %v619
      %v639 = vpack.c.b16 %v622, %v621
      %v640 = vpack.c.b16 %v624, %v623
      %v641 = vpack.c.b16 %v626, %v625
      %v642 = vpack.c.b16 %v628, %v627
      %v643 = vpack.c.b16 %v630, %v629
      %v644 = vpack.c.b16 %v632, %v631
      %vm657 = vcmask 523264
      %v659 = vsel %vm657, %v490, 0
      %v662 = vsel %vm657, %v492, 0
      %v665 = vsel %vm657, %v494, 0
      %v668 = vsel %vm657, %v496, 0
      %v671 = vsel %vm657, %v498, 0
      %v674 = vsel %vm657, %v500, 0
      %v677 = vsel %vm657, %v502, 0
      %v680 = vsel %vm657, %v504, 0
      %v683 = vsel %vm657, %v506, 0
      %v686 = vsel %vm657, %v508, 0
      %v689 = vsel %vm657, %v510, 0
      %v692 = vsel %vm657, %v512, 0
      %v695 = vsel %vm657, %v514, 0
      %v698 = vsel %vm657, %v516, 0
      %v701 = vsel %vm657, %v518, 0
      %v704 = vsel %vm657, %v520, 0
      %v707 = vsel %vm657, %v522, 0
      %v710 = vsel %vm657, %v524, 0
      %v713 = vsel %vm657, %v526, 0
      %v716 = vsel %vm657, %v528, 0
      %v719 = vsel %vm657, %v530, 0
      %v722 = vsel %vm657, %v532, 0
      %v725 = vsel %vm657, %v534, 0
      %v728 = vsel %vm657, %v536, 0
      %v731 = vsel %vm657, %v538, 0
      %v734 = vsel %vm657, %v540, 0
      %v737 = vsel %vm657, %v542, 0
      %v740 = vsel %vm657, %v544, 0
      %v743 = vsel %vm657, %v546, 0
      %v746 = vsel %vm657, %v548, 0
      %v749 = vsel %vm657, %v550, 0
      %v752 = vsel %vm657, %v552, 0
      %754 = vmatprep.subr.bf16.mxu0 0
      %755 = vmatpush1.bf16.msra.mxu0 %v633
      %756 = vmatprep.subr.bf16.mxu0 0
      %757 = vmatpush1.bf16.msra.mxu0 %v634
      %758 = vmatprep.subr.bf16.mxu0 0
      %759 = vmatpush1.bf16.msra.mxu0 %v635
      %760 = vmatprep.subr.bf16.mxu0 0
      %761 = vmatpush1.bf16.msra.mxu0 %v636
      %762 = vmatprep.subr.bf16.mxu0 0
      %763 = vmatpush1.bf16.msra.mxu0 %v637
      %764 = vmatprep.subr.bf16.mxu0 0
      %765 = vmatpush1.bf16.msra.mxu0 %v638
      %766 = vmatprep.subr.bf16.mxu0 0
      %767 = vmatpush1.bf16.msra.mxu0 %v639
      %768 = vmatprep.subr.bf16.mxu0 0
      %769 = vmatpush1.bf16.msra.mxu0 %v640
      %770 = vmatprep.subr.bf16.mxu0 0
      %771 = vmatpush1.bf16.msra.mxu0 %v641
      %772 = vmatprep.subr.bf16.mxu0 0
      %773 = vmatpush1.bf16.msra.mxu0 %v642
      %774 = vmatprep.subr.bf16.mxu0 0
      %775 = vmatpush1.bf16.msra.mxu0 %v643
      %776 = vmatprep.subr.bf16.mxu0 0
      %777 = vmatpush1.bf16.msra.mxu0 %v644
      %778 = vmatprep.subr.bf16.mxu0 0
      %779 = vmatpush1.bf16.msra.mxu0 0
      %780 = vmatprep.subr.bf16.mxu0 0
      %781 = vmatpush1.bf16.msra.mxu0 0
      %782 = vmatprep.subr.bf16.mxu0 0
      %783 = vmatpush1.bf16.msra.mxu0 0
      %784 = vmatprep.subr.bf16.mxu0 0
      %785 = vmatpush1.bf16.msra.mxu0 0
      %786 = vmatprep.mubr.bf16.mxu0 %v659
      %787 = vmatmul.mubr.bf16.gmra.mrb[0].mxu0 %v489
      %v788 = vpop.f32.mrb[0].mxu0
      %v789 = vadd.f32 0.0, %v788
      %v790 = vpop.f32.mrb[0].mxu0
      %v791 = vpop.f32.mrb[0].mxu0
      %v792 = vadd.f32 0.0, %v791
      %v793 = vpop.f32.mrb[0].mxu0
      %794 = vmatprep.mubr.bf16.mxu0 %v662
      %795 = vmatmul.mubr.bf16.gmra.mrb[0].mxu0 %v491
      %v796 = vpop.f32.mrb[0].mxu0
      %v797 = vadd.f32 0.0, %v796
      %v798 = vpop.f32.mrb[0].mxu0
      %v799 = vpop.f32.mrb[0].mxu0
      %v800 = vadd.f32 0.0, %v799
      %v801 = vpop.f32.mrb[0].mxu0
      %802 = vmatprep.mubr.bf16.mxu0 %v665
      %803 = vmatmul.mubr.bf16.gmra.mrb[0].mxu0 %v493
      %v804 = vpop.f32.mrb[0].mxu0
      %v805 = vadd.f32 0.0, %v804
      %v806 = vpop.f32.mrb[0].mxu0
      %v807 = vpop.f32.mrb[0].mxu0
      %v808 = vadd.f32 0.0, %v807
      %v809 = vpop.f32.mrb[0].mxu0
      %810 = vmatprep.mubr.bf16.mxu0 %v668
      %811 = vmatmul.mubr.bf16.gmra.mrb[0].mxu0 %v495
      %v812 = vpop.f32.mrb[0].mxu0
      %v813 = vadd.f32 0.0, %v812
      %v814 = vpop.f32.mrb[0].mxu0
      %v815 = vpop.f32.mrb[0].mxu0
      %v816 = vadd.f32 0.0, %v815
      %v817 = vpop.f32.mrb[0].mxu0
      %818 = vmatprep.mubr.bf16.mxu0 %v671
      %819 = vmatmul.mubr.bf16.gmra.mrb[0].mxu0 %v497
      %v820 = vpop.f32.mrb[0].mxu0
      %v821 = vadd.f32 0.0, %v820
      %v822 = vpop.f32.mrb[0].mxu0
      %v823 = vpop.f32.mrb[0].mxu0
      %v824 = vadd.f32 0.0, %v823
      %v825 = vpop.f32.mrb[0].mxu0
      %826 = vmatprep.mubr.bf16.mxu0 %v674
      %827 = vmatmul.mubr.bf16.gmra.mrb[0].mxu0 %v499
      %v828 = vpop.f32.mrb[0].mxu0
      %v829 = vadd.f32 0.0, %v828
      %v830 = vpop.f32.mrb[0].mxu0
      %v831 = vpop.f32.mrb[0].mxu0
      %v832 = vadd.f32 0.0, %v831
      %v833 = vpop.f32.mrb[0].mxu0
      %834 = vmatprep.mubr.bf16.mxu0 %v677
      %835 = vmatmul.mubr.bf16.gmra.mrb[0].mxu0 %v501
      %v836 = vpop.f32.mrb[0].mxu0
      %v837 = vadd.f32 0.0, %v836
      %v838 = vpop.f32.mrb[0].mxu0
      %v839 = vpop.f32.mrb[0].mxu0
      %v840 = vadd.f32 0.0, %v839
      %v841 = vpop.f32.mrb[0].mxu0
      %842 = vmatprep.mubr.bf16.mxu0 %v680
      %843 = vmatmul.mubr.bf16.gmra.mrb[0].mxu0 %v503
      %v844 = vpop.f32.mrb[0].mxu0
      %v845 = vadd.f32 0.0, %v844
      %v846 = vpop.f32.mrb[0].mxu0
      %v847 = vpop.f32.mrb[0].mxu0
      %v848 = vadd.f32 0.0, %v847
      %v849 = vpop.f32.mrb[0].mxu0
      %850 = vmatprep.mubr.bf16.mxu0 %v683
      %851 = vmatmul.mubr.bf16.gmra.mrb[0].mxu0 %v505
      %v852 = vpop.f32.mrb[0].mxu0
      %v853 = vadd.f32 0.0, %v852
      %v854 = vpop.f32.mrb[0].mxu0
      %v855 = vpop.f32.mrb[0].mxu0
      %v856 = vadd.f32 0.0, %v855
      %v857 = vpop.f32.mrb[0].mxu0
      %858 = vmatprep.mubr.bf16.mxu0 %v686
      %859 = vmatmul.mubr.bf16.gmra.mrb[0].mxu0 %v507
      %v860 = vpop.f32.mrb[0].mxu0
      %v861 = vadd.f32 0.0, %v860
      %v862 = vpop.f32.mrb[0].mxu0
      %v863 = vpop.f32.mrb[0].mxu0
      %v864 = vadd.f32 0.0, %v863
      %v865 = vpop.f32.mrb[0].mxu0
      %866 = vmatprep.mubr.bf16.mxu0 %v689
      %867 = vmatmul.mubr.bf16.gmra.mrb[0].mxu0 %v509
      %v868 = vpop.f32.mrb[0].mxu0
      %v869 = vadd.f32 0.0, %v868
      %v870 = vpop.f32.mrb[0].mxu0
      %v871 = vpop.f32.mrb[0].mxu0
      %v872 = vadd.f32 0.0, %v871
      %v873 = vpop.f32.mrb[0].mxu0
      %874 = vmatprep.mubr.bf16.mxu0 %v692
      %875 = vmatmul.mubr.bf16.gmra.mrb[0].mxu0 %v511
      %v876 = vpop.f32.mrb[0].mxu0
      %v877 = vadd.f32 0.0, %v876
      %v878 = vpop.f32.mrb[0].mxu0
      %v879 = vpop.f32.mrb[0].mxu0
      %v880 = vadd.f32 0.0, %v879
      %v881 = vpop.f32.mrb[0].mxu0
      %882 = vmatprep.mubr.bf16.mxu0 %v695
      %883 = vmatmul.mubr.bf16.gmra.mrb[0].mxu0 %v513
      %v884 = vpop.f32.mrb[0].mxu0
      %v885 = vadd.f32 0.0, %v884
      %v886 = vpop.f32.mrb[0].mxu0
      %v887 = vpop.f32.mrb[0].mxu0
      %v888 = vadd.f32 0.0, %v887
      %v889 = vpop.f32.mrb[0].mxu0
      %890 = vmatprep.mubr.bf16.mxu0 %v698
      %891 = vmatmul.mubr.bf16.gmra.mrb[0].mxu0 %v515
      %v892 = vpop.f32.mrb[0].mxu0
      %v893 = vadd.f32 0.0, %v892
      %v894 = vpop.f32.mrb[0].mxu0
      %v895 = vpop.f32.mrb[0].mxu0
      %v896 = vadd.f32 0.0, %v895
      %v897 = vpop.f32.mrb[0].mxu0
      %898 = vmatprep.mubr.bf16.mxu0 %v701
      %899 = vmatmul.mubr.bf16.gmra.mrb[0].mxu0 %v517
      %v900 = vpop.f32.mrb[0].mxu0
      %v901 = vadd.f32 0.0, %v900
      %v902 = vpop.f32.mrb[0].mxu0
      %v903 = vpop.f32.mrb[0].mxu0
      %v904 = vadd.f32 0.0, %v903
      %v905 = vpop.f32.mrb[0].mxu0
      %906 = vmatprep.mubr.bf16.mxu0 %v704
      %907 = vmatmul.mubr.bf16.gmra.mrb[0].mxu0 %v519
      %v908 = vpop.f32.mrb[0].mxu0
      %v909 = vadd.f32 0.0, %v908
      %v910 = vpop.f32.mrb[0].mxu0
      %v911 = vpop.f32.mrb[0].mxu0
      %v912 = vadd.f32 0.0, %v911
      %v913 = vpop.f32.mrb[0].mxu0
      %914 = vmatprep.mubr.bf16.mxu0 %v707
      %915 = vmatmul.mubr.bf16.gmra.mrb[0].mxu0 %v521
      %v916 = vpop.f32.mrb[0].mxu0
      %v917 = vadd.f32 0.0, %v916
      %v918 = vpop.f32.mrb[0].mxu0
      %v919 = vpop.f32.mrb[0].mxu0
      %v920 = vadd.f32 0.0, %v919
      %v921 = vpop.f32.mrb[0].mxu0
      %922 = vmatprep.mubr.bf16.mxu0 %v710
      %923 = vmatmul.mubr.bf16.gmra.mrb[0].mxu0 %v523
      %v924 = vpop.f32.mrb[0].mxu0
      %v925 = vadd.f32 0.0, %v924
      %v926 = vpop.f32.mrb[0].mxu0
      %v927 = vpop.f32.mrb[0].mxu0
      %v928 = vadd.f32 0.0, %v927
      %v929 = vpop.f32.mrb[0].mxu0
      %930 = vmatprep.mubr.bf16.mxu0 %v713
      %931 = vmatmul.mubr.bf16.gmra.mrb[0].mxu0 %v525
      %v932 = vpop.f32.mrb[0].mxu0
      %v933 = vadd.f32 0.0, %v932
      %v934 = vpop.f32.mrb[0].mxu0
      %v935 = vpop.f32.mrb[0].mxu0
      %v936 = vadd.f32 0.0, %v935
      %v937 = vpop.f32.mrb[0].mxu0
      %938 = vmatprep.mubr.bf16.mxu0 %v716
      %939 = vmatmul.mubr.bf16.gmra.mrb[0].mxu0 %v527
      %v940 = vpop.f32.mrb[0].mxu0
      %v941 = vadd.f32 0.0, %v940
      %v942 = vpop.f32.mrb[0].mxu0
      %v943 = vpop.f32.mrb[0].mxu0
      %v944 = vadd.f32 0.0, %v943
      %v945 = vpop.f32.mrb[0].mxu0
      %946 = vmatprep.mubr.bf16.mxu0 %v719
      %947 = vmatmul.mubr.bf16.gmra.mrb[0].mxu0 %v529
      %v948 = vpop.f32.mrb[0].mxu0
      %v949 = vadd.f32 0.0, %v948
      %v950 = vpop.f32.mrb[0].mxu0
      %v951 = vpop.f32.mrb[0].mxu0
      %v952 = vadd.f32 0.0, %v951
      %v953 = vpop.f32.mrb[0].mxu0
      %954 = vmatprep.mubr.bf16.mxu0 %v722
      %955 = vmatmul.mubr.bf16.gmra.mrb[0].mxu0 %v531
      %v956 = vpop.f32.mrb[0].mxu0
      %v957 = vadd.f32 0.0, %v956
      %v958 = vpop.f32.mrb[0].mxu0
      %v959 = vpop.f32.mrb[0].mxu0
      %v960 = vadd.f32 0.0, %v959
      %v961 = vpop.f32.mrb[0].mxu0
      %962 = vmatprep.mubr.bf16.mxu0 %v725
      %963 = vmatmul.mubr.bf16.gmra.mrb[0].mxu0 %v533
      %v964 = vpop.f32.mrb[0].mxu0
      %v965 = vadd.f32 0.0, %v964
      %v966 = vpop.f32.mrb[0].mxu0
      %v967 = vpop.f32.mrb[0].mxu0
      %v968 = vadd.f32 0.0, %v967
      %v969 = vpop.f32.mrb[0].mxu0
      %970 = vmatprep.mubr.bf16.mxu0 %v728
      %971 = vmatmul.mubr.bf16.gmra.mrb[0].mxu0 %v535
      %v972 = vpop.f32.mrb[0].mxu0
      %v973 = vadd.f32 0.0, %v972
      %v974 = vpop.f32.mrb[0].mxu0
      %v975 = vpop.f32.mrb[0].mxu0
      %v976 = vadd.f32 0.0, %v975
      %v977 = vpop.f32.mrb[0].mxu0
      %978 = vmatprep.mubr.bf16.mxu0 %v731
      %979 = vmatmul.mubr.bf16.gmra.mrb[0].mxu0 %v537
      %v980 = vpop.f32.mrb[0].mxu0
      %v981 = vadd.f32 0.0, %v980
      %v982 = vpop.f32.mrb[0].mxu0
      %v983 = vpop.f32.mrb[0].mxu0
      %v984 = vadd.f32 0.0, %v983
      %v985 = vpop.f32.mrb[0].mxu0
      %986 = vmatprep.mubr.bf16.mxu0 %v734
      %987 = vmatmul.mubr.bf16.gmra.mrb[0].mxu0 %v539
      %v988 = vpop.f32.mrb[0].mxu0
      %v989 = vadd.f32 0.0, %v988
      %v990 = vpop.f32.mrb[0].mxu0
      %v991 = vpop.f32.mrb[0].mxu0
      %v992 = vadd.f32 0.0, %v991
      %v993 = vpop.f32.mrb[0].mxu0
      %994 = vmatprep.mubr.bf16.mxu0 %v737
      %995 = vmatmul.mubr.bf16.gmra.mrb[0].mxu0 %v541
      %v996 = vpop.f32.mrb[0].mxu0
      %v997 = vadd.f32 0.0, %v996
      %v998 = vpop.f32.mrb[0].mxu0
      %v999 = vpop.f32.mrb[0].mxu0
      %v1000 = vadd.f32 0.0, %v999
      %v1001 = vpop.f32.mrb[0].mxu0
      %1002 = vmatprep.mubr.bf16.mxu0 %v740
      %1003 = vmatmul.mubr.bf16.gmra.mrb[0].mxu0 %v543
      %v1004 = vpop.f32.mrb[0].mxu0
      %v1005 = vadd.f32 0.0, %v1004
      %v1006 = vpop.f32.mrb[0].mxu0
      %v1007 = vpop.f32.mrb[0].mxu0
      %v1008 = vadd.f32 0.0, %v1007
      %v1009 = vpop.f32.mrb[0].mxu0
      %1010 = vmatprep.mubr.bf16.mxu0 %v743
      %1011 = vmatmul.mubr.bf16.gmra.mrb[0].mxu0 %v545
      %v1012 = vpop.f32.mrb[0].mxu0
      %v1013 = vadd.f32 0.0, %v1012
      %v1014 = vpop.f32.mrb[0].mxu0
      %v1015 = vpop.f32.mrb[0].mxu0
      %v1016 = vadd.f32 0.0, %v1015
      %v1017 = vpop.f32.mrb[0].mxu0
      %1018 = vmatprep.mubr.bf16.mxu0 %v746
      %1019 = vmatmul.mubr.bf16.gmra.mrb[0].mxu0 %v547
      %v1020 = vpop.f32.mrb[0].mxu0
      %v1021 = vadd.f32 0.0, %v1020
      %v1022 = vpop.f32.mrb[0].mxu0
      %v1023 = vpop.f32.mrb[0].mxu0
      %v1024 = vadd.f32 0.0, %v1023
      %v1025 = vpop.f32.mrb[0].mxu0
      %1026 = vmatprep.mubr.bf16.mxu0 %v749
      %1027 = vmatmul.mubr.bf16.gmra.mrb[0].mxu0 %v549
      %v1028 = vpop.f32.mrb[0].mxu0
      %v1029 = vadd.f32 0.0, %v1028
      %v1030 = vpop.f32.mrb[0].mxu0
      %v1031 = vpop.f32.mrb[0].mxu0
      %v1032 = vadd.f32 0.0, %v1031
      %v1033 = vpop.f32.mrb[0].mxu0
      %1034 = vmatprep.mubr.bf16.mxu0 %v752
      %1035 = vmatmul.mubr.bf16.gmra.mrb[0].mxu0 %v551
      %v1036 = vpop.f32.mrb[0].mxu0
      %v1037 = vadd.f32 0.0, %v1036
      %v1038 = vpop.f32.mrb[0].mxu0
      %v1039 = vpop.f32.mrb[0].mxu0
      %v1040 = vadd.f32 0.0, %v1039
      %v1041 = vpop.f32.mrb[0].mxu0
      %1042 = vdwg.mxu0
      %v1044 = vlaneseq
      %v1045 = vshrl.u32 %v1044, 7
      %v1046 = vsub.s32 0, %v1045
      %v1047 = vrot.slane %v203, %v1046
      %v1049 = vadd.f32 %v1047, %v789
      %v1050 = vadd.f32 %v1047, %v792
      %v1051 = vadd.f32 %v1047, %v797
      %v1052 = vadd.f32 %v1047, %v800
      %v1053 = vadd.f32 %v1047, %v805
      %v1054 = vadd.f32 %v1047, %v808
      %v1055 = vadd.f32 %v1047, %v813
      %v1056 = vadd.f32 %v1047, %v816
      %v1057 = vadd.f32 %v1047, %v821
      %v1058 = vadd.f32 %v1047, %v824
      %v1059 = vadd.f32 %v1047, %v829
      %v1060 = vadd.f32 %v1047, %v832
      %v1061 = vadd.f32 %v1047, %v837
      %v1062 = vadd.f32 %v1047, %v840
      %v1063 = vadd.f32 %v1047, %v845
      %v1064 = vadd.f32 %v1047, %v848
      %v1065 = vadd.f32 %v1047, %v853
      %v1066 = vadd.f32 %v1047, %v856
      %v1067 = vadd.f32 %v1047, %v861
      %v1068 = vadd.f32 %v1047, %v864
      %v1069 = vadd.f32 %v1047, %v869
      %v1070 = vadd.f32 %v1047, %v872
      %v1071 = vadd.f32 %v1047, %v877
      %v1072 = vadd.f32 %v1047, %v880
      %v1073 = vadd.f32 %v1047, %v885
      %v1074 = vadd.f32 %v1047, %v888
      %v1075 = vadd.f32 %v1047, %v893
      %v1076 = vadd.f32 %v1047, %v896
      %v1077 = vadd.f32 %v1047, %v901
      %v1078 = vadd.f32 %v1047, %v904
      %v1079 = vadd.f32 %v1047, %v909
      %v1080 = vadd.f32 %v1047, %v912
      %v1081 = vadd.f32 %v1047, %v917
      %v1082 = vadd.f32 %v1047, %v920
      %v1083 = vadd.f32 %v1047, %v925
      %v1084 = vadd.f32 %v1047, %v928
      %v1085 = vadd.f32 %v1047, %v933
      %v1086 = vadd.f32 %v1047, %v936
      %v1087 = vadd.f32 %v1047, %v941
      %v1088 = vadd.f32 %v1047, %v944
      %v1089 = vadd.f32 %v1047, %v949
      %v1090 = vadd.f32 %v1047, %v952
      %v1091 = vadd.f32 %v1047, %v957
      %v1092 = vadd.f32 %v1047, %v960
      %v1093 = vadd.f32 %v1047, %v965
      %v1094 = vadd.f32 %v1047, %v968
      %v1095 = vadd.f32 %v1047, %v973
      %v1096 = vadd.f32 %v1047, %v976
      %v1097 = vadd.f32 %v1047, %v981
      %v1098 = vadd.f32 %v1047, %v984
      %v1099 = vadd.f32 %v1047, %v989
      %v1100 = vadd.f32 %v1047, %v992
      %v1101 = vadd.f32 %v1047, %v997
      %v1102 = vadd.f32 %v1047, %v1000
      %v1103 = vadd.f32 %v1047, %v1005
      %v1104 = vadd.f32 %v1047, %v1008
      %v1105 = vadd.f32 %v1047, %v1013
      %v1106 = vadd.f32 %v1047, %v1016
      %v1107 = vadd.f32 %v1047, %v1021
      %v1108 = vadd.f32 %v1047, %v1024
      %v1109 = vadd.f32 %v1047, %v1029
      %v1110 = vadd.f32 %v1047, %v1032
      %v1111 = vadd.f32 %v1047, %v1037
      %v1112 = vadd.f32 %v1047, %v1040
      %s1113 = sadd.s32 %s202, 32
      %s1114 = sshra.s32 %s1113, 3
      %s1115 = sand.u32 %s1113, 7
      %s1116 = smul.u32 %s1114, 2
      %s1117 = smul.addr %s1116, 4
      %s1118 = scalar_lea.vmem %s0, %s1117
      %v1119 = vld [vmem:[%s1118] sm:$0xff]
      %v1120 = vld [vmem:[%s1118 + $0x8] sm:$0xff]
      %v1121 = vld [vmem:[%s1118 + $0x10] sm:$0xff]
      %v1122 = vld [vmem:[%s1118 + $0x18] sm:$0xff]
      %v1123 = vld [vmem:[%s1118 + $0x20] sm:$0xff]
      %v1124 = vld [vmem:[%s1118 + $0x28] sm:$0xff]
      %v1125 = vld [vmem:[%s1118 + $0x30] sm:$0xff]
      %v1126 = vld [vmem:[%s1118 + $0x38] sm:$0xff]
      %v1127 = vld [vmem:[%s1118 + $0x40] sm:$0xff]
      %v1128 = vld [vmem:[%s1118 + $0x48] sm:$0xff]
      %v1129 = vld [vmem:[%s1118 + $0x50] sm:$0xff]
      %v1130 = vld [vmem:[%s1118 + $0x58] sm:$0xff]
      %v1131 = vld [vmem:[%s1118 + $0x60] sm:$0xff]
      %v1132 = vld [vmem:[%s1118 + $0x68] sm:$0xff]
      %v1133 = vld [vmem:[%s1118 + $0x70] sm:$0xff]
      %v1134 = vld [vmem:[%s1118 + $0x78] sm:$0xff]
      %v1135 = vld [vmem:[%s1118 + $0x80] sm:$0xff]
      %v1136 = vld [vmem:[%s1118 + $0x88] sm:$0xff]
      %v1137 = vld [vmem:[%s1118 + $0x90] sm:$0xff]
      %v1138 = vld [vmem:[%s1118 + $0x98] sm:$0xff]
      %v1139 = vld [vmem:[%s1118 + $0xa0] sm:$0xff]
      %v1140 = vld [vmem:[%s1118 + $0xa8] sm:$0xff]
      %v1141 = vld [vmem:[%s1118 + $0xb0] sm:$0xff]
      %v1142 = vld [vmem:[%s1118 + $0xb8] sm:$0xff]
      %v1143 = vld [vmem:[%s1118 + $0xc0] sm:$0xff]
      %v1144 = vld [vmem:[%s1118 + $0xc8] sm:$0xff]
      %v1145 = vld [vmem:[%s1118 + $0xd0] sm:$0xff]
      %v1146 = vld [vmem:[%s1118 + $0xd8] sm:$0xff]
      %v1147 = vld [vmem:[%s1118 + $0xe0] sm:$0xff]
      %v1148 = vld [vmem:[%s1118 + $0xe8] sm:$0xff]
      %v1149 = vld [vmem:[%s1118 + $0xf0] sm:$0xff]
      %v1150 = vld [vmem:[%s1118 + $0xf8] sm:$0xff]
      %v1151 = vld [vmem:[%s1118 + $0x100] sm:$0xff]
      %v1152 = vld [vmem:[%s1118 + $0x108] sm:$0xff]
      %v1153 = vld [vmem:[%s1118 + $0x110] sm:$0xff]
      %v1154 = vld [vmem:[%s1118 + $0x118] sm:$0xff]
      %v1155 = vld [vmem:[%s1118 + $0x120] sm:$0xff]
      %v1156 = vld [vmem:[%s1118 + $0x128] sm:$0xff]
      %v1157 = vld [vmem:[%s1118 + $0x130] sm:$0xff]
      %v1158 = vld [vmem:[%s1118 + $0x138] sm:$0xff]
      %v1159 = vld [vmem:[%s1118 + $0x140] sm:$0xff]
      %v1160 = vld [vmem:[%s1118 + $0x148] sm:$0xff]
      %v1161 = vld [vmem:[%s1118 + $0x150] sm:$0xff]
      %v1162 = vld [vmem:[%s1118 + $0x158] sm:$0xff]
      %v1163 = vld [vmem:[%s1118 + $0x160] sm:$0xff]
      %v1164 = vld [vmem:[%s1118 + $0x168] sm:$0xff]
      %v1165 = vld [vmem:[%s1118 + $0x170] sm:$0xff]
      %v1166 = vld [vmem:[%s1118 + $0x178] sm:$0xff]
      %v1167 = vld [vmem:[%s1118 + $0x180] sm:$0xff]
      %v1168 = vld [vmem:[%s1118 + $0x188] sm:$0xff]
      %v1169 = vld [vmem:[%s1118 + $0x190] sm:$0xff]
      %v1170 = vld [vmem:[%s1118 + $0x198] sm:$0xff]
      %v1171 = vld [vmem:[%s1118 + $0x1a0] sm:$0xff]
      %v1172 = vld [vmem:[%s1118 + $0x1a8] sm:$0xff]
      %v1173 = vld [vmem:[%s1118 + $0x1b0] sm:$0xff]
      %v1174 = vld [vmem:[%s1118 + $0x1b8] sm:$0xff]
      %v1175 = vld [vmem:[%s1118 + $0x1c0] sm:$0xff]
      %v1176 = vld [vmem:[%s1118 + $0x1c8] sm:$0xff]
      %v1177 = vld [vmem:[%s1118 + $0x1d0] sm:$0xff]
      %v1178 = vld [vmem:[%s1118 + $0x1d8] sm:$0xff]
      %v1179 = vld [vmem:[%s1118 + $0x1e0] sm:$0xff]
      %v1180 = vld [vmem:[%s1118 + $0x1e8] sm:$0xff]
      %v1181 = vld [vmem:[%s1118 + $0x1f0] sm:$0xff]
      %v1182 = vld [vmem:[%s1118 + $0x1f8] sm:$0xff]
      %v1183 = vld [vmem:[%s1 + $0x60] sm:$0xf]
      %v1184 = vld [vmem:[%s1 + $0x64] sm:$0xf]
      %v1185 = vld [vmem:[%s1 + $0x68] sm:$0xf]
      %v1186 = vld [vmem:[%s1 + $0x6c] sm:$0xf]
      %v1187 = vld [vmem:[%s1 + $0x70] sm:$0xf]
      %v1188 = vld [vmem:[%s1 + $0x74] sm:$0xf]
      %v1189 = vld [vmem:[%s1 + $0x78] sm:$0xf]
      %v1190 = vld [vmem:[%s1 + $0x7c] sm:$0xf]
      %v1191 = vld [vmem:[%s1 + $0x80] sm:$0xf]
      %v1192 = vld [vmem:[%s1 + $0x84] sm:$0xf]
      %v1193 = vld [vmem:[%s1 + $0x88] sm:$0xf]
      %v1194 = vld [vmem:[%s1 + $0x8c] sm:$0xf]
      %v1195 = vld [vmem:[%s1 + $0x90] sm:$0xf]
      %v1196 = vld [vmem:[%s1 + $0x94] sm:$0xf]
      %v1197 = vld [vmem:[%s1 + $0x98] sm:$0xf]
      %v1198 = vld [vmem:[%s1 + $0x9c] sm:$0xf]
      %v1199 = vld [vmem:[%s1 + $0xa0] sm:$0xf]
      %v1200 = vld [vmem:[%s1 + $0xa4] sm:$0xf]
      %v1201 = vld [vmem:[%s1 + $0xa8] sm:$0xf]
      %v1202 = vld [vmem:[%s1 + $0xac] sm:$0xf]
      %v1203 = vld [vmem:[%s1 + $0xb0] sm:$0xf]
      %v1204 = vld [vmem:[%s1 + $0xb4] sm:$0xf]
      %v1205 = vld [vmem:[%s1 + $0xb8] sm:$0xf]
      %v1206 = vld [vmem:[%s1 + $0xbc] sm:$0xf]
      %v1271 = vunpack.c.l.b16 %v1119
      %v1272 = vunpack.c.h.b16 %v1119
      %v1273 = vunpack.c.l.b16 %v1120
      %v1274 = vunpack.c.h.b16 %v1120
      %v1275 = vunpack.c.l.b16 %v1121
      %v1276 = vunpack.c.h.b16 %v1121
      %v1277 = vunpack.c.l.b16 %v1122
      %v1278 = vunpack.c.h.b16 %v1122
      %v1279 = vunpack.c.l.b16 %v1123
      %v1280 = vunpack.c.h.b16 %v1123
      %v1281 = vunpack.c.l.b16 %v1124
      %v1282 = vunpack.c.h.b16 %v1124
      %v1283 = vunpack.c.l.b16 %v1125
      %v1284 = vunpack.c.h.b16 %v1125
      %v1285 = vunpack.c.l.b16 %v1126
      %v1286 = vunpack.c.h.b16 %v1126
      %v1287 = vunpack.c.l.b16 %v1127
      %v1288 = vunpack.c.h.b16 %v1127
      %v1289 = vunpack.c.l.b16 %v1128
      %v1290 = vunpack.c.h.b16 %v1128
      %v1291 = vunpack.c.l.b16 %v1129
      %v1292 = vunpack.c.h.b16 %v1129
      %v1293 = vunpack.c.l.b16 %v1130
      %v1294 = vunpack.c.h.b16 %v1130
      %v1295 = vunpack.c.l.b16 %v1131
      %v1296 = vunpack.c.h.b16 %v1131
      %v1297 = vunpack.c.l.b16 %v1132
      %v1298 = vunpack.c.h.b16 %v1132
      %v1299 = vunpack.c.l.b16 %v1133
      %v1300 = vunpack.c.h.b16 %v1133
      %v1301 = vunpack.c.l.b16 %v1134
      %v1302 = vunpack.c.h.b16 %v1134
      %v1303 = vunpack.c.l.b16 %v1135
      %v1304 = vunpack.c.h.b16 %v1135
      %v1305 = vunpack.c.l.b16 %v1136
      %v1306 = vunpack.c.h.b16 %v1136
      %v1307 = vunpack.c.l.b16 %v1137
      %v1308 = vunpack.c.h.b16 %v1137
      %v1309 = vunpack.c.l.b16 %v1138
      %v1310 = vunpack.c.h.b16 %v1138
      %v1311 = vunpack.c.l.b16 %v1139
      %v1312 = vunpack.c.h.b16 %v1139
      %v1313 = vunpack.c.l.b16 %v1140
      %v1314 = vunpack.c.h.b16 %v1140
      %v1315 = vunpack.c.l.b16 %v1141
      %v1316 = vunpack.c.h.b16 %v1141
      %v1317 = vunpack.c.l.b16 %v1142
      %v1318 = vunpack.c.h.b16 %v1142
      %v1319 = vunpack.c.l.b16 %v1143
      %v1320 = vunpack.c.h.b16 %v1143
      %v1321 = vunpack.c.l.b16 %v1144
      %v1322 = vunpack.c.h.b16 %v1144
      %v1323 = vunpack.c.l.b16 %v1145
      %v1324 = vunpack.c.h.b16 %v1145
      %v1325 = vunpack.c.l.b16 %v1146
      %v1326 = vunpack.c.h.b16 %v1146
      %v1327 = vunpack.c.l.b16 %v1147
      %v1328 = vunpack.c.h.b16 %v1147
      %v1329 = vunpack.c.l.b16 %v1148
      %v1330 = vunpack.c.h.b16 %v1148
      %v1331 = vunpack.c.l.b16 %v1149
      %v1332 = vunpack.c.h.b16 %v1149
      %v1333 = vunpack.c.l.b16 %v1150
      %v1334 = vunpack.c.h.b16 %v1150
      %v1335 = vunpack.c.l.b16 %v1151
      %v1336 = vunpack.c.h.b16 %v1151
      %v1337 = vunpack.c.l.b16 %v1152
      %v1338 = vunpack.c.h.b16 %v1152
      %v1339 = vunpack.c.l.b16 %v1153
      %v1340 = vunpack.c.h.b16 %v1153
      %v1341 = vunpack.c.l.b16 %v1154
      %v1342 = vunpack.c.h.b16 %v1154
      %v1343 = vunpack.c.l.b16 %v1155
      %v1344 = vunpack.c.h.b16 %v1155
      %v1345 = vunpack.c.l.b16 %v1156
      %v1346 = vunpack.c.h.b16 %v1156
      %v1347 = vunpack.c.l.b16 %v1157
      %v1348 = vunpack.c.h.b16 %v1157
      %v1349 = vunpack.c.l.b16 %v1158
      %v1350 = vunpack.c.h.b16 %v1158
      %v1351 = vunpack.c.l.b16 %v1159
      %v1352 = vunpack.c.h.b16 %v1159
      %v1353 = vunpack.c.l.b16 %v1160
      %v1354 = vunpack.c.h.b16 %v1160
      %v1355 = vunpack.c.l.b16 %v1161
      %v1356 = vunpack.c.h.b16 %v1161
      %v1357 = vunpack.c.l.b16 %v1162
      %v1358 = vunpack.c.h.b16 %v1162
      %v1359 = vunpack.c.l.b16 %v1163
      %v1360 = vunpack.c.h.b16 %v1163
      %v1361 = vunpack.c.l.b16 %v1164
      %v1362 = vunpack.c.h.b16 %v1164
      %v1363 = vunpack.c.l.b16 %v1165
      %v1364 = vunpack.c.h.b16 %v1165
      %v1365 = vunpack.c.l.b16 %v1166
      %v1366 = vunpack.c.h.b16 %v1166
      %v1367 = vunpack.c.l.b16 %v1167
      %v1368 = vunpack.c.h.b16 %v1167
      %v1369 = vunpack.c.l.b16 %v1168
      %v1370 = vunpack.c.h.b16 %v1168
      %v1371 = vunpack.c.l.b16 %v1169
      %v1372 = vunpack.c.h.b16 %v1169
      %v1373 = vunpack.c.l.b16 %v1170
      %v1374 = vunpack.c.h.b16 %v1170
      %v1375 = vunpack.c.l.b16 %v1171
      %v1376 = vunpack.c.h.b16 %v1171
      %v1377 = vunpack.c.l.b16 %v1172
      %v1378 = vunpack.c.h.b16 %v1172
      %v1379 = vunpack.c.l.b16 %v1173
      %v1380 = vunpack.c.h.b16 %v1173
      %v1381 = vunpack.c.l.b16 %v1174
      %v1382 = vunpack.c.h.b16 %v1174
      %v1383 = vunpack.c.l.b16 %v1175
      %v1384 = vunpack.c.h.b16 %v1175
      %v1385 = vunpack.c.l.b16 %v1176
      %v1386 = vunpack.c.h.b16 %v1176
      %v1387 = vunpack.c.l.b16 %v1177
      %v1388 = vunpack.c.h.b16 %v1177
      %v1389 = vunpack.c.l.b16 %v1178
      %v1390 = vunpack.c.h.b16 %v1178
      %v1391 = vunpack.c.l.b16 %v1179
      %v1392 = vunpack.c.h.b16 %v1179
      %v1393 = vunpack.c.l.b16 %v1180
      %v1394 = vunpack.c.h.b16 %v1180
      %v1395 = vunpack.c.l.b16 %v1181
      %v1396 = vunpack.c.h.b16 %v1181
      %v1397 = vunpack.c.l.b16 %v1182
      %v1398 = vunpack.c.h.b16 %v1182
      %v1399 = vpack.c.b16 %v1273, %v1271
      %v1400 = vpack.c.b16 %v1274, %v1272
      %v1401 = vpack.c.b16 %v1277, %v1275
      %v1402 = vpack.c.b16 %v1278, %v1276
      %v1403 = vpack.c.b16 %v1281, %v1279
      %v1404 = vpack.c.b16 %v1282, %v1280
      %v1405 = vpack.c.b16 %v1285, %v1283
      %v1406 = vpack.c.b16 %v1286, %v1284
      %v1407 = vpack.c.b16 %v1289, %v1287
      %v1408 = vpack.c.b16 %v1290, %v1288
      %v1409 = vpack.c.b16 %v1293, %v1291
      %v1410 = vpack.c.b16 %v1294, %v1292
      %v1411 = vpack.c.b16 %v1297, %v1295
      %v1412 = vpack.c.b16 %v1298, %v1296
      %v1413 = vpack.c.b16 %v1301, %v1299
      %v1414 = vpack.c.b16 %v1302, %v1300
      %v1415 = vpack.c.b16 %v1305, %v1303
      %v1416 = vpack.c.b16 %v1306, %v1304
      %v1417 = vpack.c.b16 %v1309, %v1307
      %v1418 = vpack.c.b16 %v1310, %v1308
      %v1419 = vpack.c.b16 %v1313, %v1311
      %v1420 = vpack.c.b16 %v1314, %v1312
      %v1421 = vpack.c.b16 %v1317, %v1315
      %v1422 = vpack.c.b16 %v1318, %v1316
      %v1423 = vpack.c.b16 %v1321, %v1319
      %v1424 = vpack.c.b16 %v1322, %v1320
      %v1425 = vpack.c.b16 %v1325, %v1323
      %v1426 = vpack.c.b16 %v1326, %v1324
      %v1427 = vpack.c.b16 %v1329, %v1327
      %v1428 = vpack.c.b16 %v1330, %v1328
      %v1429 = vpack.c.b16 %v1333, %v1331
      %v1430 = vpack.c.b16 %v1334, %v1332
      %v1431 = vpack.c.b16 %v1337, %v1335
      %v1432 = vpack.c.b16 %v1338, %v1336
      %v1433 = vpack.c.b16 %v1341, %v1339
      %v1434 = vpack.c.b16 %v1342, %v1340
      %v1435 = vpack.c.b16 %v1345, %v1343
      %v1436 = vpack.c.b16 %v1346, %v1344
      %v1437 = vpack.c.b16 %v1349, %v1347
      %v1438 = vpack.c.b16 %v1350, %v1348
      %v1439 = vpack.c.b16 %v1353, %v1351
      %v1440 = vpack.c.b16 %v1354, %v1352
      %v1441 = vpack.c.b16 %v1357, %v1355
      %v1442 = vpack.c.b16 %v1358, %v1356
      %v1443 = vpack.c.b16 %v1361, %v1359
      %v1444 = vpack.c.b16 %v1362, %v1360
      %v1445 = vpack.c.b16 %v1365, %v1363
      %v1446 = vpack.c.b16 %v1366, %v1364
      %v1447 = vpack.c.b16 %v1369, %v1367
      %v1448 = vpack.c.b16 %v1370, %v1368
      %v1449 = vpack.c.b16 %v1373, %v1371
      %v1450 = vpack.c.b16 %v1374, %v1372
      %v1451 = vpack.c.b16 %v1377, %v1375
      %v1452 = vpack.c.b16 %v1378, %v1376
      %v1453 = vpack.c.b16 %v1381, %v1379
      %v1454 = vpack.c.b16 %v1382, %v1380
      %v1455 = vpack.c.b16 %v1385, %v1383
      %v1456 = vpack.c.b16 %v1386, %v1384
      %v1457 = vpack.c.b16 %v1389, %v1387
      %v1458 = vpack.c.b16 %v1390, %v1388
      %v1459 = vpack.c.b16 %v1393, %v1391
      %v1460 = vpack.c.b16 %v1394, %v1392
      %v1461 = vpack.c.b16 %v1397, %v1395
      %v1462 = vpack.c.b16 %v1398, %v1396
      %v1519 = vunpack.c.l.b16 %v1183
      %v1520 = vunpack.c.l.b16 %v1184
      %v1521 = vunpack.c.l.b16 %v1185
      %v1522 = vunpack.c.l.b16 %v1186
      %v1523 = vunpack.c.l.b16 %v1187
      %v1524 = vunpack.c.l.b16 %v1188
      %v1525 = vunpack.c.l.b16 %v1189
      %v1526 = vunpack.c.l.b16 %v1190
      %v1527 = vunpack.c.l.b16 %v1191
      %v1528 = vunpack.c.l.b16 %v1192
      %v1529 = vunpack.c.l.b16 %v1193
      %v1530 = vunpack.c.l.b16 %v1194
      %v1531 = vunpack.c.l.b16 %v1195
      %v1532 = vunpack.c.l.b16 %v1196
      %v1533 = vunpack.c.l.b16 %v1197
      %v1534 = vunpack.c.l.b16 %v1198
      %v1535 = vunpack.c.l.b16 %v1199
      %v1536 = vunpack.c.l.b16 %v1200
      %v1537 = vunpack.c.l.b16 %v1201
      %v1538 = vunpack.c.l.b16 %v1202
      %v1539 = vunpack.c.l.b16 %v1203
      %v1540 = vunpack.c.l.b16 %v1204
      %v1541 = vunpack.c.l.b16 %v1205
      %v1542 = vunpack.c.l.b16 %v1206
      %v1543 = vpack.c.b16 %v1520, %v1519
      %v1544 = vpack.c.b16 %v1522, %v1521
      %v1545 = vpack.c.b16 %v1524, %v1523
      %v1546 = vpack.c.b16 %v1526, %v1525
      %v1547 = vpack.c.b16 %v1528, %v1527
      %v1548 = vpack.c.b16 %v1530, %v1529
      %v1549 = vpack.c.b16 %v1532, %v1531
      %v1550 = vpack.c.b16 %v1534, %v1533
      %v1551 = vpack.c.b16 %v1536, %v1535
      %v1552 = vpack.c.b16 %v1538, %v1537
      %v1553 = vpack.c.b16 %v1540, %v1539
      %v1554 = vpack.c.b16 %v1542, %v1541
      %v1568 = vsel %vm657, %v1400, 0
      %v1571 = vsel %vm657, %v1402, 0
      %v1574 = vsel %vm657, %v1404, 0
      %v1577 = vsel %vm657, %v1406, 0
      %v1580 = vsel %vm657, %v1408, 0
      %v1583 = vsel %vm657, %v1410, 0
      %v1586 = vsel %vm657, %v1412, 0
      %v1589 = vsel %vm657, %v1414, 0
      %v1592 = vsel %vm657, %v1416, 0
      %v1595 = vsel %vm657, %v1418, 0
      %v1598 = vsel %vm657, %v1420, 0
      %v1601 = vsel %vm657, %v1422, 0
      %v1604 = vsel %vm657, %v1424, 0
      %v1607 = vsel %vm657, %v1426, 0
      %v1610 = vsel %vm657, %v1428, 0
      %v1613 = vsel %vm657, %v1430, 0
      %v1616 = vsel %vm657, %v1432, 0
      %v1619 = vsel %vm657, %v1434, 0
      %v1622 = vsel %vm657, %v1436, 0
      %v1625 = vsel %vm657, %v1438, 0
      %v1628 = vsel %vm657, %v1440, 0
      %v1631 = vsel %vm657, %v1442, 0
      %v1634 = vsel %vm657, %v1444, 0
      %v1637 = vsel %vm657, %v1446, 0
      %v1640 = vsel %vm657, %v1448, 0
      %v1643 = vsel %vm657, %v1450, 0
      %v1646 = vsel %vm657, %v1452, 0
      %v1649 = vsel %vm657, %v1454, 0
      %v1652 = vsel %vm657, %v1456, 0
      %v1655 = vsel %vm657, %v1458, 0
      %v1658 = vsel %vm657, %v1460, 0
      %v1661 = vsel %vm657, %v1462, 0
      %1663 = vmatprep.subr.bf16.mxu0 0
      %1664 = vmatpush1.bf16.msra.mxu0 %v1543
      %1665 = vmatprep.subr.bf16.mxu0 0
      %1666 = vmatpush1.bf16.msra.mxu0 %v1544
      %1667 = vmatprep.subr.bf16.mxu0 0
      %1668 = vmatpush1.bf16.msra.mxu0 %v1545
      %1669 = vmatprep.subr.bf16.mxu0 0
      %1670 = vmatpush1.bf16.msra.mxu0 %v1546
      %1671 = vmatprep.subr.bf16.mxu0 0
      %1672 = vmatpush1.bf16.msra.mxu0 %v1547
      %1673 = vmatprep.subr.bf16.mxu0 0
      %1674 = vmatpush1.bf16.msra.mxu0 %v1548
      %1675 = vmatprep.subr.bf16.mxu0 0
      %1676 = vmatpush1.bf16.msra.mxu0 %v1549
      %1677 = vmatprep.subr.bf16.mxu0 0
      %1678 = vmatpush1.bf16.msra.mxu0 %v1550
      %1679 = vmatprep.subr.bf16.mxu0 0
      %1680 = vmatpush1.bf16.msra.mxu0 %v1551
      %1681 = vmatprep.subr.bf16.mxu0 0
      %1682 = vmatpush1.bf16.msra.mxu0 %v1552
      %1683 = vmatprep.subr.bf16.mxu0 0
      %1684 = vmatpush1.bf16.msra.mxu0 %v1553
      %1685 = vmatprep.subr.bf16.mxu0 0
      %1686 = vmatpush1.bf16.msra.mxu0 %v1554
      %1687 = vmatprep.subr.bf16.mxu0 0
      %1688 = vmatpush1.bf16.msra.mxu0 0
      %1689 = vmatprep.subr.bf16.mxu0 0
      %1690 = vmatpush1.bf16.msra.mxu0 0
      %1691 = vmatprep.subr.bf16.mxu0 0
      %1692 = vmatpush1.bf16.msra.mxu0 0
      %1693 = vmatprep.subr.bf16.mxu0 0
      %1694 = vmatpush1.bf16.msra.mxu0 0
      %1695 = vmatprep.mubr.bf16.mxu0 %v1568
      %1696 = vmatmul.mubr.bf16.gmra.mrb[0].mxu0 %v1399
      %v1697 = vpop.f32.mrb[0].mxu0
      %v1698 = vadd.f32 0.0, %v1697
      %v1699 = vpop.f32.mrb[0].mxu0
      %v1700 = vpop.f32.mrb[0].mxu0
      %v1701 = vadd.f32 0.0, %v1700
      %v1702 = vpop.f32.mrb[0].mxu0
      %1703 = vmatprep.mubr.bf16.mxu0 %v1571
      %1704 = vmatmul.mubr.bf16.gmra.mrb[0].mxu0 %v1401
      %v1705 = vpop.f32.mrb[0].mxu0
      %v1706 = vadd.f32 0.0, %v1705
      %v1707 = vpop.f32.mrb[0].mxu0
      %v1708 = vpop.f32.mrb[0].mxu0
      %v1709 = vadd.f32 0.0, %v1708
      %v1710 = vpop.f32.mrb[0].mxu0
      %1711 = vmatprep.mubr.bf16.mxu0 %v1574
      %1712 = vmatmul.mubr.bf16.gmra.mrb[0].mxu0 %v1403
      %v1713 = vpop.f32.mrb[0].mxu0
      %v1714 = vadd.f32 0.0, %v1713
      %v1715 = vpop.f32.mrb[0].mxu0
      %v1716 = vpop.f32.mrb[0].mxu0
      %v1717 = vadd.f32 0.0, %v1716
      %v1718 = vpop.f32.mrb[0].mxu0
      %1719 = vmatprep.mubr.bf16.mxu0 %v1577
      %1720 = vmatmul.mubr.bf16.gmra.mrb[0].mxu0 %v1405
      %v1721 = vpop.f32.mrb[0].mxu0
      %v1722 = vadd.f32 0.0, %v1721
      %v1723 = vpop.f32.mrb[0].mxu0
      %v1724 = vpop.f32.mrb[0].mxu0
      %v1725 = vadd.f32 0.0, %v1724
      %v1726 = vpop.f32.mrb[0].mxu0
      %1727 = vmatprep.mubr.bf16.mxu0 %v1580
      %1728 = vmatmul.mubr.bf16.gmra.mrb[0].mxu0 %v1407
      %v1729 = vpop.f32.mrb[0].mxu0
      %v1730 = vadd.f32 0.0, %v1729
      %v1731 = vpop.f32.mrb[0].mxu0
      %v1732 = vpop.f32.mrb[0].mxu0
      %v1733 = vadd.f32 0.0, %v1732
      %v1734 = vpop.f32.mrb[0].mxu0
      %1735 = vmatprep.mubr.bf16.mxu0 %v1583
      %1736 = vmatmul.mubr.bf16.gmra.mrb[0].mxu0 %v1409
      %v1737 = vpop.f32.mrb[0].mxu0
      %v1738 = vadd.f32 0.0, %v1737
      %v1739 = vpop.f32.mrb[0].mxu0
      %v1740 = vpop.f32.mrb[0].mxu0
      %v1741 = vadd.f32 0.0, %v1740
      %v1742 = vpop.f32.mrb[0].mxu0
      %1743 = vmatprep.mubr.bf16.mxu0 %v1586
      %1744 = vmatmul.mubr.bf16.gmra.mrb[0].mxu0 %v1411
      %v1745 = vpop.f32.mrb[0].mxu0
      %v1746 = vadd.f32 0.0, %v1745
      %v1747 = vpop.f32.mrb[0].mxu0
      %v1748 = vpop.f32.mrb[0].mxu0
      %v1749 = vadd.f32 0.0, %v1748
      %v1750 = vpop.f32.mrb[0].mxu0
      %1751 = vmatprep.mubr.bf16.mxu0 %v1589
      %1752 = vmatmul.mubr.bf16.gmra.mrb[0].mxu0 %v1413
      %v1753 = vpop.f32.mrb[0].mxu0
      %v1754 = vadd.f32 0.0, %v1753
      %v1755 = vpop.f32.mrb[0].mxu0
      %v1756 = vpop.f32.mrb[0].mxu0
      %v1757 = vadd.f32 0.0, %v1756
      %v1758 = vpop.f32.mrb[0].mxu0
      %1759 = vmatprep.mubr.bf16.mxu0 %v1592
      %1760 = vmatmul.mubr.bf16.gmra.mrb[0].mxu0 %v1415
      %v1761 = vpop.f32.mrb[0].mxu0
      %v1762 = vadd.f32 0.0, %v1761
      %v1763 = vpop.f32.mrb[0].mxu0
      %v1764 = vpop.f32.mrb[0].mxu0
      %v1765 = vadd.f32 0.0, %v1764
      %v1766 = vpop.f32.mrb[0].mxu0
      %1767 = vmatprep.mubr.bf16.mxu0 %v1595
      %1768 = vmatmul.mubr.bf16.gmra.mrb[0].mxu0 %v1417
      %v1769 = vpop.f32.mrb[0].mxu0
      %v1770 = vadd.f32 0.0, %v1769
      %v1771 = vpop.f32.mrb[0].mxu0
      %v1772 = vpop.f32.mrb[0].mxu0
      %v1773 = vadd.f32 0.0, %v1772
      %v1774 = vpop.f32.mrb[0].mxu0
      %1775 = vmatprep.mubr.bf16.mxu0 %v1598
      %1776 = vmatmul.mubr.bf16.gmra.mrb[0].mxu0 %v1419
      %v1777 = vpop.f32.mrb[0].mxu0
      %v1778 = vadd.f32 0.0, %v1777
      %v1779 = vpop.f32.mrb[0].mxu0
      %v1780 = vpop.f32.mrb[0].mxu0
      %v1781 = vadd.f32 0.0, %v1780
      %v1782 = vpop.f32.mrb[0].mxu0
      %1783 = vmatprep.mubr.bf16.mxu0 %v1601
      %1784 = vmatmul.mubr.bf16.gmra.mrb[0].mxu0 %v1421
      %v1785 = vpop.f32.mrb[0].mxu0
      %v1786 = vadd.f32 0.0, %v1785
      %v1787 = vpop.f32.mrb[0].mxu0
      %v1788 = vpop.f32.mrb[0].mxu0
      %v1789 = vadd.f32 0.0, %v1788
      %v1790 = vpop.f32.mrb[0].mxu0
      %1791 = vmatprep.mubr.bf16.mxu0 %v1604
      %1792 = vmatmul.mubr.bf16.gmra.mrb[0].mxu0 %v1423
      %v1793 = vpop.f32.mrb[0].mxu0
      %v1794 = vadd.f32 0.0, %v1793
      %v1795 = vpop.f32.mrb[0].mxu0
      %v1796 = vpop.f32.mrb[0].mxu0
      %v1797 = vadd.f32 0.0, %v1796
      %v1798 = vpop.f32.mrb[0].mxu0
      %1799 = vmatprep.mubr.bf16.mxu0 %v1607
      %1800 = vmatmul.mubr.bf16.gmra.mrb[0].mxu0 %v1425
      %v1801 = vpop.f32.mrb[0].mxu0
      %v1802 = vadd.f32 0.0, %v1801
      %v1803 = vpop.f32.mrb[0].mxu0
      %v1804 = vpop.f32.mrb[0].mxu0
      %v1805 = vadd.f32 0.0, %v1804
      %v1806 = vpop.f32.mrb[0].mxu0
      %1807 = vmatprep.mubr.bf16.mxu0 %v1610
      %1808 = vmatmul.mubr.bf16.gmra.mrb[0].mxu0 %v1427
      %v1809 = vpop.f32.mrb[0].mxu0
      %v1810 = vadd.f32 0.0, %v1809
      %v1811 = vpop.f32.mrb[0].mxu0
      %v1812 = vpop.f32.mrb[0].mxu0
      %v1813 = vadd.f32 0.0, %v1812
      %v1814 = vpop.f32.mrb[0].mxu0
      %1815 = vmatprep.mubr.bf16.mxu0 %v1613
      %1816 = vmatmul.mubr.bf16.gmra.mrb[0].mxu0 %v1429
      %v1817 = vpop.f32.mrb[0].mxu0
      %v1818 = vadd.f32 0.0, %v1817
      %v1819 = vpop.f32.mrb[0].mxu0
      %v1820 = vpop.f32.mrb[0].mxu0
      %v1821 = vadd.f32 0.0, %v1820
      %v1822 = vpop.f32.mrb[0].mxu0
      %1823 = vmatprep.mubr.bf16.mxu0 %v1616
      %1824 = vmatmul.mubr.bf16.gmra.mrb[0].mxu0 %v1431
      %v1825 = vpop.f32.mrb[0].mxu0
      %v1826 = vadd.f32 0.0, %v1825
      %v1827 = vpop.f32.mrb[0].mxu0
      %v1828 = vpop.f32.mrb[0].mxu0
      %v1829 = vadd.f32 0.0, %v1828
      %v1830 = vpop.f32.mrb[0].mxu0
      %1831 = vmatprep.mubr.bf16.mxu0 %v1619
      %1832 = vmatmul.mubr.bf16.gmra.mrb[0].mxu0 %v1433
      %v1833 = vpop.f32.mrb[0].mxu0
      %v1834 = vadd.f32 0.0, %v1833
      %v1835 = vpop.f32.mrb[0].mxu0
      %v1836 = vpop.f32.mrb[0].mxu0
      %v1837 = vadd.f32 0.0, %v1836
      %v1838 = vpop.f32.mrb[0].mxu0
      %1839 = vmatprep.mubr.bf16.mxu0 %v1622
      %1840 = vmatmul.mubr.bf16.gmra.mrb[0].mxu0 %v1435
      %v1841 = vpop.f32.mrb[0].mxu0
      %v1842 = vadd.f32 0.0, %v1841
      %v1843 = vpop.f32.mrb[0].mxu0
      %v1844 = vpop.f32.mrb[0].mxu0
      %v1845 = vadd.f32 0.0, %v1844
      %v1846 = vpop.f32.mrb[0].mxu0
      %1847 = vmatprep.mubr.bf16.mxu0 %v1625
      %1848 = vmatmul.mubr.bf16.gmra.mrb[0].mxu0 %v1437
      %v1849 = vpop.f32.mrb[0].mxu0
      %v1850 = vadd.f32 0.0, %v1849
      %v1851 = vpop.f32.mrb[0].mxu0
      %v1852 = vpop.f32.mrb[0].mxu0
      %v1853 = vadd.f32 0.0, %v1852
      %v1854 = vpop.f32.mrb[0].mxu0
      %1855 = vmatprep.mubr.bf16.mxu0 %v1628
      %1856 = vmatmul.mubr.bf16.gmra.mrb[0].mxu0 %v1439
      %v1857 = vpop.f32.mrb[0].mxu0
      %v1858 = vadd.f32 0.0, %v1857
      %v1859 = vpop.f32.mrb[0].mxu0
      %v1860 = vpop.f32.mrb[0].mxu0
      %v1861 = vadd.f32 0.0, %v1860
      %v1862 = vpop.f32.mrb[0].mxu0
      %1863 = vmatprep.mubr.bf16.mxu0 %v1631
      %1864 = vmatmul.mubr.bf16.gmra.mrb[0].mxu0 %v1441
      %v1865 = vpop.f32.mrb[0].mxu0
      %v1866 = vadd.f32 0.0, %v1865
      %v1867 = vpop.f32.mrb[0].mxu0
      %v1868 = vpop.f32.mrb[0].mxu0
      %v1869 = vadd.f32 0.0, %v1868
      %v1870 = vpop.f32.mrb[0].mxu0
      %1871 = vmatprep.mubr.bf16.mxu0 %v1634
      %1872 = vmatmul.mubr.bf16.gmra.mrb[0].mxu0 %v1443
      %v1873 = vpop.f32.mrb[0].mxu0
      %v1874 = vadd.f32 0.0, %v1873
      %v1875 = vpop.f32.mrb[0].mxu0
      %v1876 = vpop.f32.mrb[0].mxu0
      %v1877 = vadd.f32 0.0, %v1876
      %v1878 = vpop.f32.mrb[0].mxu0
      %1879 = vmatprep.mubr.bf16.mxu0 %v1637
      %1880 = vmatmul.mubr.bf16.gmra.mrb[0].mxu0 %v1445
      %v1881 = vpop.f32.mrb[0].mxu0
      %v1882 = vadd.f32 0.0, %v1881
      %v1883 = vpop.f32.mrb[0].mxu0
      %v1884 = vpop.f32.mrb[0].mxu0
      %v1885 = vadd.f32 0.0, %v1884
      %v1886 = vpop.f32.mrb[0].mxu0
      %1887 = vmatprep.mubr.bf16.mxu0 %v1640
      %1888 = vmatmul.mubr.bf16.gmra.mrb[0].mxu0 %v1447
      %v1889 = vpop.f32.mrb[0].mxu0
      %v1890 = vadd.f32 0.0, %v1889
      %v1891 = vpop.f32.mrb[0].mxu0
      %v1892 = vpop.f32.mrb[0].mxu0
      %v1893 = vadd.f32 0.0, %v1892
      %v1894 = vpop.f32.mrb[0].mxu0
      %1895 = vmatprep.mubr.bf16.mxu0 %v1643
      %1896 = vmatmul.mubr.bf16.gmra.mrb[0].mxu0 %v1449
      %v1897 = vpop.f32.mrb[0].mxu0
      %v1898 = vadd.f32 0.0, %v1897
      %v1899 = vpop.f32.mrb[0].mxu0
      %v1900 = vpop.f32.mrb[0].mxu0
      %v1901 = vadd.f32 0.0, %v1900
      %v1902 = vpop.f32.mrb[0].mxu0
      %1903 = vmatprep.mubr.bf16.mxu0 %v1646
      %1904 = vmatmul.mubr.bf16.gmra.mrb[0].mxu0 %v1451
      %v1905 = vpop.f32.mrb[0].mxu0
      %v1906 = vadd.f32 0.0, %v1905
      %v1907 = vpop.f32.mrb[0].mxu0
      %v1908 = vpop.f32.mrb[0].mxu0
      %v1909 = vadd.f32 0.0, %v1908
      %v1910 = vpop.f32.mrb[0].mxu0
      %1911 = vmatprep.mubr.bf16.mxu0 %v1649
      %1912 = vmatmul.mubr.bf16.gmra.mrb[0].mxu0 %v1453
      %v1913 = vpop.f32.mrb[0].mxu0
      %v1914 = vadd.f32 0.0, %v1913
      %v1915 = vpop.f32.mrb[0].mxu0
      %v1916 = vpop.f32.mrb[0].mxu0
      %v1917 = vadd.f32 0.0, %v1916
      %v1918 = vpop.f32.mrb[0].mxu0
      %1919 = vmatprep.mubr.bf16.mxu0 %v1652
      %1920 = vmatmul.mubr.bf16.gmra.mrb[0].mxu0 %v1455
      %v1921 = vpop.f32.mrb[0].mxu0
      %v1922 = vadd.f32 0.0, %v1921
      %v1923 = vpop.f32.mrb[0].mxu0
      %v1924 = vpop.f32.mrb[0].mxu0
      %v1925 = vadd.f32 0.0, %v1924
      %v1926 = vpop.f32.mrb[0].mxu0
      %1927 = vmatprep.mubr.bf16.mxu0 %v1655
      %1928 = vmatmul.mubr.bf16.gmra.mrb[0].mxu0 %v1457
      %v1929 = vpop.f32.mrb[0].mxu0
      %v1930 = vadd.f32 0.0, %v1929
      %v1931 = vpop.f32.mrb[0].mxu0
      %v1932 = vpop.f32.mrb[0].mxu0
      %v1933 = vadd.f32 0.0, %v1932
      %v1934 = vpop.f32.mrb[0].mxu0
      %1935 = vmatprep.mubr.bf16.mxu0 %v1658
      %1936 = vmatmul.mubr.bf16.gmra.mrb[0].mxu0 %v1459
      %v1937 = vpop.f32.mrb[0].mxu0
      %v1938 = vadd.f32 0.0, %v1937
      %v1939 = vpop.f32.mrb[0].mxu0
      %v1940 = vpop.f32.mrb[0].mxu0
      %v1941 = vadd.f32 0.0, %v1940
      %v1942 = vpop.f32.mrb[0].mxu0
      %1943 = vmatprep.mubr.bf16.mxu0 %v1661
      %1944 = vmatmul.mubr.bf16.gmra.mrb[0].mxu0 %v1461
      %v1945 = vpop.f32.mrb[0].mxu0
      %v1946 = vadd.f32 0.0, %v1945
      %v1947 = vpop.f32.mrb[0].mxu0
      %v1948 = vpop.f32.mrb[0].mxu0
      %v1949 = vadd.f32 0.0, %v1948
      %v1950 = vpop.f32.mrb[0].mxu0
      %1951 = vdwg.mxu0
      %v1952 = vadd.f32 %v1049, %v1698
      %v1953 = vadd.f32 %v1050, %v1701
      %v1954 = vadd.f32 %v1051, %v1706
      %v1955 = vadd.f32 %v1052, %v1709
      %v1956 = vadd.f32 %v1053, %v1714
      %v1957 = vadd.f32 %v1054, %v1717
      %v1958 = vadd.f32 %v1055, %v1722
      %v1959 = vadd.f32 %v1056, %v1725
      %v1960 = vadd.f32 %v1057, %v1730
      %v1961 = vadd.f32 %v1058, %v1733
      %v1962 = vadd.f32 %v1059, %v1738
      %v1963 = vadd.f32 %v1060, %v1741
      %v1964 = vadd.f32 %v1061, %v1746
      %v1965 = vadd.f32 %v1062, %v1749
      %v1966 = vadd.f32 %v1063, %v1754
      %v1967 = vadd.f32 %v1064, %v1757
      %v1968 = vadd.f32 %v1065, %v1762
      %v1969 = vadd.f32 %v1066, %v1765
      %v1970 = vadd.f32 %v1067, %v1770
      %v1971 = vadd.f32 %v1068, %v1773
      %v1972 = vadd.f32 %v1069, %v1778
      %v1973 = vadd.f32 %v1070, %v1781
      %v1974 = vadd.f32 %v1071, %v1786
      %v1975 = vadd.f32 %v1072, %v1789
      %v1976 = vadd.f32 %v1073, %v1794
      %v1977 = vadd.f32 %v1074, %v1797
      %v1978 = vadd.f32 %v1075, %v1802
      %v1979 = vadd.f32 %v1076, %v1805
      %v1980 = vadd.f32 %v1077, %v1810
      %v1981 = vadd.f32 %v1078, %v1813
      %v1982 = vadd.f32 %v1079, %v1818
      %v1983 = vadd.f32 %v1080, %v1821
      %v1984 = vadd.f32 %v1081, %v1826
      %v1985 = vadd.f32 %v1082, %v1829
      %v1986 = vadd.f32 %v1083, %v1834
      %v1987 = vadd.f32 %v1084, %v1837
      %v1988 = vadd.f32 %v1085, %v1842
      %v1989 = vadd.f32 %v1086, %v1845
      %v1990 = vadd.f32 %v1087, %v1850
      %v1991 = vadd.f32 %v1088, %v1853
      %v1992 = vadd.f32 %v1089, %v1858
      %v1993 = vadd.f32 %v1090, %v1861
      %v1994 = vadd.f32 %v1091, %v1866
      %v1995 = vadd.f32 %v1092, %v1869
      %v1996 = vadd.f32 %v1093, %v1874
      %v1997 = vadd.f32 %v1094, %v1877
      %v1998 = vadd.f32 %v1095, %v1882
      %v1999 = vadd.f32 %v1096, %v1885
      %v2000 = vadd.f32 %v1097, %v1890
      %v2001 = vadd.f32 %v1098, %v1893
      %v2002 = vadd.f32 %v1099, %v1898
      %v2003 = vadd.f32 %v1100, %v1901
      %v2004 = vadd.f32 %v1101, %v1906
      %v2005 = vadd.f32 %v1102, %v1909
      %v2006 = vadd.f32 %v1103, %v1914
      %v2007 = vadd.f32 %v1104, %v1917
      %v2008 = vadd.f32 %v1105, %v1922
      %v2009 = vadd.f32 %v1106, %v1925
      %v2010 = vadd.f32 %v1107, %v1930
      %v2011 = vadd.f32 %v1108, %v1933
      %v2012 = vadd.f32 %v1109, %v1938
      %v2013 = vadd.f32 %v1110, %v1941
      %v2014 = vadd.f32 %v1111, %v1946
      %v2015 = vadd.f32 %v1112, %v1949
      %s2016 = sadd.s32 %s202, 64
      %s2017 = sshra.s32 %s2016, 3
      %s2018 = sand.u32 %s2016, 7
      %s2019 = smul.u32 %s2017, 2
      %s2020 = smul.addr %s2019, 4
      %s2021 = scalar_lea.vmem %s0, %s2020
      %v2022 = vld [vmem:[%s2021] sm:$0xff]
      %v2023 = vld [vmem:[%s2021 + $0x8] sm:$0xff]
      %v2024 = vld [vmem:[%s2021 + $0x10] sm:$0xff]
      %v2025 = vld [vmem:[%s2021 + $0x18] sm:$0xff]
      %v2026 = vld [vmem:[%s2021 + $0x20] sm:$0xff]
      %v2027 = vld [vmem:[%s2021 + $0x28] sm:$0xff]
      %v2028 = vld [vmem:[%s2021 + $0x30] sm:$0xff]
      %v2029 = vld [vmem:[%s2021 + $0x38] sm:$0xff]
      %v2030 = vld [vmem:[%s2021 + $0x40] sm:$0xff]
      %v2031 = vld [vmem:[%s2021 + $0x48] sm:$0xff]
      %v2032 = vld [vmem:[%s2021 + $0x50] sm:$0xff]
      %v2033 = vld [vmem:[%s2021 + $0x58] sm:$0xff]
      %v2034 = vld [vmem:[%s2021 + $0x60] sm:$0xff]
      %v2035 = vld [vmem:[%s2021 + $0x68] sm:$0xff]
      %v2036 = vld [vmem:[%s2021 + $0x70] sm:$0xff]
      %v2037 = vld [vmem:[%s2021 + $0x78] sm:$0xff]
      %v2038 = vld [vmem:[%s2021 + $0x80] sm:$0xff]
      %v2039 = vld [vmem:[%s2021 + $0x88] sm:$0xff]
      %v2040 = vld [vmem:[%s2021 + $0x90] sm:$0xff]
      %v2041 = vld [vmem:[%s2021 + $0x98] sm:$0xff]
      %v2042 = vld [vmem:[%s2021 + $0xa0] sm:$0xff]
      %v2043 = vld [vmem:[%s2021 + $0xa8] sm:$0xff]
      %v2044 = vld [vmem:[%s2021 + $0xb0] sm:$0xff]
      %v2045 = vld [vmem:[%s2021 + $0xb8] sm:$0xff]
      %v2046 = vld [vmem:[%s2021 + $0xc0] sm:$0xff]
      %v2047 = vld [vmem:[%s2021 + $0xc8] sm:$0xff]
      %v2048 = vld [vmem:[%s2021 + $0xd0] sm:$0xff]
      %v2049 = vld [vmem:[%s2021 + $0xd8] sm:$0xff]
      %v2050 = vld [vmem:[%s2021 + $0xe0] sm:$0xff]
      %v2051 = vld [vmem:[%s2021 + $0xe8] sm:$0xff]
      %v2052 = vld [vmem:[%s2021 + $0xf0] sm:$0xff]
      %v2053 = vld [vmem:[%s2021 + $0xf8] sm:$0xff]
      %v2054 = vld [vmem:[%s2021 + $0x100] sm:$0xff]
      %v2055 = vld [vmem:[%s2021 + $0x108] sm:$0xff]
      %v2056 = vld [vmem:[%s2021 + $0x110] sm:$0xff]
      %v2057 = vld [vmem:[%s2021 + $0x118] sm:$0xff]
      %v2058 = vld [vmem:[%s2021 + $0x120] sm:$0xff]
      %v2059 = vld [vmem:[%s2021 + $0x128] sm:$0xff]
      %v2060 = vld [vmem:[%s2021 + $0x130] sm:$0xff]
      %v2061 = vld [vmem:[%s2021 + $0x138] sm:$0xff]
      %v2062 = vld [vmem:[%s2021 + $0x140] sm:$0xff]
      %v2063 = vld [vmem:[%s2021 + $0x148] sm:$0xff]
      %v2064 = vld [vmem:[%s2021 + $0x150] sm:$0xff]
      %v2065 = vld [vmem:[%s2021 + $0x158] sm:$0xff]
      %v2066 = vld [vmem:[%s2021 + $0x160] sm:$0xff]
      %v2067 = vld [vmem:[%s2021 + $0x168] sm:$0xff]
      %v2068 = vld [vmem:[%s2021 + $0x170] sm:$0xff]
      %v2069 = vld [vmem:[%s2021 + $0x178] sm:$0xff]
      %v2070 = vld [vmem:[%s2021 + $0x180] sm:$0xff]
      %v2071 = vld [vmem:[%s2021 + $0x188] sm:$0xff]
      %v2072 = vld [vmem:[%s2021 + $0x190] sm:$0xff]
      %v2073 = vld [vmem:[%s2021 + $0x198] sm:$0xff]
      %v2074 = vld [vmem:[%s2021 + $0x1a0] sm:$0xff]
      %v2075 = vld [vmem:[%s2021 + $0x1a8] sm:$0xff]
      %v2076 = vld [vmem:[%s2021 + $0x1b0] sm:$0xff]
      %v2077 = vld [vmem:[%s2021 + $0x1b8] sm:$0xff]
      %v2078 = vld [vmem:[%s2021 + $0x1c0] sm:$0xff]
      %v2079 = vld [vmem:[%s2021 + $0x1c8] sm:$0xff]
      %v2080 = vld [vmem:[%s2021 + $0x1d0] sm:$0xff]
      %v2081 = vld [vmem:[%s2021 + $0x1d8] sm:$0xff]
      %v2082 = vld [vmem:[%s2021 + $0x1e0] sm:$0xff]
      %v2083 = vld [vmem:[%s2021 + $0x1e8] sm:$0xff]
      %v2084 = vld [vmem:[%s2021 + $0x1f0] sm:$0xff]
      %v2085 = vld [vmem:[%s2021 + $0x1f8] sm:$0xff]
      %v2086 = vld [vmem:[%s1 + $0xc0] sm:$0xf]
      %v2087 = vld [vmem:[%s1 + $0xc4] sm:$0xf]
      %v2088 = vld [vmem:[%s1 + $0xc8] sm:$0xf]
      %v2089 = vld [vmem:[%s1 + $0xcc] sm:$0xf]
      %v2090 = vld [vmem:[%s1 + $0xd0] sm:$0xf]
      %v2091 = vld [vmem:[%s1 + $0xd4] sm:$0xf]
      %v2092 = vld [vmem:[%s1 + $0xd8] sm:$0xf]
      %v2093 = vld [vmem:[%s1 + $0xdc] sm:$0xf]
      %v2094 = vld [vmem:[%s1 + $0xe0] sm:$0xf]
      %v2095 = vld [vmem:[%s1 + $0xe4] sm:$0xf]
      %v2096 = vld [vmem:[%s1 + $0xe8] sm:$0xf]
      %v2097 = vld [vmem:[%s1 + $0xec] sm:$0xf]
      %v2098 = vld [vmem:[%s1 + $0xf0] sm:$0xf]
      %v2099 = vld [vmem:[%s1 + $0xf4] sm:$0xf]
      %v2100 = vld [vmem:[%s1 + $0xf8] sm:$0xf]
      %v2101 = vld [vmem:[%s1 + $0xfc] sm:$0xf]
      %v2102 = vld [vmem:[%s1 + $0x100] sm:$0xf]
      %v2103 = vld [vmem:[%s1 + $0x104] sm:$0xf]
      %v2104 = vld [vmem:[%s1 + $0x108] sm:$0xf]
      %v2105 = vld [vmem:[%s1 + $0x10c] sm:$0xf]
      %v2106 = vld [vmem:[%s1 + $0x110] sm:$0xf]
      %v2107 = vld [vmem:[%s1 + $0x114] sm:$0xf]
      %v2108 = vld [vmem:[%s1 + $0x118] sm:$0xf]
      %v2109 = vld [vmem:[%s1 + $0x11c] sm:$0xf]
      %v2174 = vunpack.c.l.b16 %v2022
      %v2175 = vunpack.c.h.b16 %v2022
      %v2176 = vunpack.c.l.b16 %v2023
      %v2177 = vunpack.c.h.b16 %v2023
      %v2178 = vunpack.c.l.b16 %v2024
      %v2179 = vunpack.c.h.b16 %v2024
      %v2180 = vunpack.c.l.b16 %v2025
      %v2181 = vunpack.c.h.b16 %v2025
      %v2182 = vunpack.c.l.b16 %v2026
      %v2183 = vunpack.c.h.b16 %v2026
      %v2184 = vunpack.c.l.b16 %v2027
      %v2185 = vunpack.c.h.b16 %v2027
      %v2186 = vunpack.c.l.b16 %v2028
      %v2187 = vunpack.c.h.b16 %v2028
      %v2188 = vunpack.c.l.b16 %v2029
      %v2189 = vunpack.c.h.b16 %v2029
      %v2190 = vunpack.c.l.b16 %v2030
      %v2191 = vunpack.c.h.b16 %v2030
      %v2192 = vunpack.c.l.b16 %v2031
      %v2193 = vunpack.c.h.b16 %v2031
      %v2194 = vunpack.c.l.b16 %v2032
      %v2195 = vunpack.c.h.b16 %v2032
      %v2196 = vunpack.c.l.b16 %v2033
      %v2197 = vunpack.c.h.b16 %v2033
      %v2198 = vunpack.c.l.b16 %v2034
      %v2199 = vunpack.c.h.b16 %v2034
      %v2200 = vunpack.c.l.b16 %v2035
      %v2201 = vunpack.c.h.b16 %v2035
      %v2202 = vunpack.c.l.b16 %v2036
      %v2203 = vunpack.c.h.b16 %v2036
      %v2204 = vunpack.c.l.b16 %v2037
      %v2205 = vunpack.c.h.b16 %v2037
      %v2206 = vunpack.c.l.b16 %v2038
      %v2207 = vunpack.c.h.b16 %v2038
      %v2208 = vunpack.c.l.b16 %v2039
      %v2209 = vunpack.c.h.b16 %v2039
      %v2210 = vunpack.c.l.b16 %v2040
      %v2211 = vunpack.c.h.b16 %v2040
      %v2212 = vunpack.c.l.b16 %v2041
      %v2213 = vunpack.c.h.b16 %v2041
      %v2214 = vunpack.c.l.b16 %v2042
      %v2215 = vunpack.c.h.b16 %v2042
      %v2216 = vunpack.c.l.b16 %v2043
      %v2217 = vunpack.c.h.b16 %v2043
      %v2218 = vunpack.c.l.b16 %v2044
      %v2219 = vunpack.c.h.b16 %v2044
      %v2220 = vunpack.c.l.b16 %v2045
      %v2221 = vunpack.c.h.b16 %v2045
      %v2222 = vunpack.c.l.b16 %v2046
      %v2223 = vunpack.c.h.b16 %v2046
      %v2224 = vunpack.c.l.b16 %v2047
      %v2225 = vunpack.c.h.b16 %v2047
      %v2226 = vunpack.c.l.b16 %v2048
      %v2227 = vunpack.c.h.b16 %v2048
      %v2228 = vunpack.c.l.b16 %v2049
      %v2229 = vunpack.c.h.b16 %v2049
      %v2230 = vunpack.c.l.b16 %v2050
      %v2231 = vunpack.c.h.b16 %v2050
      %v2232 = vunpack.c.l.b16 %v2051
      %v2233 = vunpack.c.h.b16 %v2051
      %v2234 = vunpack.c.l.b16 %v2052
      %v2235 = vunpack.c.h.b16 %v2052
      %v2236 = vunpack.c.l.b16 %v2053
      %v2237 = vunpack.c.h.b16 %v2053
      %v2238 = vunpack.c.l.b16 %v2054
      %v2239 = vunpack.c.h.b16 %v2054
      %v2240 = vunpack.c.l.b16 %v2055
      %v2241 = vunpack.c.h.b16 %v2055
      %v2242 = vunpack.c.l.b16 %v2056
      %v2243 = vunpack.c.h.b16 %v2056
      %v2244 = vunpack.c.l.b16 %v2057
      %v2245 = vunpack.c.h.b16 %v2057
      %v2246 = vunpack.c.l.b16 %v2058
      %v2247 = vunpack.c.h.b16 %v2058
      %v2248 = vunpack.c.l.b16 %v2059
      %v2249 = vunpack.c.h.b16 %v2059
      %v2250 = vunpack.c.l.b16 %v2060
      %v2251 = vunpack.c.h.b16 %v2060
      %v2252 = vunpack.c.l.b16 %v2061
      %v2253 = vunpack.c.h.b16 %v2061
      %v2254 = vunpack.c.l.b16 %v2062
      %v2255 = vunpack.c.h.b16 %v2062
      %v2256 = vunpack.c.l.b16 %v2063
      %v2257 = vunpack.c.h.b16 %v2063
      %v2258 = vunpack.c.l.b16 %v2064
      %v2259 = vunpack.c.h.b16 %v2064
      %v2260 = vunpack.c.l.b16 %v2065
      %v2261 = vunpack.c.h.b16 %v2065
      %v2262 = vunpack.c.l.b16 %v2066
      %v2263 = vunpack.c.h.b16 %v2066
      %v2264 = vunpack.c.l.b16 %v2067
      %v2265 = vunpack.c.h.b16 %v2067
      %v2266 = vunpack.c.l.b16 %v2068
      %v2267 = vunpack.c.h.b16 %v2068
      %v2268 = vunpack.c.l.b16 %v2069
      %v2269 = vunpack.c.h.b16 %v2069
      %v2270 = vunpack.c.l.b16 %v2070
      %v2271 = vunpack.c.h.b16 %v2070
      %v2272 = vunpack.c.l.b16 %v2071
      %v2273 = vunpack.c.h.b16 %v2071
      %v2274 = vunpack.c.l.b16 %v2072
      %v2275 = vunpack.c.h.b16 %v2072
      %v2276 = vunpack.c.l.b16 %v2073
      %v2277 = vunpack.c.h.b16 %v2073
      %v2278 = vunpack.c.l.b16 %v2074
      %v2279 = vunpack.c.h.b16 %v2074
      %v2280 = vunpack.c.l.b16 %v2075
      %v2281 = vunpack.c.h.b16 %v2075
      %v2282 = vunpack.c.l.b16 %v2076
      %v2283 = vunpack.c.h.b16 %v2076
      %v2284 = vunpack.c.l.b16 %v2077
      %v2285 = vunpack.c.h.b16 %v2077
      %v2286 = vunpack.c.l.b16 %v2078
      %v2287 = vunpack.c.h.b16 %v2078
      %v2288 = vunpack.c.l.b16 %v2079
      %v2289 = vunpack.c.h.b16 %v2079
      %v2290 = vunpack.c.l.b16 %v2080
      %v2291 = vunpack.c.h.b16 %v2080
      %v2292 = vunpack.c.l.b16 %v2081
      %v2293 = vunpack.c.h.b16 %v2081
      %v2294 = vunpack.c.l.b16 %v2082
      %v2295 = vunpack.c.h.b16 %v2082
      %v2296 = vunpack.c.l.b16 %v2083
      %v2297 = vunpack.c.h.b16 %v2083
      %v2298 = vunpack.c.l.b16 %v2084
      %v2299 = vunpack.c.h.b16 %v2084
      %v2300 = vunpack.c.l.b16 %v2085
      %v2301 = vunpack.c.h.b16 %v2085
      %v2302 = vpack.c.b16 %v2176, %v2174
      %v2303 = vpack.c.b16 %v2177, %v2175
      %v2304 = vpack.c.b16 %v2180, %v2178
      %v2305 = vpack.c.b16 %v2181, %v2179
      %v2306 = vpack.c.b16 %v2184, %v2182
      %v2307 = vpack.c.b16 %v2185, %v2183
      %v2308 = vpack.c.b16 %v2188, %v2186
      %v2309 = vpack.c.b16 %v2189, %v2187
      %v2310 = vpack.c.b16 %v2192, %v2190
      %v2311 = vpack.c.b16 %v2193, %v2191
      %v2312 = vpack.c.b16 %v2196, %v2194
      %v2313 = vpack.c.b16 %v2197, %v2195
      %v2314 = vpack.c.b16 %v2200, %v2198
      %v2315 = vpack.c.b16 %v2201, %v2199
      %v2316 = vpack.c.b16 %v2204, %v2202
      %v2317 = vpack.c.b16 %v2205, %v2203
      %v2318 = vpack.c.b16 %v2208, %v2206
      %v2319 = vpack.c.b16 %v2209, %v2207
      %v2320 = vpack.c.b16 %v2212, %v2210
      %v2321 = vpack.c.b16 %v2213, %v2211
      %v2322 = vpack.c.b16 %v2216, %v2214
      %v2323 = vpack.c.b16 %v2217, %v2215
      %v2324 = vpack.c.b16 %v2220, %v2218
      %v2325 = vpack.c.b16 %v2221, %v2219
      %v2326 = vpack.c.b16 %v2224, %v2222
      %v2327 = vpack.c.b16 %v2225, %v2223
      %v2328 = vpack.c.b16 %v2228, %v2226
      %v2329 = vpack.c.b16 %v2229, %v2227
      %v2330 = vpack.c.b16 %v2232, %v2230
      %v2331 = vpack.c.b16 %v2233, %v2231
      %v2332 = vpack.c.b16 %v2236, %v2234
      %v2333 = vpack.c.b16 %v2237, %v2235
      %v2334 = vpack.c.b16 %v2240, %v2238
      %v2335 = vpack.c.b16 %v2241, %v2239
      %v2336 = vpack.c.b16 %v2244, %v2242
      %v2337 = vpack.c.b16 %v2245, %v2243
      %v2338 = vpack.c.b16 %v2248, %v2246
      %v2339 = vpack.c.b16 %v2249, %v2247
      %v2340 = vpack.c.b16 %v2252, %v2250
      %v2341 = vpack.c.b16 %v2253, %v2251
      %v2342 = vpack.c.b16 %v2256, %v2254
      %v2343 = vpack.c.b16 %v2257, %v2255
      %v2344 = vpack.c.b16 %v2260, %v2258
      %v2345 = vpack.c.b16 %v2261, %v2259
      %v2346 = vpack.c.b16 %v2264, %v2262
      %v2347 = vpack.c.b16 %v2265, %v2263
      %v2348 = vpack.c.b16 %v2268, %v2266
      %v2349 = vpack.c.b16 %v2269, %v2267
      %v2350 = vpack.c.b16 %v2272, %v2270
      %v2351 = vpack.c.b16 %v2273, %v2271
      %v2352 = vpack.c.b16 %v2276, %v2274
      %v2353 = vpack.c.b16 %v2277, %v2275
      %v2354 = vpack.c.b16 %v2280, %v2278
      %v2355 = vpack.c.b16 %v2281, %v2279
      %v2356 = vpack.c.b16 %v2284, %v2282
      %v2357 = vpack.c.b16 %v2285, %v2283
      %v2358 = vpack.c.b16 %v2288, %v2286
      %v2359 = vpack.c.b16 %v2289, %v2287
      %v2360 = vpack.c.b16 %v2292, %v2290
      %v2361 = vpack.c.b16 %v2293, %v2291
      %v2362 = vpack.c.b16 %v2296, %v2294
      %v2363 = vpack.c.b16 %v2297, %v2295
      %v2364 = vpack.c.b16 %v2300, %v2298
      %v2365 = vpack.c.b16 %v2301, %v2299
      %v2422 = vunpack.c.l.b16 %v2086
      %v2423 = vunpack.c.l.b16 %v2087
      %v2424 = vunpack.c.l.b16 %v2088
      %v2425 = vunpack.c.l.b16 %v2089
      %v2426 = vunpack.c.l.b16 %v2090
      %v2427 = vunpack.c.l.b16 %v2091
      %v2428 = vunpack.c.l.b16 %v2092
      %v2429 = vunpack.c.l.b16 %v2093
      %v2430 = vunpack.c.l.b16 %v2094
      %v2431 = vunpack.c.l.b16 %v2095
      %v2432 = vunpack.c.l.b16 %v2096
      %v2433 = vunpack.c.l.b16 %v2097
      %v2434 = vunpack.c.l.b16 %v2098
      %v2435 = vunpack.c.l.b16 %v2099
      %v2436 = vunpack.c.l.b16 %v2100
      %v2437 = vunpack.c.l.b16 %v2101
      %v2438 = vunpack.c.l.b16 %v2102
      %v2439 = vunpack.c.l.b16 %v2103
      %v2440 = vunpack.c.l.b16 %v2104
      %v2441 = vunpack.c.l.b16 %v2105
      %v2442 = vunpack.c.l.b16 %v2106
      %v2443 = vunpack.c.l.b16 %v2107
      %v2444 = vunpack.c.l.b16 %v2108
      %v2445 = vunpack.c.l.b16 %v2109
      %v2446 = vpack.c.b16 %v2423, %v2422
      %v2447 = vpack.c.b16 %v2425, %v2424
      %v2448 = vpack.c.b16 %v2427, %v2426
      %v2449 = vpack.c.b16 %v2429, %v2428
      %v2450 = vpack.c.b16 %v2431, %v2430
      %v2451 = vpack.c.b16 %v2433, %v2432
      %v2452 = vpack.c.b16 %v2435, %v2434
      %v2453 = vpack.c.b16 %v2437, %v2436
      %v2454 = vpack.c.b16 %v2439, %v2438
      %v2455 = vpack.c.b16 %v2441, %v2440
      %v2456 = vpack.c.b16 %v2443, %v2442
      %v2457 = vpack.c.b16 %v2445, %v2444
      %v2471 = vsel %vm657, %v2303, 0
      %v2474 = vsel %vm657, %v2305, 0
      %v2477 = vsel %vm657, %v2307, 0
      %v2480 = vsel %vm657, %v2309, 0
      %v2483 = vsel %vm657, %v2311, 0
      %v2486 = vsel %vm657, %v2313, 0
      %v2489 = vsel %vm657, %v2315, 0
      %v2492 = vsel %vm657, %v2317, 0
      %v2495 = vsel %vm657, %v2319, 0
      %v2498 = vsel %vm657, %v2321, 0
      %v2501 = vsel %vm657, %v2323, 0
      %v2504 = vsel %vm657, %v2325, 0
      %v2507 = vsel %vm657, %v2327, 0
      %v2510 = vsel %vm657, %v2329, 0
      %v2513 = vsel %vm657, %v2331, 0
      %v2516 = vsel %vm657, %v2333, 0
      %v2519 = vsel %vm657, %v2335, 0
      %v2522 = vsel %vm657, %v2337, 0
      %v2525 = vsel %vm657, %v2339, 0
      %v2528 = vsel %vm657, %v2341, 0
      %v2531 = vsel %vm657, %v2343, 0
      %v2534 = vsel %vm657, %v2345, 0
      %v2537 = vsel %vm657, %v2347, 0
      %v2540 = vsel %vm657, %v2349, 0
      %v2543 = vsel %vm657, %v2351, 0
      %v2546 = vsel %vm657, %v2353, 0
      %v2549 = vsel %vm657, %v2355, 0
      %v2552 = vsel %vm657, %v2357, 0
      %v2555 = vsel %vm657, %v2359, 0
      %v2558 = vsel %vm657, %v2361, 0
      %v2561 = vsel %vm657, %v2363, 0
      %v2564 = vsel %vm657, %v2365, 0
      %2566 = vmatprep.subr.bf16.mxu0 0
      %2567 = vmatpush1.bf16.msra.mxu0 %v2446
      %2568 = vmatprep.subr.bf16.mxu0 0
      %2569 = vmatpush1.bf16.msra.mxu0 %v2447
      %2570 = vmatprep.subr.bf16.mxu0 0
      %2571 = vmatpush1.bf16.msra.mxu0 %v2448
      %2572 = vmatprep.subr.bf16.mxu0 0
      %2573 = vmatpush1.bf16.msra.mxu0 %v2449
      %2574 = vmatprep.subr.bf16.mxu0 0
      %2575 = vmatpush1.bf16.msra.mxu0 %v2450
      %2576 = vmatprep.subr.bf16.mxu0 0
      %2577 = vmatpush1.bf16.msra.mxu0 %v2451
      %2578 = vmatprep.subr.bf16.mxu0 0
      %2579 = vmatpush1.bf16.msra.mxu0 %v2452
      %2580 = vmatprep.subr.bf16.mxu0 0
      %2581 = vmatpush1.bf16.msra.mxu0 %v2453
      %2582 = vmatprep.subr.bf16.mxu0 0
      %2583 = vmatpush1.bf16.msra.mxu0 %v2454
      %2584 = vmatprep.subr.bf16.mxu0 0
      %2585 = vmatpush1.bf16.msra.mxu0 %v2455
      %2586 = vmatprep.subr.bf16.mxu0 0
      %2587 = vmatpush1.bf16.msra.mxu0 %v2456
      %2588 = vmatprep.subr.bf16.mxu0 0
      %2589 = vmatpush1.bf16.msra.mxu0 %v2457
      %2590 = vmatprep.subr.bf16.mxu0 0
      %2591 = vmatpush1.bf16.msra.mxu0 0
      %2592 = vmatprep.subr.bf16.mxu0 0
      %2593 = vmatpush1.bf16.msra.mxu0 0
      %2594 = vmatprep.subr.bf16.mxu0 0
      %2595 = vmatpush1.bf16.msra.mxu0 0
      %2596 = vmatprep.subr.bf16.mxu0 0
      %2597 = vmatpush1.bf16.msra.mxu0 0
      %2598 = vmatprep.mubr.bf16.mxu0 %v2471
      %2599 = vmatmul.mubr.bf16.gmra.mrb[0].mxu0 %v2302
      %v2600 = vpop.f32.mrb[0].mxu0
      %v2601 = vadd.f32 0.0, %v2600
      %v2602 = vpop.f32.mrb[0].mxu0
      %v2603 = vpop.f32.mrb[0].mxu0
      %v2604 = vadd.f32 0.0, %v2603
      %v2605 = vpop.f32.mrb[0].mxu0
      %2606 = vmatprep.mubr.bf16.mxu0 %v2474
      %2607 = vmatmul.mubr.bf16.gmra.mrb[0].mxu0 %v2304
      %v2608 = vpop.f32.mrb[0].mxu0
      %v2609 = vadd.f32 0.0, %v2608
      %v2610 = vpop.f32.mrb[0].mxu0
      %v2611 = vpop.f32.mrb[0].mxu0
      %v2612 = vadd.f32 0.0, %v2611
      %v2613 = vpop.f32.mrb[0].mxu0
      %2614 = vmatprep.mubr.bf16.mxu0 %v2477
      %2615 = vmatmul.mubr.bf16.gmra.mrb[0].mxu0 %v2306
      %v2616 = vpop.f32.mrb[0].mxu0
      %v2617 = vadd.f32 0.0, %v2616
      %v2618 = vpop.f32.mrb[0].mxu0
      %v2619 = vpop.f32.mrb[0].mxu0
      %v2620 = vadd.f32 0.0, %v2619
      %v2621 = vpop.f32.mrb[0].mxu0
      %2622 = vmatprep.mubr.bf16.mxu0 %v2480
      %2623 = vmatmul.mubr.bf16.gmra.mrb[0].mxu0 %v2308
      %v2624 = vpop.f32.mrb[0].mxu0
      %v2625 = vadd.f32 0.0, %v2624
      %v2626 = vpop.f32.mrb[0].mxu0
      %v2627 = vpop.f32.mrb[0].mxu0
      %v2628 = vadd.f32 0.0, %v2627
      %v2629 = vpop.f32.mrb[0].mxu0
      %2630 = vmatprep.mubr.bf16.mxu0 %v2483
      %2631 = vmatmul.mubr.bf16.gmra.mrb[0].mxu0 %v2310
      %v2632 = vpop.f32.mrb[0].mxu0
      %v2633 = vadd.f32 0.0, %v2632
      %v2634 = vpop.f32.mrb[0].mxu0
      %v2635 = vpop.f32.mrb[0].mxu0
      %v2636 = vadd.f32 0.0, %v2635
      %v2637 = vpop.f32.mrb[0].mxu0
      %2638 = vmatprep.mubr.bf16.mxu0 %v2486
      %2639 = vmatmul.mubr.bf16.gmra.mrb[0].mxu0 %v2312
      %v2640 = vpop.f32.mrb[0].mxu0
      %v2641 = vadd.f32 0.0, %v2640
      %v2642 = vpop.f32.mrb[0].mxu0
      %v2643 = vpop.f32.mrb[0].mxu0
      %v2644 = vadd.f32 0.0, %v2643
      %v2645 = vpop.f32.mrb[0].mxu0
      %2646 = vmatprep.mubr.bf16.mxu0 %v2489
      %2647 = vmatmul.mubr.bf16.gmra.mrb[0].mxu0 %v2314
      %v2648 = vpop.f32.mrb[0].mxu0
      %v2649 = vadd.f32 0.0, %v2648
      %v2650 = vpop.f32.mrb[0].mxu0
      %v2651 = vpop.f32.mrb[0].mxu0
      %v2652 = vadd.f32 0.0, %v2651
      %v2653 = vpop.f32.mrb[0].mxu0
      %2654 = vmatprep.mubr.bf16.mxu0 %v2492
      %2655 = vmatmul.mubr.bf16.gmra.mrb[0].mxu0 %v2316
      %v2656 = vpop.f32.mrb[0].mxu0
      %v2657 = vadd.f32 0.0, %v2656
      %v2658 = vpop.f32.mrb[0].mxu0
      %v2659 = vpop.f32.mrb[0].mxu0
      %v2660 = vadd.f32 0.0, %v2659
      %v2661 = vpop.f32.mrb[0].mxu0
      %2662 = vmatprep.mubr.bf16.mxu0 %v2495
      %2663 = vmatmul.mubr.bf16.gmra.mrb[0].mxu0 %v2318
      %v2664 = vpop.f32.mrb[0].mxu0
      %v2665 = vadd.f32 0.0, %v2664
      %v2666 = vpop.f32.mrb[0].mxu0
      %v2667 = vpop.f32.mrb[0].mxu0
      %v2668 = vadd.f32 0.0, %v2667
      %v2669 = vpop.f32.mrb[0].mxu0
      %2670 = vmatprep.mubr.bf16.mxu0 %v2498
      %2671 = vmatmul.mubr.bf16.gmra.mrb[0].mxu0 %v2320
      %v2672 = vpop.f32.mrb[0].mxu0
      %v2673 = vadd.f32 0.0, %v2672
      %v2674 = vpop.f32.mrb[0].mxu0
      %v2675 = vpop.f32.mrb[0].mxu0
      %v2676 = vadd.f32 0.0, %v2675
      %v2677 = vpop.f32.mrb[0].mxu0
      %2678 = vmatprep.mubr.bf16.mxu0 %v2501
      %2679 = vmatmul.mubr.bf16.gmra.mrb[0].mxu0 %v2322
      %v2680 = vpop.f32.mrb[0].mxu0
      %v2681 = vadd.f32 0.0, %v2680
      %v2682 = vpop.f32.mrb[0].mxu0
      %v2683 = vpop.f32.mrb[0].mxu0
      %v2684 = vadd.f32 0.0, %v2683
      %v2685 = vpop.f32.mrb[0].mxu0
      %2686 = vmatprep.mubr.bf16.mxu0 %v2504
      %2687 = vmatmul.mubr.bf16.gmra.mrb[0].mxu0 %v2324
      %v2688 = vpop.f32.mrb[0].mxu0
      %v2689 = vadd.f32 0.0, %v2688
      %v2690 = vpop.f32.mrb[0].mxu0
      %v2691 = vpop.f32.mrb[0].mxu0
      %v2692 = vadd.f32 0.0, %v2691
      %v2693 = vpop.f32.mrb[0].mxu0
      %2694 = vmatprep.mubr.bf16.mxu0 %v2507
      %2695 = vmatmul.mubr.bf16.gmra.mrb[0].mxu0 %v2326
      %v2696 = vpop.f32.mrb[0].mxu0
      %v2697 = vadd.f32 0.0, %v2696
      %v2698 = vpop.f32.mrb[0].mxu0
      %v2699 = vpop.f32.mrb[0].mxu0
      %v2700 = vadd.f32 0.0, %v2699
      %v2701 = vpop.f32.mrb[0].mxu0
      %2702 = vmatprep.mubr.bf16.mxu0 %v2510
      %2703 = vmatmul.mubr.bf16.gmra.mrb[0].mxu0 %v2328
      %v2704 = vpop.f32.mrb[0].mxu0
      %v2705 = vadd.f32 0.0, %v2704
      %v2706 = vpop.f32.mrb[0].mxu0
      %v2707 = vpop.f32.mrb[0].mxu0
      %v2708 = vadd.f32 0.0, %v2707
      %v2709 = vpop.f32.mrb[0].mxu0
      %2710 = vmatprep.mubr.bf16.mxu0 %v2513
      %2711 = vmatmul.mubr.bf16.gmra.mrb[0].mxu0 %v2330
      %v2712 = vpop.f32.mrb[0].mxu0
      %v2713 = vadd.f32 0.0, %v2712
      %v2714 = vpop.f32.mrb[0].mxu0
      %v2715 = vpop.f32.mrb[0].mxu0
      %v2716 = vadd.f32 0.0, %v2715
      %v2717 = vpop.f32.mrb[0].mxu0
      %2718 = vmatprep.mubr.bf16.mxu0 %v2516
      %2719 = vmatmul.mubr.bf16.gmra.mrb[0].mxu0 %v2332
      %v2720 = vpop.f32.mrb[0].mxu0
      %v2721 = vadd.f32 0.0, %v2720
      %v2722 = vpop.f32.mrb[0].mxu0
      %v2723 = vpop.f32.mrb[0].mxu0
      %v2724 = vadd.f32 0.0, %v2723
      %v2725 = vpop.f32.mrb[0].mxu0
      %2726 = vmatprep.mubr.bf16.mxu0 %v2519
      %2727 = vmatmul.mubr.bf16.gmra.mrb[0].mxu0 %v2334
      %v2728 = vpop.f32.mrb[0].mxu0
      %v2729 = vadd.f32 0.0, %v2728
      %v2730 = vpop.f32.mrb[0].mxu0
      %v2731 = vpop.f32.mrb[0].mxu0
      %v2732 = vadd.f32 0.0, %v2731
      %v2733 = vpop.f32.mrb[0].mxu0
      %2734 = vmatprep.mubr.bf16.mxu0 %v2522
      %2735 = vmatmul.mubr.bf16.gmra.mrb[0].mxu0 %v2336
      %v2736 = vpop.f32.mrb[0].mxu0
      %v2737 = vadd.f32 0.0, %v2736
      %v2738 = vpop.f32.mrb[0].mxu0
      %v2739 = vpop.f32.mrb[0].mxu0
      %v2740 = vadd.f32 0.0, %v2739
      %v2741 = vpop.f32.mrb[0].mxu0
      %2742 = vmatprep.mubr.bf16.mxu0 %v2525
      %2743 = vmatmul.mubr.bf16.gmra.mrb[0].mxu0 %v2338
      %v2744 = vpop.f32.mrb[0].mxu0
      %v2745 = vadd.f32 0.0, %v2744
      %v2746 = vpop.f32.mrb[0].mxu0
      %v2747 = vpop.f32.mrb[0].mxu0
      %v2748 = vadd.f32 0.0, %v2747
      %v2749 = vpop.f32.mrb[0].mxu0
      %2750 = vmatprep.mubr.bf16.mxu0 %v2528
      %2751 = vmatmul.mubr.bf16.gmra.mrb[0].mxu0 %v2340
      %v2752 = vpop.f32.mrb[0].mxu0
      %v2753 = vadd.f32 0.0, %v2752
      %v2754 = vpop.f32.mrb[0].mxu0
      %v2755 = vpop.f32.mrb[0].mxu0
      %v2756 = vadd.f32 0.0, %v2755
      %v2757 = vpop.f32.mrb[0].mxu0
      %2758 = vmatprep.mubr.bf16.mxu0 %v2531
      %2759 = vmatmul.mubr.bf16.gmra.mrb[0].mxu0 %v2342
      %v2760 = vpop.f32.mrb[0].mxu0
      %v2761 = vadd.f32 0.0, %v2760
      %v2762 = vpop.f32.mrb[0].mxu0
      %v2763 = vpop.f32.mrb[0].mxu0
      %v2764 = vadd.f32 0.0, %v2763
      %v2765 = vpop.f32.mrb[0].mxu0
      %2766 = vmatprep.mubr.bf16.mxu0 %v2534
      %2767 = vmatmul.mubr.bf16.gmra.mrb[0].mxu0 %v2344
      %v2768 = vpop.f32.mrb[0].mxu0
      %v2769 = vadd.f32 0.0, %v2768
      %v2770 = vpop.f32.mrb[0].mxu0
      %v2771 = vpop.f32.mrb[0].mxu0
      %v2772 = vadd.f32 0.0, %v2771
      %v2773 = vpop.f32.mrb[0].mxu0
      %2774 = vmatprep.mubr.bf16.mxu0 %v2537
      %2775 = vmatmul.mubr.bf16.gmra.mrb[0].mxu0 %v2346
      %v2776 = vpop.f32.mrb[0].mxu0
      %v2777 = vadd.f32 0.0, %v2776
      %v2778 = vpop.f32.mrb[0].mxu0
      %v2779 = vpop.f32.mrb[0].mxu0
      %v2780 = vadd.f32 0.0, %v2779
      %v2781 = vpop.f32.mrb[0].mxu0
      %2782 = vmatprep.mubr.bf16.mxu0 %v2540
      %2783 = vmatmul.mubr.bf16.gmra.mrb[0].mxu0 %v2348
      %v2784 = vpop.f32.mrb[0].mxu0
      %v2785 = vadd.f32 0.0, %v2784
      %v2786 = vpop.f32.mrb[0].mxu0
      %v2787 = vpop.f32.mrb[0].mxu0
      %v2788 = vadd.f32 0.0, %v2787
      %v2789 = vpop.f32.mrb[0].mxu0
      %2790 = vmatprep.mubr.bf16.mxu0 %v2543
      %2791 = vmatmul.mubr.bf16.gmra.mrb[0].mxu0 %v2350
      %v2792 = vpop.f32.mrb[0].mxu0
      %v2793 = vadd.f32 0.0, %v2792
      %v2794 = vpop.f32.mrb[0].mxu0
      %v2795 = vpop.f32.mrb[0].mxu0
      %v2796 = vadd.f32 0.0, %v2795
      %v2797 = vpop.f32.mrb[0].mxu0
      %2798 = vmatprep.mubr.bf16.mxu0 %v2546
      %2799 = vmatmul.mubr.bf16.gmra.mrb[0].mxu0 %v2352
      %v2800 = vpop.f32.mrb[0].mxu0
      %v2801 = vadd.f32 0.0, %v2800
      %v2802 = vpop.f32.mrb[0].mxu0
      %v2803 = vpop.f32.mrb[0].mxu0
      %v2804 = vadd.f32 0.0, %v2803
      %v2805 = vpop.f32.mrb[0].mxu0
      %2806 = vmatprep.mubr.bf16.mxu0 %v2549
      %2807 = vmatmul.mubr.bf16.gmra.mrb[0].mxu0 %v2354
      %v2808 = vpop.f32.mrb[0].mxu0
      %v2809 = vadd.f32 0.0, %v2808
      %v2810 = vpop.f32.mrb[0].mxu0
      %v2811 = vpop.f32.mrb[0].mxu0
      %v2812 = vadd.f32 0.0, %v2811
      %v2813 = vpop.f32.mrb[0].mxu0
      %2814 = vmatprep.mubr.bf16.mxu0 %v2552
      %2815 = vmatmul.mubr.bf16.gmra.mrb[0].mxu0 %v2356
      %v2816 = vpop.f32.mrb[0].mxu0
      %v2817 = vadd.f32 0.0, %v2816
      %v2818 = vpop.f32.mrb[0].mxu0
      %v2819 = vpop.f32.mrb[0].mxu0
      %v2820 = vadd.f32 0.0, %v2819
      %v2821 = vpop.f32.mrb[0].mxu0
      %2822 = vmatprep.mubr.bf16.mxu0 %v2555
      %2823 = vmatmul.mubr.bf16.gmra.mrb[0].mxu0 %v2358
      %v2824 = vpop.f32.mrb[0].mxu0
      %v2825 = vadd.f32 0.0, %v2824
      %v2826 = vpop.f32.mrb[0].mxu0
      %v2827 = vpop.f32.mrb[0].mxu0
      %v2828 = vadd.f32 0.0, %v2827
      %v2829 = vpop.f32.mrb[0].mxu0
      %2830 = vmatprep.mubr.bf16.mxu0 %v2558
      %2831 = vmatmul.mubr.bf16.gmra.mrb[0].mxu0 %v2360
      %v2832 = vpop.f32.mrb[0].mxu0
      %v2833 = vadd.f32 0.0, %v2832
      %v2834 = vpop.f32.mrb[0].mxu0
      %v2835 = vpop.f32.mrb[0].mxu0
      %v2836 = vadd.f32 0.0, %v2835
      %v2837 = vpop.f32.mrb[0].mxu0
      %2838 = vmatprep.mubr.bf16.mxu0 %v2561
      %2839 = vmatmul.mubr.bf16.gmra.mrb[0].mxu0 %v2362
      %v2840 = vpop.f32.mrb[0].mxu0
      %v2841 = vadd.f32 0.0, %v2840
      %v2842 = vpop.f32.mrb[0].mxu0
      %v2843 = vpop.f32.mrb[0].mxu0
      %v2844 = vadd.f32 0.0, %v2843
      %v2845 = vpop.f32.mrb[0].mxu0
      %2846 = vmatprep.mubr.bf16.mxu0 %v2564
      %2847 = vmatmul.mubr.bf16.gmra.mrb[0].mxu0 %v2364
      %v2848 = vpop.f32.mrb[0].mxu0
      %v2849 = vadd.f32 0.0, %v2848
      %v2850 = vpop.f32.mrb[0].mxu0
      %v2851 = vpop.f32.mrb[0].mxu0
      %v2852 = vadd.f32 0.0, %v2851
      %v2853 = vpop.f32.mrb[0].mxu0
      %2854 = vdwg.mxu0
      %v2855 = vadd.f32 %v1952, %v2601
      %v2856 = vadd.f32 %v1953, %v2604
      %v2857 = vadd.f32 %v1954, %v2609
      %v2858 = vadd.f32 %v1955, %v2612
      %v2859 = vadd.f32 %v1956, %v2617
      %v2860 = vadd.f32 %v1957, %v2620
      %v2861 = vadd.f32 %v1958, %v2625
      %v2862 = vadd.f32 %v1959, %v2628
      %v2863 = vadd.f32 %v1960, %v2633
      %v2864 = vadd.f32 %v1961, %v2636
      %v2865 = vadd.f32 %v1962, %v2641
      %v2866 = vadd.f32 %v1963, %v2644
      %v2867 = vadd.f32 %v1964, %v2649
      %v2868 = vadd.f32 %v1965, %v2652
      %v2869 = vadd.f32 %v1966, %v2657
      %v2870 = vadd.f32 %v1967, %v2660
      %v2871 = vadd.f32 %v1968, %v2665
      %v2872 = vadd.f32 %v1969, %v2668
      %v2873 = vadd.f32 %v1970, %v2673
      %v2874 = vadd.f32 %v1971, %v2676
      %v2875 = vadd.f32 %v1972, %v2681
      %v2876 = vadd.f32 %v1973, %v2684
      %v2877 = vadd.f32 %v1974, %v2689
      %v2878 = vadd.f32 %v1975, %v2692
      %v2879 = vadd.f32 %v1976, %v2697
      %v2880 = vadd.f32 %v1977, %v2700
      %v2881 = vadd.f32 %v1978, %v2705
      %v2882 = vadd.f32 %v1979, %v2708
      %v2883 = vadd.f32 %v1980, %v2713
      %v2884 = vadd.f32 %v1981, %v2716
      %v2885 = vadd.f32 %v1982, %v2721
      %v2886 = vadd.f32 %v1983, %v2724
      %v2887 = vadd.f32 %v1984, %v2729
      %v2888 = vadd.f32 %v1985, %v2732
      %v2889 = vadd.f32 %v1986, %v2737
      %v2890 = vadd.f32 %v1987, %v2740
      %v2891 = vadd.f32 %v1988, %v2745
      %v2892 = vadd.f32 %v1989, %v2748
      %v2893 = vadd.f32 %v1990, %v2753
      %v2894 = vadd.f32 %v1991, %v2756
      %v2895 = vadd.f32 %v1992, %v2761
      %v2896 = vadd.f32 %v1993, %v2764
      %v2897 = vadd.f32 %v1994, %v2769
      %v2898 = vadd.f32 %v1995, %v2772
      %v2899 = vadd.f32 %v1996, %v2777
      %v2900 = vadd.f32 %v1997, %v2780
      %v2901 = vadd.f32 %v1998, %v2785
      %v2902 = vadd.f32 %v1999, %v2788
      %v2903 = vadd.f32 %v2000, %v2793
      %v2904 = vadd.f32 %v2001, %v2796
      %v2905 = vadd.f32 %v2002, %v2801
      %v2906 = vadd.f32 %v2003, %v2804
      %v2907 = vadd.f32 %v2004, %v2809
      %v2908 = vadd.f32 %v2005, %v2812
      %v2909 = vadd.f32 %v2006, %v2817
      %v2910 = vadd.f32 %v2007, %v2820
      %v2911 = vadd.f32 %v2008, %v2825
      %v2912 = vadd.f32 %v2009, %v2828
      %v2913 = vadd.f32 %v2010, %v2833
      %v2914 = vadd.f32 %v2011, %v2836
      %v2915 = vadd.f32 %v2012, %v2841
      %v2916 = vadd.f32 %v2013, %v2844
      %v2917 = vadd.f32 %v2014, %v2849
      %v2918 = vadd.f32 %v2015, %v2852
      %v2919 = vld [vmem:[%s193] sm:$0xff]
      %v2920 = vld [vmem:[%s193 + $0x8] sm:$0xff]
      %v2921 = vld [vmem:[%s193 + $0x10] sm:$0xff]
      %v2922 = vld [vmem:[%s193 + $0x18] sm:$0xff]
      %v2923 = vld [vmem:[%s193 + $0x20] sm:$0xff]
      %v2924 = vld [vmem:[%s193 + $0x28] sm:$0xff]
      %v2925 = vld [vmem:[%s193 + $0x30] sm:$0xff]
      %v2926 = vld [vmem:[%s193 + $0x38] sm:$0xff]
      %v2927 = vld [vmem:[%s193 + $0x40] sm:$0xff]
      %v2928 = vld [vmem:[%s193 + $0x48] sm:$0xff]
      %v2929 = vld [vmem:[%s193 + $0x50] sm:$0xff]
      %v2930 = vld [vmem:[%s193 + $0x58] sm:$0xff]
      %v2931 = vld [vmem:[%s193 + $0x60] sm:$0xff]
      %v2932 = vld [vmem:[%s193 + $0x68] sm:$0xff]
      %v2933 = vld [vmem:[%s193 + $0x70] sm:$0xff]
      %v2934 = vld [vmem:[%s193 + $0x78] sm:$0xff]
      %v2935 = vld [vmem:[%s193 + $0x80] sm:$0xff]
      %v2936 = vld [vmem:[%s193 + $0x88] sm:$0xff]
      %v2937 = vld [vmem:[%s193 + $0x90] sm:$0xff]
      %v2938 = vld [vmem:[%s193 + $0x98] sm:$0xff]
      %v2939 = vld [vmem:[%s193 + $0xa0] sm:$0xff]
      %v2940 = vld [vmem:[%s193 + $0xa8] sm:$0xff]
      %v2941 = vld [vmem:[%s193 + $0xb0] sm:$0xff]
      %v2942 = vld [vmem:[%s193 + $0xb8] sm:$0xff]
      %v2943 = vld [vmem:[%s193 + $0xc0] sm:$0xff]
      %v2944 = vld [vmem:[%s193 + $0xc8] sm:$0xff]
      %v2945 = vld [vmem:[%s193 + $0xd0] sm:$0xff]
      %v2946 = vld [vmem:[%s193 + $0xd8] sm:$0xff]
      %v2947 = vld [vmem:[%s193 + $0xe0] sm:$0xff]
      %v2948 = vld [vmem:[%s193 + $0xe8] sm:$0xff]
      %v2949 = vld [vmem:[%s193 + $0xf0] sm:$0xff]
      %v2950 = vld [vmem:[%s193 + $0xf8] sm:$0xff]
      %v2951 = vld [vmem:[%s193 + $0x100] sm:$0xff]
      %v2952 = vld [vmem:[%s193 + $0x108] sm:$0xff]
      %v2953 = vld [vmem:[%s193 + $0x110] sm:$0xff]
      %v2954 = vld [vmem:[%s193 + $0x118] sm:$0xff]
      %v2955 = vld [vmem:[%s193 + $0x120] sm:$0xff]
      %v2956 = vld [vmem:[%s193 + $0x128] sm:$0xff]
      %v2957 = vld [vmem:[%s193 + $0x130] sm:$0xff]
      %v2958 = vld [vmem:[%s193 + $0x138] sm:$0xff]
      %v2959 = vld [vmem:[%s193 + $0x140] sm:$0xff]
      %v2960 = vld [vmem:[%s193 + $0x148] sm:$0xff]
      %v2961 = vld [vmem:[%s193 + $0x150] sm:$0xff]
      %v2962 = vld [vmem:[%s193 + $0x158] sm:$0xff]
      %v2963 = vld [vmem:[%s193 + $0x160] sm:$0xff]
      %v2964 = vld [vmem:[%s193 + $0x168] sm:$0xff]
      %v2965 = vld [vmem:[%s193 + $0x170] sm:$0xff]
      %v2966 = vld [vmem:[%s193 + $0x178] sm:$0xff]
      %v2967 = vld [vmem:[%s193 + $0x180] sm:$0xff]
      %v2968 = vld [vmem:[%s193 + $0x188] sm:$0xff]
      %v2969 = vld [vmem:[%s193 + $0x190] sm:$0xff]
      %v2970 = vld [vmem:[%s193 + $0x198] sm:$0xff]
      %v2971 = vld [vmem:[%s193 + $0x1a0] sm:$0xff]
      %v2972 = vld [vmem:[%s193 + $0x1a8] sm:$0xff]
      %v2973 = vld [vmem:[%s193 + $0x1b0] sm:$0xff]
      %v2974 = vld [vmem:[%s193 + $0x1b8] sm:$0xff]
      %v2975 = vld [vmem:[%s193 + $0x1c0] sm:$0xff]
      %v2976 = vld [vmem:[%s193 + $0x1c8] sm:$0xff]
      %v2977 = vld [vmem:[%s193 + $0x1d0] sm:$0xff]
      %v2978 = vld [vmem:[%s193 + $0x1d8] sm:$0xff]
      %v2979 = vld [vmem:[%s193 + $0x1e0] sm:$0xff]
      %v2980 = vld [vmem:[%s193 + $0x1e8] sm:$0xff]
      %v2981 = vld [vmem:[%s193 + $0x1f0] sm:$0xff]
      %v2982 = vld [vmem:[%s193 + $0x1f8] sm:$0xff]
      %v2983 = vadd.f32 %v2855, %v2919
      %v2984 = vadd.f32 %v2856, %v2920
      %v2985 = vadd.f32 %v2857, %v2921
      %v2986 = vadd.f32 %v2858, %v2922
      %v2987 = vadd.f32 %v2859, %v2923
      %v2988 = vadd.f32 %v2860, %v2924
      %v2989 = vadd.f32 %v2861, %v2925
      %v2990 = vadd.f32 %v2862, %v2926
      %v2991 = vadd.f32 %v2863, %v2927
      %v2992 = vadd.f32 %v2864, %v2928
      %v2993 = vadd.f32 %v2865, %v2929
      %v2994 = vadd.f32 %v2866, %v2930
      %v2995 = vadd.f32 %v2867, %v2931
      %v2996 = vadd.f32 %v2868, %v2932
      %v2997 = vadd.f32 %v2869, %v2933
      %v2998 = vadd.f32 %v2870, %v2934
      %v2999 = vadd.f32 %v2871, %v2935
      %v3000 = vadd.f32 %v2872, %v2936
      %v3001 = vadd.f32 %v2873, %v2937
      %v3002 = vadd.f32 %v2874, %v2938
      %v3003 = vadd.f32 %v2875, %v2939
      %v3004 = vadd.f32 %v2876, %v2940
      %v3005 = vadd.f32 %v2877, %v2941
      %v3006 = vadd.f32 %v2878, %v2942
      %v3007 = vadd.f32 %v2879, %v2943
      %v3008 = vadd.f32 %v2880, %v2944
      %v3009 = vadd.f32 %v2881, %v2945
      %v3010 = vadd.f32 %v2882, %v2946
      %v3011 = vadd.f32 %v2883, %v2947
      %v3012 = vadd.f32 %v2884, %v2948
      %v3013 = vadd.f32 %v2885, %v2949
      %v3014 = vadd.f32 %v2886, %v2950
      %v3015 = vadd.f32 %v2887, %v2951
      %v3016 = vadd.f32 %v2888, %v2952
      %v3017 = vadd.f32 %v2889, %v2953
      %v3018 = vadd.f32 %v2890, %v2954
      %v3019 = vadd.f32 %v2891, %v2955
      %v3020 = vadd.f32 %v2892, %v2956
      %v3021 = vadd.f32 %v2893, %v2957
      %v3022 = vadd.f32 %v2894, %v2958
      %v3023 = vadd.f32 %v2895, %v2959
      %v3024 = vadd.f32 %v2896, %v2960
      %v3025 = vadd.f32 %v2897, %v2961
      %v3026 = vadd.f32 %v2898, %v2962
      %v3027 = vadd.f32 %v2899, %v2963
      %v3028 = vadd.f32 %v2900, %v2964
      %v3029 = vadd.f32 %v2901, %v2965
      %v3030 = vadd.f32 %v2902, %v2966
      %v3031 = vadd.f32 %v2903, %v2967
      %v3032 = vadd.f32 %v2904, %v2968
      %v3033 = vadd.f32 %v2905, %v2969
      %v3034 = vadd.f32 %v2906, %v2970
      %v3035 = vadd.f32 %v2907, %v2971
      %v3036 = vadd.f32 %v2908, %v2972
      %v3037 = vadd.f32 %v2909, %v2973
      %v3038 = vadd.f32 %v2910, %v2974
      %v3039 = vadd.f32 %v2911, %v2975
      %v3040 = vadd.f32 %v2912, %v2976
      %v3041 = vadd.f32 %v2913, %v2977
      %v3042 = vadd.f32 %v2914, %v2978
      %v3043 = vadd.f32 %v2915, %v2979
      %v3044 = vadd.f32 %v2916, %v2980
      %v3045 = vadd.f32 %v2917, %v2981
      %v3046 = vadd.f32 %v2918, %v2982
      %v3047 = vpack.c.bf16 %v2984, %v2983
      %v3048 = vpack.c.bf16 %v2986, %v2985
      %v3049 = vpack.c.bf16 %v2988, %v2987
      %v3050 = vpack.c.bf16 %v2990, %v2989
      %v3051 = vpack.c.bf16 %v2992, %v2991
      %v3052 = vpack.c.bf16 %v2994, %v2993
      %v3053 = vpack.c.bf16 %v2996, %v2995
      %v3054 = vpack.c.bf16 %v2998, %v2997
      %v3055 = vpack.c.bf16 %v3000, %v2999
      %v3056 = vpack.c.bf16 %v3002, %v3001
      %v3057 = vpack.c.bf16 %v3004, %v3003
      %v3058 = vpack.c.bf16 %v3006, %v3005
      %v3059 = vpack.c.bf16 %v3008, %v3007
      %v3060 = vpack.c.bf16 %v3010, %v3009
      %v3061 = vpack.c.bf16 %v3012, %v3011
      %v3062 = vpack.c.bf16 %v3014, %v3013
      %v3063 = vpack.c.bf16 %v3016, %v3015
      %v3064 = vpack.c.bf16 %v3018, %v3017
      %v3065 = vpack.c.bf16 %v3020, %v3019
      %v3066 = vpack.c.bf16 %v3022, %v3021
      %v3067 = vpack.c.bf16 %v3024, %v3023
      %v3068 = vpack.c.bf16 %v3026, %v3025
      %v3069 = vpack.c.bf16 %v3028, %v3027
      %v3070 = vpack.c.bf16 %v3030, %v3029
      %v3071 = vpack.c.bf16 %v3032, %v3031
      %v3072 = vpack.c.bf16 %v3034, %v3033
      %v3073 = vpack.c.bf16 %v3036, %v3035
      %v3074 = vpack.c.bf16 %v3038, %v3037
      %v3075 = vpack.c.bf16 %v3040, %v3039
      %v3076 = vpack.c.bf16 %v3042, %v3041
      %v3077 = vpack.c.bf16 %v3044, %v3043
      %v3078 = vpack.c.bf16 %v3046, %v3045
      %v3111 = vunpack.c.l.b16 %v3047
      %v3112 = vunpack.c.h.b16 %v3047
      %v3113 = vunpack.c.l.b16 %v3048
      %v3114 = vunpack.c.h.b16 %v3048
      %v3115 = vunpack.c.l.b16 %v3049
      %v3116 = vunpack.c.h.b16 %v3049
      %v3117 = vunpack.c.l.b16 %v3050
      %v3118 = vunpack.c.h.b16 %v3050
      %v3119 = vunpack.c.l.b16 %v3051
      %v3120 = vunpack.c.h.b16 %v3051
      %v3121 = vunpack.c.l.b16 %v3052
      %v3122 = vunpack.c.h.b16 %v3052
      %v3123 = vunpack.c.l.b16 %v3053
      %v3124 = vunpack.c.h.b16 %v3053
      %v3125 = vunpack.c.l.b16 %v3054
      %v3126 = vunpack.c.h.b16 %v3054
      %v3127 = vunpack.c.l.b16 %v3055
      %v3128 = vunpack.c.h.b16 %v3055
      %v3129 = vunpack.c.l.b16 %v3056
      %v3130 = vunpack.c.h.b16 %v3056
      %v3131 = vunpack.c.l.b16 %v3057
      %v3132 = vunpack.c.h.b16 %v3057
      %v3133 = vunpack.c.l.b16 %v3058
      %v3134 = vunpack.c.h.b16 %v3058
      %v3135 = vunpack.c.l.b16 %v3059
      %v3136 = vunpack.c.h.b16 %v3059
      %v3137 = vunpack.c.l.b16 %v3060
      %v3138 = vunpack.c.h.b16 %v3060
      %v3139 = vunpack.c.l.b16 %v3061
      %v3140 = vunpack.c.h.b16 %v3061
      %v3141 = vunpack.c.l.b16 %v3062
      %v3142 = vunpack.c.h.b16 %v3062
      %v3143 = vunpack.c.l.b16 %v3063
      %v3144 = vunpack.c.h.b16 %v3063
      %v3145 = vunpack.c.l.b16 %v3064
      %v3146 = vunpack.c.h.b16 %v3064
      %v3147 = vunpack.c.l.b16 %v3065
      %v3148 = vunpack.c.h.b16 %v3065
      %v3149 = vunpack.c.l.b16 %v3066
      %v3150 = vunpack.c.h.b16 %v3066
      %v3151 = vunpack.c.l.b16 %v3067
      %v3152 = vunpack.c.h.b16 %v3067
      %v3153 = vunpack.c.l.b16 %v3068
      %v3154 = vunpack.c.h.b16 %v3068
      %v3155 = vunpack.c.l.b16 %v3069
      %v3156 = vunpack.c.h.b16 %v3069
      %v3157 = vunpack.c.l.b16 %v3070
      %v3158 = vunpack.c.h.b16 %v3070
      %v3159 = vunpack.c.l.b16 %v3071
      %v3160 = vunpack.c.h.b16 %v3071
      %v3161 = vunpack.c.l.b16 %v3072
      %v3162 = vunpack.c.h.b16 %v3072
      %v3163 = vunpack.c.l.b16 %v3073
      %v3164 = vunpack.c.h.b16 %v3073
      %v3165 = vunpack.c.l.b16 %v3074
      %v3166 = vunpack.c.h.b16 %v3074
      %v3167 = vunpack.c.l.b16 %v3075
      %v3168 = vunpack.c.h.b16 %v3075
      %v3169 = vunpack.c.l.b16 %v3076
      %v3170 = vunpack.c.h.b16 %v3076
      %v3171 = vunpack.c.l.b16 %v3077
      %v3172 = vunpack.c.h.b16 %v3077
      %v3173 = vunpack.c.l.b16 %v3078
      %v3174 = vunpack.c.h.b16 %v3078
      %v3175 = vpack.c.b16 %v3111, %v3111
      %v3176 = vpack.c.b16 %v3112, %v3112
      %v3177 = vpack.c.b16 %v3113, %v3113
      %v3178 = vpack.c.b16 %v3114, %v3114
      %v3179 = vpack.c.b16 %v3115, %v3115
      %v3180 = vpack.c.b16 %v3116, %v3116
      %v3181 = vpack.c.b16 %v3117, %v3117
      %v3182 = vpack.c.b16 %v3118, %v3118
      %v3183 = vpack.c.b16 %v3119, %v3119
      %v3184 = vpack.c.b16 %v3120, %v3120
      %v3185 = vpack.c.b16 %v3121, %v3121
      %v3186 = vpack.c.b16 %v3122, %v3122
      %v3187 = vpack.c.b16 %v3123, %v3123
      %v3188 = vpack.c.b16 %v3124, %v3124
      %v3189 = vpack.c.b16 %v3125, %v3125
      %v3190 = vpack.c.b16 %v3126, %v3126
      %v3191 = vpack.c.b16 %v3127, %v3127
      %v3192 = vpack.c.b16 %v3128, %v3128
      %v3193 = vpack.c.b16 %v3129, %v3129
      %v3194 = vpack.c.b16 %v3130, %v3130
      %v3195 = vpack.c.b16 %v3131, %v3131
      %v3196 = vpack.c.b16 %v3132, %v3132
      %v3197 = vpack.c.b16 %v3133, %v3133
      %v3198 = vpack.c.b16 %v3134, %v3134
      %v3199 = vpack.c.b16 %v3135, %v3135
      %v3200 = vpack.c.b16 %v3136, %v3136
      %v3201 = vpack.c.b16 %v3137, %v3137
      %v3202 = vpack.c.b16 %v3138, %v3138
      %v3203 = vpack.c.b16 %v3139, %v3139
      %v3204 = vpack.c.b16 %v3140, %v3140
      %v3205 = vpack.c.b16 %v3141, %v3141
      %v3206 = vpack.c.b16 %v3142, %v3142
      %v3207 = vpack.c.b16 %v3143, %v3143
      %v3208 = vpack.c.b16 %v3144, %v3144
      %v3209 = vpack.c.b16 %v3145, %v3145
      %v3210 = vpack.c.b16 %v3146, %v3146
      %v3211 = vpack.c.b16 %v3147, %v3147
      %v3212 = vpack.c.b16 %v3148, %v3148
      %v3213 = vpack.c.b16 %v3149, %v3149
      %v3214 = vpack.c.b16 %v3150, %v3150
      %v3215 = vpack.c.b16 %v3151, %v3151
      %v3216 = vpack.c.b16 %v3152, %v3152
      %v3217 = vpack.c.b16 %v3153, %v3153
      %v3218 = vpack.c.b16 %v3154, %v3154
      %v3219 = vpack.c.b16 %v3155, %v3155
      %v3220 = vpack.c.b16 %v3156, %v3156
      %v3221 = vpack.c.b16 %v3157, %v3157
      %v3222 = vpack.c.b16 %v3158, %v3158
      %v3223 = vpack.c.b16 %v3159, %v3159
      %v3224 = vpack.c.b16 %v3160, %v3160
      %v3225 = vpack.c.b16 %v3161, %v3161
      %v3226 = vpack.c.b16 %v3162, %v3162
      %v3227 = vpack.c.b16 %v3163, %v3163
      %v3228 = vpack.c.b16 %v3164, %v3164
      %v3229 = vpack.c.b16 %v3165, %v3165
      %v3230 = vpack.c.b16 %v3166, %v3166
      %v3231 = vpack.c.b16 %v3167, %v3167
      %v3232 = vpack.c.b16 %v3168, %v3168
      %v3233 = vpack.c.b16 %v3169, %v3169
      %v3234 = vpack.c.b16 %v3170, %v3170
      %v3235 = vpack.c.b16 %v3171, %v3171
      %v3236 = vpack.c.b16 %v3172, %v3172
      %v3237 = vpack.c.b16 %v3173, %v3173
      %v3238 = vpack.c.b16 %v3174, %v3174
      %3303 = vst [vmem:[%s199] sm:$0xf] %v3175
      %3304 = vst [vmem:[%s199 + $0x4] sm:$0xf] %v3176
      %3305 = vst [vmem:[%s199 + $0x8] sm:$0xf] %v3177
      %3306 = vst [vmem:[%s199 + $0xc] sm:$0xf] %v3178
      %3307 = vst [vmem:[%s199 + $0x10] sm:$0xf] %v3179
      %3308 = vst [vmem:[%s199 + $0x14] sm:$0xf] %v3180
      %3309 = vst [vmem:[%s199 + $0x18] sm:$0xf] %v3181
      %3310 = vst [vmem:[%s199 + $0x1c] sm:$0xf] %v3182
      %3311 = vst [vmem:[%s199 + $0x20] sm:$0xf] %v3183
      %3312 = vst [vmem:[%s199 + $0x24] sm:$0xf] %v3184
      %3313 = vst [vmem:[%s199 + $0x28] sm:$0xf] %v3185
      %3314 = vst [vmem:[%s199 + $0x2c] sm:$0xf] %v3186
      %3315 = vst [vmem:[%s199 + $0x30] sm:$0xf] %v3187
      %3316 = vst [vmem:[%s199 + $0x34] sm:$0xf] %v3188
      %3317 = vst [vmem:[%s199 + $0x38] sm:$0xf] %v3189
      %3318 = vst [vmem:[%s199 + $0x3c] sm:$0xf] %v3190
      %3319 = vst [vmem:[%s199 + $0x40] sm:$0xf] %v3191
      %3320 = vst [vmem:[%s199 + $0x44] sm:$0xf] %v3192
      %3321 = vst [vmem:[%s199 + $0x48] sm:$0xf] %v3193
      %3322 = vst [vmem:[%s199 + $0x4c] sm:$0xf] %v3194
      %3323 = vst [vmem:[%s199 + $0x50] sm:$0xf] %v3195
      %3324 = vst [vmem:[%s199 + $0x54] sm:$0xf] %v3196
      %3325 = vst [vmem:[%s199 + $0x58] sm:$0xf] %v3197
      %3326 = vst [vmem:[%s199 + $0x5c] sm:$0xf] %v3198
      %3327 = vst [vmem:[%s199 + $0x60] sm:$0xf] %v3199
      %3328 = vst [vmem:[%s199 + $0x64] sm:$0xf] %v3200
      %3329 = vst [vmem:[%s199 + $0x68] sm:$0xf] %v3201
      %3330 = vst [vmem:[%s199 + $0x6c] sm:$0xf] %v3202
      %3331 = vst [vmem:[%s199 + $0x70] sm:$0xf] %v3203
      %3332 = vst [vmem:[%s199 + $0x74] sm:$0xf] %v3204
      %3333 = vst [vmem:[%s199 + $0x78] sm:$0xf] %v3205
      %3334 = vst [vmem:[%s199 + $0x7c] sm:$0xf] %v3206
      %3335 = vst [vmem:[%s199 + $0x80] sm:$0xf] %v3207
      %3336 = vst [vmem:[%s199 + $0x84] sm:$0xf] %v3208
      %3337 = vst [vmem:[%s199 + $0x88] sm:$0xf] %v3209
      %3338 = vst [vmem:[%s199 + $0x8c] sm:$0xf] %v3210
      %3339 = vst [vmem:[%s199 + $0x90] sm:$0xf] %v3211
      %3340 = vst [vmem:[%s199 + $0x94] sm:$0xf] %v3212
      %3341 = vst [vmem:[%s199 + $0x98] sm:$0xf] %v3213
      %3342 = vst [vmem:[%s199 + $0x9c] sm:$0xf] %v3214
      %3343 = vst [vmem:[%s199 + $0xa0] sm:$0xf] %v3215
      %3344 = vst [vmem:[%s199 + $0xa4] sm:$0xf] %v3216
      %3345 = vst [vmem:[%s199 + $0xa8] sm:$0xf] %v3217
      %3346 = vst [vmem:[%s199 + $0xac] sm:$0xf] %v3218
      %3347 = vst [vmem:[%s199 + $0xb0] sm:$0xf] %v3219
      %3348 = vst [vmem:[%s199 + $0xb4] sm:$0xf] %v3220
      %3349 = vst [vmem:[%s199 + $0xb8] sm:$0xf] %v3221
      %3350 = vst [vmem:[%s199 + $0xbc] sm:$0xf] %v3222
      %3351 = vst [vmem:[%s199 + $0xc0] sm:$0xf] %v3223
      %3352 = vst [vmem:[%s199 + $0xc4] sm:$0xf] %v3224
      %3353 = vst [vmem:[%s199 + $0xc8] sm:$0xf] %v3225
      %3354 = vst [vmem:[%s199 + $0xcc] sm:$0xf] %v3226
      %3355 = vst [vmem:[%s199 + $0xd0] sm:$0xf] %v3227
      %3356 = vst [vmem:[%s199 + $0xd4] sm:$0xf] %v3228
      %3357 = vst [vmem:[%s199 + $0xd8] sm:$0xf] %v3229
      %3358 = vst [vmem:[%s199 + $0xdc] sm:$0xf] %v3230
      %3359 = vst [vmem:[%s199 + $0xe0] sm:$0xf] %v3231
      %3360 = vst [vmem:[%s199 + $0xe4] sm:$0xf] %v3232
      %3361 = vst [vmem:[%s199 + $0xe8] sm:$0xf] %v3233
      %3362 = vst [vmem:[%s199 + $0xec] sm:$0xf] %v3234
      %3363 = vst [vmem:[%s199 + $0xf0] sm:$0xf] %v3235
      %3364 = vst [vmem:[%s199 + $0xf4] sm:$0xf] %v3236
      %3365 = vst [vmem:[%s199 + $0xf8] sm:$0xf] %v3237
      %3366 = vst [vmem:[%s199 + $0xfc] sm:$0xf] %v3238
      %s3367 = smul.u32 64, %s15
      %p3368 = scmp.lt.s32.totalorder %s3367, 127
      %s3369 = scalar_select %p3368, %s3367, 127
      %s3370 = smul.addr %s3369, 4
      %s3371 = scalar_lea.vmem %s4, %s3370
      // Predicated region
      $region37: #{launet_stage1.12} parent=35 // pred_check
        %p3372 = pneg %p122
      $region38: #{launet_stage1.12} parent=35 // pred_check_branch
        %3374 = sbr.rel (%p3372) target = $region40
      $region39: #{launet_stage1.12} parent=35 // pred_region
        %s3375 = smul.u32 64, %s15
      $region40: #{launet_stage1.12} parent=35 // pred_fallthru
        _
    $region36: #{launet_stage1.12} parent=5 // pred_fallthru
      _
    %p3376 = scmp.le.s32.totalorder 2, %s10
    // Predicated region
    $region41: #{launet_stage1.12} parent=5 // pred_check
      %p3377 = pneg %p3376
    $region42: #{launet_stage1.12} parent=5 // pred_check_branch
      %3379 = sbr.rel (%p3377) target = $region44
    $region43: #{launet_stage1.12} parent=5 // pred_region
      %s3380 = ssub.s32 %s10, 2
      // Predicated region
      $region45: #{launet_stage1.12} parent=43 // pred_check
        %p3381 = pneg %p128
      $region46: #{launet_stage1.12} parent=43 // pred_check_branch
        %3383 = sbr.rel (%p3381) target = $region48
      $region47: #{launet_stage1.12} parent=43 // pred_region
        %s3384 = smul.u32 64, %s16
        %p3385 = scmp.lt.s32.totalorder %s3384, 127
        %s3386 = scalar_select %p3385, %s3384, 127
        %s3387 = smul.addr %s3386, 4
        %s3388 = scalar_lea.vmem %s4, %s3387
      $region48: #{launet_stage1.12} parent=43 // pred_fallthru
        _
    $region44: #{launet_stage1.12} parent=5 // pred_fallthru
      _
  $region6: #{launet_stage1.12} parent=0 // loop_footer
    %s14 = sadd.s32 1, %s10
  $region7: #{launet_stage1.12} parent=0 // loop_footer_branch
    %9 = sbr.rel target = $region3
  $region8: #{launet_stage1.12} parent=0 // loop_exit
    _

// kernel: launet_stage1.14
$region0: #{launet_stage1.14}
  #allocation0 [shape = 'u32[]', space=smem, size = 0x4, offset = 0x4, fixed_abs, tag = 'smem constant byte address 0x4 - core index']
  #allocation1 [shape = 'u32[144,128]{1,0:T(1,128)}', space=vmem, size = 0x12000, scoped, tag = 'internal scratch']
  %s0 = inlined_call_operand.vmem [shape: bf16[4,7,576], index: 0, kind: input, shape index: {}]
  %s1 = inlined_call_operand.vmem [shape: bf16[4,576,128], index: 1, kind: input, shape index: {}]
  %s2 = inlined_call_operand.vmem [shape: f32[4,1,128], index: 2, kind: input, shape index: {}]
  %s3 = inlined_call_operand.vmem [shape: f32[4,7,128], index: 3, kind: output, shape index: {}]
  %s4 = sld [smem:[#allocation0]]
  $region45: #{launet_stage1.14} parent=0
    _
  %s6 = ssub.s32 1, %s4
  %s7 = scalar_select 0, %s6, %s4
  loop: start=0, step=1, limit=6
  $region2: #{launet_stage1.14} parent=0 // loop_pre_header
    _
  $region3: #{launet_stage1.14} parent=0 // loop_header
    %s9 = sphi 0, %s13
    %p10 = scmp.ge.s32.totalorder %s9, 6
    %s16 = sphi 0, %s28
    %s17 = sphi 0, %s24
    %s18 = sphi 0, %s16
    %s19 = sphi 0, %s17
    %s20 = sphi 0, %s18
    %s21 = sphi 0, %s19
    %s33 = sphi 0, %s35
    %s36 = sphi 0, %s33
    %s37 = sphi 0, %s36
    %s53 = sphi 0, %s37
    %s59 = sphi 0, %s61
    %s62 = sphi 0, %s59
    %s63 = sphi 0, %s62
    %s79 = sphi 0, %s63
    %s85 = sphi 0, %s87
    %s88 = sphi 0, %s85
    %s89 = sphi 0, %s88
    %s105 = sphi 0, %s89
    %s113 = sphi 0, %s115
    %s116 = sphi 0, %s113
    %s117 = sphi 0, %s116
    %s133 = sphi 0, %s117
  $region4: #{launet_stage1.14} parent=0 // loop_header_branch
    %12 = sbr.rel (%p10) target = $region8
  $region5: #{launet_stage1.14} parent=0 // loop_body
    %s14 = ssub.s32 %s9, 1
    %s15 = ssub.s32 %s9, 2
    %s22 = sadd.s32 1, %s17
    %p23 = scmp.ge.s32.totalorder %s22, 1
    %s24 = scalar_select %p23, 0, %s22
    %s25 = sadd.s32 1, %s16
    %s26 = scalar_select %p23, %s25, %s16
    %p27 = scmp.ge.s32.totalorder %s26, 4
    %s28 = scalar_select %p27, 0, %s26
    %s29 = ssub.s32 %s16, %s28
    %s30 = ssub.s32 %s17, %s24
    %s31 = sor.u32 %s29, %s30
    %p32 = scmp.eq.s32.totalorder %s31, 0
    %s34 = sadd.s32 %s33, 1
    %s35 = scalar_select %p32, %s33, %s34
    %p38 = pneg %p32
    %p39 = scmp.eq.s32.totalorder %s9, 3
    %p40 = por %p38, %p39
    %p41 = scmp.ne.s32.totalorder %s33, %s36
    %p42 = scmp.eq.s32.totalorder %s9, 0
    %p43 = por %p41, %p42
    %p44 = scmp.ne.s32.totalorder %s33, %s36
    %p45 = scmp.eq.s32.totalorder %s14, 3
    %p46 = por %p44, %p45
    %p47 = scmp.ne.s32.totalorder %s36, %s37
    %p48 = scmp.eq.s32.totalorder %s14, 0
    %p49 = por %p47, %p48
    %p50 = scmp.ne.s32.totalorder %s36, %s37
    %p51 = scmp.eq.s32.totalorder %s15, 3
    %p52 = por %p50, %p51
    %p54 = scmp.ne.s32.totalorder %s37, %s53
    %p55 = scmp.eq.s32.totalorder %s15, 0
    %p56 = por %p54, %p55
    %s57 = ssub.s32 %s16, %s28
    %p58 = scmp.eq.s32.totalorder %s57, 0
    %s60 = sadd.s32 %s59, 1
    %s61 = scalar_select %p58, %s59, %s60
    %p64 = pneg %p58
    %p65 = scmp.eq.s32.totalorder %s9, 3
    %p66 = por %p64, %p65
    %p67 = scmp.ne.s32.totalorder %s59, %s62
    %p68 = scmp.eq.s32.totalorder %s9, 0
    %p69 = por %p67, %p68
    %p70 = scmp.ne.s32.totalorder %s59, %s62
    %p71 = scmp.eq.s32.totalorder %s14, 3
    %p72 = por %p70, %p71
    %p73 = scmp.ne.s32.totalorder %s62, %s63
    %p74 = scmp.eq.s32.totalorder %s14, 0
    %p75 = por %p73, %p74
    %p76 = scmp.ne.s32.totalorder %s62, %s63
    %p77 = scmp.eq.s32.totalorder %s15, 3
    %p78 = por %p76, %p77
    %p80 = scmp.ne.s32.totalorder %s63, %s79
    %p81 = scmp.eq.s32.totalorder %s15, 0
    %p82 = por %p80, %p81
    %s83 = ssub.s32 %s16, %s28
    %p84 = scmp.eq.s32.totalorder %s83, 0
    %s86 = sadd.s32 %s85, 1
    %s87 = scalar_select %p84, %s85, %s86
    %p90 = pneg %p84
    %p91 = scmp.eq.s32.totalorder %s9, 3
    %p92 = por %p90, %p91
    %p93 = scmp.ne.s32.totalorder %s85, %s88
    %p94 = scmp.eq.s32.totalorder %s9, 0
    %p95 = por %p93, %p94
    %p96 = scmp.ne.s32.totalorder %s85, %s88
    %p97 = scmp.eq.s32.totalorder %s14, 3
    %p98 = por %p96, %p97
    %p99 = scmp.ne.s32.totalorder %s88, %s89
    %p100 = scmp.eq.s32.totalorder %s14, 0
    %p101 = por %p99, %p100
    %p102 = scmp.ne.s32.totalorder %s88, %s89
    %p103 = scmp.eq.s32.totalorder %s15, 3
    %p104 = por %p102, %p103
    %p106 = scmp.ne.s32.totalorder %s89, %s105
    %p107 = scmp.eq.s32.totalorder %s15, 0
    %p108 = por %p106, %p107
    %s109 = ssub.s32 %s16, %s28
    %s110 = ssub.s32 %s17, %s24
    %s111 = sor.u32 %s109, %s110
    %p112 = scmp.eq.s32.totalorder %s111, 0
    %s114 = sadd.s32 %s113, 1
    %s115 = scalar_select %p112, %s113, %s114
    %p118 = pneg %p112
    %p119 = scmp.eq.s32.totalorder %s9, 3
    %p120 = por %p118, %p119
    %p121 = scmp.ne.s32.totalorder %s113, %s116
    %p122 = scmp.eq.s32.totalorder %s9, 0
    %p123 = por %p121, %p122
    %p124 = scmp.ne.s32.totalorder %s113, %s116
    %p125 = scmp.eq.s32.totalorder %s14, 3
    %p126 = por %p124, %p125
    %p127 = scmp.ne.s32.totalorder %s116, %s117
    %p128 = scmp.eq.s32.totalorder %s14, 0
    %p129 = por %p127, %p128
    %p130 = scmp.ne.s32.totalorder %s116, %s117
    %p131 = scmp.eq.s32.totalorder %s15, 3
    %p132 = por %p130, %p131
    %p134 = scmp.ne.s32.totalorder %s117, %s133
    %p135 = scmp.eq.s32.totalorder %s15, 0
    %p136 = por %p134, %p135
    %p137 = scmp.le.s32.totalorder 1, %s9
    %p138 = scmp.lt.s32.totalorder %s9, 5
    %p139 = pnand %p137, %p138
    %p140 = pneg %p139
    // Predicated region
    $region9: #{launet_stage1.14} parent=5 // pred_check
      _
    $region10: #{launet_stage1.14} parent=5 // pred_check_branch
      %142 = sbr.rel (%p139) target = $region12
    $region11: #{launet_stage1.14} parent=5 // pred_region
      %s143 = ssub.s32 %s9, 1
    $region12: #{launet_stage1.14} parent=5 // pred_fallthru
      _
    %p144 = scmp.lt.s32.totalorder %s9, 4
    // Predicated region
    $region13: #{launet_stage1.14} parent=5 // pred_check
      %p145 = pneg %p144
    $region14: #{launet_stage1.14} parent=5 // pred_check_branch
      %147 = sbr.rel (%p145) target = $region16
    $region15: #{launet_stage1.14} parent=5 // pred_region
      // Predicated region
      $region17: #{launet_stage1.14} parent=15 // pred_check
        %p148 = pneg %p43
      $region18: #{launet_stage1.14} parent=15 // pred_check_branch
        %150 = sbr.rel (%p148) target = $region20
      $region19: #{launet_stage1.14} parent=15 // pred_region
        %p151 = scmp.lt.s32.totalorder %s16, 3
        %s152 = scalar_select %p151, %s16, 3
        %p153 = scmp.lt.s32.totalorder %s17, 0
        %s154 = scalar_select %p153, %s17, 0
        %s155 = smul.addr %s154, 5
        %s156 = smul.addr %s152, 5
        %s157 = sadd.s32 %s155, %s156
        %s158 = smul.addr %s157, 4
        %s159 = scalar_lea.vmem %s0, %s158
      $region20: #{launet_stage1.14} parent=15 // pred_fallthru
        _
      // Predicated region
      $region21: #{launet_stage1.14} parent=15 // pred_check
        %p160 = pneg %p69
      $region22: #{launet_stage1.14} parent=15 // pred_check_branch
        %162 = sbr.rel (%p160) target = $region24
      $region23: #{launet_stage1.14} parent=15 // pred_region
        %p163 = scmp.lt.s32.totalorder %s16, 3
        %s164 = scalar_select %p163, %s16, 3
        %s165 = smul.addr %s164, 72
        %s166 = smul.addr %s165, 4
        %s167 = scalar_lea.vmem %s1, %s166
      $region24: #{launet_stage1.14} parent=15 // pred_fallthru
        _
      // Predicated region
      $region25: #{launet_stage1.14} parent=15 // pred_check
        %p168 = pneg %p95
      $region26: #{launet_stage1.14} parent=15 // pred_check_branch
        %170 = sbr.rel (%p168) target = $region28
      $region27: #{launet_stage1.14} parent=15 // pred_region
        %p171 = scmp.lt.s32.totalorder %s16, 3
        %s172 = scalar_select %p171, %s16, 3
        %s173 = scalar_lea.vmem %s2, %s172
      $region28: #{launet_stage1.14} parent=15 // pred_fallthru
        _
    $region16: #{launet_stage1.14} parent=5 // pred_fallthru
      _
    %p174 = scmp.le.s32.totalorder 1, %s9
    %p175 = scmp.lt.s32.totalorder %s9, 5
    %p176 = pnand %p174, %p175
    %p177 = pneg %p176
    // Predicated region
    $region29: #{launet_stage1.14} parent=5 // pred_check
      _
    $region30: #{launet_stage1.14} parent=5 // pred_check_branch
      %179 = sbr.rel (%p176) target = $region32
    $region31: #{launet_stage1.14} parent=5 // pred_region
      %s180 = ssub.s32 %s9, 1
      %p181 = scmp.lt.s32.totalorder %s18, 3
      %s182 = scalar_select %p181, %s18, 3
      %p183 = scmp.lt.s32.totalorder %s19, 0
      %s184 = scalar_select %p183, %s19, 0
      %s185 = smul.addr %s184, 5
      %s186 = smul.addr %s182, 5
      %s187 = sadd.s32 %s185, %s186
      %s188 = smul.addr %s187, 4
      %s189 = scalar_lea.vmem %s0, %s188
      %p190 = pneg %p49
      %p191 = pneg %p46
      %p192 = scmp.lt.s32.totalorder %s18, 3
      %s193 = scalar_select %p192, %s18, 3
      %s194 = smul.addr %s193, 72
      %s195 = smul.addr %s194, 4
      %s196 = scalar_lea.vmem %s1, %s195
      %p197 = pneg %p75
      %p198 = pneg %p72
      %p199 = scmp.lt.s32.totalorder %s18, 3
      %s200 = scalar_select %p199, %s18, 3
      %s201 = scalar_lea.vmem %s2, %s200
      %p202 = pneg %p101
      %p203 = pneg %p98
      %p204 = pneg %p129
      %p205 = pneg %p126
      %p206 = scmp.lt.s32.totalorder %s18, 3
      %s207 = scalar_select %p206, %s18, 3
      %p208 = scmp.lt.s32.totalorder %s19, 0
      %s209 = scalar_select %p208, %s19, 0
      %s210 = sadd.s32 %s209, %s207
      %s211 = smul.addr %s210, 8
      %s212 = scalar_lea.vmem %s3, %s211
      %p213 = scmp.lt.s32.totalorder %s18, 3
      %s214 = scalar_select %p213, %s18, 3
      %p215 = scmp.lt.s32.totalorder %s19, 0
      %s216 = scalar_select %p215, %s19, 0
      %s217 = smul.addr %s216, 5
      %s218 = smul.addr %s214, 5
      %s219 = sadd.s32 %s217, %s218
      %s220 = smul.addr %s219, 4
      %s221 = scalar_lea.vmem %s0, %s220
      %p222 = scmp.lt.s32.totalorder %s18, 3
      %s223 = scalar_select %p222, %s18, 3
      %s224 = smul.addr %s223, 72
      %s225 = smul.addr %s224, 4
      %s226 = scalar_lea.vmem %s1, %s225
      %p227 = scmp.lt.s32.totalorder %s18, 3
      %s228 = scalar_select %p227, %s18, 3
      %s229 = scalar_lea.vmem %s2, %s228
      %p230 = scmp.lt.s32.totalorder %s18, 3
      %s231 = scalar_select %p230, %s18, 3
      %p232 = scmp.lt.s32.totalorder %s19, 0
      %s233 = scalar_select %p232, %s19, 0
      %s234 = sadd.s32 %s233, %s231
      %s235 = smul.addr %s234, 8
      %s236 = scalar_lea.vmem %s3, %s235
      %v238 = vld [vmem:[%s221] sm:$0xff]
      %v239 = vld [vmem:[%s221 + $0x8] sm:$0xff]
      %v240 = vld [vmem:[%s221 + $0x10] sm:$0xf]
      %v241 = vld [vmem:[%s226] sm:$0xf]
      %v242 = vld [vmem:[%s226 + $0x4] sm:$0xf]
      %v243 = vld [vmem:[%s226 + $0x8] sm:$0xf]
      %v244 = vld [vmem:[%s226 + $0xc] sm:$0xf]
      %v245 = vld [vmem:[%s226 + $0x10] sm:$0xf]
      %v246 = vld [vmem:[%s226 + $0x14] sm:$0xf]
      %v247 = vld [vmem:[%s226 + $0x18] sm:$0xf]
      %v248 = vld [vmem:[%s226 + $0x1c] sm:$0xf]
      %v249 = vld [vmem:[%s226 + $0x20] sm:$0xf]
      %v250 = vld [vmem:[%s226 + $0x24] sm:$0xf]
      %v251 = vld [vmem:[%s226 + $0x28] sm:$0xf]
      %v252 = vld [vmem:[%s226 + $0x2c] sm:$0xf]
      %v253 = vld [vmem:[%s226 + $0x30] sm:$0xf]
      %v254 = vld [vmem:[%s226 + $0x34] sm:$0xf]
      %v255 = vld [vmem:[%s226 + $0x38] sm:$0xf]
      %v256 = vld [vmem:[%s226 + $0x3c] sm:$0xf]
      %v257 = vld [vmem:[%s226 + $0x40] sm:$0xf]
      %v258 = vld [vmem:[%s226 + $0x44] sm:$0xf]
      %v259 = vld [vmem:[%s226 + $0x48] sm:$0xf]
      %v260 = vld [vmem:[%s226 + $0x4c] sm:$0xf]
      %v261 = vld [vmem:[%s226 + $0x50] sm:$0xf]
      %v262 = vld [vmem:[%s226 + $0x54] sm:$0xf]
      %v263 = vld [vmem:[%s226 + $0x58] sm:$0xf]
      %v264 = vld [vmem:[%s226 + $0x5c] sm:$0xf]
      %v265 = vld [vmem:[%s226 + $0x60] sm:$0xf]
      %v266 = vld [vmem:[%s226 + $0x64] sm:$0xf]
      %v267 = vld [vmem:[%s226 + $0x68] sm:$0xf]
      %v268 = vld [vmem:[%s226 + $0x6c] sm:$0xf]
      %v269 = vld [vmem:[%s226 + $0x70] sm:$0xf]
      %v270 = vld [vmem:[%s226 + $0x74] sm:$0xf]
      %v271 = vld [vmem:[%s226 + $0x78] sm:$0xf]
      %v272 = vld [vmem:[%s226 + $0x7c] sm:$0xf]
      %v273 = vld [vmem:[%s226 + $0x80] sm:$0xf]
      %v274 = vld [vmem:[%s226 + $0x84] sm:$0xf]
      %v275 = vld [vmem:[%s226 + $0x88] sm:$0xf]
      %v276 = vld [vmem:[%s226 + $0x8c] sm:$0xf]
      %v277 = vld [vmem:[%s226 + $0x90] sm:$0xf]
      %v278 = vld [vmem:[%s226 + $0x94] sm:$0xf]
      %v279 = vld [vmem:[%s226 + $0x98] sm:$0xf]
      %v280 = vld [vmem:[%s226 + $0x9c] sm:$0xf]
      %v281 = vld [vmem:[%s226 + $0xa0] sm:$0xf]
      %v282 = vld [vmem:[%s226 + $0xa4] sm:$0xf]
      %v283 = vld [vmem:[%s226 + $0xa8] sm:$0xf]
      %v284 = vld [vmem:[%s226 + $0xac] sm:$0xf]
      %v285 = vld [vmem:[%s226 + $0xb0] sm:$0xf]
      %v286 = vld [vmem:[%s226 + $0xb4] sm:$0xf]
      %v287 = vld [vmem:[%s226 + $0xb8] sm:$0xf]
      %v288 = vld [vmem:[%s226 + $0xbc] sm:$0xf]
      %v289 = vld [vmem:[%s226 + $0xc0] sm:$0xf]
      %v290 = vld [vmem:[%s226 + $0xc4] sm:$0xf]
      %v291 = vld [vmem:[%s226 + $0xc8] sm:$0xf]
      %v292 = vld [vmem:[%s226 + $0xcc] sm:$0xf]
      %v293 = vld [vmem:[%s226 + $0xd0] sm:$0xf]
      %v294 = vld [vmem:[%s226 + $0xd4] sm:$0xf]
      %v295 = vld [vmem:[%s226 + $0xd8] sm:$0xf]
      %v296 = vld [vmem:[%s226 + $0xdc] sm:$0xf]
      %v297 = vld [vmem:[%s226 + $0xe0] sm:$0xf]
      %v298 = vld [vmem:[%s226 + $0xe4] sm:$0xf]
      %v299 = vld [vmem:[%s226 + $0xe8] sm:$0xf]
      %v300 = vld [vmem:[%s226 + $0xec] sm:$0xf]
      %v301 = vld [vmem:[%s226 + $0xf0] sm:$0xf]
      %v302 = vld [vmem:[%s226 + $0xf4] sm:$0xf]
      %v303 = vld [vmem:[%s226 + $0xf8] sm:$0xf]
      %v304 = vld [vmem:[%s226 + $0xfc] sm:$0xf]
      %v305 = vld [vmem:[%s226 + $0x100] sm:$0xf]
      %v306 = vld [vmem:[%s226 + $0x104] sm:$0xf]
      %v307 = vld [vmem:[%s226 + $0x108] sm:$0xf]
      %v308 = vld [vmem:[%s226 + $0x10c] sm:$0xf]
      %v309 = vld [vmem:[%s226 + $0x110] sm:$0xf]
      %v310 = vld [vmem:[%s226 + $0x114] sm:$0xf]
      %v311 = vld [vmem:[%s226 + $0x118] sm:$0xf]
      %v312 = vld [vmem:[%s226 + $0x11c] sm:$0xf]
      %v313 = vld [vmem:[%s229] sm:$0x1]
      %v315 = vlaneseq
      %v316 = vshrl.u32 %v315, 7
      %v317 = vsub.s32 0, %v316
      %v318 = vrot.slane %v313, %v317
      %v323 = vunpack.c.l.b16 %v238
      %v324 = vunpack.c.h.b16 %v238
      %v325 = vunpack.c.l.b16 %v239
      %v326 = vunpack.c.h.b16 %v239
      %v327 = vunpack.c.l.b16 %v240
      %v328 = vpack.c.b16 %v323, %v323
      %v329 = vpack.c.b16 %v324, %v324
      %v330 = vpack.c.b16 %v325, %v325
      %v331 = vpack.c.b16 %v326, %v326
      %v332 = vpack.c.b16 %v327, %v327
      %v409 = vunpack.c.l.b16 %v241
      %v410 = vunpack.c.l.b16 %v242
      %v411 = vunpack.c.l.b16 %v243
      %v412 = vunpack.c.l.b16 %v244
      %v413 = vunpack.c.l.b16 %v245
      %v414 = vunpack.c.l.b16 %v246
      %v415 = vunpack.c.l.b16 %v247
      %v416 = vunpack.c.l.b16 %v248
      %v417 = vunpack.c.l.b16 %v249
      %v418 = vunpack.c.l.b16 %v250
      %v419 = vunpack.c.l.b16 %v251
      %v420 = vunpack.c.l.b16 %v252
      %v421 = vunpack.c.l.b16 %v253
      %v422 = vunpack.c.l.b16 %v254
      %v423 = vunpack.c.l.b16 %v255
      %v424 = vunpack.c.l.b16 %v256
      %v425 = vunpack.c.l.b16 %v257
      %v426 = vunpack.c.l.b16 %v258
      %v427 = vunpack.c.l.b16 %v259
      %v428 = vunpack.c.l.b16 %v260
      %v429 = vunpack.c.l.b16 %v261
      %v430 = vunpack.c.l.b16 %v262
      %v431 = vunpack.c.l.b16 %v263
      %v432 = vunpack.c.l.b16 %v264
      %v433 = vunpack.c.l.b16 %v265
      %v434 = vunpack.c.l.b16 %v266
      %v435 = vunpack.c.l.b16 %v267
      %v436 = vunpack.c.l.b16 %v268
      %v437 = vunpack.c.l.b16 %v269
      %v438 = vunpack.c.l.b16 %v270
      %v439 = vunpack.c.l.b16 %v271
      %v440 = vunpack.c.l.b16 %v272
      %v441 = vunpack.c.l.b16 %v273
      %v442 = vunpack.c.l.b16 %v274
      %v443 = vunpack.c.l.b16 %v275
      %v444 = vunpack.c.l.b16 %v276
      %v445 = vunpack.c.l.b16 %v277
      %v446 = vunpack.c.l.b16 %v278
      %v447 = vunpack.c.l.b16 %v279
      %v448 = vunpack.c.l.b16 %v280
      %v449 = vunpack.c.l.b16 %v281
      %v450 = vunpack.c.l.b16 %v282
      %v451 = vunpack.c.l.b16 %v283
      %v452 = vunpack.c.l.b16 %v284
      %v453 = vunpack.c.l.b16 %v285
      %v454 = vunpack.c.l.b16 %v286
      %v455 = vunpack.c.l.b16 %v287
      %v456 = vunpack.c.l.b16 %v288
      %v457 = vunpack.c.l.b16 %v289
      %v458 = vunpack.c.l.b16 %v290
      %v459 = vunpack.c.l.b16 %v291
      %v460 = vunpack.c.l.b16 %v292
      %v461 = vunpack.c.l.b16 %v293
      %v462 = vunpack.c.l.b16 %v294
      %v463 = vunpack.c.l.b16 %v295
      %v464 = vunpack.c.l.b16 %v296
      %v465 = vunpack.c.l.b16 %v297
      %v466 = vunpack.c.l.b16 %v298
      %v467 = vunpack.c.l.b16 %v299
      %v468 = vunpack.c.l.b16 %v300
      %v469 = vunpack.c.l.b16 %v301
      %v470 = vunpack.c.l.b16 %v302
      %v471 = vunpack.c.l.b16 %v303
      %v472 = vunpack.c.l.b16 %v304
      %v473 = vunpack.c.l.b16 %v305
      %v474 = vunpack.c.l.b16 %v306
      %v475 = vunpack.c.l.b16 %v307
      %v476 = vunpack.c.l.b16 %v308
      %v477 = vunpack.c.l.b16 %v309
      %v478 = vunpack.c.l.b16 %v310
      %v479 = vunpack.c.l.b16 %v311
      %v480 = vunpack.c.l.b16 %v312
      %v481 = vpack.c.b16 %v410, %v409
      %v482 = vpack.c.b16 %v412, %v411
      %v483 = vpack.c.b16 %v414, %v413
      %v484 = vpack.c.b16 %v416, %v415
      %v485 = vpack.c.b16 %v418, %v417
      %v486 = vpack.c.b16 %v420, %v419
      %v487 = vpack.c.b16 %v422, %v421
      %v488 = vpack.c.b16 %v424, %v423
      %v489 = vpack.c.b16 %v426, %v425
      %v490 = vpack.c.b16 %v428, %v427
      %v491 = vpack.c.b16 %v430, %v429
      %v492 = vpack.c.b16 %v432, %v431
      %v493 = vpack.c.b16 %v434, %v433
      %v494 = vpack.c.b16 %v436, %v435
      %v495 = vpack.c.b16 %v438, %v437
      %v496 = vpack.c.b16 %v440, %v439
      %v497 = vpack.c.b16 %v442, %v441
      %v498 = vpack.c.b16 %v444, %v443
      %v499 = vpack.c.b16 %v446, %v445
      %v500 = vpack.c.b16 %v448, %v447
      %v501 = vpack.c.b16 %v450, %v449
      %v502 = vpack.c.b16 %v452, %v451
      %v503 = vpack.c.b16 %v454, %v453
      %v504 = vpack.c.b16 %v456, %v455
      %v505 = vpack.c.b16 %v458, %v457
      %v506 = vpack.c.b16 %v460, %v459
      %v507 = vpack.c.b16 %v462, %v461
      %v508 = vpack.c.b16 %v464, %v463
      %v509 = vpack.c.b16 %v466, %v465
      %v510 = vpack.c.b16 %v468, %v467
      %v511 = vpack.c.b16 %v470, %v469
      %v512 = vpack.c.b16 %v472, %v471
      %v513 = vpack.c.b16 %v474, %v473
      %v514 = vpack.c.b16 %v476, %v475
      %v515 = vpack.c.b16 %v478, %v477
      %v516 = vpack.c.b16 %v480, %v479
      %vm553 = vcmask 523264
      %v555 = vsel %vm553, %v332, 0
      %557 = vmatprep.subr.bf16.mxu0 0
      %558 = vmatpush1.bf16.msra.mxu0 %v481
      %559 = vmatprep.subr.bf16.mxu0 0
      %560 = vmatpush1.bf16.msra.mxu0 %v482
      %561 = vmatprep.subr.bf16.mxu0 0
      %562 = vmatpush1.bf16.msra.mxu0 %v483
      %563 = vmatprep.subr.bf16.mxu0 0
      %564 = vmatpush1.bf16.msra.mxu0 %v484
      %565 = vmatprep.subr.bf16.mxu0 0
      %566 = vmatpush1.bf16.msra.mxu0 %v485
      %567 = vmatprep.subr.bf16.mxu0 0
      %568 = vmatpush1.bf16.msra.mxu0 %v486
      %569 = vmatprep.subr.bf16.mxu0 0
      %570 = vmatpush1.bf16.msra.mxu0 %v487
      %571 = vmatprep.subr.bf16.mxu0 0
      %572 = vmatpush1.bf16.msra.mxu0 %v488
      %573 = vmatprep.subr.bf16.mxu0 0
      %574 = vmatpush1.bf16.msra.mxu0 %v489
      %575 = vmatprep.subr.bf16.mxu0 0
      %576 = vmatpush1.bf16.msra.mxu0 %v490
      %577 = vmatprep.subr.bf16.mxu0 0
      %578 = vmatpush1.bf16.msra.mxu0 %v491
      %579 = vmatprep.subr.bf16.mxu0 0
      %580 = vmatpush1.bf16.msra.mxu0 %v492
      %581 = vmatprep.subr.bf16.mxu0 0
      %582 = vmatpush1.bf16.msra.mxu0 %v493
      %583 = vmatprep.subr.bf16.mxu0 0
      %584 = vmatpush1.bf16.msra.mxu0 %v494
      %585 = vmatprep.subr.bf16.mxu0 0
      %586 = vmatpush1.bf16.msra.mxu0 %v495
      %587 = vmatprep.subr.bf16.mxu0 0
      %588 = vmatpush1.bf16.msra.mxu0 %v496
      %589 = vmatprep.mubr.bf16.mxu0 %v329
      %590 = vmatmul.mubr.bf16.gmra.mrb[0].mxu0 %v328
      %v591 = vpop.f32.mrb[0].mxu0
      %v592 = vadd.f32 %v318, %v591
      %v593 = vpop.f32.mrb[0].mxu0
      %v594 = vpop.f32.mrb[0].mxu0
      %v595 = vpop.f32.mrb[0].mxu0
      %596 = vdwg.mxu0
      %597 = vmatprep.subr.bf16.mxu0 0
      %598 = vmatpush1.bf16.msra.mxu0 %v497
      %599 = vmatprep.subr.bf16.mxu0 0
      %600 = vmatpush1.bf16.msra.mxu0 %v498
      %601 = vmatprep.subr.bf16.mxu0 0
      %602 = vmatpush1.bf16.msra.mxu0 %v499
      %603 = vmatprep.subr.bf16.mxu0 0
      %604 = vmatpush1.bf16.msra.mxu0 %v500
      %605 = vmatprep.subr.bf16.mxu0 0
      %606 = vmatpush1.bf16.msra.mxu0 %v501
      %607 = vmatprep.subr.bf16.mxu0 0
      %608 = vmatpush1.bf16.msra.mxu0 %v502
      %609 = vmatprep.subr.bf16.mxu0 0
      %610 = vmatpush1.bf16.msra.mxu0 %v503
      %611 = vmatprep.subr.bf16.mxu0 0
      %612 = vmatpush1.bf16.msra.mxu0 %v504
      %613 = vmatprep.subr.bf16.mxu0 0
      %614 = vmatpush1.bf16.msra.mxu0 %v505
      %615 = vmatprep.subr.bf16.mxu0 0
      %616 = vmatpush1.bf16.msra.mxu0 %v506
      %617 = vmatprep.subr.bf16.mxu0 0
      %618 = vmatpush1.bf16.msra.mxu0 %v507
      %619 = vmatprep.subr.bf16.mxu0 0
      %620 = vmatpush1.bf16.msra.mxu0 %v508
      %621 = vmatprep.subr.bf16.mxu0 0
      %622 = vmatpush1.bf16.msra.mxu0 %v509
      %623 = vmatprep.subr.bf16.mxu0 0
      %624 = vmatpush1.bf16.msra.mxu0 %v510
      %625 = vmatprep.subr.bf16.mxu0 0
      %626 = vmatpush1.bf16.msra.mxu0 %v511
      %627 = vmatprep.subr.bf16.mxu0 0
      %628 = vmatpush1.bf16.msra.mxu0 %v512
      %629 = vmatprep.mubr.bf16.mxu0 %v331
      %630 = vmatmul.mubr.bf16.gmra.mrb[0].mxu0 %v330
      %v631 = vpop.f32.mrb[0].mxu0
      %v632 = vadd.f32 %v592, %v631
      %v633 = vpop.f32.mrb[0].mxu0
      %v634 = vpop.f32.mrb[0].mxu0
      %v635 = vpop.f32.mrb[0].mxu0
      %636 = vdwg.mxu0
      %637 = vmatprep.subr.bf16.mxu0 0
      %638 = vmatpush1.bf16.msra.mxu0 %v513
      %639 = vmatprep.subr.bf16.mxu0 0
      %640 = vmatpush1.bf16.msra.mxu0 %v514
      %641 = vmatprep.subr.bf16.mxu0 0
      %642 = vmatpush1.bf16.msra.mxu0 %v515
      %643 = vmatprep.subr.bf16.mxu0 0
      %644 = vmatpush1.bf16.msra.mxu0 %v516
      %645 = vmatprep.subr.bf16.mxu0 0
      %646 = vmatpush1.bf16.msra.mxu0 0
      %647 = vmatprep.subr.bf16.mxu0 0
      %648 = vmatpush1.bf16.msra.mxu0 0
      %649 = vmatprep.subr.bf16.mxu0 0
      %650 = vmatpush1.bf16.msra.mxu0 0
      %651 = vmatprep.subr.bf16.mxu0 0
      %652 = vmatpush1.bf16.msra.mxu0 0
      %653 = vmatprep.subr.bf16.mxu0 0
      %654 = vmatpush1.bf16.msra.mxu0 0
      %655 = vmatprep.subr.bf16.mxu0 0
      %656 = vmatpush1.bf16.msra.mxu0 0
      %657 = vmatprep.subr.bf16.mxu0 0
      %658 = vmatpush1.bf16.msra.mxu0 0
      %659 = vmatprep.subr.bf16.mxu0 0
      %660 = vmatpush1.bf16.msra.mxu0 0
      %661 = vmatprep.subr.bf16.mxu0 0
      %662 = vmatpush1.bf16.msra.mxu0 0
      %663 = vmatprep.subr.bf16.mxu0 0
      %664 = vmatpush1.bf16.msra.mxu0 0
      %665 = vmatprep.subr.bf16.mxu0 0
      %666 = vmatpush1.bf16.msra.mxu0 0
      %667 = vmatprep.subr.bf16.mxu0 0
      %668 = vmatpush1.bf16.msra.mxu0 0
      %669 = vmatprep.mubr.bf16.mxu0 0
      %670 = vmatmul.mubr.bf16.gmra.mrb[0].mxu0 %v555
      %v671 = vpop.f32.mrb[0].mxu0
      %v672 = vadd.f32 %v632, %v671
      %v673 = vpop.f32.mrb[0].mxu0
      %v674 = vpop.f32.mrb[0].mxu0
      %v675 = vpop.f32.mrb[0].mxu0
      %676 = vdwg.mxu0
      %677 = vst [vmem:[%s236] sm:$0x7f] %v672
      %p678 = scmp.lt.s32.totalorder %s18, 3
      %s679 = scalar_select %p678, %s18, 3
      %p680 = scmp.lt.s32.totalorder %s19, 0
      %s681 = scalar_select %p680, %s19, 0
      %s682 = sadd.s32 %s681, %s679
      %s683 = smul.addr %s682, 8
      %s684 = scalar_lea.vmem %s3, %s683
      // Predicated region
      $region33: #{launet_stage1.14} parent=31 // pred_check
        %p685 = pneg %p126
      $region34: #{launet_stage1.14} parent=31 // pred_check_branch
        %687 = sbr.rel (%p685) target = $region36
      $region35: #{launet_stage1.14} parent=31 // pred_region
        _
      $region36: #{launet_stage1.14} parent=31 // pred_fallthru
        _
    $region32: #{launet_stage1.14} parent=5 // pred_fallthru
      _
    %p688 = scmp.le.s32.totalorder 2, %s9
    // Predicated region
    $region37: #{launet_stage1.14} parent=5 // pred_check
      %p689 = pneg %p688
    $region38: #{launet_stage1.14} parent=5 // pred_check_branch
      %691 = sbr.rel (%p689) target = $region40
    $region39: #{launet_stage1.14} parent=5 // pred_region
      %s692 = ssub.s32 %s9, 2
      // Predicated region
      $region41: #{launet_stage1.14} parent=39 // pred_check
        %p693 = pneg %p132
      $region42: #{launet_stage1.14} parent=39 // pred_check_branch
        %695 = sbr.rel (%p693) target = $region44
      $region43: #{launet_stage1.14} parent=39 // pred_region
        %p696 = scmp.lt.s32.totalorder %s20, 3
        %s697 = scalar_select %p696, %s20, 3
        %p698 = scmp.lt.s32.totalorder %s21, 0
        %s699 = scalar_select %p698, %s21, 0
        %s700 = sadd.s32 %s699, %s697
        %s701 = smul.addr %s700, 8
        %s702 = scalar_lea.vmem %s3, %s701
      $region44: #{launet_stage1.14} parent=39 // pred_fallthru
        _
    $region40: #{launet_stage1.14} parent=5 // pred_fallthru
      _
  $region6: #{launet_stage1.14} parent=0 // loop_footer
    %s13 = sadd.s32 1, %s9
  $region7: #{launet_stage1.14} parent=0 // loop_footer_branch
    %8 = sbr.rel target = $region3
  $region8: #{launet_stage1.14} parent=0 // loop_exit
    _

// kernel: launet_stage1.15
$region0: #{launet_stage1.15}
  #allocation0 [shape = 'u32[]', space=smem, size = 0x4, offset = 0x4, fixed_abs, tag = 'smem constant byte address 0x4 - core index']
  #allocation1 [shape = 'u32[144,128]{1,0:T(1,128)}', space=vmem, size = 0x12000, scoped, tag = 'internal scratch']
  %s0 = inlined_call_operand.vmem [shape: f32[4,7,64], index: 0, kind: input, shape index: {}]
  %s1 = inlined_call_operand.vmem [shape: f32[4,64,2], index: 1, kind: input, shape index: {}]
  %s2 = inlined_call_operand.vmem [shape: f32[4,1,2], index: 2, kind: input, shape index: {}]
  %s3 = inlined_call_operand.vmem [shape: f32[4,1,2], index: 3, kind: output, shape index: {}]
  %s4 = sld [smem:[#allocation0]]
  $region45: #{launet_stage1.15} parent=0
    _
  %s6 = ssub.s32 1, %s4
  %s7 = scalar_select 0, %s6, %s4
  loop: start=0, step=1, limit=6
  $region2: #{launet_stage1.15} parent=0 // loop_pre_header
    _
  $region3: #{launet_stage1.15} parent=0 // loop_header
    %s9 = sphi 0, %s13
    %p10 = scmp.ge.s32.totalorder %s9, 6
    %s19 = sphi 0, %s21
    %s22 = sphi 0, %s19
    %s23 = sphi 0, %s22
    %s39 = sphi 0, %s23
    %s45 = sphi 0, %s47
    %s48 = sphi 0, %s45
    %s49 = sphi 0, %s48
    %s65 = sphi 0, %s49
    %s71 = sphi 0, %s73
    %s74 = sphi 0, %s71
    %s75 = sphi 0, %s74
    %s91 = sphi 0, %s75
    %s97 = sphi 0, %s99
    %s100 = sphi 0, %s97
    %s101 = sphi 0, %s100
    %s117 = sphi 0, %s101
  $region4: #{launet_stage1.15} parent=0 // loop_header_branch
    %12 = sbr.rel (%p10) target = $region8
  $region5: #{launet_stage1.15} parent=0 // loop_body
    %s14 = ssub.s32 %s9, 1
    %s15 = ssub.s32 %s9, 2
    %s16 = sadd.s32 %s9, 1
    %s17 = ssub.s32 %s9, %s16
    %p18 = scmp.eq.s32.totalorder %s17, 0
    %s20 = sadd.s32 %s19, 1
    %s21 = scalar_select %p18, %s19, %s20
    %p24 = pneg %p18
    %p25 = scmp.eq.s32.totalorder %s9, 3
    %p26 = por %p24, %p25
    %p27 = scmp.ne.s32.totalorder %s19, %s22
    %p28 = scmp.eq.s32.totalorder %s9, 0
    %p29 = por %p27, %p28
    %p30 = scmp.ne.s32.totalorder %s19, %s22
    %p31 = scmp.eq.s32.totalorder %s14, 3
    %p32 = por %p30, %p31
    %p33 = scmp.ne.s32.totalorder %s22, %s23
    %p34 = scmp.eq.s32.totalorder %s14, 0
    %p35 = por %p33, %p34
    %p36 = scmp.ne.s32.totalorder %s22, %s23
    %p37 = scmp.eq.s32.totalorder %s15, 3
    %p38 = por %p36, %p37
    %p40 = scmp.ne.s32.totalorder %s23, %s39
    %p41 = scmp.eq.s32.totalorder %s15, 0
    %p42 = por %p40, %p41
    %s43 = ssub.s32 %s9, %s16
    %p44 = scmp.eq.s32.totalorder %s43, 0
    %s46 = sadd.s32 %s45, 1
    %s47 = scalar_select %p44, %s45, %s46
    %p50 = pneg %p44
    %p51 = scmp.eq.s32.totalorder %s9, 3
    %p52 = por %p50, %p51
    %p53 = scmp.ne.s32.totalorder %s45, %s48
    %p54 = scmp.eq.s32.totalorder %s9, 0
    %p55 = por %p53, %p54
    %p56 = scmp.ne.s32.totalorder %s45, %s48
    %p57 = scmp.eq.s32.totalorder %s14, 3
    %p58 = por %p56, %p57
    %p59 = scmp.ne.s32.totalorder %s48, %s49
    %p60 = scmp.eq.s32.totalorder %s14, 0
    %p61 = por %p59, %p60
    %p62 = scmp.ne.s32.totalorder %s48, %s49
    %p63 = scmp.eq.s32.totalorder %s15, 3
    %p64 = por %p62, %p63
    %p66 = scmp.ne.s32.totalorder %s49, %s65
    %p67 = scmp.eq.s32.totalorder %s15, 0
    %p68 = por %p66, %p67
    %s69 = ssub.s32 %s9, %s16
    %p70 = scmp.eq.s32.totalorder %s69, 0
    %s72 = sadd.s32 %s71, 1
    %s73 = scalar_select %p70, %s71, %s72
    %p76 = pneg %p70
    %p77 = scmp.eq.s32.totalorder %s9, 3
    %p78 = por %p76, %p77
    %p79 = scmp.ne.s32.totalorder %s71, %s74
    %p80 = scmp.eq.s32.totalorder %s9, 0
    %p81 = por %p79, %p80
    %p82 = scmp.ne.s32.totalorder %s71, %s74
    %p83 = scmp.eq.s32.totalorder %s14, 3
    %p84 = por %p82, %p83
    %p85 = scmp.ne.s32.totalorder %s74, %s75
    %p86 = scmp.eq.s32.totalorder %s14, 0
    %p87 = por %p85, %p86
    %p88 = scmp.ne.s32.totalorder %s74, %s75
    %p89 = scmp.eq.s32.totalorder %s15, 3
    %p90 = por %p88, %p89
    %p92 = scmp.ne.s32.totalorder %s75, %s91
    %p93 = scmp.eq.s32.totalorder %s15, 0
    %p94 = por %p92, %p93
    %s95 = ssub.s32 %s9, %s16
    %p96 = scmp.eq.s32.totalorder %s95, 0
    %s98 = sadd.s32 %s97, 1
    %s99 = scalar_select %p96, %s97, %s98
    %p102 = pneg %p96
    %p103 = scmp.eq.s32.totalorder %s9, 3
    %p104 = por %p102, %p103
    %p105 = scmp.ne.s32.totalorder %s97, %s100
    %p106 = scmp.eq.s32.totalorder %s9, 0
    %p107 = por %p105, %p106
    %p108 = scmp.ne.s32.totalorder %s97, %s100
    %p109 = scmp.eq.s32.totalorder %s14, 3
    %p110 = por %p108, %p109
    %p111 = scmp.ne.s32.totalorder %s100, %s101
    %p112 = scmp.eq.s32.totalorder %s14, 0
    %p113 = por %p111, %p112
    %p114 = scmp.ne.s32.totalorder %s100, %s101
    %p115 = scmp.eq.s32.totalorder %s15, 3
    %p116 = por %p114, %p115
    %p118 = scmp.ne.s32.totalorder %s101, %s117
    %p119 = scmp.eq.s32.totalorder %s15, 0
    %p120 = por %p118, %p119
    %p121 = scmp.le.s32.totalorder 1, %s9
    %p122 = scmp.lt.s32.totalorder %s9, 5
    %p123 = pnand %p121, %p122
    %p124 = pneg %p123
    // Predicated region
    $region9: #{launet_stage1.15} parent=5 // pred_check
      _
    $region10: #{launet_stage1.15} parent=5 // pred_check_branch
      %126 = sbr.rel (%p123) target = $region12
    $region11: #{launet_stage1.15} parent=5 // pred_region
      %s127 = ssub.s32 %s9, 1
    $region12: #{launet_stage1.15} parent=5 // pred_fallthru
      _
    %p128 = scmp.lt.s32.totalorder %s9, 4
    // Predicated region
    $region13: #{launet_stage1.15} parent=5 // pred_check
      %p129 = pneg %p128
    $region14: #{launet_stage1.15} parent=5 // pred_check_branch
      %131 = sbr.rel (%p129) target = $region16
    $region15: #{launet_stage1.15} parent=5 // pred_region
      // Predicated region
      $region17: #{launet_stage1.15} parent=15 // pred_check
        %p132 = pneg %p29
      $region18: #{launet_stage1.15} parent=15 // pred_check_branch
        %134 = sbr.rel (%p132) target = $region20
      $region19: #{launet_stage1.15} parent=15 // pred_region
        %p135 = scmp.lt.s32.totalorder %s9, 3
        %s136 = scalar_select %p135, %s9, 3
        %s137 = smul.addr %s136, 8
        %s138 = scalar_lea.vmem %s0, %s137
      $region20: #{launet_stage1.15} parent=15 // pred_fallthru
        _
      // Predicated region
      $region21: #{launet_stage1.15} parent=15 // pred_check
        %p139 = pneg %p55
      $region22: #{launet_stage1.15} parent=15 // pred_check_branch
        %141 = sbr.rel (%p139) target = $region24
      $region23: #{launet_stage1.15} parent=15 // pred_region
        %p142 = scmp.lt.s32.totalorder %s9, 3
        %s143 = scalar_select %p142, %s9, 3
        %s144 = smul.addr %s143, 8
        %s145 = smul.addr %s144, 8
        %s146 = scalar_lea.vmem %s1, %s145
      $region24: #{launet_stage1.15} parent=15 // pred_fallthru
        _
      // Predicated region
      $region25: #{launet_stage1.15} parent=15 // pred_check
        %p147 = pneg %p81
      $region26: #{launet_stage1.15} parent=15 // pred_check_branch
        %149 = sbr.rel (%p147) target = $region28
      $region27: #{launet_stage1.15} parent=15 // pred_region
        %p150 = scmp.lt.s32.totalorder %s9, 3
        %s151 = scalar_select %p150, %s9, 3
        %s152 = scalar_lea.vmem %s2, %s151
      $region28: #{launet_stage1.15} parent=15 // pred_fallthru
        _
    $region16: #{launet_stage1.15} parent=5 // pred_fallthru
      _
    %p153 = scmp.le.s32.totalorder 1, %s9
    %p154 = scmp.lt.s32.totalorder %s9, 5
    %p155 = pnand %p153, %p154
    %p156 = pneg %p155
    // Predicated region
    $region29: #{launet_stage1.15} parent=5 // pred_check
      _
    $region30: #{launet_stage1.15} parent=5 // pred_check_branch
      %158 = sbr.rel (%p155) target = $region32
    $region31: #{launet_stage1.15} parent=5 // pred_region
      %s159 = ssub.s32 %s9, 1
      %p160 = scmp.lt.s32.totalorder %s14, 3
      %s161 = scalar_select %p160, %s14, 3
      %s162 = smul.addr %s161, 8
      %s163 = scalar_lea.vmem %s0, %s162
      %p164 = pneg %p35
      %p165 = pneg %p32
      %p166 = scmp.lt.s32.totalorder %s14, 3
      %s167 = scalar_select %p166, %s14, 3
      %s168 = smul.addr %s167, 8
      %s169 = smul.addr %s168, 8
      %s170 = scalar_lea.vmem %s1, %s169
      %p171 = pneg %p61
      %p172 = pneg %p58
      %p173 = scmp.lt.s32.totalorder %s14, 3
      %s174 = scalar_select %p173, %s14, 3
      %s175 = scalar_lea.vmem %s2, %s174
      %p176 = pneg %p87
      %p177 = pneg %p84
      %p178 = pneg %p113
      %p179 = pneg %p110
      %p180 = scmp.lt.s32.totalorder %s14, 3
      %s181 = scalar_select %p180, %s14, 3
      %s182 = scalar_lea.vmem %s3, %s181
      %p183 = scmp.lt.s32.totalorder %s14, 3
      %s184 = scalar_select %p183, %s14, 3
      %s185 = smul.addr %s184, 8
      %s186 = scalar_lea.vmem %s0, %s185
      %p187 = scmp.lt.s32.totalorder %s14, 3
      %s188 = scalar_select %p187, %s14, 3
      %s189 = smul.addr %s188, 8
      %s190 = smul.addr %s189, 8
      %s191 = scalar_lea.vmem %s1, %s190
      %p192 = scmp.lt.s32.totalorder %s14, 3
      %s193 = scalar_select %p192, %s14, 3
      %s194 = scalar_lea.vmem %s2, %s193
      %p195 = scmp.lt.s32.totalorder %s14, 3
      %s196 = scalar_select %p195, %s14, 3
      %s197 = scalar_lea.vmem %s3, %s196
      %v198 = vld [vmem:[%s186] sm:$0x7f]
      %vm199 = vcmask 522240
      %v200 = vsel %vm199, %v198, 0.0
      %v201 = vrot.slane %v200, 4
      %v202 = vadd.f32 %v200, %v201
      %v203 = vrot.slane %v202, 2
      %v204 = vadd.f32 %v202, %v203
      %v205 = vrot.slane %v204, 1
      %v206 = vadd.f32 %v204, %v205
      %v207 = vrcp.pop 7.0
      %v208 = vmul.f32 %v206, %v207
      %v209 = vld [vmem:[%s191] sm:$0xff]
      %v210 = vld [vmem:[%s191 + $0x8] sm:$0xff]
      %v211 = vld [vmem:[%s191 + $0x10] sm:$0xff]
      %v212 = vld [vmem:[%s191 + $0x18] sm:$0xff]
      %v213 = vld [vmem:[%s191 + $0x20] sm:$0xff]
      %v214 = vld [vmem:[%s191 + $0x28] sm:$0xff]
      %v215 = vld [vmem:[%s191 + $0x30] sm:$0xff]
      %v216 = vld [vmem:[%s191 + $0x38] sm:$0xff]
      %v217 = vld [vmem:[%s194] sm:$0x1]
      %vm218 = vcmask 523264
      %v220 = vsel %vm218, %v208, 0
      %222 = vmatprep.subr.mxu0 0.0
      %223 = vmatpush1.msra.mxu0 %v209
      %224 = vmatprep.subr.mxu0 0.0
      %225 = vmatpush1.msra.mxu0 %v210
      %226 = vmatprep.subr.mxu0 0.0
      %227 = vmatpush1.msra.mxu0 %v211
      %228 = vmatprep.subr.mxu0 0.0
      %229 = vmatpush1.msra.mxu0 %v212
      %230 = vmatprep.subr.mxu0 0.0
      %231 = vmatpush1.msra.mxu0 %v213
      %232 = vmatprep.subr.mxu0 0.0
      %233 = vmatpush1.msra.mxu0 %v214
      %234 = vmatprep.subr.mxu0 0.0
      %235 = vmatpush1.msra.mxu0 %v215
      %236 = vmatprep.subr.mxu0 0.0
      %237 = vmatpush1.msra.mxu0 %v216
      %238 = vmatprep.subr.mxu0 0.0
      %239 = vmatpush1.msra.mxu0 0.0
      %240 = vmatprep.subr.mxu0 0.0
      %241 = vmatpush1.msra.mxu0 0.0
      %242 = vmatprep.subr.mxu0 0.0
      %243 = vmatpush1.msra.mxu0 0.0
      %244 = vmatprep.subr.mxu0 0.0
      %245 = vmatpush1.msra.mxu0 0.0
      %246 = vmatprep.subr.mxu0 0.0
      %247 = vmatpush1.msra.mxu0 0.0
      %248 = vmatprep.subr.mxu0 0.0
      %249 = vmatpush1.msra.mxu0 0.0
      %250 = vmatprep.subr.mxu0 0.0
      %251 = vmatpush1.msra.mxu0 0.0
      %252 = vmatprep.subr.mxu0 0.0
      %253 = vmatpush1.msra.mxu0 0.0
      %254 = vmatprep.subr.mxu0 0.0
      %255 = vmatpush1.msra.mxu0 0.0
      %256 = vmatprep.subr.mxu0 0.0
      %257 = vmatpush1.msra.mxu0 0.0
      %258 = vmatprep.subr.mxu0 0.0
      %259 = vmatpush1.msra.mxu0 0.0
      %260 = vmatprep.subr.mxu0 0.0
      %261 = vmatpush1.msra.mxu0 0.0
      %262 = vmatprep.subr.mxu0 0.0
      %263 = vmatpush1.msra.mxu0 0.0
      %264 = vmatprep.subr.mxu0 0.0
      %265 = vmatpush1.msra.mxu0 0.0
      %266 = vmatprep.subr.mxu0 0.0
      %267 = vmatpush1.msra.mxu0 0.0
      %268 = vmatprep.subr.mxu0 0.0
      %269 = vmatpush1.msra.mxu0 0.0
      %270 = vmatprep.subr.mxu0 0.0
      %271 = vmatpush1.msra.mxu0 0.0
      %272 = vmatprep.subr.mxu0 0.0
      %273 = vmatpush1.msra.mxu0 0.0
      %274 = vmatprep.subr.mxu0 0.0
      %275 = vmatpush1.msra.mxu0 0.0
      %276 = vmatprep.subr.mxu0 0.0
      %277 = vmatpush1.msra.mxu0 0.0
      %278 = vmatprep.subr.mxu0 0.0
      %279 = vmatpush1.msra.mxu0 0.0
      %280 = vmatprep.subr.mxu0 0.0
      %281 = vmatpush1.msra.mxu0 0.0
      %282 = vmatprep.subr.mxu0 0.0
      %283 = vmatpush1.msra.mxu0 0.0
      %284 = vmatprep.subr.mxu0 0.0
      %285 = vmatpush1.msra.mxu0 0.0
      %286 = vmatprep.mubr.f32.mxu0 0.0
      %287 = vmatmul.mubr.f32.gmra.mrb[0].mxu0 %v220
      %v288 = vpop.f32.mrb[0].mxu0
      %v289 = vadd.f32 %v217, %v288
      %v290 = vpop.f32.mrb[0].mxu0
      %291 = vdwg.mxu0
      %vm292 = vcmask 8192
      %v293 = vsel %vm292, %v289, -inf
      %294 = vmax.xlane.f32.xlu0 %v293
      %v295 = vpop.xlane.xlu0 %294
      %v296 = vsub.f32 %v289, %v295
      %v297 = vmul.f32 %v296, 1.442695
      %v298 = vpow.pop %v297
      %v299 = vsel %vm292, %v298, 0.0
      %300 = vadd.xlane.f32.xlu0 %v299
      %v301 = vpop.xlane.xlu0 %300
      %v302 = vrcp.pop %v301
      %v303 = vmul.f32 %v298, %v302
      %304 = vst.msk [vmem:[%s197] sm:$0x1] %vm292, %v303
      %p305 = scmp.lt.s32.totalorder %s14, 3
      %s306 = scalar_select %p305, %s14, 3
      %s307 = scalar_lea.vmem %s3, %s306
      // Predicated region
      $region33: #{launet_stage1.15} parent=31 // pred_check
        %p308 = pneg %p110
      $region34: #{launet_stage1.15} parent=31 // pred_check_branch
        %310 = sbr.rel (%p308) target = $region36
      $region35: #{launet_stage1.15} parent=31 // pred_region
        _
      $region36: #{launet_stage1.15} parent=31 // pred_fallthru
        _
    $region32: #{launet_stage1.15} parent=5 // pred_fallthru
      _
    %p311 = scmp.le.s32.totalorder 2, %s9
    // Predicated region
    $region37: #{launet_stage1.15} parent=5 // pred_check
      %p312 = pneg %p311
    $region38: #{launet_stage1.15} parent=5 // pred_check_branch
      %314 = sbr.rel (%p312) target = $region40
    $region39: #{launet_stage1.15} parent=5 // pred_region
      %s315 = ssub.s32 %s9, 2
      // Predicated region
      $region41: #{launet_stage1.15} parent=39 // pred_check
        %p316 = pneg %p116
      $region42: #{launet_stage1.15} parent=39 // pred_check_branch
        %318 = sbr.rel (%p316) target = $region44
      $region43: #{launet_stage1.15} parent=39 // pred_region
        %p319 = scmp.lt.s32.totalorder %s15, 3
        %s320 = scalar_select %p319, %s15, 3
        %s321 = scalar_lea.vmem %s3, %s320
      $region44: #{launet_stage1.15} parent=39 // pred_fallthru
        _
    $region40: #{launet_stage1.15} parent=5 // pred_fallthru
      _
  $region6: #{launet_stage1.15} parent=0 // loop_footer
    %s13 = sadd.s32 1, %s9
  $region7: #{launet_stage1.15} parent=0 // loop_footer_branch
    %8 = sbr.rel target = $region3
  $region8: #{launet_stage1.15} parent=0 // loop_exit
    _

// kernel: launet_stage1.10
$region0: #{launet_stage1.10}
  #allocation0 [shape = 'u32[]', space=smem, size = 0x4, offset = 0x4, fixed_abs, tag = 'smem constant byte address 0x4 - core index']
  #allocation1 [shape = 'u32[144,128]{1,0:T(1,128)}', space=vmem, size = 0x12000, scoped, tag = 'internal scratch']
  %s0 = inlined_call_operand.vmem [shape: bf16[3,32,32], index: 0, kind: input, shape index: {}]
  %s1 = inlined_call_operand.vmem [shape: bf16[32,128], index: 1, kind: input, shape index: {}]
  %s2 = inlined_call_operand.vmem [shape: bf16[128,32], index: 2, kind: input, shape index: {}]
  %s3 = inlined_call_operand.hbm [shape: f32[3,128,128], index: 3, kind: output, shape index: {}]
  %s4 = sld [smem:[#allocation0]]
  $region45: #{launet_stage1.10} parent=0
    _
  %s6 = ssub.s32 1, %s4
  %s7 = scalar_select 0, %s6, %s4
  $region1: #{launet_stage1.10} parent=0
    #allocation2 [shape = 'u8[131072]{0}', space=vmem, size = 0x20000, scoped, tag = 'output window, operand 0']
    #allocation3 [shape = 's32[2]{0}', space=sflag, size = 0x8, scoped, tag = 'scoped memory for launet_stage1.10']
    %8 = vsyncpa [#allocation3], 0
    %s9 = scalar_lea.sflag [#allocation3], 1
    %10 = vsyncpa %s9, 0
    loop: start=0, step=1, limit=5
    $region2: #{launet_stage1.10} parent=1 // loop_pre_header
      _
    $region3: #{launet_stage1.10} parent=1 // loop_header
      %s12 = sphi 0, %s16
      %p13 = scmp.ge.s32.totalorder %s12, 5
      %s22 = sphi 0, %s24
      %s25 = sphi 0, %s22
      %s26 = sphi 0, %s25
      %s42 = sphi 0, %s26
      %s46 = sphi 0, %s46
      %s48 = sphi 0, %s46
      %s49 = sphi 0, %s48
      %s63 = sphi 0, %s49
      %s67 = sphi 0, %s67
      %s69 = sphi 0, %s67
      %s70 = sphi 0, %s69
      %s84 = sphi 0, %s70
      %s90 = sphi 0, %s92
      %s93 = sphi 0, %s90
      %s94 = sphi 0, %s93
      %s110 = sphi 0, %s94
    $region4: #{launet_stage1.10} parent=1 // loop_header_branch
      %15 = sbr.rel (%p13) target = $region8
    $region5: #{launet_stage1.10} parent=1 // loop_body
      %s17 = ssub.s32 %s12, 1
      %s18 = ssub.s32 %s12, 2
      %s19 = sadd.s32 %s12, 1
      %s20 = ssub.s32 %s12, %s19
      %p21 = scmp.eq.s32.totalorder %s20, 0
      %s23 = sadd.s32 %s22, 1
      %s24 = scalar_select %p21, %s22, %s23
      %p27 = pneg %p21
      %p28 = scmp.eq.s32.totalorder %s12, 2
      %p29 = por %p27, %p28
      %p30 = scmp.ne.s32.totalorder %s22, %s25
      %p31 = scmp.eq.s32.totalorder %s12, 0
      %p32 = por %p30, %p31
      %p33 = scmp.ne.s32.totalorder %s22, %s25
      %p34 = scmp.eq.s32.totalorder %s17, 2
      %p35 = por %p33, %p34
      %p36 = scmp.ne.s32.totalorder %s25, %s26
      %p37 = scmp.eq.s32.totalorder %s17, 0
      %p38 = por %p36, %p37
      %p39 = scmp.ne.s32.totalorder %s25, %s26
      %p40 = scmp.eq.s32.totalorder %s18, 2
      %p41 = por %p39, %p40
      %p43 = scmp.ne.s32.totalorder %s26, %s42
      %p44 = scmp.eq.s32.totalorder %s18, 0
      %p45 = por %p43, %p44
      %s47 = sadd.s32 %s46, 1
      %p50 = scmp.eq.s32.totalorder %s12, 2
      %p51 = scmp.ne.s32.totalorder %s46, %s48
      %p52 = scmp.eq.s32.totalorder %s12, 0
      %p53 = por %p51, %p52
      %p54 = scmp.ne.s32.totalorder %s46, %s48
      %p55 = scmp.eq.s32.totalorder %s17, 2
      %p56 = por %p54, %p55
      %p57 = scmp.ne.s32.totalorder %s48, %s49
      %p58 = scmp.eq.s32.totalorder %s17, 0
      %p59 = por %p57, %p58
      %p60 = scmp.ne.s32.totalorder %s48, %s49
      %p61 = scmp.eq.s32.totalorder %s18, 2
      %p62 = por %p60, %p61
      %p64 = scmp.ne.s32.totalorder %s49, %s63
      %p65 = scmp.eq.s32.totalorder %s18, 0
      %p66 = por %p64, %p65
      %s68 = sadd.s32 %s67, 1
      %p71 = scmp.eq.s32.totalorder %s12, 2
      %p72 = scmp.ne.s32.totalorder %s67, %s69
      %p73 = scmp.eq.s32.totalorder %s12, 0
      %p74 = por %p72, %p73
      %p75 = scmp.ne.s32.totalorder %s67, %s69
      %p76 = scmp.eq.s32.totalorder %s17, 2
      %p77 = por %p75, %p76
      %p78 = scmp.ne.s32.totalorder %s69, %s70
      %p79 = scmp.eq.s32.totalorder %s17, 0
      %p80 = por %p78, %p79
      %p81 = scmp.ne.s32.totalorder %s69, %s70
      %p82 = scmp.eq.s32.totalorder %s18, 2
      %p83 = por %p81, %p82
      %p85 = scmp.ne.s32.totalorder %s70, %s84
      %p86 = scmp.eq.s32.totalorder %s18, 0
      %p87 = por %p85, %p86
      %s88 = ssub.s32 %s12, %s19
      %p89 = scmp.eq.s32.totalorder %s88, 0
      %s91 = sadd.s32 %s90, 1
      %s92 = scalar_select %p89, %s90, %s91
      %p95 = pneg %p89
      %p96 = scmp.eq.s32.totalorder %s12, 2
      %p97 = por %p95, %p96
      %p98 = scmp.ne.s32.totalorder %s90, %s93
      %p99 = scmp.eq.s32.totalorder %s12, 0
      %p100 = por %p98, %p99
      %p101 = scmp.ne.s32.totalorder %s90, %s93
      %p102 = scmp.eq.s32.totalorder %s17, 2
      %p103 = por %p101, %p102
      %p104 = scmp.ne.s32.totalorder %s93, %s94
      %p105 = scmp.eq.s32.totalorder %s17, 0
      %p106 = por %p104, %p105
      %p107 = scmp.ne.s32.totalorder %s93, %s94
      %p108 = scmp.eq.s32.totalorder %s18, 2
      %p109 = por %p107, %p108
      %p111 = scmp.ne.s32.totalorder %s94, %s110
      %p112 = scmp.eq.s32.totalorder %s18, 0
      %p113 = por %p111, %p112
      %p114 = scmp.le.s32.totalorder 1, %s12
      %p115 = scmp.lt.s32.totalorder %s12, 4
      %p116 = pnand %p114, %p115
      %p117 = pneg %p116
      // Predicated region
      $region9: #{launet_stage1.10} parent=5 // pred_check
        _
      $region10: #{launet_stage1.10} parent=5 // pred_check_branch
        %119 = sbr.rel (%p116) target = $region12
      $region11: #{launet_stage1.10} parent=5 // pred_region
        %s120 = ssub.s32 %s12, 1
        // Predicated region
        $region13: #{launet_stage1.10} parent=11 // pred_check
          %p121 = pneg %p59
        $region14: #{launet_stage1.10} parent=11 // pred_check_branch
          %123 = sbr.rel (%p121) target = $region16
        $region15: #{launet_stage1.10} parent=11 // pred_region
          _
        $region16: #{launet_stage1.10} parent=11 // pred_fallthru
          _
        // Predicated region
        $region17: #{launet_stage1.10} parent=11 // pred_check
          %p124 = pneg %p80
        $region18: #{launet_stage1.10} parent=11 // pred_check_branch
          %126 = sbr.rel (%p124) target = $region20
        $region19: #{launet_stage1.10} parent=11 // pred_region
          _
        $region20: #{launet_stage1.10} parent=11 // pred_fallthru
          _
      $region12: #{launet_stage1.10} parent=5 // pred_fallthru
        _
      %p127 = scmp.lt.s32.totalorder %s12, 3
      // Predicated region
      $region21: #{launet_stage1.10} parent=5 // pred_check
        %p128 = pneg %p127
      $region22: #{launet_stage1.10} parent=5 // pred_check_branch
        %130 = sbr.rel (%p128) target = $region24
      $region23: #{launet_stage1.10} parent=5 // pred_region
        // Predicated region
        $region25: #{launet_stage1.10} parent=23 // pred_check
          %p131 = pneg %p32
        $region26: #{launet_stage1.10} parent=23 // pred_check_branch
          %133 = sbr.rel (%p131) target = $region28
        $region27: #{launet_stage1.10} parent=23 // pred_region
          %p134 = scmp.lt.s32.totalorder %s12, 2
          %s135 = scalar_select %p134, %s12, 2
          %s136 = smul.addr %s135, 4
          %s137 = smul.addr %s136, 4
          %s138 = scalar_lea.vmem %s0, %s137
        $region28: #{launet_stage1.10} parent=23 // pred_fallthru
          _
      $region24: #{launet_stage1.10} parent=5 // pred_fallthru
        _
      %p139 = scmp.le.s32.totalorder 1, %s12
      %p140 = scmp.lt.s32.totalorder %s12, 4
      %p141 = pnand %p139, %p140
      %p142 = pneg %p141
      // Predicated region
      $region29: #{launet_stage1.10} parent=5 // pred_check
        _
      $region30: #{launet_stage1.10} parent=5 // pred_check_branch
        %144 = sbr.rel (%p141) target = $region32
      $region31: #{launet_stage1.10} parent=5 // pred_region
        %s145 = ssub.s32 %s12, 1
        %p146 = scmp.lt.s32.totalorder %s17, 2
        %s147 = scalar_select %p146, %s17, 2
        %s148 = smul.addr %s147, 4
        %s149 = smul.addr %s148, 4
        %s150 = scalar_lea.vmem %s0, %s149
        %p151 = pneg %p38
        %p152 = pneg %p35
        %p153 = pneg %p59
        %p154 = pneg %p56
        %p155 = pneg %p80
        %p156 = pneg %p77
        %p157 = pneg %p106
        %p158 = pneg %p103
        %s159 = sand.u32 %s93, 1
        %s160 = scalar_lea.sflag [#allocation3], %s159
        %s161 = sand.u32 %s93, 1
        %s162 = smul.addr %s161, 128
        %s163 = scalar_lea.vmem [#allocation2], %s162
        %p164 = scmp.lt.s32.totalorder %s17, 2
        %s165 = scalar_select %p164, %s17, 2
        %s166 = smul.addr %s165, 4
        %s167 = smul.addr %s166, 4
        %s168 = scalar_lea.vmem %s0, %s167
        %v170 = vld [vmem:[%s168] sm:$0xf]
        %v171 = vld [vmem:[%s168 + $0x4] sm:$0xf]
        %v172 = vld [vmem:[%s168 + $0x8] sm:$0xf]
        %v173 = vld [vmem:[%s168 + $0xc] sm:$0xf]
        %v174 = vld [vmem:[%s1] sm:$0xf]
        %v175 = vld [vmem:[%s1 + $0x4] sm:$0xf]
        %v176 = vld [vmem:[%s1 + $0x8] sm:$0xf]
        %v177 = vld [vmem:[%s1 + $0xc] sm:$0xf]
        %v182 = vunpack.c.l.b16 %v170
        %v183 = vunpack.c.l.b16 %v171
        %v184 = vunpack.c.l.b16 %v172
        %v185 = vunpack.c.l.b16 %v173
        %v186 = vpack.c.b16 %v183, %v182
        %v187 = vpack.c.b16 %v185, %v184
        %v192 = vunpack.c.l.b16 %v174
        %v193 = vunpack.c.l.b16 %v175
        %v194 = vunpack.c.l.b16 %v176
        %v195 = vunpack.c.l.b16 %v177
        %v196 = vpack.c.b16 %v193, %v192
        %v197 = vpack.c.b16 %v195, %v194
        %vm200 = vcmask 261120
        %v202 = vsel %vm200, %v186, 0
        %v205 = vsel %vm200, %v187, 0
        %207 = vmatprep.subr.bf16.mxu0 0
        %208 = vmatpush1.bf16.msra.mxu0 %v196
        %209 = vmatprep.subr.bf16.mxu0 0
        %210 = vmatpush1.bf16.msra.mxu0 %v197
        %211 = vmatprep.subr.bf16.mxu0 0
        %212 = vmatpush1.bf16.msra.mxu0 0
        %213 = vmatprep.subr.bf16.mxu0 0
        %214 = vmatpush1.bf16.msra.mxu0 0
        %215 = vmatprep.subr.bf16.mxu0 0
        %216 = vmatpush1.bf16.msra.mxu0 0
        %217 = vmatprep.subr.bf16.mxu0 0
        %218 = vmatpush1.bf16.msra.mxu0 0
        %219 = vmatprep.subr.bf16.mxu0 0
        %220 = vmatpush1.bf16.msra.mxu0 0
        %221 = vmatprep.subr.bf16.mxu0 0
        %222 = vmatpush1.bf16.msra.mxu0 0
        %223 = vmatprep.subr.bf16.mxu0 0
        %224 = vmatpush1.bf16.msra.mxu0 0
        %225 = vmatprep.subr.bf16.mxu0 0
        %226 = vmatpush1.bf16.msra.mxu0 0
        %227 = vmatprep.subr.bf16.mxu0 0
        %228 = vmatpush1.bf16.msra.mxu0 0
        %229 = vmatprep.subr.bf16.mxu0 0
        %230 = vmatpush1.bf16.msra.mxu0 0
        %231 = vmatprep.subr.bf16.mxu0 0
        %232 = vmatpush1.bf16.msra.mxu0 0
        %233 = vmatprep.subr.bf16.mxu0 0
        %234 = vmatpush1.bf16.msra.mxu0 0
        %235 = vmatprep.subr.bf16.mxu0 0
        %236 = vmatpush1.bf16.msra.mxu0 0
        %237 = vmatprep.subr.bf16.mxu0 0
        %238 = vmatpush1.bf16.msra.mxu0 0
        %239 = vmatprep.mubr.bf16.mxu0 0
        %240 = vmatmul.mubr.bf16.gmra.mrb[0].mxu0 %v202
        %v241 = vpop.f32.mrb[0].mxu0
        %v242 = vadd.f32 0.0, %v241
        %v243 = vpop.f32.mrb[0].mxu0
        %v244 = vpop.f32.mrb[0].mxu0
        %v245 = vadd.f32 0.0, %v244
        %v246 = vpop.f32.mrb[0].mxu0
        %247 = vmatprep.mubr.bf16.mxu0 0
        %248 = vmatmul.mubr.bf16.gmra.mrb[0].mxu0 %v205
        %v249 = vpop.f32.mrb[0].mxu0
        %v250 = vadd.f32 0.0, %v249
        %v251 = vpop.f32.mrb[0].mxu0
        %v252 = vpop.f32.mrb[0].mxu0
        %v253 = vadd.f32 0.0, %v252
        %v254 = vpop.f32.mrb[0].mxu0
        %255 = vdwg.mxu0
        %v256 = vld [vmem:[%s2] sm:$0xf]
        %v257 = vld [vmem:[%s2 + $0x4] sm:$0xf]
        %v258 = vld [vmem:[%s2 + $0x8] sm:$0xf]
        %v259 = vld [vmem:[%s2 + $0xc] sm:$0xf]
        %v260 = vld [vmem:[%s2 + $0x10] sm:$0xf]
        %v261 = vld [vmem:[%s2 + $0x14] sm:$0xf]
        %v262 = vld [vmem:[%s2 + $0x18] sm:$0xf]
        %v263 = vld [vmem:[%s2 + $0x1c] sm:$0xf]
        %v264 = vld [vmem:[%s2 + $0x20] sm:$0xf]
        %v265 = vld [vmem:[%s2 + $0x24] sm:$0xf]
        %v266 = vld [vmem:[%s2 + $0x28] sm:$0xf]
        %v267 = vld [vmem:[%s2 + $0x2c] sm:$0xf]
        %v268 = vld [vmem:[%s2 + $0x30] sm:$0xf]
        %v269 = vld [vmem:[%s2 + $0x34] sm:$0xf]
        %v270 = vld [vmem:[%s2 + $0x38] sm:$0xf]
        %v271 = vld [vmem:[%s2 + $0x3c] sm:$0xf]
        %v272 = vpack.c.bf16 %v245, %v242
        %v273 = vpack.c.bf16 %v253, %v250
        %v290 = vunpack.c.l.b16 %v256
        %v291 = vunpack.c.l.b16 %v257
        %v292 = vunpack.c.l.b16 %v258
        %v293 = vunpack.c.l.b16 %v259
        %v294 = vunpack.c.l.b16 %v260
        %v295 = vunpack.c.l.b16 %v261
        %v296 = vunpack.c.l.b16 %v262
        %v297 = vunpack.c.l.b16 %v263
        %v298 = vunpack.c.l.b16 %v264
        %v299 = vunpack.c.l.b16 %v265
        %v300 = vunpack.c.l.b16 %v266
        %v301 = vunpack.c.l.b16 %v267
        %v302 = vunpack.c.l.b16 %v268
        %v303 = vunpack.c.l.b16 %v269
        %v304 = vunpack.c.l.b16 %v270
        %v305 = vunpack.c.l.b16 %v271
        %v306 = vpack.c.b16 %v291, %v290
        %v307 = vpack.c.b16 %v293, %v292
        %v308 = vpack.c.b16 %v295, %v294
        %v309 = vpack.c.b16 %v297, %v296
        %v310 = vpack.c.b16 %v299, %v298
        %v311 = vpack.c.b16 %v301, %v300
        %v312 = vpack.c.b16 %v303, %v302
        %v313 = vpack.c.b16 %v305, %v304
        %v315 = vsel %vm200, %v306, 0
        %v318 = vsel %vm200, %v307, 0
        %v321 = vsel %vm200, %v308, 0
        %v324 = vsel %vm200, %v309, 0
        %v327 = vsel %vm200, %v310, 0
        %v330 = vsel %vm200, %v311, 0
        %v333 = vsel %vm200, %v312, 0
        %v336 = vsel %vm200, %v313, 0
        %338 = vmatprep.subr.bf16.mxu0 0
        %339 = vmatpush1.bf16.msra.mxu0 %v272
        %340 = vmatprep.subr.bf16.mxu0 0
        %341 = vmatpush1.bf16.msra.mxu0 %v273
        %342 = vmatprep.subr.bf16.mxu0 0
        %343 = vmatpush1.bf16.msra.mxu0 0
        %344 = vmatprep.subr.bf16.mxu0 0
        %345 = vmatpush1.bf16.msra.mxu0 0
        %346 = vmatprep.subr.bf16.mxu0 0
        %347 = vmatpush1.bf16.msra.mxu0 0
        %348 = vmatprep.subr.bf16.mxu0 0
        %349 = vmatpush1.bf16.msra.mxu0 0
        %350 = vmatprep.subr.bf16.mxu0 0
        %351 = vmatpush1.bf16.msra.mxu0 0
        %352 = vmatprep.subr.bf16.mxu0 0
        %353 = vmatpush1.bf16.msra.mxu0 0
        %354 = vmatprep.subr.bf16.mxu0 0
        %355 = vmatpush1.bf16.msra.mxu0 0
        %356 = vmatprep.subr.bf16.mxu0 0
        %357 = vmatpush1.bf16.msra.mxu0 0
        %358 = vmatprep.subr.bf16.mxu0 0
        %359 = vmatpush1.bf16.msra.mxu0 0
        %360 = vmatprep.subr.bf16.mxu0 0
        %361 = vmatpush1.bf16.msra.mxu0 0
        %362 = vmatprep.subr.bf16.mxu0 0
        %363 = vmatpush1.bf16.msra.mxu0 0
        %364 = vmatprep.subr.bf16.mxu0 0
        %365 = vmatpush1.bf16.msra.mxu0 0
        %366 = vmatprep.subr.bf16.mxu0 0
        %367 = vmatpush1.bf16.msra.mxu0 0
        %368 = vmatprep.subr.bf16.mxu0 0
        %369 = vmatpush1.bf16.msra.mxu0 0
        %370 = vmatprep.mubr.bf16.mxu0 0
        %371 = vmatmul.mubr.bf16.gmra.mrb[0].mxu0 %v315
        %v372 = vpop.f32.mrb[0].mxu0
        %v373 = vadd.f32 0.0, %v372
        %v374 = vpop.f32.mrb[0].mxu0
        %v375 = vpop.f32.mrb[0].mxu0
        %v376 = vadd.f32 0.0, %v375
        %v377 = vpop.f32.mrb[0].mxu0
        %378 = vmatprep.mubr.bf16.mxu0 0
        %379 = vmatmul.mubr.bf16.gmra.mrb[0].mxu0 %v318
        %v380 = vpop.f32.mrb[0].mxu0
        %v381 = vadd.f32 0.0, %v380
        %v382 = vpop.f32.mrb[0].mxu0
        %v383 = vpop.f32.mrb[0].mxu0
        %v384 = vadd.f32 0.0, %v383
        %v385 = vpop.f32.mrb[0].mxu0
        %386 = vmatprep.mubr.bf16.mxu0 0
        %387 = vmatmul.mubr.bf16.gmra.mrb[0].mxu0 %v321
        %v388 = vpop.f32.mrb[0].mxu0
        %v389 = vadd.f32 0.0, %v388
        %v390 = vpop.f32.mrb[0].mxu0
        %v391 = vpop.f32.mrb[0].mxu0
        %v392 = vadd.f32 0.0, %v391
        %v393 = vpop.f32.mrb[0].mxu0
        %394 = vmatprep.mubr.bf16.mxu0 0
        %395 = vmatmul.mubr.bf16.gmra.mrb[0].mxu0 %v324
        %v396 = vpop.f32.mrb[0].mxu0
        %v397 = vadd.f32 0.0, %v396
        %v398 = vpop.f32.mrb[0].mxu0
        %v399 = vpop.f32.mrb[0].mxu0
        %v400 = vadd.f32 0.0, %v399
        %v401 = vpop.f32.mrb[0].mxu0
        %402 = vmatprep.mubr.bf16.mxu0 0
        %403 = vmatmul.mubr.bf16.gmra.mrb[0].mxu0 %v327
        %v404 = vpop.f32.mrb[0].mxu0
        %v405 = vadd.f32 0.0, %v404
        %v406 = vpop.f32.mrb[0].mxu0
        %v407 = vpop.f32.mrb[0].mxu0
        %v408 = vadd.f32 0.0, %v407
        %v409 = vpop.f32.mrb[0].mxu0
        %410 = vmatprep.mubr.bf16.mxu0 0
        %411 = vmatmul.mubr.bf16.gmra.mrb[0].mxu0 %v330
        %v412 = vpop.f32.mrb[0].mxu0
        %v413 = vadd.f32 0.0, %v412
        %v414 = vpop.f32.mrb[0].mxu0
        %v415 = vpop.f32.mrb[0].mxu0
        %v416 = vadd.f32 0.0, %v415
        %v417 = vpop.f32.mrb[0].mxu0
        %418 = vmatprep.mubr.bf16.mxu0 0
        %419 = vmatmul.mubr.bf16.gmra.mrb[0].mxu0 %v333
        %v420 = vpop.f32.mrb[0].mxu0
        %v421 = vadd.f32 0.0, %v420
        %v422 = vpop.f32.mrb[0].mxu0
        %v423 = vpop.f32.mrb[0].mxu0
        %v424 = vadd.f32 0.0, %v423
        %v425 = vpop.f32.mrb[0].mxu0
        %426 = vmatprep.mubr.bf16.mxu0 0
        %427 = vmatmul.mubr.bf16.gmra.mrb[0].mxu0 %v336
        %v428 = vpop.f32.mrb[0].mxu0
        %v429 = vadd.f32 0.0, %v428
        %v430 = vpop.f32.mrb[0].mxu0
        %v431 = vpop.f32.mrb[0].mxu0
        %v432 = vadd.f32 0.0, %v431
        %v433 = vpop.f32.mrb[0].mxu0
        %434 = vdwg.mxu0
        %435 = vst [vmem:[%s163] sm:$0xff] %v373
        %436 = vst [vmem:[%s163 + $0x8] sm:$0xff] %v376
        %437 = vst [vmem:[%s163 + $0x10] sm:$0xff] %v381
        %438 = vst [vmem:[%s163 + $0x18] sm:$0xff] %v384
        %439 = vst [vmem:[%s163 + $0x20] sm:$0xff] %v389
        %440 = vst [vmem:[%s163 + $0x28] sm:$0xff] %v392
        %441 = vst [vmem:[%s163 + $0x30] sm:$0xff] %v397
        %442 = vst [vmem:[%s163 + $0x38] sm:$0xff] %v400
        %443 = vst [vmem:[%s163 + $0x40] sm:$0xff] %v405
        %444 = vst [vmem:[%s163 + $0x48] sm:$0xff] %v408
        %445 = vst [vmem:[%s163 + $0x50] sm:$0xff] %v413
        %446 = vst [vmem:[%s163 + $0x58] sm:$0xff] %v416
        %447 = vst [vmem:[%s163 + $0x60] sm:$0xff] %v421
        %448 = vst [vmem:[%s163 + $0x68] sm:$0xff] %v424
        %449 = vst [vmem:[%s163 + $0x70] sm:$0xff] %v429
        %450 = vst [vmem:[%s163 + $0x78] sm:$0xff] %v432
        %s451 = sand.u32 %s93, 1
        %s452 = scalar_lea.sflag [#allocation3], %s451
        %s453 = sand.u32 %s93, 1
        %s454 = smul.addr %s453, 128
        %s455 = scalar_lea.vmem [#allocation2], %s454
        // Predicated region
        $region33: #{launet_stage1.10} parent=31 // pred_check
          %p456 = pneg %p103
        $region34: #{launet_stage1.10} parent=31 // pred_check_branch
          %458 = sbr.rel (%p456) target = $region36
        $region35: #{launet_stage1.10} parent=31 // pred_region
          %s460 = ssub.s32 2048, 2048
          %461 = vsyncadd %s452, %s460
          %s462 = smul.addr %s17, 16
          %s463 = smul.addr %s462, 128
          %s464 = scalar_lea.hbm %s3, %s463
          %s465 = sshll.u32 %s455, 4
          %s466 = int_to_ptr.vmem [resolvable:$true] %s465
          %471 = dma.vmem_to_hbm [thread:$0]  %s466, 2048, %s464, %s452, 128, 128, 8
        $region36: #{launet_stage1.10} parent=31 // pred_fallthru
          _
      $region32: #{launet_stage1.10} parent=5 // pred_fallthru
        _
      %p472 = scmp.le.s32.totalorder 2, %s12
      // Predicated region
      $region37: #{launet_stage1.10} parent=5 // pred_check
        %p473 = pneg %p472
      $region38: #{launet_stage1.10} parent=5 // pred_check_branch
        %475 = sbr.rel (%p473) target = $region40
      $region39: #{launet_stage1.10} parent=5 // pred_region
        %s476 = ssub.s32 %s12, 2
        // Predicated region
        $region41: #{launet_stage1.10} parent=39 // pred_check
          %p477 = pneg %p109
        $region42: #{launet_stage1.10} parent=39 // pred_check_branch
          %479 = sbr.rel (%p477) target = $region44
        $region43: #{launet_stage1.10} parent=39 // pred_region
          %s480 = sand.u32 %s94, 1
          %s481 = scalar_lea.sflag [#allocation3], %s480
          %s482 = sand.u32 %s94, 1
          %s483 = smul.addr %s482, 128
          %s484 = scalar_lea.vmem [#allocation2], %s483
          %485 = dma.done %s481, 2048
        $region44: #{launet_stage1.10} parent=39 // pred_fallthru
          _
      $region40: #{launet_stage1.10} parent=5 // pred_fallthru
        _
    $region6: #{launet_stage1.10} parent=1 // loop_footer
      %s16 = sadd.s32 1, %s12
    $region7: #{launet_stage1.10} parent=1 // loop_footer_branch
      %11 = sbr.rel target = $region3
    $region8: #{launet_stage1.10} parent=1 // loop_exit
      _
    %486 = vsyncpa [#allocation3], 1
    %s487 = scalar_lea.sflag [#allocation3], 1
    %488 = vsyncpa %s487, 1

// kernel: launet_stage1.9
$region0: #{launet_stage1.9}
  #allocation0 [shape = 'u32[]', space=smem, size = 0x4, offset = 0x4, fixed_abs, tag = 'smem constant byte address 0x4 - core index']
  #allocation1 [shape = 'u32[144,128]{1,0:T(1,128)}', space=vmem, size = 0x12000, scoped, tag = 'internal scratch']
  %s0 = inlined_call_operand.vmem [shape: bf16[3,32,32], index: 0, kind: input, shape index: {}]
  %s1 = inlined_call_operand.vmem [shape: bf16[32,64], index: 1, kind: input, shape index: {}]
  %s2 = inlined_call_operand.vmem [shape: bf16[64,32], index: 2, kind: input, shape index: {}]
  %s3 = inlined_call_operand.hbm [shape: f32[3,64,64], index: 3, kind: output, shape index: {}]
  %s4 = sld [smem:[#allocation0]]
  $region45: #{launet_stage1.9} parent=0
    _
  %s6 = ssub.s32 1, %s4
  %s7 = scalar_select 0, %s6, %s4
  $region1: #{launet_stage1.9} parent=0
    #allocation2 [shape = 'u8[65536]{0}', space=vmem, size = 0x10000, scoped, tag = 'output window, operand 0']
    #allocation3 [shape = 's32[2]{0}', space=sflag, size = 0x8, scoped, tag = 'scoped memory for launet_stage1.9']
    %8 = vsyncpa [#allocation3], 0
    %s9 = scalar_lea.sflag [#allocation3], 1
    %10 = vsyncpa %s9, 0
    loop: start=0, step=1, limit=5
    $region2: #{launet_stage1.9} parent=1 // loop_pre_header
      _
    $region3: #{launet_stage1.9} parent=1 // loop_header
      %s12 = sphi 0, %s16
      %p13 = scmp.ge.s32.totalorder %s12, 5
      %s22 = sphi 0, %s24
      %s25 = sphi 0, %s22
      %s26 = sphi 0, %s25
      %s42 = sphi 0, %s26
      %s46 = sphi 0, %s46
      %s48 = sphi 0, %s46
      %s49 = sphi 0, %s48
      %s63 = sphi 0, %s49
      %s67 = sphi 0, %s67
      %s69 = sphi 0, %s67
      %s70 = sphi 0, %s69
      %s84 = sphi 0, %s70
      %s90 = sphi 0, %s92
      %s93 = sphi 0, %s90
      %s94 = sphi 0, %s93
      %s110 = sphi 0, %s94
    $region4: #{launet_stage1.9} parent=1 // loop_header_branch
      %15 = sbr.rel (%p13) target = $region8
    $region5: #{launet_stage1.9} parent=1 // loop_body
      %s17 = ssub.s32 %s12, 1
      %s18 = ssub.s32 %s12, 2
      %s19 = sadd.s32 %s12, 1
      %s20 = ssub.s32 %s12, %s19
      %p21 = scmp.eq.s32.totalorder %s20, 0
      %s23 = sadd.s32 %s22, 1
      %s24 = scalar_select %p21, %s22, %s23
      %p27 = pneg %p21
      %p28 = scmp.eq.s32.totalorder %s12, 2
      %p29 = por %p27, %p28
      %p30 = scmp.ne.s32.totalorder %s22, %s25
      %p31 = scmp.eq.s32.totalorder %s12, 0
      %p32 = por %p30, %p31
      %p33 = scmp.ne.s32.totalorder %s22, %s25
      %p34 = scmp.eq.s32.totalorder %s17, 2
      %p35 = por %p33, %p34
      %p36 = scmp.ne.s32.totalorder %s25, %s26
      %p37 = scmp.eq.s32.totalorder %s17, 0
      %p38 = por %p36, %p37
      %p39 = scmp.ne.s32.totalorder %s25, %s26
      %p40 = scmp.eq.s32.totalorder %s18, 2
      %p41 = por %p39, %p40
      %p43 = scmp.ne.s32.totalorder %s26, %s42
      %p44 = scmp.eq.s32.totalorder %s18, 0
      %p45 = por %p43, %p44
      %s47 = sadd.s32 %s46, 1
      %p50 = scmp.eq.s32.totalorder %s12, 2
      %p51 = scmp.ne.s32.totalorder %s46, %s48
      %p52 = scmp.eq.s32.totalorder %s12, 0
      %p53 = por %p51, %p52
      %p54 = scmp.ne.s32.totalorder %s46, %s48
      %p55 = scmp.eq.s32.totalorder %s17, 2
      %p56 = por %p54, %p55
      %p57 = scmp.ne.s32.totalorder %s48, %s49
      %p58 = scmp.eq.s32.totalorder %s17, 0
      %p59 = por %p57, %p58
      %p60 = scmp.ne.s32.totalorder %s48, %s49
      %p61 = scmp.eq.s32.totalorder %s18, 2
      %p62 = por %p60, %p61
      %p64 = scmp.ne.s32.totalorder %s49, %s63
      %p65 = scmp.eq.s32.totalorder %s18, 0
      %p66 = por %p64, %p65
      %s68 = sadd.s32 %s67, 1
      %p71 = scmp.eq.s32.totalorder %s12, 2
      %p72 = scmp.ne.s32.totalorder %s67, %s69
      %p73 = scmp.eq.s32.totalorder %s12, 0
      %p74 = por %p72, %p73
      %p75 = scmp.ne.s32.totalorder %s67, %s69
      %p76 = scmp.eq.s32.totalorder %s17, 2
      %p77 = por %p75, %p76
      %p78 = scmp.ne.s32.totalorder %s69, %s70
      %p79 = scmp.eq.s32.totalorder %s17, 0
      %p80 = por %p78, %p79
      %p81 = scmp.ne.s32.totalorder %s69, %s70
      %p82 = scmp.eq.s32.totalorder %s18, 2
      %p83 = por %p81, %p82
      %p85 = scmp.ne.s32.totalorder %s70, %s84
      %p86 = scmp.eq.s32.totalorder %s18, 0
      %p87 = por %p85, %p86
      %s88 = ssub.s32 %s12, %s19
      %p89 = scmp.eq.s32.totalorder %s88, 0
      %s91 = sadd.s32 %s90, 1
      %s92 = scalar_select %p89, %s90, %s91
      %p95 = pneg %p89
      %p96 = scmp.eq.s32.totalorder %s12, 2
      %p97 = por %p95, %p96
      %p98 = scmp.ne.s32.totalorder %s90, %s93
      %p99 = scmp.eq.s32.totalorder %s12, 0
      %p100 = por %p98, %p99
      %p101 = scmp.ne.s32.totalorder %s90, %s93
      %p102 = scmp.eq.s32.totalorder %s17, 2
      %p103 = por %p101, %p102
      %p104 = scmp.ne.s32.totalorder %s93, %s94
      %p105 = scmp.eq.s32.totalorder %s17, 0
      %p106 = por %p104, %p105
      %p107 = scmp.ne.s32.totalorder %s93, %s94
      %p108 = scmp.eq.s32.totalorder %s18, 2
      %p109 = por %p107, %p108
      %p111 = scmp.ne.s32.totalorder %s94, %s110
      %p112 = scmp.eq.s32.totalorder %s18, 0
      %p113 = por %p111, %p112
      %p114 = scmp.le.s32.totalorder 1, %s12
      %p115 = scmp.lt.s32.totalorder %s12, 4
      %p116 = pnand %p114, %p115
      %p117 = pneg %p116
      // Predicated region
      $region9: #{launet_stage1.9} parent=5 // pred_check
        _
      $region10: #{launet_stage1.9} parent=5 // pred_check_branch
        %119 = sbr.rel (%p116) target = $region12
      $region11: #{launet_stage1.9} parent=5 // pred_region
        %s120 = ssub.s32 %s12, 1
        // Predicated region
        $region13: #{launet_stage1.9} parent=11 // pred_check
          %p121 = pneg %p59
        $region14: #{launet_stage1.9} parent=11 // pred_check_branch
          %123 = sbr.rel (%p121) target = $region16
        $region15: #{launet_stage1.9} parent=11 // pred_region
          _
        $region16: #{launet_stage1.9} parent=11 // pred_fallthru
          _
        // Predicated region
        $region17: #{launet_stage1.9} parent=11 // pred_check
          %p124 = pneg %p80
        $region18: #{launet_stage1.9} parent=11 // pred_check_branch
          %126 = sbr.rel (%p124) target = $region20
        $region19: #{launet_stage1.9} parent=11 // pred_region
          _
        $region20: #{launet_stage1.9} parent=11 // pred_fallthru
          _
      $region12: #{launet_stage1.9} parent=5 // pred_fallthru
        _
      %p127 = scmp.lt.s32.totalorder %s12, 3
      // Predicated region
      $region21: #{launet_stage1.9} parent=5 // pred_check
        %p128 = pneg %p127
      $region22: #{launet_stage1.9} parent=5 // pred_check_branch
        %130 = sbr.rel (%p128) target = $region24
      $region23: #{launet_stage1.9} parent=5 // pred_region
        // Predicated region
        $region25: #{launet_stage1.9} parent=23 // pred_check
          %p131 = pneg %p32
        $region26: #{launet_stage1.9} parent=23 // pred_check_branch
          %133 = sbr.rel (%p131) target = $region28
        $region27: #{launet_stage1.9} parent=23 // pred_region
          %p134 = scmp.lt.s32.totalorder %s12, 2
          %s135 = scalar_select %p134, %s12, 2
          %s136 = smul.addr %s135, 4
          %s137 = smul.addr %s136, 4
          %s138 = scalar_lea.vmem %s0, %s137
        $region28: #{launet_stage1.9} parent=23 // pred_fallthru
          _
      $region24: #{launet_stage1.9} parent=5 // pred_fallthru
        _
      %p139 = scmp.le.s32.totalorder 1, %s12
      %p140 = scmp.lt.s32.totalorder %s12, 4
      %p141 = pnand %p139, %p140
      %p142 = pneg %p141
      // Predicated region
      $region29: #{launet_stage1.9} parent=5 // pred_check
        _
      $region30: #{launet_stage1.9} parent=5 // pred_check_branch
        %144 = sbr.rel (%p141) target = $region32
      $region31: #{launet_stage1.9} parent=5 // pred_region
        %s145 = ssub.s32 %s12, 1
        %p146 = scmp.lt.s32.totalorder %s17, 2
        %s147 = scalar_select %p146, %s17, 2
        %s148 = smul.addr %s147, 4
        %s149 = smul.addr %s148, 4
        %s150 = scalar_lea.vmem %s0, %s149
        %p151 = pneg %p38
        %p152 = pneg %p35
        %p153 = pneg %p59
        %p154 = pneg %p56
        %p155 = pneg %p80
        %p156 = pneg %p77
        %p157 = pneg %p106
        %p158 = pneg %p103
        %s159 = sand.u32 %s93, 1
        %s160 = scalar_lea.sflag [#allocation3], %s159
        %s161 = sand.u32 %s93, 1
        %s162 = smul.addr %s161, 64
        %s163 = scalar_lea.vmem [#allocation2], %s162
        %p164 = scmp.lt.s32.totalorder %s17, 2
        %s165 = scalar_select %p164, %s17, 2
        %s166 = smul.addr %s165, 4
        %s167 = smul.addr %s166, 4
        %s168 = scalar_lea.vmem %s0, %s167
        %v170 = vld [vmem:[%s168] sm:$0xf]
        %v171 = vld [vmem:[%s168 + $0x4] sm:$0xf]
        %v172 = vld [vmem:[%s168 + $0x8] sm:$0xf]
        %v173 = vld [vmem:[%s168 + $0xc] sm:$0xf]
        %v174 = vld [vmem:[%s1] sm:$0xf]
        %v175 = vld [vmem:[%s1 + $0x4] sm:$0xf]
        %v176 = vld [vmem:[%s1 + $0x8] sm:$0xf]
        %v177 = vld [vmem:[%s1 + $0xc] sm:$0xf]
        %v182 = vunpack.c.l.b16 %v170
        %v183 = vunpack.c.l.b16 %v171
        %v184 = vunpack.c.l.b16 %v172
        %v185 = vunpack.c.l.b16 %v173
        %v186 = vpack.c.b16 %v183, %v182
        %v187 = vpack.c.b16 %v185, %v184
        %v192 = vunpack.c.l.b16 %v174
        %v193 = vunpack.c.l.b16 %v175
        %v194 = vunpack.c.l.b16 %v176
        %v195 = vunpack.c.l.b16 %v177
        %v196 = vpack.c.b16 %v193, %v192
        %v197 = vpack.c.b16 %v195, %v194
        %vm200 = vcmask 261120
        %v202 = vsel %vm200, %v186, 0
        %v205 = vsel %vm200, %v187, 0
        %207 = vmatprep.subr.bf16.mxu0 0
        %208 = vmatpush1.bf16.msra.mxu0 %v196
        %209 = vmatprep.subr.bf16.mxu0 0
        %210 = vmatpush1.bf16.msra.mxu0 %v197
        %211 = vmatprep.subr.bf16.mxu0 0
        %212 = vmatpush1.bf16.msra.mxu0 0
        %213 = vmatprep.subr.bf16.mxu0 0
        %214 = vmatpush1.bf16.msra.mxu0 0
        %215 = vmatprep.subr.bf16.mxu0 0
        %216 = vmatpush1.bf16.msra.mxu0 0
        %217 = vmatprep.subr.bf16.mxu0 0
        %218 = vmatpush1.bf16.msra.mxu0 0
        %219 = vmatprep.subr.bf16.mxu0 0
        %220 = vmatpush1.bf16.msra.mxu0 0
        %221 = vmatprep.subr.bf16.mxu0 0
        %222 = vmatpush1.bf16.msra.mxu0 0
        %223 = vmatprep.subr.bf16.mxu0 0
        %224 = vmatpush1.bf16.msra.mxu0 0
        %225 = vmatprep.subr.bf16.mxu0 0
        %226 = vmatpush1.bf16.msra.mxu0 0
        %227 = vmatprep.subr.bf16.mxu0 0
        %228 = vmatpush1.bf16.msra.mxu0 0
        %229 = vmatprep.subr.bf16.mxu0 0
        %230 = vmatpush1.bf16.msra.mxu0 0
        %231 = vmatprep.subr.bf16.mxu0 0
        %232 = vmatpush1.bf16.msra.mxu0 0
        %233 = vmatprep.subr.bf16.mxu0 0
        %234 = vmatpush1.bf16.msra.mxu0 0
        %235 = vmatprep.subr.bf16.mxu0 0
        %236 = vmatpush1.bf16.msra.mxu0 0
        %237 = vmatprep.subr.bf16.mxu0 0
        %238 = vmatpush1.bf16.msra.mxu0 0
        %239 = vmatprep.mubr.bf16.mxu0 0
        %240 = vmatmul.mubr.bf16.gmra.mrb[0].mxu0 %v202
        %v241 = vpop.f32.mrb[0].mxu0
        %v242 = vadd.f32 0.0, %v241
        %v243 = vpop.f32.mrb[0].mxu0
        %v244 = vpop.f32.mrb[0].mxu0
        %v245 = vadd.f32 0.0, %v244
        %v246 = vpop.f32.mrb[0].mxu0
        %247 = vmatprep.mubr.bf16.mxu0 0
        %248 = vmatmul.mubr.bf16.gmra.mrb[0].mxu0 %v205
        %v249 = vpop.f32.mrb[0].mxu0
        %v250 = vadd.f32 0.0, %v249
        %v251 = vpop.f32.mrb[0].mxu0
        %v252 = vpop.f32.mrb[0].mxu0
        %v253 = vadd.f32 0.0, %v252
        %v254 = vpop.f32.mrb[0].mxu0
        %255 = vdwg.mxu0
        %v256 = vld [vmem:[%s2] sm:$0xf]
        %v257 = vld [vmem:[%s2 + $0x4] sm:$0xf]
        %v258 = vld [vmem:[%s2 + $0x8] sm:$0xf]
        %v259 = vld [vmem:[%s2 + $0xc] sm:$0xf]
        %v260 = vld [vmem:[%s2 + $0x10] sm:$0xf]
        %v261 = vld [vmem:[%s2 + $0x14] sm:$0xf]
        %v262 = vld [vmem:[%s2 + $0x18] sm:$0xf]
        %v263 = vld [vmem:[%s2 + $0x1c] sm:$0xf]
        %v264 = vpack.c.bf16 %v245, %v242
        %v265 = vpack.c.bf16 %v253, %v250
        %v274 = vunpack.c.l.b16 %v256
        %v275 = vunpack.c.l.b16 %v257
        %v276 = vunpack.c.l.b16 %v258
        %v277 = vunpack.c.l.b16 %v259
        %v278 = vunpack.c.l.b16 %v260
        %v279 = vunpack.c.l.b16 %v261
        %v280 = vunpack.c.l.b16 %v262
        %v281 = vunpack.c.l.b16 %v263
        %v282 = vpack.c.b16 %v275, %v274
        %v283 = vpack.c.b16 %v277, %v276
        %v284 = vpack.c.b16 %v279, %v278
        %v285 = vpack.c.b16 %v281, %v280
        %v287 = vsel %vm200, %v282, 0
        %v290 = vsel %vm200, %v283, 0
        %v293 = vsel %vm200, %v284, 0
        %v296 = vsel %vm200, %v285, 0
        %298 = vmatprep.subr.bf16.mxu0 0
        %299 = vmatpush1.bf16.msra.mxu0 %v264
        %300 = vmatprep.subr.bf16.mxu0 0
        %301 = vmatpush1.bf16.msra.mxu0 %v265
        %302 = vmatprep.subr.bf16.mxu0 0
        %303 = vmatpush1.bf16.msra.mxu0 0
        %304 = vmatprep.subr.bf16.mxu0 0
        %305 = vmatpush1.bf16.msra.mxu0 0
        %306 = vmatprep.subr.bf16.mxu0 0
        %307 = vmatpush1.bf16.msra.mxu0 0
        %308 = vmatprep.subr.bf16.mxu0 0
        %309 = vmatpush1.bf16.msra.mxu0 0
        %310 = vmatprep.subr.bf16.mxu0 0
        %311 = vmatpush1.bf16.msra.mxu0 0
        %312 = vmatprep.subr.bf16.mxu0 0
        %313 = vmatpush1.bf16.msra.mxu0 0
        %314 = vmatprep.subr.bf16.mxu0 0
        %315 = vmatpush1.bf16.msra.mxu0 0
        %316 = vmatprep.subr.bf16.mxu0 0
        %317 = vmatpush1.bf16.msra.mxu0 0
        %318 = vmatprep.subr.bf16.mxu0 0
        %319 = vmatpush1.bf16.msra.mxu0 0
        %320 = vmatprep.subr.bf16.mxu0 0
        %321 = vmatpush1.bf16.msra.mxu0 0
        %322 = vmatprep.subr.bf16.mxu0 0
        %323 = vmatpush1.bf16.msra.mxu0 0
        %324 = vmatprep.subr.bf16.mxu0 0
        %325 = vmatpush1.bf16.msra.mxu0 0
        %326 = vmatprep.subr.bf16.mxu0 0
        %327 = vmatpush1.bf16.msra.mxu0 0
        %328 = vmatprep.subr.bf16.mxu0 0
        %329 = vmatpush1.bf16.msra.mxu0 0
        %330 = vmatprep.mubr.bf16.mxu0 0
        %331 = vmatmul.mubr.bf16.gmra.mrb[0].mxu0 %v287
        %v332 = vpop.f32.mrb[0].mxu0
        %v333 = vadd.f32 0.0, %v332
        %v334 = vpop.f32.mrb[0].mxu0
        %v335 = vpop.f32.mrb[0].mxu0
        %v336 = vadd.f32 0.0, %v335
        %v337 = vpop.f32.mrb[0].mxu0
        %338 = vmatprep.mubr.bf16.mxu0 0
        %339 = vmatmul.mubr.bf16.gmra.mrb[0].mxu0 %v290
        %v340 = vpop.f32.mrb[0].mxu0
        %v341 = vadd.f32 0.0, %v340
        %v342 = vpop.f32.mrb[0].mxu0
        %v343 = vpop.f32.mrb[0].mxu0
        %v344 = vadd.f32 0.0, %v343
        %v345 = vpop.f32.mrb[0].mxu0
        %346 = vmatprep.mubr.bf16.mxu0 0
        %347 = vmatmul.mubr.bf16.gmra.mrb[0].mxu0 %v293
        %v348 = vpop.f32.mrb[0].mxu0
        %v349 = vadd.f32 0.0, %v348
        %v350 = vpop.f32.mrb[0].mxu0
        %v351 = vpop.f32.mrb[0].mxu0
        %v352 = vadd.f32 0.0, %v351
        %v353 = vpop.f32.mrb[0].mxu0
        %354 = vmatprep.mubr.bf16.mxu0 0
        %355 = vmatmul.mubr.bf16.gmra.mrb[0].mxu0 %v296
        %v356 = vpop.f32.mrb[0].mxu0
        %v357 = vadd.f32 0.0, %v356
        %v358 = vpop.f32.mrb[0].mxu0
        %v359 = vpop.f32.mrb[0].mxu0
        %v360 = vadd.f32 0.0, %v359
        %v361 = vpop.f32.mrb[0].mxu0
        %362 = vdwg.mxu0
        %vm363 = vcmask 523264
        %364 = vst.msk [vmem:[%s163] sm:$0xff] %vm363, %v333
        %365 = vst.msk [vmem:[%s163 + $0x8] sm:$0xff] %vm363, %v336
        %366 = vst.msk [vmem:[%s163 + $0x10] sm:$0xff] %vm363, %v341
        %367 = vst.msk [vmem:[%s163 + $0x18] sm:$0xff] %vm363, %v344
        %368 = vst.msk [vmem:[%s163 + $0x20] sm:$0xff] %vm363, %v349
        %369 = vst.msk [vmem:[%s163 + $0x28] sm:$0xff] %vm363, %v352
        %370 = vst.msk [vmem:[%s163 + $0x30] sm:$0xff] %vm363, %v357
        %371 = vst.msk [vmem:[%s163 + $0x38] sm:$0xff] %vm363, %v360
        %s372 = sand.u32 %s93, 1
        %s373 = scalar_lea.sflag [#allocation3], %s372
        %s374 = sand.u32 %s93, 1
        %s375 = smul.addr %s374, 64
        %s376 = scalar_lea.vmem [#allocation2], %s375
        // Predicated region
        $region33: #{launet_stage1.9} parent=31 // pred_check
          %p377 = pneg %p103
        $region34: #{launet_stage1.9} parent=31 // pred_check_branch
          %379 = sbr.rel (%p377) target = $region36
        $region35: #{launet_stage1.9} parent=31 // pred_region
          %s381 = ssub.s32 1024, 1024
          %382 = vsyncadd %s373, %s381
          %s383 = smul.addr %s17, 8
          %s384 = smul.addr %s383, 128
          %s385 = scalar_lea.hbm %s3, %s384
          %s386 = sshll.u32 %s376, 4
          %s387 = int_to_ptr.vmem [resolvable:$true] %s386
          %392 = dma.vmem_to_hbm [thread:$0]  %s387, 1024, %s385, %s373, 128, 128, 8
        $region36: #{launet_stage1.9} parent=31 // pred_fallthru
          _
      $region32: #{launet_stage1.9} parent=5 // pred_fallthru
        _
      %p393 = scmp.le.s32.totalorder 2, %s12
      // Predicated region
      $region37: #{launet_stage1.9} parent=5 // pred_check
        %p394 = pneg %p393
      $region38: #{launet_stage1.9} parent=5 // pred_check_branch
        %396 = sbr.rel (%p394) target = $region40
      $region39: #{launet_stage1.9} parent=5 // pred_region
        %s397 = ssub.s32 %s12, 2
        // Predicated region
        $region41: #{launet_stage1.9} parent=39 // pred_check
          %p398 = pneg %p109
        $region42: #{launet_stage1.9} parent=39 // pred_check_branch
          %400 = sbr.rel (%p398) target = $region44
        $region43: #{launet_stage1.9} parent=39 // pred_region
          %s401 = sand.u32 %s94, 1
          %s402 = scalar_lea.sflag [#allocation3], %s401
          %s403 = sand.u32 %s94, 1
          %s404 = smul.addr %s403, 64
          %s405 = scalar_lea.vmem [#allocation2], %s404
          %406 = dma.done %s402, 1024
        $region44: #{launet_stage1.9} parent=39 // pred_fallthru
          _
      $region40: #{launet_stage1.9} parent=5 // pred_fallthru
        _
    $region6: #{launet_stage1.9} parent=1 // loop_footer
      %s16 = sadd.s32 1, %s12
    $region7: #{launet_stage1.9} parent=1 // loop_footer_branch
      %11 = sbr.rel target = $region3
    $region8: #{launet_stage1.9} parent=1 // loop_exit
      _
    %407 = vsyncpa [#allocation3], 1
    %s408 = scalar_lea.sflag [#allocation3], 1
    %409 = vsyncpa %s408, 1

</llo_original>
